<compile_context>
chip_gen: v7x
topology: tpu7x:2x2x1
jax: 0.10.0
libtpu: 0.0.40
codegen_flags: <defaults>
</compile_context>

<pallas_src>
import functools

import numpy as np
import jax
import jax.numpy as jnp
from jax.experimental import pallas as pl
from jax.experimental.pallas import tpu as pltpu

BN_EPS = 1e-5
CPAD = 128  # lane-dense channel padding


# --------------------------------- kernel ----------------------------------- #

def _bn_relu(acc, gamma, beta):
    """Training-mode BatchNorm (batch stats over all rows) + ReLU, one pass."""
    m = acc.shape[0]
    mean = jnp.sum(acc, axis=0, keepdims=True) * (1.0 / m)
    var = jnp.sum(acc * acc, axis=0, keepdims=True) * (1.0 / m) - mean * mean
    scale = gamma * jax.lax.rsqrt(var + BN_EPS)
    shift = beta - mean * scale
    return jnp.maximum(acc * scale + shift, 0.0)


def _encoder_kernel(*refs, cfg):
    n_in = cfg['n_inputs']
    in_refs = refs[:n_in]
    out_ref = refs[n_in]
    scratch = refs[n_in + 1:]

    col1_ref = in_refs[0]
    w1_ref, g1_ref, b1_ref = in_refs[1:4]
    w2_ref, g2_ref, b2_ref = in_refs[4:7]
    p = 7
    s1_params = []
    for _ in range(cfg['n_s1']):
        s1_params.append(in_refs[p:p + 3])
        p += 3
    wf_ref, bf_ref = in_refs[p], in_refs[p + 1]

    ap2_ref, col2_ref = scratch[0], scratch[1]
    s1_scratch = [(scratch[2 + 2 * l], scratch[3 + 2 * l]) for l in range(cfg['n_s1'])]

    N = cfg['batch']
    Ho1, Wo1 = cfg['Ho1'], cfg['Wo1']
    Ho2, Wo2 = cfg['Ho2'], cfg['Wo2']
    Hpad2 = cfg['Hpad2']
    C = CPAD
    f32 = jnp.float32

    # ---- layer 1: host-built im2col slab -> one wide matmul + BN + ReLU ---- #
    acc = jnp.dot(col1_ref[...], w1_ref[...], preferred_element_type=f32)
    a = _bn_relu(acc, g1_ref[...], b1_ref[...]).astype(jnp.bfloat16)
    # rows of `a` are ordered (n, oh1, wp2-parity, u) -- see build_encoder.

    # ---- layer 2 (stride 2): contiguous scatter into a w-parity-split,
    #      spatially padded VMEM scratch, then contiguous window copies ------ #
    half = Wo1 // 2
    ap2_ref[...] = jnp.zeros_like(ap2_ref)
    for n in range(N):
        for oh in range(Ho1):
            r0 = (n * Ho1 + oh) * 2 * half
            row = n * Hpad2 + oh + 1
            ap2_ref[0, row, 1:1 + half, :] = a[r0:r0 + half, :]            # wp2 even
            ap2_ref[1, row, 0:half, :] = a[r0 + half:r0 + 2 * half, :]     # wp2 odd
    for i in range(4):            # kh = 4
        for j in range(3):        # kw = 3
            k = i * 3 + j
            for n in range(N):
                for oh in range(Ho2):
                    d0 = (n * Ho2 + oh) * Wo2
                    col2_ref[d0:d0 + Wo2, k * C:(k + 1) * C] = \
                        ap2_ref[j % 2, n * Hpad2 + 2 * oh + i,
                                (j // 2):(j // 2) + Wo2, :]
    acc = jnp.dot(col2_ref[...], w2_ref[...], preferred_element_type=f32)
    a = _bn_relu(acc, g2_ref[...], b2_ref[...]).astype(jnp.bfloat16)
    # rows of `a` are now in raster order (n, oh2, ow2).

    # ---- stride-1 3x3 layers ---- #
    Hc, Wc = Ho2, Wo2
    Hpad, Wpad = Hc + 2, Wc + 2
    for l, (wl_ref, gl_ref, bl_ref) in enumerate(s1_params):
        ap_ref, col_ref = s1_scratch[l]
        ap_ref[...] = jnp.zeros_like(ap_ref)
        for n in range(N):
            for oh in range(Hc):
                s0 = (n * Hc + oh) * Wc
                ap_ref[n * Hpad + oh + 1, 1:1 + Wc, :] = a[s0:s0 + Wc, :]
        for i in range(3):
            for j in range(3):
                k = i * 3 + j
                for n in range(N):
                    for oh in range(Hc):
                        d0 = (n * Hc + oh) * Wc
                        col_ref[d0:d0 + Wc, k * C:(k + 1) * C] = \
                            ap_ref[n * Hpad + oh + i, j:j + Wc, :]
        acc = jnp.dot(col_ref[...], wl_ref[...], preferred_element_type=f32)
        a = _bn_relu(acc, gl_ref[...], bl_ref[...]).astype(jnp.bfloat16)

    # ---- final 1x1 conv (+ bias), lane-dense (M, 128) f32 store ---- #
    y = jnp.dot(a, wf_ref[...], preferred_element_type=f32) + bf_ref[...]
    out_ref[...] = y.astype(out_ref.dtype)
    # TODO(synk): BatchNorm2d running_mean/running_var updates (training-mode
    # side effect) are not materialized; only forward activations are produced.


# ----------------------------- pallas_call wrapper --------------------------- #

def _full_spec(shape):
    nd = len(shape)
    return pl.BlockSpec(shape, lambda i, _nd=nd: (0,) * _nd)


def _im2col_first_layer(x_nchw, cfg):
    """Boundary-side (host) im2col for layer 1: lane-dense bf16 slab whose rows
    are ordered (n, oh1, parity-of-(ow1+1), u) so the in-kernel scatter into
    layer 2's parity-split scratch is a set of contiguous block copies."""
    N, Cin, H, W = x_nchw.shape
    Ho1, Wo1 = cfg['Ho1'], cfg['Wo1']
    kh, kw, sh, sw, ph, pw = 4, 3, 2, 2, 1, 1
    x = jnp.transpose(x_nchw, (0, 2, 3, 1)).astype(jnp.bfloat16)        # NHWC, bf16
    xp = jnp.pad(x, ((0, 0), (ph, ph), (pw, pw), (0, 0)))
    blocks = []
    for i in range(kh):
        for j in range(kw):
            win = jax.lax.slice(
                xp, (0, i, j, 0),
                (N, i + sh * (Ho1 - 1) + 1, j + sw * (Wo1 - 1) + 1, Cin),
                (1, sh, sw, 1))                                          # (N,Ho1,Wo1,Cin)
            blocks.append(jnp.pad(win, ((0, 0), (0, 0), (0, 0), (0, CPAD - Cin))))
    col = jnp.concatenate(blocks, axis=-1).reshape(N * Ho1 * Wo1, kh * kw * CPAD)
    return jnp.take(col, cfg['perm1'], axis=0)


def encoder_forward(x_nchw, enc):
    cfg = enc['cfg']
    n, c, h, w = x_nchw.shape
    assert (n, c, h, w) == (cfg['batch'], cfg['in_channels'], cfg['H'], cfg['W'])

    col1 = _im2col_first_layer(x_nchw, cfg)
    inputs = [col1] + list(enc['kernel_inputs'])

    m_out = cfg['batch'] * cfg['Ho2'] * cfg['Wo2']
    kernel = functools.partial(_encoder_kernel, cfg=cfg)

    out = pl.pallas_call(
        kernel,
        out_shape=jax.ShapeDtypeStruct((m_out, CPAD), jnp.float32),
        grid=(1,),
        in_specs=[_full_spec(a.shape) for a in inputs],
        out_specs=_full_spec((m_out, CPAD)),
        scratch_shapes=enc['scratch_shapes'],
        compiler_params=pltpu.CompilerParams(dimension_semantics=("arbitrary",)),
    )(*inputs)

    e_dim = cfg['embedding_dim']
    y = out[:, :e_dim].reshape(cfg['batch'], cfg['Ho2'], cfg['Wo2'], e_dim)
    return jnp.transpose(y, (0, 3, 1, 2))                                # NHWC -> NCHW


# ------------------------------- parameter build ----------------------------- #

def _pack_conv_weight(w_oihw):
    """(Cout, Cin, kh, kw) torch-convention weight -> (kh*kw*CPAD, CPAD) bf16."""
    cout, cin, kh, kw = w_oihw.shape
    packed = np.zeros((kh * kw * CPAD, CPAD), np.float32)
    w_np = np.asarray(w_oihw)
    for i in range(kh):
        for j in range(kw):
            k = i * kw + j
            packed[k * CPAD:k * CPAD + cin, :cout] = w_np[:, :, i, j].T
    return jnp.asarray(packed, jnp.bfloat16)


def _pad_vec(v):
    out = np.zeros((1, CPAD), np.float32)
    v = np.asarray(v)
    out[0, :v.shape[0]] = v
    return jnp.asarray(out)


def build_encoder(key, in_channels, hidden_dims, embedding_dim, batch, height, width):
    assert len(hidden_dims) >= 2, "kernel specialised for >= 2 hidden dims (two stride-2 stages)"
    assert max([in_channels, embedding_dim] + list(hidden_dims)) <= CPAD

    # ---- geometry ---- #
    Ho1 = (height + 2 - 4) // 2 + 1
    Wo1 = (width + 2 - 3) // 2 + 1
    assert Wo1 % 2 == 0, "w-parity-split layout assumes an even first-layer output width"
    Ho2 = (Ho1 + 2 - 4) // 2 + 1
    Wo2 = (Wo1 + 2 - 3) // 2 + 1
    Hpad2, Wq2 = Ho1 + 2, Wo1 // 2 + 1
    n_s1 = len(hidden_dims) - 2

    # ---- layer definitions (matches the PyTorch Encoder structure) ---- #
    defs = [dict(cin=in_channels, cout=hidden_dims[0], k=(4, 3), s=(2, 2), p=(1, 1), bn=True),
            dict(cin=hidden_dims[0], cout=hidden_dims[1], k=(4, 3), s=(2, 2), p=(1, 1), bn=True)]
    prev = hidden_dims[1]
    for h_dim in hidden_dims[2:]:
        defs.append(dict(cin=prev, cout=h_dim, k=(3, 3), s=(1, 1), p=(1, 1), bn=True))
        prev = h_dim
    defs.append(dict(cin=prev, cout=embedding_dim, k=(1, 1), s=(1, 1), p=(0, 0), bn=False))

    kernel_inputs, ref_layers = [], []
    for ld in defs:
        key, k_w, k_b, k_g, k_be = jax.random.split(key, 5)
        cout, cin = ld['cout'], ld['cin']
        kh, kw = ld['k']
        w_t = 0.05 * jax.random.normal(k_w, (cout, cin, kh, kw), jnp.float32)
        b_t = 0.05 * jax.random.normal(k_b, (cout,), jnp.float32)
        w_packed = _pack_conv_weight(w_t)
        if ld['bn']:
            gamma = 1.0 + 0.05 * jax.random.normal(k_g, (cout,), jnp.float32)
            beta = 0.05 * jax.random.normal(k_be, (cout,), jnp.float32)
            # Conv bias dropped in-kernel: exactly cancelled by BN mean subtraction.
            kernel_inputs += [w_packed, _pad_vec(gamma), _pad_vec(beta)]
            ref_layers.append(dict(w=w_t, b=b_t, gamma=gamma, beta=beta,
                                   stride=ld['s'], pad=ld['p'], bn=True))
        else:
            kernel_inputs += [w_packed, _pad_vec(b_t)]
            ref_layers.append(dict(w=w_t, b=b_t, stride=ld['s'], pad=ld['p'], bn=False))

    # Layer-1 output row permutation: per (n, oh1) list odd ow1 first (wp2 even),
    # then even ow1 (wp2 odd), so the in-kernel scatter into ap2 is contiguous.
    perm = []
    for n in range(batch):
        for oh in range(Ho1):
            for ow in list(range(1, Wo1, 2)) + list(range(0, Wo1, 2)):
                perm.append((n * Ho1 + oh) * Wo1 + ow)
    perm1 = jnp.asarray(np.array(perm, np.int32))

    cfg = dict(batch=batch, in_channels=in_channels, H=height, W=width,
               embedding_dim=embedding_dim,
               Ho1=Ho1, Wo1=Wo1, Ho2=Ho2, Wo2=Wo2, Hpad2=Hpad2,
               n_s1=n_s1, n_inputs=1 + 3 * 2 + 3 * n_s1 + 2, perm1=perm1)

    m2 = batch * Ho2 * Wo2
    scratch_shapes = [pltpu.VMEM((2, batch * Hpad2, Wq2, CPAD), jnp.bfloat16),
                      pltpu.VMEM((m2, 12 * CPAD), jnp.bfloat16)]
    for _ in range(n_s1):
        scratch_shapes += [pltpu.VMEM((batch * (Ho2 + 2), Wo2 + 2, CPAD), jnp.bfloat16),
                           pltpu.VMEM((m2, 9 * CPAD), jnp.bfloat16)]

    return dict(cfg=cfg, kernel_inputs=kernel_inputs,
                scratch_shapes=scratch_shapes, ref_layers=ref_layers)


# ------------------------------- pure-JAX reference -------------------------- #

def encoder_reference(x_nchw, enc):
    """Reference with the kernel's precision policy (bf16-rounded input /
    weights / inter-layer activations, f32 BN math, biased batch variance)."""
    a = x_nchw.astype(jnp.bfloat16).astype(jnp.float32)
    for lyr in enc['ref_layers']:
        w = lyr['w'].astype(jnp.bfloat16).astype(jnp.float32)
        sh, sw = lyr['stride']
        ph, pw = lyr['pad']
        z = jax.lax.conv_general_dilated(
            a, w, window_strides=(sh, sw), padding=((ph, ph), (pw, pw)),
            dimension_numbers=('NCHW', 'OIHW', 'NCHW'))
        z = z + lyr['b'][None, :, None, None]
        if lyr['bn']:
            mean = jnp.mean(z, axis=(0, 2, 3), keepdims=True)
            var = jnp.mean((z - mean) ** 2, axis=(0, 2, 3), keepdims=True)
            z = (z - mean) * (lyr['gamma'][None, :, None, None]
                              * jax.lax.rsqrt(var + BN_EPS)) + lyr['beta'][None, :, None, None]
            a = jnp.maximum(z, 0.0).astype(jnp.bfloat16).astype(jnp.float32)
        else:
            a = z
    return a


# ----------------------------------- main ------------------------------------ #

if __name__ == "__main__":
    key = jax.random.PRNGKey(0)
    key, x_key, p_key = jax.random.split(key, 3)

    in_channels = 4
    hidden_dims = [8, 16, 32]
    embedding_dim = 16
    batch, height, width = 2, 16, 16

    x = jax.random.normal(x_key, (batch, in_channels, height, width), jnp.float32)
    enc = build_encoder(p_key, in_channels, hidden_dims, embedding_dim,
                        batch, height, width)

    fwd = jax.jit(functools.partial(encoder_forward, enc=enc))
    out = jax.block_until_ready(fwd(x))

    # Expected spatial downsampling: 16 -> 8 -> 4, then the stride-1 layer + 1x1.
    assert out.shape == (batch, embedding_dim, 4, 4), out.shape
    assert out.dtype == jnp.float32
    assert bool(jnp.all(jnp.isfinite(out)))

    ref = jax.block_until_ready(encoder_reference(x, enc))
    max_err = float(jnp.max(jnp.abs(out - ref)))
    assert max_err < 0.15, f"max |kernel - reference| = {max_err}"
    print("KERNEL_OK")
</pallas_src>

<mosaic_0001>
module attributes {stable_mosaic.version = 11 : i64} {
  func.func @_encoder_kernel(%arg0: i32, %arg1: memref<128x1536xbf16, #tpu.memory_space<vmem>>, %arg2: memref<1536x128xbf16, #tpu.memory_space<vmem>>, %arg3: memref<1x128xf32, #tpu.memory_space<vmem>>, %arg4: memref<1x128xf32, #tpu.memory_space<vmem>>, %arg5: memref<1536x128xbf16, #tpu.memory_space<vmem>>, %arg6: memref<1x128xf32, #tpu.memory_space<vmem>>, %arg7: memref<1x128xf32, #tpu.memory_space<vmem>>, %arg8: memref<1152x128xbf16, #tpu.memory_space<vmem>>, %arg9: memref<1x128xf32, #tpu.memory_space<vmem>>, %arg10: memref<1x128xf32, #tpu.memory_space<vmem>>, %arg11: memref<128x128xbf16, #tpu.memory_space<vmem>>, %arg12: memref<1x128xf32, #tpu.memory_space<vmem>>, %arg13: memref<32x128xf32, #tpu.memory_space<vmem>>, %arg14: memref<2x20x5x128xbf16, #tpu.memory_space<vmem>>, %arg15: memref<32x1536xbf16, #tpu.memory_space<vmem>>, %arg16: memref<12x6x128xbf16, #tpu.memory_space<vmem>>, %arg17: memref<32x1152xbf16, #tpu.memory_space<vmem>>) attributes {dimension_semantics = [#tpu.dimension_semantics<arbitrary>], iteration_bounds = array<i64: 1>, scalar_prefetch = 0 : i64, scratch_operands = 4 : i64, tpu.core_type = #tpu.core_type<tc>, window_params = [{pipeline_mode = #tpu.pipeline_mode<synchronous>, transform_indices = @transform_0, window_bounds = array<i64: 128, 1536>}, {pipeline_mode = #tpu.pipeline_mode<synchronous>, transform_indices = @transform_1, window_bounds = array<i64: 1536, 128>}, {pipeline_mode = #tpu.pipeline_mode<synchronous>, transform_indices = @transform_2, window_bounds = array<i64: 1, 128>}, {pipeline_mode = #tpu.pipeline_mode<synchronous>, transform_indices = @transform_3, window_bounds = array<i64: 1, 128>}, {pipeline_mode = #tpu.pipeline_mode<synchronous>, transform_indices = @transform_4, window_bounds = array<i64: 1536, 128>}, {pipeline_mode = #tpu.pipeline_mode<synchronous>, transform_indices = @transform_5, window_bounds = array<i64: 1, 128>}, {pipeline_mode = #tpu.pipeline_mode<synchronous>, transform_indices = @transform_6, window_bounds = array<i64: 1, 128>}, {pipeline_mode = #tpu.pipeline_mode<synchronous>, transform_indices = @transform_7, window_bounds = array<i64: 1152, 128>}, {pipeline_mode = #tpu.pipeline_mode<synchronous>, transform_indices = @transform_8, window_bounds = array<i64: 1, 128>}, {pipeline_mode = #tpu.pipeline_mode<synchronous>, transform_indices = @transform_9, window_bounds = array<i64: 1, 128>}, {pipeline_mode = #tpu.pipeline_mode<synchronous>, transform_indices = @transform_10, window_bounds = array<i64: 128, 128>}, {pipeline_mode = #tpu.pipeline_mode<synchronous>, transform_indices = @transform_11, window_bounds = array<i64: 1, 128>}, {pipeline_mode = #tpu.pipeline_mode<synchronous>, transform_indices = @transform_12, window_bounds = array<i64: 32, 128>}]} {
    %c0 = arith.constant 0 : index
    %c0_0 = arith.constant 0 : index
    %0 = vector.load %arg1[%c0, %c0_0] : memref<128x1536xbf16, #tpu.memory_space<vmem>>, vector<128x1536xbf16>
    %c0_1 = arith.constant 0 : index
    %c0_2 = arith.constant 0 : index
    %1 = vector.load %arg2[%c0_1, %c0_2] : memref<1536x128xbf16, #tpu.memory_space<vmem>>, vector<1536x128xbf16>
    %cst = arith.constant dense<0.000000e+00> : vector<128x128xf32>
    %2 = tpu.matmul %0, %1, %cst {dimension_numbers = #tpu.dot_dimension_numbers<[1], [0], [0], [1], [0, 0, 1, 1], [], []>} : vector<128x1536xbf16>, vector<1536x128xbf16>, vector<128x128xf32> -> vector<128x128xf32>
    %c0_3 = arith.constant 0 : index
    %c0_4 = arith.constant 0 : index
    %3 = vector.load %arg3[%c0_3, %c0_4] : memref<1x128xf32, #tpu.memory_space<vmem>>, vector<1x128xf32>
    %c0_5 = arith.constant 0 : index
    %c0_6 = arith.constant 0 : index
    %4 = vector.load %arg4[%c0_5, %c0_6] : memref<1x128xf32, #tpu.memory_space<vmem>>, vector<1x128xf32>
    %cst_7 = arith.constant dense<0.000000e+00> : vector<128xf32>
    %5 = vector.multi_reduction <add>, %2, %cst_7 [0] : vector<128x128xf32> to vector<128xf32>
    %6 = vector.shape_cast %5 : vector<128xf32> to vector<1x128xf32>
    %cst_8 = arith.constant 7.812500e-03 : f32
    %7 = vector.broadcast %cst_8 : f32 to vector<1x128xf32>
    %8 = arith.mulf %6, %7 : vector<1x128xf32>
    %9 = arith.mulf %2, %2 : vector<128x128xf32>
    %cst_9 = arith.constant dense<0.000000e+00> : vector<128xf32>
    %10 = vector.multi_reduction <add>, %9, %cst_9 [0] : vector<128x128xf32> to vector<128xf32>
    %11 = vector.shape_cast %10 : vector<128xf32> to vector<1x128xf32>
    %cst_10 = arith.constant 7.812500e-03 : f32
    %12 = vector.broadcast %cst_10 : f32 to vector<1x128xf32>
    %13 = arith.mulf %11, %12 : vector<1x128xf32>
    %14 = arith.mulf %8, %8 : vector<1x128xf32>
    %15 = arith.subf %13, %14 : vector<1x128xf32>
    %cst_11 = arith.constant 9.99999974E-6 : f32
    %16 = vector.broadcast %cst_11 : f32 to vector<1x128xf32>
    %17 = arith.addf %15, %16 : vector<1x128xf32>
    %18 = math.rsqrt %17 : vector<1x128xf32>
    %19 = arith.mulf %3, %18 : vector<1x128xf32>
    %20 = arith.mulf %8, %19 : vector<1x128xf32>
    %21 = arith.subf %4, %20 : vector<1x128xf32>
    %22 = vector.broadcast %19 : vector<1x128xf32> to vector<128x128xf32>
    %23 = arith.mulf %2, %22 : vector<128x128xf32>
    %24 = vector.broadcast %21 : vector<1x128xf32> to vector<128x128xf32>
    %25 = arith.addf %23, %24 : vector<128x128xf32>
    %cst_12 = arith.constant 0.000000e+00 : f32
    %26 = vector.broadcast %cst_12 : f32 to vector<128x128xf32>
    %27 = arith.maximumf %25, %26 : vector<128x128xf32>
    %28 = arith.truncf %27 : vector<128x128xf32> to vector<128x128xbf16>
    %cst_13 = arith.constant 0.000000e+00 : bf16
    %29 = vector.broadcast %cst_13 : bf16 to vector<2x20x5x128xbf16>
    %c0_14 = arith.constant 0 : index
    %c0_15 = arith.constant 0 : index
    %c0_16 = arith.constant 0 : index
    %c0_17 = arith.constant 0 : index
    %30 = vector.load %arg14[%c0_14, %c0_15, %c0_16, %c0_17] : memref<2x20x5x128xbf16, #tpu.memory_space<vmem>>, vector<2x20x5x128xbf16>
    tpu.vector_store %arg14[%c0_14, %c0_15, %c0_16, %c0_17], %29 {strides = array<i32>} : memref<2x20x5x128xbf16, #tpu.memory_space<vmem>>, vector<2x20x5x128xbf16>,
    %31 = vector.extract_strided_slice %28 {offsets = [0, 0], sizes = [4, 128], strides = [1, 1]} : vector<128x128xbf16> to vector<4x128xbf16>
    %c0_18 = arith.constant 0 : index
    %c1 = arith.constant 1 : index
    %c1_19 = arith.constant 1 : index
    %c0_20 = arith.constant 0 : index
    %32 = vector.load %arg14[%c0_18, %c1, %c1_19, %c0_20] : memref<2x20x5x128xbf16, #tpu.memory_space<vmem>>, vector<1x1x4x128xbf16>
    %33 = vector.shape_cast %32 : vector<1x1x4x128xbf16> to vector<4x128xbf16>
    %34 = vector.shape_cast %31 : vector<4x128xbf16> to vector<1x1x4x128xbf16>
    tpu.vector_store %arg14[%c0_18, %c1, %c1_19, %c0_20], %34 {strides = array<i32>} : memref<2x20x5x128xbf16, #tpu.memory_space<vmem>>, vector<1x1x4x128xbf16>,
    %35 = vector.extract_strided_slice %28 {offsets = [4, 0], sizes = [4, 128], strides = [1, 1]} : vector<128x128xbf16> to vector<4x128xbf16>
    %c1_21 = arith.constant 1 : index
    %c1_22 = arith.constant 1 : index
    %c0_23 = arith.constant 0 : index
    %c0_24 = arith.constant 0 : index
    %36 = vector.load %arg14[%c1_21, %c1_22, %c0_23, %c0_24] : memref<2x20x5x128xbf16, #tpu.memory_space<vmem>>, vector<1x1x4x128xbf16>
    %37 = vector.shape_cast %36 : vector<1x1x4x128xbf16> to vector<4x128xbf16>
    %38 = vector.shape_cast %35 : vector<4x128xbf16> to vector<1x1x4x128xbf16>
    tpu.vector_store %arg14[%c1_21, %c1_22, %c0_23, %c0_24], %38 {strides = array<i32>} : memref<2x20x5x128xbf16, #tpu.memory_space<vmem>>, vector<1x1x4x128xbf16>,
    %39 = vector.extract_strided_slice %28 {offsets = [8, 0], sizes = [4, 128], strides = [1, 1]} : vector<128x128xbf16> to vector<4x128xbf16>
    %c0_25 = arith.constant 0 : index
    %c2 = arith.constant 2 : index
    %c1_26 = arith.constant 1 : index
    %c0_27 = arith.constant 0 : index
    %40 = vector.load %arg14[%c0_25, %c2, %c1_26, %c0_27] : memref<2x20x5x128xbf16, #tpu.memory_space<vmem>>, vector<1x1x4x128xbf16>
    %41 = vector.shape_cast %40 : vector<1x1x4x128xbf16> to vector<4x128xbf16>
    %42 = vector.shape_cast %39 : vector<4x128xbf16> to vector<1x1x4x128xbf16>
    tpu.vector_store %arg14[%c0_25, %c2, %c1_26, %c0_27], %42 {strides = array<i32>} : memref<2x20x5x128xbf16, #tpu.memory_space<vmem>>, vector<1x1x4x128xbf16>,
    %43 = vector.extract_strided_slice %28 {offsets = [12, 0], sizes = [4, 128], strides = [1, 1]} : vector<128x128xbf16> to vector<4x128xbf16>
    %c1_28 = arith.constant 1 : index
    %c2_29 = arith.constant 2 : index
    %c0_30 = arith.constant 0 : index
    %c0_31 = arith.constant 0 : index
    %44 = vector.load %arg14[%c1_28, %c2_29, %c0_30, %c0_31] : memref<2x20x5x128xbf16, #tpu.memory_space<vmem>>, vector<1x1x4x128xbf16>
    %45 = vector.shape_cast %44 : vector<1x1x4x128xbf16> to vector<4x128xbf16>
    %46 = vector.shape_cast %43 : vector<4x128xbf16> to vector<1x1x4x128xbf16>
    tpu.vector_store %arg14[%c1_28, %c2_29, %c0_30, %c0_31], %46 {strides = array<i32>} : memref<2x20x5x128xbf16, #tpu.memory_space<vmem>>, vector<1x1x4x128xbf16>,
    %47 = vector.extract_strided_slice %28 {offsets = [16, 0], sizes = [4, 128], strides = [1, 1]} : vector<128x128xbf16> to vector<4x128xbf16>
    %c0_32 = arith.constant 0 : index
    %c3 = arith.constant 3 : index
    %c1_33 = arith.constant 1 : index
    %c0_34 = arith.constant 0 : index
    %48 = vector.load %arg14[%c0_32, %c3, %c1_33, %c0_34] : memref<2x20x5x128xbf16, #tpu.memory_space<vmem>>, vector<1x1x4x128xbf16>
    %49 = vector.shape_cast %48 : vector<1x1x4x128xbf16> to vector<4x128xbf16>
    %50 = vector.shape_cast %47 : vector<4x128xbf16> to vector<1x1x4x128xbf16>
    tpu.vector_store %arg14[%c0_32, %c3, %c1_33, %c0_34], %50 {strides = array<i32>} : memref<2x20x5x128xbf16, #tpu.memory_space<vmem>>, vector<1x1x4x128xbf16>,
    %51 = vector.extract_strided_slice %28 {offsets = [20, 0], sizes = [4, 128], strides = [1, 1]} : vector<128x128xbf16> to vector<4x128xbf16>
    %c1_35 = arith.constant 1 : index
    %c3_36 = arith.constant 3 : index
    %c0_37 = arith.constant 0 : index
    %c0_38 = arith.constant 0 : index
    %52 = vector.load %arg14[%c1_35, %c3_36, %c0_37, %c0_38] : memref<2x20x5x128xbf16, #tpu.memory_space<vmem>>, vector<1x1x4x128xbf16>
    %53 = vector.shape_cast %52 : vector<1x1x4x128xbf16> to vector<4x128xbf16>
    %54 = vector.shape_cast %51 : vector<4x128xbf16> to vector<1x1x4x128xbf16>
    tpu.vector_store %arg14[%c1_35, %c3_36, %c0_37, %c0_38], %54 {strides = array<i32>} : memref<2x20x5x128xbf16, #tpu.memory_space<vmem>>, vector<1x1x4x128xbf16>,
    %55 = vector.extract_strided_slice %28 {offsets = [24, 0], sizes = [4, 128], strides = [1, 1]} : vector<128x128xbf16> to vector<4x128xbf16>
    %c0_39 = arith.constant 0 : index
    %c4 = arith.constant 4 : index
    %c1_40 = arith.constant 1 : index
    %c0_41 = arith.constant 0 : index
    %56 = vector.load %arg14[%c0_39, %c4, %c1_40, %c0_41] : memref<2x20x5x128xbf16, #tpu.memory_space<vmem>>, vector<1x1x4x128xbf16>
    %57 = vector.shape_cast %56 : vector<1x1x4x128xbf16> to vector<4x128xbf16>
    %58 = vector.shape_cast %55 : vector<4x128xbf16> to vector<1x1x4x128xbf16>
    tpu.vector_store %arg14[%c0_39, %c4, %c1_40, %c0_41], %58 {strides = array<i32>} : memref<2x20x5x128xbf16, #tpu.memory_space<vmem>>, vector<1x1x4x128xbf16>,
    %59 = vector.extract_strided_slice %28 {offsets = [28, 0], sizes = [4, 128], strides = [1, 1]} : vector<128x128xbf16> to vector<4x128xbf16>
    %c1_42 = arith.constant 1 : index
    %c4_43 = arith.constant 4 : index
    %c0_44 = arith.constant 0 : index
    %c0_45 = arith.constant 0 : index
    %60 = vector.load %arg14[%c1_42, %c4_43, %c0_44, %c0_45] : memref<2x20x5x128xbf16, #tpu.memory_space<vmem>>, vector<1x1x4x128xbf16>
    %61 = vector.shape_cast %60 : vector<1x1x4x128xbf16> to vector<4x128xbf16>
    %62 = vector.shape_cast %59 : vector<4x128xbf16> to vector<1x1x4x128xbf16>
    tpu.vector_store %arg14[%c1_42, %c4_43, %c0_44, %c0_45], %62 {strides = array<i32>} : memref<2x20x5x128xbf16, #tpu.memory_space<vmem>>, vector<1x1x4x128xbf16>,
    %63 = vector.extract_strided_slice %28 {offsets = [32, 0], sizes = [4, 128], strides = [1, 1]} : vector<128x128xbf16> to vector<4x128xbf16>
    %c0_46 = arith.constant 0 : index
    %c5 = arith.constant 5 : index
    %c1_47 = arith.constant 1 : index
    %c0_48 = arith.constant 0 : index
    %64 = vector.load %arg14[%c0_46, %c5, %c1_47, %c0_48] : memref<2x20x5x128xbf16, #tpu.memory_space<vmem>>, vector<1x1x4x128xbf16>
    %65 = vector.shape_cast %64 : vector<1x1x4x128xbf16> to vector<4x128xbf16>
    %66 = vector.shape_cast %63 : vector<4x128xbf16> to vector<1x1x4x128xbf16>
    tpu.vector_store %arg14[%c0_46, %c5, %c1_47, %c0_48], %66 {strides = array<i32>} : memref<2x20x5x128xbf16, #tpu.memory_space<vmem>>, vector<1x1x4x128xbf16>,
    %67 = vector.extract_strided_slice %28 {offsets = [36, 0], sizes = [4, 128], strides = [1, 1]} : vector<128x128xbf16> to vector<4x128xbf16>
    %c1_49 = arith.constant 1 : index
    %c5_50 = arith.constant 5 : index
    %c0_51 = arith.constant 0 : index
    %c0_52 = arith.constant 0 : index
    %68 = vector.load %arg14[%c1_49, %c5_50, %c0_51, %c0_52] : memref<2x20x5x128xbf16, #tpu.memory_space<vmem>>, vector<1x1x4x128xbf16>
    %69 = vector.shape_cast %68 : vector<1x1x4x128xbf16> to vector<4x128xbf16>
    %70 = vector.shape_cast %67 : vector<4x128xbf16> to vector<1x1x4x128xbf16>
    tpu.vector_store %arg14[%c1_49, %c5_50, %c0_51, %c0_52], %70 {strides = array<i32>} : memref<2x20x5x128xbf16, #tpu.memory_space<vmem>>, vector<1x1x4x128xbf16>,
    %71 = vector.extract_strided_slice %28 {offsets = [40, 0], sizes = [4, 128], strides = [1, 1]} : vector<128x128xbf16> to vector<4x128xbf16>
    %c0_53 = arith.constant 0 : index
    %c6 = arith.constant 6 : index
    %c1_54 = arith.constant 1 : index
    %c0_55 = arith.constant 0 : index
    %72 = vector.load %arg14[%c0_53, %c6, %c1_54, %c0_55] : memref<2x20x5x128xbf16, #tpu.memory_space<vmem>>, vector<1x1x4x128xbf16>
    %73 = vector.shape_cast %72 : vector<1x1x4x128xbf16> to vector<4x128xbf16>
    %74 = vector.shape_cast %71 : vector<4x128xbf16> to vector<1x1x4x128xbf16>
    tpu.vector_store %arg14[%c0_53, %c6, %c1_54, %c0_55], %74 {strides = array<i32>} : memref<2x20x5x128xbf16, #tpu.memory_space<vmem>>, vector<1x1x4x128xbf16>,
    %75 = vector.extract_strided_slice %28 {offsets = [44, 0], sizes = [4, 128], strides = [1, 1]} : vector<128x128xbf16> to vector<4x128xbf16>
    %c1_56 = arith.constant 1 : index
    %c6_57 = arith.constant 6 : index
    %c0_58 = arith.constant 0 : index
    %c0_59 = arith.constant 0 : index
    %76 = vector.load %arg14[%c1_56, %c6_57, %c0_58, %c0_59] : memref<2x20x5x128xbf16, #tpu.memory_space<vmem>>, vector<1x1x4x128xbf16>
    %77 = vector.shape_cast %76 : vector<1x1x4x128xbf16> to vector<4x128xbf16>
    %78 = vector.shape_cast %75 : vector<4x128xbf16> to vector<1x1x4x128xbf16>
    tpu.vector_store %arg14[%c1_56, %c6_57, %c0_58, %c0_59], %78 {strides = array<i32>} : memref<2x20x5x128xbf16, #tpu.memory_space<vmem>>, vector<1x1x4x128xbf16>,
    %79 = vector.extract_strided_slice %28 {offsets = [48, 0], sizes = [4, 128], strides = [1, 1]} : vector<128x128xbf16> to vector<4x128xbf16>
    %c0_60 = arith.constant 0 : index
    %c7 = arith.constant 7 : index
    %c1_61 = arith.constant 1 : index
    %c0_62 = arith.constant 0 : index
    %80 = vector.load %arg14[%c0_60, %c7, %c1_61, %c0_62] : memref<2x20x5x128xbf16, #tpu.memory_space<vmem>>, vector<1x1x4x128xbf16>
    %81 = vector.shape_cast %80 : vector<1x1x4x128xbf16> to vector<4x128xbf16>
    %82 = vector.shape_cast %79 : vector<4x128xbf16> to vector<1x1x4x128xbf16>
    tpu.vector_store %arg14[%c0_60, %c7, %c1_61, %c0_62], %82 {strides = array<i32>} : memref<2x20x5x128xbf16, #tpu.memory_space<vmem>>, vector<1x1x4x128xbf16>,
    %83 = vector.extract_strided_slice %28 {offsets = [52, 0], sizes = [4, 128], strides = [1, 1]} : vector<128x128xbf16> to vector<4x128xbf16>
    %c1_63 = arith.constant 1 : index
    %c7_64 = arith.constant 7 : index
    %c0_65 = arith.constant 0 : index
    %c0_66 = arith.constant 0 : index
    %84 = vector.load %arg14[%c1_63, %c7_64, %c0_65, %c0_66] : memref<2x20x5x128xbf16, #tpu.memory_space<vmem>>, vector<1x1x4x128xbf16>
    %85 = vector.shape_cast %84 : vector<1x1x4x128xbf16> to vector<4x128xbf16>
    %86 = vector.shape_cast %83 : vector<4x128xbf16> to vector<1x1x4x128xbf16>
    tpu.vector_store %arg14[%c1_63, %c7_64, %c0_65, %c0_66], %86 {strides = array<i32>} : memref<2x20x5x128xbf16, #tpu.memory_space<vmem>>, vector<1x1x4x128xbf16>,
    %87 = vector.extract_strided_slice %28 {offsets = [56, 0], sizes = [4, 128], strides = [1, 1]} : vector<128x128xbf16> to vector<4x128xbf16>
    %c0_67 = arith.constant 0 : index
    %c8 = arith.constant 8 : index
    %c1_68 = arith.constant 1 : index
    %c0_69 = arith.constant 0 : index
    %88 = vector.load %arg14[%c0_67, %c8, %c1_68, %c0_69] : memref<2x20x5x128xbf16, #tpu.memory_space<vmem>>, vector<1x1x4x128xbf16>
    %89 = vector.shape_cast %88 : vector<1x1x4x128xbf16> to vector<4x128xbf16>
    %90 = vector.shape_cast %87 : vector<4x128xbf16> to vector<1x1x4x128xbf16>
    tpu.vector_store %arg14[%c0_67, %c8, %c1_68, %c0_69], %90 {strides = array<i32>} : memref<2x20x5x128xbf16, #tpu.memory_space<vmem>>, vector<1x1x4x128xbf16>,
    %91 = vector.extract_strided_slice %28 {offsets = [60, 0], sizes = [4, 128], strides = [1, 1]} : vector<128x128xbf16> to vector<4x128xbf16>
    %c1_70 = arith.constant 1 : index
    %c8_71 = arith.constant 8 : index
    %c0_72 = arith.constant 0 : index
    %c0_73 = arith.constant 0 : index
    %92 = vector.load %arg14[%c1_70, %c8_71, %c0_72, %c0_73] : memref<2x20x5x128xbf16, #tpu.memory_space<vmem>>, vector<1x1x4x128xbf16>
    %93 = vector.shape_cast %92 : vector<1x1x4x128xbf16> to vector<4x128xbf16>
    %94 = vector.shape_cast %91 : vector<4x128xbf16> to vector<1x1x4x128xbf16>
    tpu.vector_store %arg14[%c1_70, %c8_71, %c0_72, %c0_73], %94 {strides = array<i32>} : memref<2x20x5x128xbf16, #tpu.memory_space<vmem>>, vector<1x1x4x128xbf16>,
    %95 = vector.extract_strided_slice %28 {offsets = [64, 0], sizes = [4, 128], strides = [1, 1]} : vector<128x128xbf16> to vector<4x128xbf16>
    %c0_74 = arith.constant 0 : index
    %c11 = arith.constant 11 : index
    %c1_75 = arith.constant 1 : index
    %c0_76 = arith.constant 0 : index
    %96 = vector.load %arg14[%c0_74, %c11, %c1_75, %c0_76] : memref<2x20x5x128xbf16, #tpu.memory_space<vmem>>, vector<1x1x4x128xbf16>
    %97 = vector.shape_cast %96 : vector<1x1x4x128xbf16> to vector<4x128xbf16>
    %98 = vector.shape_cast %95 : vector<4x128xbf16> to vector<1x1x4x128xbf16>
    tpu.vector_store %arg14[%c0_74, %c11, %c1_75, %c0_76], %98 {strides = array<i32>} : memref<2x20x5x128xbf16, #tpu.memory_space<vmem>>, vector<1x1x4x128xbf16>,
    %99 = vector.extract_strided_slice %28 {offsets = [68, 0], sizes = [4, 128], strides = [1, 1]} : vector<128x128xbf16> to vector<4x128xbf16>
    %c1_77 = arith.constant 1 : index
    %c11_78 = arith.constant 11 : index
    %c0_79 = arith.constant 0 : index
    %c0_80 = arith.constant 0 : index
    %100 = vector.load %arg14[%c1_77, %c11_78, %c0_79, %c0_80] : memref<2x20x5x128xbf16, #tpu.memory_space<vmem>>, vector<1x1x4x128xbf16>
    %101 = vector.shape_cast %100 : vector<1x1x4x128xbf16> to vector<4x128xbf16>
    %102 = vector.shape_cast %99 : vector<4x128xbf16> to vector<1x1x4x128xbf16>
    tpu.vector_store %arg14[%c1_77, %c11_78, %c0_79, %c0_80], %102 {strides = array<i32>} : memref<2x20x5x128xbf16, #tpu.memory_space<vmem>>, vector<1x1x4x128xbf16>,
    %103 = vector.extract_strided_slice %28 {offsets = [72, 0], sizes = [4, 128], strides = [1, 1]} : vector<128x128xbf16> to vector<4x128xbf16>
    %c0_81 = arith.constant 0 : index
    %c12 = arith.constant 12 : index
    %c1_82 = arith.constant 1 : index
    %c0_83 = arith.constant 0 : index
    %104 = vector.load %arg14[%c0_81, %c12, %c1_82, %c0_83] : memref<2x20x5x128xbf16, #tpu.memory_space<vmem>>, vector<1x1x4x128xbf16>
    %105 = vector.shape_cast %104 : vector<1x1x4x128xbf16> to vector<4x128xbf16>
    %106 = vector.shape_cast %103 : vector<4x128xbf16> to vector<1x1x4x128xbf16>
    tpu.vector_store %arg14[%c0_81, %c12, %c1_82, %c0_83], %106 {strides = array<i32>} : memref<2x20x5x128xbf16, #tpu.memory_space<vmem>>, vector<1x1x4x128xbf16>,
    %107 = vector.extract_strided_slice %28 {offsets = [76, 0], sizes = [4, 128], strides = [1, 1]} : vector<128x128xbf16> to vector<4x128xbf16>
    %c1_84 = arith.constant 1 : index
    %c12_85 = arith.constant 12 : index
    %c0_86 = arith.constant 0 : index
    %c0_87 = arith.constant 0 : index
    %108 = vector.load %arg14[%c1_84, %c12_85, %c0_86, %c0_87] : memref<2x20x5x128xbf16, #tpu.memory_space<vmem>>, vector<1x1x4x128xbf16>
    %109 = vector.shape_cast %108 : vector<1x1x4x128xbf16> to vector<4x128xbf16>
    %110 = vector.shape_cast %107 : vector<4x128xbf16> to vector<1x1x4x128xbf16>
    tpu.vector_store %arg14[%c1_84, %c12_85, %c0_86, %c0_87], %110 {strides = array<i32>} : memref<2x20x5x128xbf16, #tpu.memory_space<vmem>>, vector<1x1x4x128xbf16>,
    %111 = vector.extract_strided_slice %28 {offsets = [80, 0], sizes = [4, 128], strides = [1, 1]} : vector<128x128xbf16> to vector<4x128xbf16>
    %c0_88 = arith.constant 0 : index
    %c13 = arith.constant 13 : index
    %c1_89 = arith.constant 1 : index
    %c0_90 = arith.constant 0 : index
    %112 = vector.load %arg14[%c0_88, %c13, %c1_89, %c0_90] : memref<2x20x5x128xbf16, #tpu.memory_space<vmem>>, vector<1x1x4x128xbf16>
    %113 = vector.shape_cast %112 : vector<1x1x4x128xbf16> to vector<4x128xbf16>
    %114 = vector.shape_cast %111 : vector<4x128xbf16> to vector<1x1x4x128xbf16>
    tpu.vector_store %arg14[%c0_88, %c13, %c1_89, %c0_90], %114 {strides = array<i32>} : memref<2x20x5x128xbf16, #tpu.memory_space<vmem>>, vector<1x1x4x128xbf16>,
    %115 = vector.extract_strided_slice %28 {offsets = [84, 0], sizes = [4, 128], strides = [1, 1]} : vector<128x128xbf16> to vector<4x128xbf16>
    %c1_91 = arith.constant 1 : index
    %c13_92 = arith.constant 13 : index
    %c0_93 = arith.constant 0 : index
    %c0_94 = arith.constant 0 : index
    %116 = vector.load %arg14[%c1_91, %c13_92, %c0_93, %c0_94] : memref<2x20x5x128xbf16, #tpu.memory_space<vmem>>, vector<1x1x4x128xbf16>
    %117 = vector.shape_cast %116 : vector<1x1x4x128xbf16> to vector<4x128xbf16>
    %118 = vector.shape_cast %115 : vector<4x128xbf16> to vector<1x1x4x128xbf16>
    tpu.vector_store %arg14[%c1_91, %c13_92, %c0_93, %c0_94], %118 {strides = array<i32>} : memref<2x20x5x128xbf16, #tpu.memory_space<vmem>>, vector<1x1x4x128xbf16>,
    %119 = vector.extract_strided_slice %28 {offsets = [88, 0], sizes = [4, 128], strides = [1, 1]} : vector<128x128xbf16> to vector<4x128xbf16>
    %c0_95 = arith.constant 0 : index
    %c14 = arith.constant 14 : index
    %c1_96 = arith.constant 1 : index
    %c0_97 = arith.constant 0 : index
    %120 = vector.load %arg14[%c0_95, %c14, %c1_96, %c0_97] : memref<2x20x5x128xbf16, #tpu.memory_space<vmem>>, vector<1x1x4x128xbf16>
    %121 = vector.shape_cast %120 : vector<1x1x4x128xbf16> to vector<4x128xbf16>
    %122 = vector.shape_cast %119 : vector<4x128xbf16> to vector<1x1x4x128xbf16>
    tpu.vector_store %arg14[%c0_95, %c14, %c1_96, %c0_97], %122 {strides = array<i32>} : memref<2x20x5x128xbf16, #tpu.memory_space<vmem>>, vector<1x1x4x128xbf16>,
    %123 = vector.extract_strided_slice %28 {offsets = [92, 0], sizes = [4, 128], strides = [1, 1]} : vector<128x128xbf16> to vector<4x128xbf16>
    %c1_98 = arith.constant 1 : index
    %c14_99 = arith.constant 14 : index
    %c0_100 = arith.constant 0 : index
    %c0_101 = arith.constant 0 : index
    %124 = vector.load %arg14[%c1_98, %c14_99, %c0_100, %c0_101] : memref<2x20x5x128xbf16, #tpu.memory_space<vmem>>, vector<1x1x4x128xbf16>
    %125 = vector.shape_cast %124 : vector<1x1x4x128xbf16> to vector<4x128xbf16>
    %126 = vector.shape_cast %123 : vector<4x128xbf16> to vector<1x1x4x128xbf16>
    tpu.vector_store %arg14[%c1_98, %c14_99, %c0_100, %c0_101], %126 {strides = array<i32>} : memref<2x20x5x128xbf16, #tpu.memory_space<vmem>>, vector<1x1x4x128xbf16>,
    %127 = vector.extract_strided_slice %28 {offsets = [96, 0], sizes = [4, 128], strides = [1, 1]} : vector<128x128xbf16> to vector<4x128xbf16>
    %c0_102 = arith.constant 0 : index
    %c15 = arith.constant 15 : index
    %c1_103 = arith.constant 1 : index
    %c0_104 = arith.constant 0 : index
    %128 = vector.load %arg14[%c0_102, %c15, %c1_103, %c0_104] : memref<2x20x5x128xbf16, #tpu.memory_space<vmem>>, vector<1x1x4x128xbf16>
    %129 = vector.shape_cast %128 : vector<1x1x4x128xbf16> to vector<4x128xbf16>
    %130 = vector.shape_cast %127 : vector<4x128xbf16> to vector<1x1x4x128xbf16>
    tpu.vector_store %arg14[%c0_102, %c15, %c1_103, %c0_104], %130 {strides = array<i32>} : memref<2x20x5x128xbf16, #tpu.memory_space<vmem>>, vector<1x1x4x128xbf16>,
    %131 = vector.extract_strided_slice %28 {offsets = [100, 0], sizes = [4, 128], strides = [1, 1]} : vector<128x128xbf16> to vector<4x128xbf16>
    %c1_105 = arith.constant 1 : index
    %c15_106 = arith.constant 15 : index
    %c0_107 = arith.constant 0 : index
    %c0_108 = arith.constant 0 : index
    %132 = vector.load %arg14[%c1_105, %c15_106, %c0_107, %c0_108] : memref<2x20x5x128xbf16, #tpu.memory_space<vmem>>, vector<1x1x4x128xbf16>
    %133 = vector.shape_cast %132 : vector<1x1x4x128xbf16> to vector<4x128xbf16>
    %134 = vector.shape_cast %131 : vector<4x128xbf16> to vector<1x1x4x128xbf16>
    tpu.vector_store %arg14[%c1_105, %c15_106, %c0_107, %c0_108], %134 {strides = array<i32>} : memref<2x20x5x128xbf16, #tpu.memory_space<vmem>>, vector<1x1x4x128xbf16>,
    %135 = vector.extract_strided_slice %28 {offsets = [104, 0], sizes = [4, 128], strides = [1, 1]} : vector<128x128xbf16> to vector<4x128xbf16>
    %c0_109 = arith.constant 0 : index
    %c16 = arith.constant 16 : index
    %c1_110 = arith.constant 1 : index
    %c0_111 = arith.constant 0 : index
    %136 = vector.load %arg14[%c0_109, %c16, %c1_110, %c0_111] : memref<2x20x5x128xbf16, #tpu.memory_space<vmem>>, vector<1x1x4x128xbf16>
    %137 = vector.shape_cast %136 : vector<1x1x4x128xbf16> to vector<4x128xbf16>
    %138 = vector.shape_cast %135 : vector<4x128xbf16> to vector<1x1x4x128xbf16>
    tpu.vector_store %arg14[%c0_109, %c16, %c1_110, %c0_111], %138 {strides = array<i32>} : memref<2x20x5x128xbf16, #tpu.memory_space<vmem>>, vector<1x1x4x128xbf16>,
    %139 = vector.extract_strided_slice %28 {offsets = [108, 0], sizes = [4, 128], strides = [1, 1]} : vector<128x128xbf16> to vector<4x128xbf16>
    %c1_112 = arith.constant 1 : index
    %c16_113 = arith.constant 16 : index
    %c0_114 = arith.constant 0 : index
    %c0_115 = arith.constant 0 : index
    %140 = vector.load %arg14[%c1_112, %c16_113, %c0_114, %c0_115] : memref<2x20x5x128xbf16, #tpu.memory_space<vmem>>, vector<1x1x4x128xbf16>
    %141 = vector.shape_cast %140 : vector<1x1x4x128xbf16> to vector<4x128xbf16>
    %142 = vector.shape_cast %139 : vector<4x128xbf16> to vector<1x1x4x128xbf16>
    tpu.vector_store %arg14[%c1_112, %c16_113, %c0_114, %c0_115], %142 {strides = array<i32>} : memref<2x20x5x128xbf16, #tpu.memory_space<vmem>>, vector<1x1x4x128xbf16>,
    %143 = vector.extract_strided_slice %28 {offsets = [112, 0], sizes = [4, 128], strides = [1, 1]} : vector<128x128xbf16> to vector<4x128xbf16>
    %c0_116 = arith.constant 0 : index
    %c17 = arith.constant 17 : index
    %c1_117 = arith.constant 1 : index
    %c0_118 = arith.constant 0 : index
    %144 = vector.load %arg14[%c0_116, %c17, %c1_117, %c0_118] : memref<2x20x5x128xbf16, #tpu.memory_space<vmem>>, vector<1x1x4x128xbf16>
    %145 = vector.shape_cast %144 : vector<1x1x4x128xbf16> to vector<4x128xbf16>
    %146 = vector.shape_cast %143 : vector<4x128xbf16> to vector<1x1x4x128xbf16>
    tpu.vector_store %arg14[%c0_116, %c17, %c1_117, %c0_118], %146 {strides = array<i32>} : memref<2x20x5x128xbf16, #tpu.memory_space<vmem>>, vector<1x1x4x128xbf16>,
    %147 = vector.extract_strided_slice %28 {offsets = [116, 0], sizes = [4, 128], strides = [1, 1]} : vector<128x128xbf16> to vector<4x128xbf16>
    %c1_119 = arith.constant 1 : index
    %c17_120 = arith.constant 17 : index
    %c0_121 = arith.constant 0 : index
    %c0_122 = arith.constant 0 : index
    %148 = vector.load %arg14[%c1_119, %c17_120, %c0_121, %c0_122] : memref<2x20x5x128xbf16, #tpu.memory_space<vmem>>, vector<1x1x4x128xbf16>
    %149 = vector.shape_cast %148 : vector<1x1x4x128xbf16> to vector<4x128xbf16>
    %150 = vector.shape_cast %147 : vector<4x128xbf16> to vector<1x1x4x128xbf16>
    tpu.vector_store %arg14[%c1_119, %c17_120, %c0_121, %c0_122], %150 {strides = array<i32>} : memref<2x20x5x128xbf16, #tpu.memory_space<vmem>>, vector<1x1x4x128xbf16>,
    %151 = vector.extract_strided_slice %28 {offsets = [120, 0], sizes = [4, 128], strides = [1, 1]} : vector<128x128xbf16> to vector<4x128xbf16>
    %c0_123 = arith.constant 0 : index
    %c18 = arith.constant 18 : index
    %c1_124 = arith.constant 1 : index
    %c0_125 = arith.constant 0 : index
    %152 = vector.load %arg14[%c0_123, %c18, %c1_124, %c0_125] : memref<2x20x5x128xbf16, #tpu.memory_space<vmem>>, vector<1x1x4x128xbf16>
    %153 = vector.shape_cast %152 : vector<1x1x4x128xbf16> to vector<4x128xbf16>
    %154 = vector.shape_cast %151 : vector<4x128xbf16> to vector<1x1x4x128xbf16>
    tpu.vector_store %arg14[%c0_123, %c18, %c1_124, %c0_125], %154 {strides = array<i32>} : memref<2x20x5x128xbf16, #tpu.memory_space<vmem>>, vector<1x1x4x128xbf16>,
    %155 = vector.extract_strided_slice %28 {offsets = [124, 0], sizes = [4, 128], strides = [1, 1]} : vector<128x128xbf16> to vector<4x128xbf16>
    %c1_126 = arith.constant 1 : index
    %c18_127 = arith.constant 18 : index
    %c0_128 = arith.constant 0 : index
    %c0_129 = arith.constant 0 : index
    %156 = vector.load %arg14[%c1_126, %c18_127, %c0_128, %c0_129] : memref<2x20x5x128xbf16, #tpu.memory_space<vmem>>, vector<1x1x4x128xbf16>
    %157 = vector.shape_cast %156 : vector<1x1x4x128xbf16> to vector<4x128xbf16>
    %158 = vector.shape_cast %155 : vector<4x128xbf16> to vector<1x1x4x128xbf16>
    tpu.vector_store %arg14[%c1_126, %c18_127, %c0_128, %c0_129], %158 {strides = array<i32>} : memref<2x20x5x128xbf16, #tpu.memory_space<vmem>>, vector<1x1x4x128xbf16>,
    %c0_130 = arith.constant 0 : index
    %c0_131 = arith.constant 0 : index
    %c0_132 = arith.constant 0 : index
    %c0_133 = arith.constant 0 : index
    %159 = vector.load %arg14[%c0_130, %c0_131, %c0_132, %c0_133] : memref<2x20x5x128xbf16, #tpu.memory_space<vmem>>, vector<1x1x4x128xbf16>
    %160 = vector.shape_cast %159 : vector<1x1x4x128xbf16> to vector<4x128xbf16>
    %c0_134 = arith.constant 0 : index
    %c0_135 = arith.constant 0 : index
    %161 = vector.load %arg15[%c0_134, %c0_135] : memref<32x1536xbf16, #tpu.memory_space<vmem>>, vector<4x128xbf16>
    tpu.vector_store %arg15[%c0_134, %c0_135], %160 {strides = array<i32>} : memref<32x1536xbf16, #tpu.memory_space<vmem>>, vector<4x128xbf16>,
    %c0_136 = arith.constant 0 : index
    %c2_137 = arith.constant 2 : index
    %c0_138 = arith.constant 0 : index
    %c0_139 = arith.constant 0 : index
    %162 = vector.load %arg14[%c0_136, %c2_137, %c0_138, %c0_139] : memref<2x20x5x128xbf16, #tpu.memory_space<vmem>>, vector<1x1x4x128xbf16>
    %163 = vector.shape_cast %162 : vector<1x1x4x128xbf16> to vector<4x128xbf16>
    %c4_140 = arith.constant 4 : index
    %c0_141 = arith.constant 0 : index
    %164 = vector.load %arg15[%c4_140, %c0_141] : memref<32x1536xbf16, #tpu.memory_space<vmem>>, vector<4x128xbf16>
    tpu.vector_store %arg15[%c4_140, %c0_141], %163 {strides = array<i32>} : memref<32x1536xbf16, #tpu.memory_space<vmem>>, vector<4x128xbf16>,
    %c0_142 = arith.constant 0 : index
    %c4_143 = arith.constant 4 : index
    %c0_144 = arith.constant 0 : index
    %c0_145 = arith.constant 0 : index
    %165 = vector.load %arg14[%c0_142, %c4_143, %c0_144, %c0_145] : memref<2x20x5x128xbf16, #tpu.memory_space<vmem>>, vector<1x1x4x128xbf16>
    %166 = vector.shape_cast %165 : vector<1x1x4x128xbf16> to vector<4x128xbf16>
    %c8_146 = arith.constant 8 : index
    %c0_147 = arith.constant 0 : index
    %167 = vector.load %arg15[%c8_146, %c0_147] : memref<32x1536xbf16, #tpu.memory_space<vmem>>, vector<4x128xbf16>
    tpu.vector_store %arg15[%c8_146, %c0_147], %166 {strides = array<i32>} : memref<32x1536xbf16, #tpu.memory_space<vmem>>, vector<4x128xbf16>,
    %c0_148 = arith.constant 0 : index
    %c6_149 = arith.constant 6 : index
    %c0_150 = arith.constant 0 : index
    %c0_151 = arith.constant 0 : index
    %168 = vector.load %arg14[%c0_148, %c6_149, %c0_150, %c0_151] : memref<2x20x5x128xbf16, #tpu.memory_space<vmem>>, vector<1x1x4x128xbf16>
    %169 = vector.shape_cast %168 : vector<1x1x4x128xbf16> to vector<4x128xbf16>
    %c12_152 = arith.constant 12 : index
    %c0_153 = arith.constant 0 : index
    %170 = vector.load %arg15[%c12_152, %c0_153] : memref<32x1536xbf16, #tpu.memory_space<vmem>>, vector<4x128xbf16>
    tpu.vector_store %arg15[%c12_152, %c0_153], %169 {strides = array<i32>} : memref<32x1536xbf16, #tpu.memory_space<vmem>>, vector<4x128xbf16>,
    %c0_154 = arith.constant 0 : index
    %c10 = arith.constant 10 : index
    %c0_155 = arith.constant 0 : index
    %c0_156 = arith.constant 0 : index
    %171 = vector.load %arg14[%c0_154, %c10, %c0_155, %c0_156] : memref<2x20x5x128xbf16, #tpu.memory_space<vmem>>, vector<1x1x4x128xbf16>
    %172 = vector.shape_cast %171 : vector<1x1x4x128xbf16> to vector<4x128xbf16>
    %c16_157 = arith.constant 16 : index
    %c0_158 = arith.constant 0 : index
    %173 = vector.load %arg15[%c16_157, %c0_158] : memref<32x1536xbf16, #tpu.memory_space<vmem>>, vector<4x128xbf16>
    tpu.vector_store %arg15[%c16_157, %c0_158], %172 {strides = array<i32>} : memref<32x1536xbf16, #tpu.memory_space<vmem>>, vector<4x128xbf16>,
    %c0_159 = arith.constant 0 : index
    %c12_160 = arith.constant 12 : index
    %c0_161 = arith.constant 0 : index
    %c0_162 = arith.constant 0 : index
    %174 = vector.load %arg14[%c0_159, %c12_160, %c0_161, %c0_162] : memref<2x20x5x128xbf16, #tpu.memory_space<vmem>>, vector<1x1x4x128xbf16>
    %175 = vector.shape_cast %174 : vector<1x1x4x128xbf16> to vector<4x128xbf16>
    %c20 = arith.constant 20 : index
    %c0_163 = arith.constant 0 : index
    %176 = vector.load %arg15[%c20, %c0_163] : memref<32x1536xbf16, #tpu.memory_space<vmem>>, vector<4x128xbf16>
    tpu.vector_store %arg15[%c20, %c0_163], %175 {strides = array<i32>} : memref<32x1536xbf16, #tpu.memory_space<vmem>>, vector<4x128xbf16>,
    %c0_164 = arith.constant 0 : index
    %c14_165 = arith.constant 14 : index
    %c0_166 = arith.constant 0 : index
    %c0_167 = arith.constant 0 : index
    %177 = vector.load %arg14[%c0_164, %c14_165, %c0_166, %c0_167] : memref<2x20x5x128xbf16, #tpu.memory_space<vmem>>, vector<1x1x4x128xbf16>
    %178 = vector.shape_cast %177 : vector<1x1x4x128xbf16> to vector<4x128xbf16>
    %c24 = arith.constant 24 : index
    %c0_168 = arith.constant 0 : index
    %179 = vector.load %arg15[%c24, %c0_168] : memref<32x1536xbf16, #tpu.memory_space<vmem>>, vector<4x128xbf16>
    tpu.vector_store %arg15[%c24, %c0_168], %178 {strides = array<i32>} : memref<32x1536xbf16, #tpu.memory_space<vmem>>, vector<4x128xbf16>,
    %c0_169 = arith.constant 0 : index
    %c16_170 = arith.constant 16 : index
    %c0_171 = arith.constant 0 : index
    %c0_172 = arith.constant 0 : index
    %180 = vector.load %arg14[%c0_169, %c16_170, %c0_171, %c0_172] : memref<2x20x5x128xbf16, #tpu.memory_space<vmem>>, vector<1x1x4x128xbf16>
    %181 = vector.shape_cast %180 : vector<1x1x4x128xbf16> to vector<4x128xbf16>
    %c28 = arith.constant 28 : index
    %c0_173 = arith.constant 0 : index
    %182 = vector.load %arg15[%c28, %c0_173] : memref<32x1536xbf16, #tpu.memory_space<vmem>>, vector<4x128xbf16>
    tpu.vector_store %arg15[%c28, %c0_173], %181 {strides = array<i32>} : memref<32x1536xbf16, #tpu.memory_space<vmem>>, vector<4x128xbf16>,
    %c1_174 = arith.constant 1 : index
    %c0_175 = arith.constant 0 : index
    %c0_176 = arith.constant 0 : index
    %c0_177 = arith.constant 0 : index
    %183 = vector.load %arg14[%c1_174, %c0_175, %c0_176, %c0_177] : memref<2x20x5x128xbf16, #tpu.memory_space<vmem>>, vector<1x1x4x128xbf16>
    %184 = vector.shape_cast %183 : vector<1x1x4x128xbf16> to vector<4x128xbf16>
    %c0_178 = arith.constant 0 : index
    %c128 = arith.constant 128 : index
    %185 = vector.load %arg15[%c0_178, %c128] : memref<32x1536xbf16, #tpu.memory_space<vmem>>, vector<4x128xbf16>
    tpu.vector_store %arg15[%c0_178, %c128], %184 {strides = array<i32>} : memref<32x1536xbf16, #tpu.memory_space<vmem>>, vector<4x128xbf16>,
    %c1_179 = arith.constant 1 : index
    %c2_180 = arith.constant 2 : index
    %c0_181 = arith.constant 0 : index
    %c0_182 = arith.constant 0 : index
    %186 = vector.load %arg14[%c1_179, %c2_180, %c0_181, %c0_182] : memref<2x20x5x128xbf16, #tpu.memory_space<vmem>>, vector<1x1x4x128xbf16>
    %187 = vector.shape_cast %186 : vector<1x1x4x128xbf16> to vector<4x128xbf16>
    %c4_183 = arith.constant 4 : index
    %c128_184 = arith.constant 128 : index
    %188 = vector.load %arg15[%c4_183, %c128_184] : memref<32x1536xbf16, #tpu.memory_space<vmem>>, vector<4x128xbf16>
    tpu.vector_store %arg15[%c4_183, %c128_184], %187 {strides = array<i32>} : memref<32x1536xbf16, #tpu.memory_space<vmem>>, vector<4x128xbf16>,
    %c1_185 = arith.constant 1 : index
    %c4_186 = arith.constant 4 : index
    %c0_187 = arith.constant 0 : index
    %c0_188 = arith.constant 0 : index
    %189 = vector.load %arg14[%c1_185, %c4_186, %c0_187, %c0_188] : memref<2x20x5x128xbf16, #tpu.memory_space<vmem>>, vector<1x1x4x128xbf16>
    %190 = vector.shape_cast %189 : vector<1x1x4x128xbf16> to vector<4x128xbf16>
    %c8_189 = arith.constant 8 : index
    %c128_190 = arith.constant 128 : index
    %191 = vector.load %arg15[%c8_189, %c128_190] : memref<32x1536xbf16, #tpu.memory_space<vmem>>, vector<4x128xbf16>
    tpu.vector_store %arg15[%c8_189, %c128_190], %190 {strides = array<i32>} : memref<32x1536xbf16, #tpu.memory_space<vmem>>, vector<4x128xbf16>,
    %c1_191 = arith.constant 1 : index
    %c6_192 = arith.constant 6 : index
    %c0_193 = arith.constant 0 : index
    %c0_194 = arith.constant 0 : index
    %192 = vector.load %arg14[%c1_191, %c6_192, %c0_193, %c0_194] : memref<2x20x5x128xbf16, #tpu.memory_space<vmem>>, vector<1x1x4x128xbf16>
    %193 = vector.shape_cast %192 : vector<1x1x4x128xbf16> to vector<4x128xbf16>
    %c12_195 = arith.constant 12 : index
    %c128_196 = arith.constant 128 : index
    %194 = vector.load %arg15[%c12_195, %c128_196] : memref<32x1536xbf16, #tpu.memory_space<vmem>>, vector<4x128xbf16>
    tpu.vector_store %arg15[%c12_195, %c128_196], %193 {strides = array<i32>} : memref<32x1536xbf16, #tpu.memory_space<vmem>>, vector<4x128xbf16>,
    %c1_197 = arith.constant 1 : index
    %c10_198 = arith.constant 10 : index
    %c0_199 = arith.constant 0 : index
    %c0_200 = arith.constant 0 : index
    %195 = vector.load %arg14[%c1_197, %c10_198, %c0_199, %c0_200] : memref<2x20x5x128xbf16, #tpu.memory_space<vmem>>, vector<1x1x4x128xbf16>
    %196 = vector.shape_cast %195 : vector<1x1x4x128xbf16> to vector<4x128xbf16>
    %c16_201 = arith.constant 16 : index
    %c128_202 = arith.constant 128 : index
    %197 = vector.load %arg15[%c16_201, %c128_202] : memref<32x1536xbf16, #tpu.memory_space<vmem>>, vector<4x128xbf16>
    tpu.vector_store %arg15[%c16_201, %c128_202], %196 {strides = array<i32>} : memref<32x1536xbf16, #tpu.memory_space<vmem>>, vector<4x128xbf16>,
    %c1_203 = arith.constant 1 : index
    %c12_204 = arith.constant 12 : index
    %c0_205 = arith.constant 0 : index
    %c0_206 = arith.constant 0 : index
    %198 = vector.load %arg14[%c1_203, %c12_204, %c0_205, %c0_206] : memref<2x20x5x128xbf16, #tpu.memory_space<vmem>>, vector<1x1x4x128xbf16>
    %199 = vector.shape_cast %198 : vector<1x1x4x128xbf16> to vector<4x128xbf16>
    %c20_207 = arith.constant 20 : index
    %c128_208 = arith.constant 128 : index
    %200 = vector.load %arg15[%c20_207, %c128_208] : memref<32x1536xbf16, #tpu.memory_space<vmem>>, vector<4x128xbf16>
    tpu.vector_store %arg15[%c20_207, %c128_208], %199 {strides = array<i32>} : memref<32x1536xbf16, #tpu.memory_space<vmem>>, vector<4x128xbf16>,
    %c1_209 = arith.constant 1 : index
    %c14_210 = arith.constant 14 : index
    %c0_211 = arith.constant 0 : index
    %c0_212 = arith.constant 0 : index
    %201 = vector.load %arg14[%c1_209, %c14_210, %c0_211, %c0_212] : memref<2x20x5x128xbf16, #tpu.memory_space<vmem>>, vector<1x1x4x128xbf16>
    %202 = vector.shape_cast %201 : vector<1x1x4x128xbf16> to vector<4x128xbf16>
    %c24_213 = arith.constant 24 : index
    %c128_214 = arith.constant 128 : index
    %203 = vector.load %arg15[%c24_213, %c128_214] : memref<32x1536xbf16, #tpu.memory_space<vmem>>, vector<4x128xbf16>
    tpu.vector_store %arg15[%c24_213, %c128_214], %202 {strides = array<i32>} : memref<32x1536xbf16, #tpu.memory_space<vmem>>, vector<4x128xbf16>,
    %c1_215 = arith.constant 1 : index
    %c16_216 = arith.constant 16 : index
    %c0_217 = arith.constant 0 : index
    %c0_218 = arith.constant 0 : index
    %204 = vector.load %arg14[%c1_215, %c16_216, %c0_217, %c0_218] : memref<2x20x5x128xbf16, #tpu.memory_space<vmem>>, vector<1x1x4x128xbf16>
    %205 = vector.shape_cast %204 : vector<1x1x4x128xbf16> to vector<4x128xbf16>
    %c28_219 = arith.constant 28 : index
    %c128_220 = arith.constant 128 : index
    %206 = vector.load %arg15[%c28_219, %c128_220] : memref<32x1536xbf16, #tpu.memory_space<vmem>>, vector<4x128xbf16>
    tpu.vector_store %arg15[%c28_219, %c128_220], %205 {strides = array<i32>} : memref<32x1536xbf16, #tpu.memory_space<vmem>>, vector<4x128xbf16>,
    %c0_221 = arith.constant 0 : index
    %c0_222 = arith.constant 0 : index
    %c1_223 = arith.constant 1 : index
    %c0_224 = arith.constant 0 : index
    %207 = vector.load %arg14[%c0_221, %c0_222, %c1_223, %c0_224] : memref<2x20x5x128xbf16, #tpu.memory_space<vmem>>, vector<1x1x4x128xbf16>
    %208 = vector.shape_cast %207 : vector<1x1x4x128xbf16> to vector<4x128xbf16>
    %c0_225 = arith.constant 0 : index
    %c256 = arith.constant 256 : index
    %209 = vector.load %arg15[%c0_225, %c256] : memref<32x1536xbf16, #tpu.memory_space<vmem>>, vector<4x128xbf16>
    tpu.vector_store %arg15[%c0_225, %c256], %208 {strides = array<i32>} : memref<32x1536xbf16, #tpu.memory_space<vmem>>, vector<4x128xbf16>,
    %c0_226 = arith.constant 0 : index
    %c2_227 = arith.constant 2 : index
    %c1_228 = arith.constant 1 : index
    %c0_229 = arith.constant 0 : index
    %210 = vector.load %arg14[%c0_226, %c2_227, %c1_228, %c0_229] : memref<2x20x5x128xbf16, #tpu.memory_space<vmem>>, vector<1x1x4x128xbf16>
    %211 = vector.shape_cast %210 : vector<1x1x4x128xbf16> to vector<4x128xbf16>
    %c4_230 = arith.constant 4 : index
    %c256_231 = arith.constant 256 : index
    %212 = vector.load %arg15[%c4_230, %c256_231] : memref<32x1536xbf16, #tpu.memory_space<vmem>>, vector<4x128xbf16>
    tpu.vector_store %arg15[%c4_230, %c256_231], %211 {strides = array<i32>} : memref<32x1536xbf16, #tpu.memory_space<vmem>>, vector<4x128xbf16>,
    %c0_232 = arith.constant 0 : index
    %c4_233 = arith.constant 4 : index
    %c1_234 = arith.constant 1 : index
    %c0_235 = arith.constant 0 : index
    %213 = vector.load %arg14[%c0_232, %c4_233, %c1_234, %c0_235] : memref<2x20x5x128xbf16, #tpu.memory_space<vmem>>, vector<1x1x4x128xbf16>
    %214 = vector.shape_cast %213 : vector<1x1x4x128xbf16> to vector<4x128xbf16>
    %c8_236 = arith.constant 8 : index
    %c256_237 = arith.constant 256 : index
    %215 = vector.load %arg15[%c8_236, %c256_237] : memref<32x1536xbf16, #tpu.memory_space<vmem>>, vector<4x128xbf16>
    tpu.vector_store %arg15[%c8_236, %c256_237], %214 {strides = array<i32>} : memref<32x1536xbf16, #tpu.memory_space<vmem>>, vector<4x128xbf16>,
    %c0_238 = arith.constant 0 : index
    %c6_239 = arith.constant 6 : index
    %c1_240 = arith.constant 1 : index
    %c0_241 = arith.constant 0 : index
    %216 = vector.load %arg14[%c0_238, %c6_239, %c1_240, %c0_241] : memref<2x20x5x128xbf16, #tpu.memory_space<vmem>>, vector<1x1x4x128xbf16>
    %217 = vector.shape_cast %216 : vector<1x1x4x128xbf16> to vector<4x128xbf16>
    %c12_242 = arith.constant 12 : index
    %c256_243 = arith.constant 256 : index
    %218 = vector.load %arg15[%c12_242, %c256_243] : memref<32x1536xbf16, #tpu.memory_space<vmem>>, vector<4x128xbf16>
    tpu.vector_store %arg15[%c12_242, %c256_243], %217 {strides = array<i32>} : memref<32x1536xbf16, #tpu.memory_space<vmem>>, vector<4x128xbf16>,
    %c0_244 = arith.constant 0 : index
    %c10_245 = arith.constant 10 : index
    %c1_246 = arith.constant 1 : index
    %c0_247 = arith.constant 0 : index
    %219 = vector.load %arg14[%c0_244, %c10_245, %c1_246, %c0_247] : memref<2x20x5x128xbf16, #tpu.memory_space<vmem>>, vector<1x1x4x128xbf16>
    %220 = vector.shape_cast %219 : vector<1x1x4x128xbf16> to vector<4x128xbf16>
    %c16_248 = arith.constant 16 : index
    %c256_249 = arith.constant 256 : index
    %221 = vector.load %arg15[%c16_248, %c256_249] : memref<32x1536xbf16, #tpu.memory_space<vmem>>, vector<4x128xbf16>
    tpu.vector_store %arg15[%c16_248, %c256_249], %220 {strides = array<i32>} : memref<32x1536xbf16, #tpu.memory_space<vmem>>, vector<4x128xbf16>,
    %c0_250 = arith.constant 0 : index
    %c12_251 = arith.constant 12 : index
    %c1_252 = arith.constant 1 : index
    %c0_253 = arith.constant 0 : index
    %222 = vector.load %arg14[%c0_250, %c12_251, %c1_252, %c0_253] : memref<2x20x5x128xbf16, #tpu.memory_space<vmem>>, vector<1x1x4x128xbf16>
    %223 = vector.shape_cast %222 : vector<1x1x4x128xbf16> to vector<4x128xbf16>
    %c20_254 = arith.constant 20 : index
    %c256_255 = arith.constant 256 : index
    %224 = vector.load %arg15[%c20_254, %c256_255] : memref<32x1536xbf16, #tpu.memory_space<vmem>>, vector<4x128xbf16>
    tpu.vector_store %arg15[%c20_254, %c256_255], %223 {strides = array<i32>} : memref<32x1536xbf16, #tpu.memory_space<vmem>>, vector<4x128xbf16>,
    %c0_256 = arith.constant 0 : index
    %c14_257 = arith.constant 14 : index
    %c1_258 = arith.constant 1 : index
    %c0_259 = arith.constant 0 : index
    %225 = vector.load %arg14[%c0_256, %c14_257, %c1_258, %c0_259] : memref<2x20x5x128xbf16, #tpu.memory_space<vmem>>, vector<1x1x4x128xbf16>
    %226 = vector.shape_cast %225 : vector<1x1x4x128xbf16> to vector<4x128xbf16>
    %c24_260 = arith.constant 24 : index
    %c256_261 = arith.constant 256 : index
    %227 = vector.load %arg15[%c24_260, %c256_261] : memref<32x1536xbf16, #tpu.memory_space<vmem>>, vector<4x128xbf16>
    tpu.vector_store %arg15[%c24_260, %c256_261], %226 {strides = array<i32>} : memref<32x1536xbf16, #tpu.memory_space<vmem>>, vector<4x128xbf16>,
    %c0_262 = arith.constant 0 : index
    %c16_263 = arith.constant 16 : index
    %c1_264 = arith.constant 1 : index
    %c0_265 = arith.constant 0 : index
    %228 = vector.load %arg14[%c0_262, %c16_263, %c1_264, %c0_265] : memref<2x20x5x128xbf16, #tpu.memory_space<vmem>>, vector<1x1x4x128xbf16>
    %229 = vector.shape_cast %228 : vector<1x1x4x128xbf16> to vector<4x128xbf16>
    %c28_266 = arith.constant 28 : index
    %c256_267 = arith.constant 256 : index
    %230 = vector.load %arg15[%c28_266, %c256_267] : memref<32x1536xbf16, #tpu.memory_space<vmem>>, vector<4x128xbf16>
    tpu.vector_store %arg15[%c28_266, %c256_267], %229 {strides = array<i32>} : memref<32x1536xbf16, #tpu.memory_space<vmem>>, vector<4x128xbf16>,
    %c0_268 = arith.constant 0 : index
    %c1_269 = arith.constant 1 : index
    %c0_270 = arith.constant 0 : index
    %c0_271 = arith.constant 0 : index
    %231 = vector.load %arg14[%c0_268, %c1_269, %c0_270, %c0_271] : memref<2x20x5x128xbf16, #tpu.memory_space<vmem>>, vector<1x1x4x128xbf16>
    %232 = vector.shape_cast %231 : vector<1x1x4x128xbf16> to vector<4x128xbf16>
    %c0_272 = arith.constant 0 : index
    %c384 = arith.constant 384 : index
    %233 = vector.load %arg15[%c0_272, %c384] : memref<32x1536xbf16, #tpu.memory_space<vmem>>, vector<4x128xbf16>
    tpu.vector_store %arg15[%c0_272, %c384], %232 {strides = array<i32>} : memref<32x1536xbf16, #tpu.memory_space<vmem>>, vector<4x128xbf16>,
    %c0_273 = arith.constant 0 : index
    %c3_274 = arith.constant 3 : index
    %c0_275 = arith.constant 0 : index
    %c0_276 = arith.constant 0 : index
    %234 = vector.load %arg14[%c0_273, %c3_274, %c0_275, %c0_276] : memref<2x20x5x128xbf16, #tpu.memory_space<vmem>>, vector<1x1x4x128xbf16>
    %235 = vector.shape_cast %234 : vector<1x1x4x128xbf16> to vector<4x128xbf16>
    %c4_277 = arith.constant 4 : index
    %c384_278 = arith.constant 384 : index
    %236 = vector.load %arg15[%c4_277, %c384_278] : memref<32x1536xbf16, #tpu.memory_space<vmem>>, vector<4x128xbf16>
    tpu.vector_store %arg15[%c4_277, %c384_278], %235 {strides = array<i32>} : memref<32x1536xbf16, #tpu.memory_space<vmem>>, vector<4x128xbf16>,
    %c0_279 = arith.constant 0 : index
    %c5_280 = arith.constant 5 : index
    %c0_281 = arith.constant 0 : index
    %c0_282 = arith.constant 0 : index
    %237 = vector.load %arg14[%c0_279, %c5_280, %c0_281, %c0_282] : memref<2x20x5x128xbf16, #tpu.memory_space<vmem>>, vector<1x1x4x128xbf16>
    %238 = vector.shape_cast %237 : vector<1x1x4x128xbf16> to vector<4x128xbf16>
    %c8_283 = arith.constant 8 : index
    %c384_284 = arith.constant 384 : index
    %239 = vector.load %arg15[%c8_283, %c384_284] : memref<32x1536xbf16, #tpu.memory_space<vmem>>, vector<4x128xbf16>
    tpu.vector_store %arg15[%c8_283, %c384_284], %238 {strides = array<i32>} : memref<32x1536xbf16, #tpu.memory_space<vmem>>, vector<4x128xbf16>,
    %c0_285 = arith.constant 0 : index
    %c7_286 = arith.constant 7 : index
    %c0_287 = arith.constant 0 : index
    %c0_288 = arith.constant 0 : index
    %240 = vector.load %arg14[%c0_285, %c7_286, %c0_287, %c0_288] : memref<2x20x5x128xbf16, #tpu.memory_space<vmem>>, vector<1x1x4x128xbf16>
    %241 = vector.shape_cast %240 : vector<1x1x4x128xbf16> to vector<4x128xbf16>
    %c12_289 = arith.constant 12 : index
    %c384_290 = arith.constant 384 : index
    %242 = vector.load %arg15[%c12_289, %c384_290] : memref<32x1536xbf16, #tpu.memory_space<vmem>>, vector<4x128xbf16>
    tpu.vector_store %arg15[%c12_289, %c384_290], %241 {strides = array<i32>} : memref<32x1536xbf16, #tpu.memory_space<vmem>>, vector<4x128xbf16>,
    %c0_291 = arith.constant 0 : index
    %c11_292 = arith.constant 11 : index
    %c0_293 = arith.constant 0 : index
    %c0_294 = arith.constant 0 : index
    %243 = vector.load %arg14[%c0_291, %c11_292, %c0_293, %c0_294] : memref<2x20x5x128xbf16, #tpu.memory_space<vmem>>, vector<1x1x4x128xbf16>
    %244 = vector.shape_cast %243 : vector<1x1x4x128xbf16> to vector<4x128xbf16>
    %c16_295 = arith.constant 16 : index
    %c384_296 = arith.constant 384 : index
    %245 = vector.load %arg15[%c16_295, %c384_296] : memref<32x1536xbf16, #tpu.memory_space<vmem>>, vector<4x128xbf16>
    tpu.vector_store %arg15[%c16_295, %c384_296], %244 {strides = array<i32>} : memref<32x1536xbf16, #tpu.memory_space<vmem>>, vector<4x128xbf16>,
    %c0_297 = arith.constant 0 : index
    %c13_298 = arith.constant 13 : index
    %c0_299 = arith.constant 0 : index
    %c0_300 = arith.constant 0 : index
    %246 = vector.load %arg14[%c0_297, %c13_298, %c0_299, %c0_300] : memref<2x20x5x128xbf16, #tpu.memory_space<vmem>>, vector<1x1x4x128xbf16>
    %247 = vector.shape_cast %246 : vector<1x1x4x128xbf16> to vector<4x128xbf16>
    %c20_301 = arith.constant 20 : index
    %c384_302 = arith.constant 384 : index
    %248 = vector.load %arg15[%c20_301, %c384_302] : memref<32x1536xbf16, #tpu.memory_space<vmem>>, vector<4x128xbf16>
    tpu.vector_store %arg15[%c20_301, %c384_302], %247 {strides = array<i32>} : memref<32x1536xbf16, #tpu.memory_space<vmem>>, vector<4x128xbf16>,
    %c0_303 = arith.constant 0 : index
    %c15_304 = arith.constant 15 : index
    %c0_305 = arith.constant 0 : index
    %c0_306 = arith.constant 0 : index
    %249 = vector.load %arg14[%c0_303, %c15_304, %c0_305, %c0_306] : memref<2x20x5x128xbf16, #tpu.memory_space<vmem>>, vector<1x1x4x128xbf16>
    %250 = vector.shape_cast %249 : vector<1x1x4x128xbf16> to vector<4x128xbf16>
    %c24_307 = arith.constant 24 : index
    %c384_308 = arith.constant 384 : index
    %251 = vector.load %arg15[%c24_307, %c384_308] : memref<32x1536xbf16, #tpu.memory_space<vmem>>, vector<4x128xbf16>
    tpu.vector_store %arg15[%c24_307, %c384_308], %250 {strides = array<i32>} : memref<32x1536xbf16, #tpu.memory_space<vmem>>, vector<4x128xbf16>,
    %c0_309 = arith.constant 0 : index
    %c17_310 = arith.constant 17 : index
    %c0_311 = arith.constant 0 : index
    %c0_312 = arith.constant 0 : index
    %252 = vector.load %arg14[%c0_309, %c17_310, %c0_311, %c0_312] : memref<2x20x5x128xbf16, #tpu.memory_space<vmem>>, vector<1x1x4x128xbf16>
    %253 = vector.shape_cast %252 : vector<1x1x4x128xbf16> to vector<4x128xbf16>
    %c28_313 = arith.constant 28 : index
    %c384_314 = arith.constant 384 : index
    %254 = vector.load %arg15[%c28_313, %c384_314] : memref<32x1536xbf16, #tpu.memory_space<vmem>>, vector<4x128xbf16>
    tpu.vector_store %arg15[%c28_313, %c384_314], %253 {strides = array<i32>} : memref<32x1536xbf16, #tpu.memory_space<vmem>>, vector<4x128xbf16>,
    %c1_315 = arith.constant 1 : index
    %c1_316 = arith.constant 1 : index
    %c0_317 = arith.constant 0 : index
    %c0_318 = arith.constant 0 : index
    %255 = vector.load %arg14[%c1_315, %c1_316, %c0_317, %c0_318] : memref<2x20x5x128xbf16, #tpu.memory_space<vmem>>, vector<1x1x4x128xbf16>
    %256 = vector.shape_cast %255 : vector<1x1x4x128xbf16> to vector<4x128xbf16>
    %c0_319 = arith.constant 0 : index
    %c512 = arith.constant 512 : index
    %257 = vector.load %arg15[%c0_319, %c512] : memref<32x1536xbf16, #tpu.memory_space<vmem>>, vector<4x128xbf16>
    tpu.vector_store %arg15[%c0_319, %c512], %256 {strides = array<i32>} : memref<32x1536xbf16, #tpu.memory_space<vmem>>, vector<4x128xbf16>,
    %c1_320 = arith.constant 1 : index
    %c3_321 = arith.constant 3 : index
    %c0_322 = arith.constant 0 : index
    %c0_323 = arith.constant 0 : index
    %258 = vector.load %arg14[%c1_320, %c3_321, %c0_322, %c0_323] : memref<2x20x5x128xbf16, #tpu.memory_space<vmem>>, vector<1x1x4x128xbf16>
    %259 = vector.shape_cast %258 : vector<1x1x4x128xbf16> to vector<4x128xbf16>
    %c4_324 = arith.constant 4 : index
    %c512_325 = arith.constant 512 : index
    %260 = vector.load %arg15[%c4_324, %c512_325] : memref<32x1536xbf16, #tpu.memory_space<vmem>>, vector<4x128xbf16>
    tpu.vector_store %arg15[%c4_324, %c512_325], %259 {strides = array<i32>} : memref<32x1536xbf16, #tpu.memory_space<vmem>>, vector<4x128xbf16>,
    %c1_326 = arith.constant 1 : index
    %c5_327 = arith.constant 5 : index
    %c0_328 = arith.constant 0 : index
    %c0_329 = arith.constant 0 : index
    %261 = vector.load %arg14[%c1_326, %c5_327, %c0_328, %c0_329] : memref<2x20x5x128xbf16, #tpu.memory_space<vmem>>, vector<1x1x4x128xbf16>
    %262 = vector.shape_cast %261 : vector<1x1x4x128xbf16> to vector<4x128xbf16>
    %c8_330 = arith.constant 8 : index
    %c512_331 = arith.constant 512 : index
    %263 = vector.load %arg15[%c8_330, %c512_331] : memref<32x1536xbf16, #tpu.memory_space<vmem>>, vector<4x128xbf16>
    tpu.vector_store %arg15[%c8_330, %c512_331], %262 {strides = array<i32>} : memref<32x1536xbf16, #tpu.memory_space<vmem>>, vector<4x128xbf16>,
    %c1_332 = arith.constant 1 : index
    %c7_333 = arith.constant 7 : index
    %c0_334 = arith.constant 0 : index
    %c0_335 = arith.constant 0 : index
    %264 = vector.load %arg14[%c1_332, %c7_333, %c0_334, %c0_335] : memref<2x20x5x128xbf16, #tpu.memory_space<vmem>>, vector<1x1x4x128xbf16>
    %265 = vector.shape_cast %264 : vector<1x1x4x128xbf16> to vector<4x128xbf16>
    %c12_336 = arith.constant 12 : index
    %c512_337 = arith.constant 512 : index
    %266 = vector.load %arg15[%c12_336, %c512_337] : memref<32x1536xbf16, #tpu.memory_space<vmem>>, vector<4x128xbf16>
    tpu.vector_store %arg15[%c12_336, %c512_337], %265 {strides = array<i32>} : memref<32x1536xbf16, #tpu.memory_space<vmem>>, vector<4x128xbf16>,
    %c1_338 = arith.constant 1 : index
    %c11_339 = arith.constant 11 : index
    %c0_340 = arith.constant 0 : index
    %c0_341 = arith.constant 0 : index
    %267 = vector.load %arg14[%c1_338, %c11_339, %c0_340, %c0_341] : memref<2x20x5x128xbf16, #tpu.memory_space<vmem>>, vector<1x1x4x128xbf16>
    %268 = vector.shape_cast %267 : vector<1x1x4x128xbf16> to vector<4x128xbf16>
    %c16_342 = arith.constant 16 : index
    %c512_343 = arith.constant 512 : index
    %269 = vector.load %arg15[%c16_342, %c512_343] : memref<32x1536xbf16, #tpu.memory_space<vmem>>, vector<4x128xbf16>
    tpu.vector_store %arg15[%c16_342, %c512_343], %268 {strides = array<i32>} : memref<32x1536xbf16, #tpu.memory_space<vmem>>, vector<4x128xbf16>,
    %c1_344 = arith.constant 1 : index
    %c13_345 = arith.constant 13 : index
    %c0_346 = arith.constant 0 : index
    %c0_347 = arith.constant 0 : index
    %270 = vector.load %arg14[%c1_344, %c13_345, %c0_346, %c0_347] : memref<2x20x5x128xbf16, #tpu.memory_space<vmem>>, vector<1x1x4x128xbf16>
    %271 = vector.shape_cast %270 : vector<1x1x4x128xbf16> to vector<4x128xbf16>
    %c20_348 = arith.constant 20 : index
    %c512_349 = arith.constant 512 : index
    %272 = vector.load %arg15[%c20_348, %c512_349] : memref<32x1536xbf16, #tpu.memory_space<vmem>>, vector<4x128xbf16>
    tpu.vector_store %arg15[%c20_348, %c512_349], %271 {strides = array<i32>} : memref<32x1536xbf16, #tpu.memory_space<vmem>>, vector<4x128xbf16>,
    %c1_350 = arith.constant 1 : index
    %c15_351 = arith.constant 15 : index
    %c0_352 = arith.constant 0 : index
    %c0_353 = arith.constant 0 : index
    %273 = vector.load %arg14[%c1_350, %c15_351, %c0_352, %c0_353] : memref<2x20x5x128xbf16, #tpu.memory_space<vmem>>, vector<1x1x4x128xbf16>
    %274 = vector.shape_cast %273 : vector<1x1x4x128xbf16> to vector<4x128xbf16>
    %c24_354 = arith.constant 24 : index
    %c512_355 = arith.constant 512 : index
    %275 = vector.load %arg15[%c24_354, %c512_355] : memref<32x1536xbf16, #tpu.memory_space<vmem>>, vector<4x128xbf16>
    tpu.vector_store %arg15[%c24_354, %c512_355], %274 {strides = array<i32>} : memref<32x1536xbf16, #tpu.memory_space<vmem>>, vector<4x128xbf16>,
    %c1_356 = arith.constant 1 : index
    %c17_357 = arith.constant 17 : index
    %c0_358 = arith.constant 0 : index
    %c0_359 = arith.constant 0 : index
    %276 = vector.load %arg14[%c1_356, %c17_357, %c0_358, %c0_359] : memref<2x20x5x128xbf16, #tpu.memory_space<vmem>>, vector<1x1x4x128xbf16>
    %277 = vector.shape_cast %276 : vector<1x1x4x128xbf16> to vector<4x128xbf16>
    %c28_360 = arith.constant 28 : index
    %c512_361 = arith.constant 512 : index
    %278 = vector.load %arg15[%c28_360, %c512_361] : memref<32x1536xbf16, #tpu.memory_space<vmem>>, vector<4x128xbf16>
    tpu.vector_store %arg15[%c28_360, %c512_361], %277 {strides = array<i32>} : memref<32x1536xbf16, #tpu.memory_space<vmem>>, vector<4x128xbf16>,
    %c0_362 = arith.constant 0 : index
    %c1_363 = arith.constant 1 : index
    %c1_364 = arith.constant 1 : index
    %c0_365 = arith.constant 0 : index
    %279 = vector.load %arg14[%c0_362, %c1_363, %c1_364, %c0_365] : memref<2x20x5x128xbf16, #tpu.memory_space<vmem>>, vector<1x1x4x128xbf16>
    %280 = vector.shape_cast %279 : vector<1x1x4x128xbf16> to vector<4x128xbf16>
    %c0_366 = arith.constant 0 : index
    %c640 = arith.constant 640 : index
    %281 = vector.load %arg15[%c0_366, %c640] : memref<32x1536xbf16, #tpu.memory_space<vmem>>, vector<4x128xbf16>
    tpu.vector_store %arg15[%c0_366, %c640], %280 {strides = array<i32>} : memref<32x1536xbf16, #tpu.memory_space<vmem>>, vector<4x128xbf16>,
    %c0_367 = arith.constant 0 : index
    %c3_368 = arith.constant 3 : index
    %c1_369 = arith.constant 1 : index
    %c0_370 = arith.constant 0 : index
    %282 = vector.load %arg14[%c0_367, %c3_368, %c1_369, %c0_370] : memref<2x20x5x128xbf16, #tpu.memory_space<vmem>>, vector<1x1x4x128xbf16>
    %283 = vector.shape_cast %282 : vector<1x1x4x128xbf16> to vector<4x128xbf16>
    %c4_371 = arith.constant 4 : index
    %c640_372 = arith.constant 640 : index
    %284 = vector.load %arg15[%c4_371, %c640_372] : memref<32x1536xbf16, #tpu.memory_space<vmem>>, vector<4x128xbf16>
    tpu.vector_store %arg15[%c4_371, %c640_372], %283 {strides = array<i32>} : memref<32x1536xbf16, #tpu.memory_space<vmem>>, vector<4x128xbf16>,
    %c0_373 = arith.constant 0 : index
    %c5_374 = arith.constant 5 : index
    %c1_375 = arith.constant 1 : index
    %c0_376 = arith.constant 0 : index
    %285 = vector.load %arg14[%c0_373, %c5_374, %c1_375, %c0_376] : memref<2x20x5x128xbf16, #tpu.memory_space<vmem>>, vector<1x1x4x128xbf16>
    %286 = vector.shape_cast %285 : vector<1x1x4x128xbf16> to vector<4x128xbf16>
    %c8_377 = arith.constant 8 : index
    %c640_378 = arith.constant 640 : index
    %287 = vector.load %arg15[%c8_377, %c640_378] : memref<32x1536xbf16, #tpu.memory_space<vmem>>, vector<4x128xbf16>
    tpu.vector_store %arg15[%c8_377, %c640_378], %286 {strides = array<i32>} : memref<32x1536xbf16, #tpu.memory_space<vmem>>, vector<4x128xbf16>,
    %c0_379 = arith.constant 0 : index
    %c7_380 = arith.constant 7 : index
    %c1_381 = arith.constant 1 : index
    %c0_382 = arith.constant 0 : index
    %288 = vector.load %arg14[%c0_379, %c7_380, %c1_381, %c0_382] : memref<2x20x5x128xbf16, #tpu.memory_space<vmem>>, vector<1x1x4x128xbf16>
    %289 = vector.shape_cast %288 : vector<1x1x4x128xbf16> to vector<4x128xbf16>
    %c12_383 = arith.constant 12 : index
    %c640_384 = arith.constant 640 : index
    %290 = vector.load %arg15[%c12_383, %c640_384] : memref<32x1536xbf16, #tpu.memory_space<vmem>>, vector<4x128xbf16>
    tpu.vector_store %arg15[%c12_383, %c640_384], %289 {strides = array<i32>} : memref<32x1536xbf16, #tpu.memory_space<vmem>>, vector<4x128xbf16>,
    %c0_385 = arith.constant 0 : index
    %c11_386 = arith.constant 11 : index
    %c1_387 = arith.constant 1 : index
    %c0_388 = arith.constant 0 : index
    %291 = vector.load %arg14[%c0_385, %c11_386, %c1_387, %c0_388] : memref<2x20x5x128xbf16, #tpu.memory_space<vmem>>, vector<1x1x4x128xbf16>
    %292 = vector.shape_cast %291 : vector<1x1x4x128xbf16> to vector<4x128xbf16>
    %c16_389 = arith.constant 16 : index
    %c640_390 = arith.constant 640 : index
    %293 = vector.load %arg15[%c16_389, %c640_390] : memref<32x1536xbf16, #tpu.memory_space<vmem>>, vector<4x128xbf16>
    tpu.vector_store %arg15[%c16_389, %c640_390], %292 {strides = array<i32>} : memref<32x1536xbf16, #tpu.memory_space<vmem>>, vector<4x128xbf16>,
    %c0_391 = arith.constant 0 : index
    %c13_392 = arith.constant 13 : index
    %c1_393 = arith.constant 1 : index
    %c0_394 = arith.constant 0 : index
    %294 = vector.load %arg14[%c0_391, %c13_392, %c1_393, %c0_394] : memref<2x20x5x128xbf16, #tpu.memory_space<vmem>>, vector<1x1x4x128xbf16>
    %295 = vector.shape_cast %294 : vector<1x1x4x128xbf16> to vector<4x128xbf16>
    %c20_395 = arith.constant 20 : index
    %c640_396 = arith.constant 640 : index
    %296 = vector.load %arg15[%c20_395, %c640_396] : memref<32x1536xbf16, #tpu.memory_space<vmem>>, vector<4x128xbf16>
    tpu.vector_store %arg15[%c20_395, %c640_396], %295 {strides = array<i32>} : memref<32x1536xbf16, #tpu.memory_space<vmem>>, vector<4x128xbf16>,
    %c0_397 = arith.constant 0 : index
    %c15_398 = arith.constant 15 : index
    %c1_399 = arith.constant 1 : index
    %c0_400 = arith.constant 0 : index
    %297 = vector.load %arg14[%c0_397, %c15_398, %c1_399, %c0_400] : memref<2x20x5x128xbf16, #tpu.memory_space<vmem>>, vector<1x1x4x128xbf16>
    %298 = vector.shape_cast %297 : vector<1x1x4x128xbf16> to vector<4x128xbf16>
    %c24_401 = arith.constant 24 : index
    %c640_402 = arith.constant 640 : index
    %299 = vector.load %arg15[%c24_401, %c640_402] : memref<32x1536xbf16, #tpu.memory_space<vmem>>, vector<4x128xbf16>
    tpu.vector_store %arg15[%c24_401, %c640_402], %298 {strides = array<i32>} : memref<32x1536xbf16, #tpu.memory_space<vmem>>, vector<4x128xbf16>,
    %c0_403 = arith.constant 0 : index
    %c17_404 = arith.constant 17 : index
    %c1_405 = arith.constant 1 : index
    %c0_406 = arith.constant 0 : index
    %300 = vector.load %arg14[%c0_403, %c17_404, %c1_405, %c0_406] : memref<2x20x5x128xbf16, #tpu.memory_space<vmem>>, vector<1x1x4x128xbf16>
    %301 = vector.shape_cast %300 : vector<1x1x4x128xbf16> to vector<4x128xbf16>
    %c28_407 = arith.constant 28 : index
    %c640_408 = arith.constant 640 : index
    %302 = vector.load %arg15[%c28_407, %c640_408] : memref<32x1536xbf16, #tpu.memory_space<vmem>>, vector<4x128xbf16>
    tpu.vector_store %arg15[%c28_407, %c640_408], %301 {strides = array<i32>} : memref<32x1536xbf16, #tpu.memory_space<vmem>>, vector<4x128xbf16>,
    %c0_409 = arith.constant 0 : index
    %c2_410 = arith.constant 2 : index
    %c0_411 = arith.constant 0 : index
    %c0_412 = arith.constant 0 : index
    %303 = vector.load %arg14[%c0_409, %c2_410, %c0_411, %c0_412] : memref<2x20x5x128xbf16, #tpu.memory_space<vmem>>, vector<1x1x4x128xbf16>
    %304 = vector.shape_cast %303 : vector<1x1x4x128xbf16> to vector<4x128xbf16>
    %c0_413 = arith.constant 0 : index
    %c768 = arith.constant 768 : index
    %305 = vector.load %arg15[%c0_413, %c768] : memref<32x1536xbf16, #tpu.memory_space<vmem>>, vector<4x128xbf16>
    tpu.vector_store %arg15[%c0_413, %c768], %304 {strides = array<i32>} : memref<32x1536xbf16, #tpu.memory_space<vmem>>, vector<4x128xbf16>,
    %c0_414 = arith.constant 0 : index
    %c4_415 = arith.constant 4 : index
    %c0_416 = arith.constant 0 : index
    %c0_417 = arith.constant 0 : index
    %306 = vector.load %arg14[%c0_414, %c4_415, %c0_416, %c0_417] : memref<2x20x5x128xbf16, #tpu.memory_space<vmem>>, vector<1x1x4x128xbf16>
    %307 = vector.shape_cast %306 : vector<1x1x4x128xbf16> to vector<4x128xbf16>
    %c4_418 = arith.constant 4 : index
    %c768_419 = arith.constant 768 : index
    %308 = vector.load %arg15[%c4_418, %c768_419] : memref<32x1536xbf16, #tpu.memory_space<vmem>>, vector<4x128xbf16>
    tpu.vector_store %arg15[%c4_418, %c768_419], %307 {strides = array<i32>} : memref<32x1536xbf16, #tpu.memory_space<vmem>>, vector<4x128xbf16>,
    %c0_420 = arith.constant 0 : index
    %c6_421 = arith.constant 6 : index
    %c0_422 = arith.constant 0 : index
    %c0_423 = arith.constant 0 : index
    %309 = vector.load %arg14[%c0_420, %c6_421, %c0_422, %c0_423] : memref<2x20x5x128xbf16, #tpu.memory_space<vmem>>, vector<1x1x4x128xbf16>
    %310 = vector.shape_cast %309 : vector<1x1x4x128xbf16> to vector<4x128xbf16>
    %c8_424 = arith.constant 8 : index
    %c768_425 = arith.constant 768 : index
    %311 = vector.load %arg15[%c8_424, %c768_425] : memref<32x1536xbf16, #tpu.memory_space<vmem>>, vector<4x128xbf16>
    tpu.vector_store %arg15[%c8_424, %c768_425], %310 {strides = array<i32>} : memref<32x1536xbf16, #tpu.memory_space<vmem>>, vector<4x128xbf16>,
    %c0_426 = arith.constant 0 : index
    %c8_427 = arith.constant 8 : index
    %c0_428 = arith.constant 0 : index
    %c0_429 = arith.constant 0 : index
    %312 = vector.load %arg14[%c0_426, %c8_427, %c0_428, %c0_429] : memref<2x20x5x128xbf16, #tpu.memory_space<vmem>>, vector<1x1x4x128xbf16>
    %313 = vector.shape_cast %312 : vector<1x1x4x128xbf16> to vector<4x128xbf16>
    %c12_430 = arith.constant 12 : index
    %c768_431 = arith.constant 768 : index
    %314 = vector.load %arg15[%c12_430, %c768_431] : memref<32x1536xbf16, #tpu.memory_space<vmem>>, vector<4x128xbf16>
    tpu.vector_store %arg15[%c12_430, %c768_431], %313 {strides = array<i32>} : memref<32x1536xbf16, #tpu.memory_space<vmem>>, vector<4x128xbf16>,
    %c0_432 = arith.constant 0 : index
    %c12_433 = arith.constant 12 : index
    %c0_434 = arith.constant 0 : index
    %c0_435 = arith.constant 0 : index
    %315 = vector.load %arg14[%c0_432, %c12_433, %c0_434, %c0_435] : memref<2x20x5x128xbf16, #tpu.memory_space<vmem>>, vector<1x1x4x128xbf16>
    %316 = vector.shape_cast %315 : vector<1x1x4x128xbf16> to vector<4x128xbf16>
    %c16_436 = arith.constant 16 : index
    %c768_437 = arith.constant 768 : index
    %317 = vector.load %arg15[%c16_436, %c768_437] : memref<32x1536xbf16, #tpu.memory_space<vmem>>, vector<4x128xbf16>
    tpu.vector_store %arg15[%c16_436, %c768_437], %316 {strides = array<i32>} : memref<32x1536xbf16, #tpu.memory_space<vmem>>, vector<4x128xbf16>,
    %c0_438 = arith.constant 0 : index
    %c14_439 = arith.constant 14 : index
    %c0_440 = arith.constant 0 : index
    %c0_441 = arith.constant 0 : index
    %318 = vector.load %arg14[%c0_438, %c14_439, %c0_440, %c0_441] : memref<2x20x5x128xbf16, #tpu.memory_space<vmem>>, vector<1x1x4x128xbf16>
    %319 = vector.shape_cast %318 : vector<1x1x4x128xbf16> to vector<4x128xbf16>
    %c20_442 = arith.constant 20 : index
    %c768_443 = arith.constant 768 : index
    %320 = vector.load %arg15[%c20_442, %c768_443] : memref<32x1536xbf16, #tpu.memory_space<vmem>>, vector<4x128xbf16>
    tpu.vector_store %arg15[%c20_442, %c768_443], %319 {strides = array<i32>} : memref<32x1536xbf16, #tpu.memory_space<vmem>>, vector<4x128xbf16>,
    %c0_444 = arith.constant 0 : index
    %c16_445 = arith.constant 16 : index
    %c0_446 = arith.constant 0 : index
    %c0_447 = arith.constant 0 : index
    %321 = vector.load %arg14[%c0_444, %c16_445, %c0_446, %c0_447] : memref<2x20x5x128xbf16, #tpu.memory_space<vmem>>, vector<1x1x4x128xbf16>
    %322 = vector.shape_cast %321 : vector<1x1x4x128xbf16> to vector<4x128xbf16>
    %c24_448 = arith.constant 24 : index
    %c768_449 = arith.constant 768 : index
    %323 = vector.load %arg15[%c24_448, %c768_449] : memref<32x1536xbf16, #tpu.memory_space<vmem>>, vector<4x128xbf16>
    tpu.vector_store %arg15[%c24_448, %c768_449], %322 {strides = array<i32>} : memref<32x1536xbf16, #tpu.memory_space<vmem>>, vector<4x128xbf16>,
    %c0_450 = arith.constant 0 : index
    %c18_451 = arith.constant 18 : index
    %c0_452 = arith.constant 0 : index
    %c0_453 = arith.constant 0 : index
    %324 = vector.load %arg14[%c0_450, %c18_451, %c0_452, %c0_453] : memref<2x20x5x128xbf16, #tpu.memory_space<vmem>>, vector<1x1x4x128xbf16>
    %325 = vector.shape_cast %324 : vector<1x1x4x128xbf16> to vector<4x128xbf16>
    %c28_454 = arith.constant 28 : index
    %c768_455 = arith.constant 768 : index
    %326 = vector.load %arg15[%c28_454, %c768_455] : memref<32x1536xbf16, #tpu.memory_space<vmem>>, vector<4x128xbf16>
    tpu.vector_store %arg15[%c28_454, %c768_455], %325 {strides = array<i32>} : memref<32x1536xbf16, #tpu.memory_space<vmem>>, vector<4x128xbf16>,
    %c1_456 = arith.constant 1 : index
    %c2_457 = arith.constant 2 : index
    %c0_458 = arith.constant 0 : index
    %c0_459 = arith.constant 0 : index
    %327 = vector.load %arg14[%c1_456, %c2_457, %c0_458, %c0_459] : memref<2x20x5x128xbf16, #tpu.memory_space<vmem>>, vector<1x1x4x128xbf16>
    %328 = vector.shape_cast %327 : vector<1x1x4x128xbf16> to vector<4x128xbf16>
    %c0_460 = arith.constant 0 : index
    %c896 = arith.constant 896 : index
    %329 = vector.load %arg15[%c0_460, %c896] : memref<32x1536xbf16, #tpu.memory_space<vmem>>, vector<4x128xbf16>
    tpu.vector_store %arg15[%c0_460, %c896], %328 {strides = array<i32>} : memref<32x1536xbf16, #tpu.memory_space<vmem>>, vector<4x128xbf16>,
    %c1_461 = arith.constant 1 : index
    %c4_462 = arith.constant 4 : index
    %c0_463 = arith.constant 0 : index
    %c0_464 = arith.constant 0 : index
    %330 = vector.load %arg14[%c1_461, %c4_462, %c0_463, %c0_464] : memref<2x20x5x128xbf16, #tpu.memory_space<vmem>>, vector<1x1x4x128xbf16>
    %331 = vector.shape_cast %330 : vector<1x1x4x128xbf16> to vector<4x128xbf16>
    %c4_465 = arith.constant 4 : index
    %c896_466 = arith.constant 896 : index
    %332 = vector.load %arg15[%c4_465, %c896_466] : memref<32x1536xbf16, #tpu.memory_space<vmem>>, vector<4x128xbf16>
    tpu.vector_store %arg15[%c4_465, %c896_466], %331 {strides = array<i32>} : memref<32x1536xbf16, #tpu.memory_space<vmem>>, vector<4x128xbf16>,
    %c1_467 = arith.constant 1 : index
    %c6_468 = arith.constant 6 : index
    %c0_469 = arith.constant 0 : index
    %c0_470 = arith.constant 0 : index
    %333 = vector.load %arg14[%c1_467, %c6_468, %c0_469, %c0_470] : memref<2x20x5x128xbf16, #tpu.memory_space<vmem>>, vector<1x1x4x128xbf16>
    %334 = vector.shape_cast %333 : vector<1x1x4x128xbf16> to vector<4x128xbf16>
    %c8_471 = arith.constant 8 : index
    %c896_472 = arith.constant 896 : index
    %335 = vector.load %arg15[%c8_471, %c896_472] : memref<32x1536xbf16, #tpu.memory_space<vmem>>, vector<4x128xbf16>
    tpu.vector_store %arg15[%c8_471, %c896_472], %334 {strides = array<i32>} : memref<32x1536xbf16, #tpu.memory_space<vmem>>, vector<4x128xbf16>,
    %c1_473 = arith.constant 1 : index
    %c8_474 = arith.constant 8 : index
    %c0_475 = arith.constant 0 : index
    %c0_476 = arith.constant 0 : index
    %336 = vector.load %arg14[%c1_473, %c8_474, %c0_475, %c0_476] : memref<2x20x5x128xbf16, #tpu.memory_space<vmem>>, vector<1x1x4x128xbf16>
    %337 = vector.shape_cast %336 : vector<1x1x4x128xbf16> to vector<4x128xbf16>
    %c12_477 = arith.constant 12 : index
    %c896_478 = arith.constant 896 : index
    %338 = vector.load %arg15[%c12_477, %c896_478] : memref<32x1536xbf16, #tpu.memory_space<vmem>>, vector<4x128xbf16>
    tpu.vector_store %arg15[%c12_477, %c896_478], %337 {strides = array<i32>} : memref<32x1536xbf16, #tpu.memory_space<vmem>>, vector<4x128xbf16>,
    %c1_479 = arith.constant 1 : index
    %c12_480 = arith.constant 12 : index
    %c0_481 = arith.constant 0 : index
    %c0_482 = arith.constant 0 : index
    %339 = vector.load %arg14[%c1_479, %c12_480, %c0_481, %c0_482] : memref<2x20x5x128xbf16, #tpu.memory_space<vmem>>, vector<1x1x4x128xbf16>
    %340 = vector.shape_cast %339 : vector<1x1x4x128xbf16> to vector<4x128xbf16>
    %c16_483 = arith.constant 16 : index
    %c896_484 = arith.constant 896 : index
    %341 = vector.load %arg15[%c16_483, %c896_484] : memref<32x1536xbf16, #tpu.memory_space<vmem>>, vector<4x128xbf16>
    tpu.vector_store %arg15[%c16_483, %c896_484], %340 {strides = array<i32>} : memref<32x1536xbf16, #tpu.memory_space<vmem>>, vector<4x128xbf16>,
    %c1_485 = arith.constant 1 : index
    %c14_486 = arith.constant 14 : index
    %c0_487 = arith.constant 0 : index
    %c0_488 = arith.constant 0 : index
    %342 = vector.load %arg14[%c1_485, %c14_486, %c0_487, %c0_488] : memref<2x20x5x128xbf16, #tpu.memory_space<vmem>>, vector<1x1x4x128xbf16>
    %343 = vector.shape_cast %342 : vector<1x1x4x128xbf16> to vector<4x128xbf16>
    %c20_489 = arith.constant 20 : index
    %c896_490 = arith.constant 896 : index
    %344 = vector.load %arg15[%c20_489, %c896_490] : memref<32x1536xbf16, #tpu.memory_space<vmem>>, vector<4x128xbf16>
    tpu.vector_store %arg15[%c20_489, %c896_490], %343 {strides = array<i32>} : memref<32x1536xbf16, #tpu.memory_space<vmem>>, vector<4x128xbf16>,
    %c1_491 = arith.constant 1 : index
    %c16_492 = arith.constant 16 : index
    %c0_493 = arith.constant 0 : index
    %c0_494 = arith.constant 0 : index
    %345 = vector.load %arg14[%c1_491, %c16_492, %c0_493, %c0_494] : memref<2x20x5x128xbf16, #tpu.memory_space<vmem>>, vector<1x1x4x128xbf16>
    %346 = vector.shape_cast %345 : vector<1x1x4x128xbf16> to vector<4x128xbf16>
    %c24_495 = arith.constant 24 : index
    %c896_496 = arith.constant 896 : index
    %347 = vector.load %arg15[%c24_495, %c896_496] : memref<32x1536xbf16, #tpu.memory_space<vmem>>, vector<4x128xbf16>
    tpu.vector_store %arg15[%c24_495, %c896_496], %346 {strides = array<i32>} : memref<32x1536xbf16, #tpu.memory_space<vmem>>, vector<4x128xbf16>,
    %c1_497 = arith.constant 1 : index
    %c18_498 = arith.constant 18 : index
    %c0_499 = arith.constant 0 : index
    %c0_500 = arith.constant 0 : index
    %348 = vector.load %arg14[%c1_497, %c18_498, %c0_499, %c0_500] : memref<2x20x5x128xbf16, #tpu.memory_space<vmem>>, vector<1x1x4x128xbf16>
    %349 = vector.shape_cast %348 : vector<1x1x4x128xbf16> to vector<4x128xbf16>
    %c28_501 = arith.constant 28 : index
    %c896_502 = arith.constant 896 : index
    %350 = vector.load %arg15[%c28_501, %c896_502] : memref<32x1536xbf16, #tpu.memory_space<vmem>>, vector<4x128xbf16>
    tpu.vector_store %arg15[%c28_501, %c896_502], %349 {strides = array<i32>} : memref<32x1536xbf16, #tpu.memory_space<vmem>>, vector<4x128xbf16>,
    %c0_503 = arith.constant 0 : index
    %c2_504 = arith.constant 2 : index
    %c1_505 = arith.constant 1 : index
    %c0_506 = arith.constant 0 : index
    %351 = vector.load %arg14[%c0_503, %c2_504, %c1_505, %c0_506] : memref<2x20x5x128xbf16, #tpu.memory_space<vmem>>, vector<1x1x4x128xbf16>
    %352 = vector.shape_cast %351 : vector<1x1x4x128xbf16> to vector<4x128xbf16>
    %c0_507 = arith.constant 0 : index
    %c1024 = arith.constant 1024 : index
    %353 = vector.load %arg15[%c0_507, %c1024] : memref<32x1536xbf16, #tpu.memory_space<vmem>>, vector<4x128xbf16>
    tpu.vector_store %arg15[%c0_507, %c1024], %352 {strides = array<i32>} : memref<32x1536xbf16, #tpu.memory_space<vmem>>, vector<4x128xbf16>,
    %c0_508 = arith.constant 0 : index
    %c4_509 = arith.constant 4 : index
    %c1_510 = arith.constant 1 : index
    %c0_511 = arith.constant 0 : index
    %354 = vector.load %arg14[%c0_508, %c4_509, %c1_510, %c0_511] : memref<2x20x5x128xbf16, #tpu.memory_space<vmem>>, vector<1x1x4x128xbf16>
    %355 = vector.shape_cast %354 : vector<1x1x4x128xbf16> to vector<4x128xbf16>
    %c4_512 = arith.constant 4 : index
    %c1024_513 = arith.constant 1024 : index
    %356 = vector.load %arg15[%c4_512, %c1024_513] : memref<32x1536xbf16, #tpu.memory_space<vmem>>, vector<4x128xbf16>
    tpu.vector_store %arg15[%c4_512, %c1024_513], %355 {strides = array<i32>} : memref<32x1536xbf16, #tpu.memory_space<vmem>>, vector<4x128xbf16>,
    %c0_514 = arith.constant 0 : index
    %c6_515 = arith.constant 6 : index
    %c1_516 = arith.constant 1 : index
    %c0_517 = arith.constant 0 : index
    %357 = vector.load %arg14[%c0_514, %c6_515, %c1_516, %c0_517] : memref<2x20x5x128xbf16, #tpu.memory_space<vmem>>, vector<1x1x4x128xbf16>
    %358 = vector.shape_cast %357 : vector<1x1x4x128xbf16> to vector<4x128xbf16>
    %c8_518 = arith.constant 8 : index
    %c1024_519 = arith.constant 1024 : index
    %359 = vector.load %arg15[%c8_518, %c1024_519] : memref<32x1536xbf16, #tpu.memory_space<vmem>>, vector<4x128xbf16>
    tpu.vector_store %arg15[%c8_518, %c1024_519], %358 {strides = array<i32>} : memref<32x1536xbf16, #tpu.memory_space<vmem>>, vector<4x128xbf16>,
    %c0_520 = arith.constant 0 : index
    %c8_521 = arith.constant 8 : index
    %c1_522 = arith.constant 1 : index
    %c0_523 = arith.constant 0 : index
    %360 = vector.load %arg14[%c0_520, %c8_521, %c1_522, %c0_523] : memref<2x20x5x128xbf16, #tpu.memory_space<vmem>>, vector<1x1x4x128xbf16>
    %361 = vector.shape_cast %360 : vector<1x1x4x128xbf16> to vector<4x128xbf16>
    %c12_524 = arith.constant 12 : index
    %c1024_525 = arith.constant 1024 : index
    %362 = vector.load %arg15[%c12_524, %c1024_525] : memref<32x1536xbf16, #tpu.memory_space<vmem>>, vector<4x128xbf16>
    tpu.vector_store %arg15[%c12_524, %c1024_525], %361 {strides = array<i32>} : memref<32x1536xbf16, #tpu.memory_space<vmem>>, vector<4x128xbf16>,
    %c0_526 = arith.constant 0 : index
    %c12_527 = arith.constant 12 : index
    %c1_528 = arith.constant 1 : index
    %c0_529 = arith.constant 0 : index
    %363 = vector.load %arg14[%c0_526, %c12_527, %c1_528, %c0_529] : memref<2x20x5x128xbf16, #tpu.memory_space<vmem>>, vector<1x1x4x128xbf16>
    %364 = vector.shape_cast %363 : vector<1x1x4x128xbf16> to vector<4x128xbf16>
    %c16_530 = arith.constant 16 : index
    %c1024_531 = arith.constant 1024 : index
    %365 = vector.load %arg15[%c16_530, %c1024_531] : memref<32x1536xbf16, #tpu.memory_space<vmem>>, vector<4x128xbf16>
    tpu.vector_store %arg15[%c16_530, %c1024_531], %364 {strides = array<i32>} : memref<32x1536xbf16, #tpu.memory_space<vmem>>, vector<4x128xbf16>,
    %c0_532 = arith.constant 0 : index
    %c14_533 = arith.constant 14 : index
    %c1_534 = arith.constant 1 : index
    %c0_535 = arith.constant 0 : index
    %366 = vector.load %arg14[%c0_532, %c14_533, %c1_534, %c0_535] : memref<2x20x5x128xbf16, #tpu.memory_space<vmem>>, vector<1x1x4x128xbf16>
    %367 = vector.shape_cast %366 : vector<1x1x4x128xbf16> to vector<4x128xbf16>
    %c20_536 = arith.constant 20 : index
    %c1024_537 = arith.constant 1024 : index
    %368 = vector.load %arg15[%c20_536, %c1024_537] : memref<32x1536xbf16, #tpu.memory_space<vmem>>, vector<4x128xbf16>
    tpu.vector_store %arg15[%c20_536, %c1024_537], %367 {strides = array<i32>} : memref<32x1536xbf16, #tpu.memory_space<vmem>>, vector<4x128xbf16>,
    %c0_538 = arith.constant 0 : index
    %c16_539 = arith.constant 16 : index
    %c1_540 = arith.constant 1 : index
    %c0_541 = arith.constant 0 : index
    %369 = vector.load %arg14[%c0_538, %c16_539, %c1_540, %c0_541] : memref<2x20x5x128xbf16, #tpu.memory_space<vmem>>, vector<1x1x4x128xbf16>
    %370 = vector.shape_cast %369 : vector<1x1x4x128xbf16> to vector<4x128xbf16>
    %c24_542 = arith.constant 24 : index
    %c1024_543 = arith.constant 1024 : index
    %371 = vector.load %arg15[%c24_542, %c1024_543] : memref<32x1536xbf16, #tpu.memory_space<vmem>>, vector<4x128xbf16>
    tpu.vector_store %arg15[%c24_542, %c1024_543], %370 {strides = array<i32>} : memref<32x1536xbf16, #tpu.memory_space<vmem>>, vector<4x128xbf16>,
    %c0_544 = arith.constant 0 : index
    %c18_545 = arith.constant 18 : index
    %c1_546 = arith.constant 1 : index
    %c0_547 = arith.constant 0 : index
    %372 = vector.load %arg14[%c0_544, %c18_545, %c1_546, %c0_547] : memref<2x20x5x128xbf16, #tpu.memory_space<vmem>>, vector<1x1x4x128xbf16>
    %373 = vector.shape_cast %372 : vector<1x1x4x128xbf16> to vector<4x128xbf16>
    %c28_548 = arith.constant 28 : index
    %c1024_549 = arith.constant 1024 : index
    %374 = vector.load %arg15[%c28_548, %c1024_549] : memref<32x1536xbf16, #tpu.memory_space<vmem>>, vector<4x128xbf16>
    tpu.vector_store %arg15[%c28_548, %c1024_549], %373 {strides = array<i32>} : memref<32x1536xbf16, #tpu.memory_space<vmem>>, vector<4x128xbf16>,
    %c0_550 = arith.constant 0 : index
    %c3_551 = arith.constant 3 : index
    %c0_552 = arith.constant 0 : index
    %c0_553 = arith.constant 0 : index
    %375 = vector.load %arg14[%c0_550, %c3_551, %c0_552, %c0_553] : memref<2x20x5x128xbf16, #tpu.memory_space<vmem>>, vector<1x1x4x128xbf16>
    %376 = vector.shape_cast %375 : vector<1x1x4x128xbf16> to vector<4x128xbf16>
    %c0_554 = arith.constant 0 : index
    %c1152 = arith.constant 1152 : index
    %377 = vector.load %arg15[%c0_554, %c1152] : memref<32x1536xbf16, #tpu.memory_space<vmem>>, vector<4x128xbf16>
    tpu.vector_store %arg15[%c0_554, %c1152], %376 {strides = array<i32>} : memref<32x1536xbf16, #tpu.memory_space<vmem>>, vector<4x128xbf16>,
    %c0_555 = arith.constant 0 : index
    %c5_556 = arith.constant 5 : index
    %c0_557 = arith.constant 0 : index
    %c0_558 = arith.constant 0 : index
    %378 = vector.load %arg14[%c0_555, %c5_556, %c0_557, %c0_558] : memref<2x20x5x128xbf16, #tpu.memory_space<vmem>>, vector<1x1x4x128xbf16>
    %379 = vector.shape_cast %378 : vector<1x1x4x128xbf16> to vector<4x128xbf16>
    %c4_559 = arith.constant 4 : index
    %c1152_560 = arith.constant 1152 : index
    %380 = vector.load %arg15[%c4_559, %c1152_560] : memref<32x1536xbf16, #tpu.memory_space<vmem>>, vector<4x128xbf16>
    tpu.vector_store %arg15[%c4_559, %c1152_560], %379 {strides = array<i32>} : memref<32x1536xbf16, #tpu.memory_space<vmem>>, vector<4x128xbf16>,
    %c0_561 = arith.constant 0 : index
    %c7_562 = arith.constant 7 : index
    %c0_563 = arith.constant 0 : index
    %c0_564 = arith.constant 0 : index
    %381 = vector.load %arg14[%c0_561, %c7_562, %c0_563, %c0_564] : memref<2x20x5x128xbf16, #tpu.memory_space<vmem>>, vector<1x1x4x128xbf16>
    %382 = vector.shape_cast %381 : vector<1x1x4x128xbf16> to vector<4x128xbf16>
    %c8_565 = arith.constant 8 : index
    %c1152_566 = arith.constant 1152 : index
    %383 = vector.load %arg15[%c8_565, %c1152_566] : memref<32x1536xbf16, #tpu.memory_space<vmem>>, vector<4x128xbf16>
    tpu.vector_store %arg15[%c8_565, %c1152_566], %382 {strides = array<i32>} : memref<32x1536xbf16, #tpu.memory_space<vmem>>, vector<4x128xbf16>,
    %c0_567 = arith.constant 0 : index
    %c9 = arith.constant 9 : index
    %c0_568 = arith.constant 0 : index
    %c0_569 = arith.constant 0 : index
    %384 = vector.load %arg14[%c0_567, %c9, %c0_568, %c0_569] : memref<2x20x5x128xbf16, #tpu.memory_space<vmem>>, vector<1x1x4x128xbf16>
    %385 = vector.shape_cast %384 : vector<1x1x4x128xbf16> to vector<4x128xbf16>
    %c12_570 = arith.constant 12 : index
    %c1152_571 = arith.constant 1152 : index
    %386 = vector.load %arg15[%c12_570, %c1152_571] : memref<32x1536xbf16, #tpu.memory_space<vmem>>, vector<4x128xbf16>
    tpu.vector_store %arg15[%c12_570, %c1152_571], %385 {strides = array<i32>} : memref<32x1536xbf16, #tpu.memory_space<vmem>>, vector<4x128xbf16>,
    %c0_572 = arith.constant 0 : index
    %c13_573 = arith.constant 13 : index
    %c0_574 = arith.constant 0 : index
    %c0_575 = arith.constant 0 : index
    %387 = vector.load %arg14[%c0_572, %c13_573, %c0_574, %c0_575] : memref<2x20x5x128xbf16, #tpu.memory_space<vmem>>, vector<1x1x4x128xbf16>
    %388 = vector.shape_cast %387 : vector<1x1x4x128xbf16> to vector<4x128xbf16>
    %c16_576 = arith.constant 16 : index
    %c1152_577 = arith.constant 1152 : index
    %389 = vector.load %arg15[%c16_576, %c1152_577] : memref<32x1536xbf16, #tpu.memory_space<vmem>>, vector<4x128xbf16>
    tpu.vector_store %arg15[%c16_576, %c1152_577], %388 {strides = array<i32>} : memref<32x1536xbf16, #tpu.memory_space<vmem>>, vector<4x128xbf16>,
    %c0_578 = arith.constant 0 : index
    %c15_579 = arith.constant 15 : index
    %c0_580 = arith.constant 0 : index
    %c0_581 = arith.constant 0 : index
    %390 = vector.load %arg14[%c0_578, %c15_579, %c0_580, %c0_581] : memref<2x20x5x128xbf16, #tpu.memory_space<vmem>>, vector<1x1x4x128xbf16>
    %391 = vector.shape_cast %390 : vector<1x1x4x128xbf16> to vector<4x128xbf16>
    %c20_582 = arith.constant 20 : index
    %c1152_583 = arith.constant 1152 : index
    %392 = vector.load %arg15[%c20_582, %c1152_583] : memref<32x1536xbf16, #tpu.memory_space<vmem>>, vector<4x128xbf16>
    tpu.vector_store %arg15[%c20_582, %c1152_583], %391 {strides = array<i32>} : memref<32x1536xbf16, #tpu.memory_space<vmem>>, vector<4x128xbf16>,
    %c0_584 = arith.constant 0 : index
    %c17_585 = arith.constant 17 : index
    %c0_586 = arith.constant 0 : index
    %c0_587 = arith.constant 0 : index
    %393 = vector.load %arg14[%c0_584, %c17_585, %c0_586, %c0_587] : memref<2x20x5x128xbf16, #tpu.memory_space<vmem>>, vector<1x1x4x128xbf16>
    %394 = vector.shape_cast %393 : vector<1x1x4x128xbf16> to vector<4x128xbf16>
    %c24_588 = arith.constant 24 : index
    %c1152_589 = arith.constant 1152 : index
    %395 = vector.load %arg15[%c24_588, %c1152_589] : memref<32x1536xbf16, #tpu.memory_space<vmem>>, vector<4x128xbf16>
    tpu.vector_store %arg15[%c24_588, %c1152_589], %394 {strides = array<i32>} : memref<32x1536xbf16, #tpu.memory_space<vmem>>, vector<4x128xbf16>,
    %c0_590 = arith.constant 0 : index
    %c19 = arith.constant 19 : index
    %c0_591 = arith.constant 0 : index
    %c0_592 = arith.constant 0 : index
    %396 = vector.load %arg14[%c0_590, %c19, %c0_591, %c0_592] : memref<2x20x5x128xbf16, #tpu.memory_space<vmem>>, vector<1x1x4x128xbf16>
    %397 = vector.shape_cast %396 : vector<1x1x4x128xbf16> to vector<4x128xbf16>
    %c28_593 = arith.constant 28 : index
    %c1152_594 = arith.constant 1152 : index
    %398 = vector.load %arg15[%c28_593, %c1152_594] : memref<32x1536xbf16, #tpu.memory_space<vmem>>, vector<4x128xbf16>
    tpu.vector_store %arg15[%c28_593, %c1152_594], %397 {strides = array<i32>} : memref<32x1536xbf16, #tpu.memory_space<vmem>>, vector<4x128xbf16>,
    %c1_595 = arith.constant 1 : index
    %c3_596 = arith.constant 3 : index
    %c0_597 = arith.constant 0 : index
    %c0_598 = arith.constant 0 : index
    %399 = vector.load %arg14[%c1_595, %c3_596, %c0_597, %c0_598] : memref<2x20x5x128xbf16, #tpu.memory_space<vmem>>, vector<1x1x4x128xbf16>
    %400 = vector.shape_cast %399 : vector<1x1x4x128xbf16> to vector<4x128xbf16>
    %c0_599 = arith.constant 0 : index
    %c1280 = arith.constant 1280 : index
    %401 = vector.load %arg15[%c0_599, %c1280] : memref<32x1536xbf16, #tpu.memory_space<vmem>>, vector<4x128xbf16>
    tpu.vector_store %arg15[%c0_599, %c1280], %400 {strides = array<i32>} : memref<32x1536xbf16, #tpu.memory_space<vmem>>, vector<4x128xbf16>,
    %c1_600 = arith.constant 1 : index
    %c5_601 = arith.constant 5 : index
    %c0_602 = arith.constant 0 : index
    %c0_603 = arith.constant 0 : index
    %402 = vector.load %arg14[%c1_600, %c5_601, %c0_602, %c0_603] : memref<2x20x5x128xbf16, #tpu.memory_space<vmem>>, vector<1x1x4x128xbf16>
    %403 = vector.shape_cast %402 : vector<1x1x4x128xbf16> to vector<4x128xbf16>
    %c4_604 = arith.constant 4 : index
    %c1280_605 = arith.constant 1280 : index
    %404 = vector.load %arg15[%c4_604, %c1280_605] : memref<32x1536xbf16, #tpu.memory_space<vmem>>, vector<4x128xbf16>
    tpu.vector_store %arg15[%c4_604, %c1280_605], %403 {strides = array<i32>} : memref<32x1536xbf16, #tpu.memory_space<vmem>>, vector<4x128xbf16>,
    %c1_606 = arith.constant 1 : index
    %c7_607 = arith.constant 7 : index
    %c0_608 = arith.constant 0 : index
    %c0_609 = arith.constant 0 : index
    %405 = vector.load %arg14[%c1_606, %c7_607, %c0_608, %c0_609] : memref<2x20x5x128xbf16, #tpu.memory_space<vmem>>, vector<1x1x4x128xbf16>
    %406 = vector.shape_cast %405 : vector<1x1x4x128xbf16> to vector<4x128xbf16>
    %c8_610 = arith.constant 8 : index
    %c1280_611 = arith.constant 1280 : index
    %407 = vector.load %arg15[%c8_610, %c1280_611] : memref<32x1536xbf16, #tpu.memory_space<vmem>>, vector<4x128xbf16>
    tpu.vector_store %arg15[%c8_610, %c1280_611], %406 {strides = array<i32>} : memref<32x1536xbf16, #tpu.memory_space<vmem>>, vector<4x128xbf16>,
    %c1_612 = arith.constant 1 : index
    %c9_613 = arith.constant 9 : index
    %c0_614 = arith.constant 0 : index
    %c0_615 = arith.constant 0 : index
    %408 = vector.load %arg14[%c1_612, %c9_613, %c0_614, %c0_615] : memref<2x20x5x128xbf16, #tpu.memory_space<vmem>>, vector<1x1x4x128xbf16>
    %409 = vector.shape_cast %408 : vector<1x1x4x128xbf16> to vector<4x128xbf16>
    %c12_616 = arith.constant 12 : index
    %c1280_617 = arith.constant 1280 : index
    %410 = vector.load %arg15[%c12_616, %c1280_617] : memref<32x1536xbf16, #tpu.memory_space<vmem>>, vector<4x128xbf16>
    tpu.vector_store %arg15[%c12_616, %c1280_617], %409 {strides = array<i32>} : memref<32x1536xbf16, #tpu.memory_space<vmem>>, vector<4x128xbf16>,
    %c1_618 = arith.constant 1 : index
    %c13_619 = arith.constant 13 : index
    %c0_620 = arith.constant 0 : index
    %c0_621 = arith.constant 0 : index
    %411 = vector.load %arg14[%c1_618, %c13_619, %c0_620, %c0_621] : memref<2x20x5x128xbf16, #tpu.memory_space<vmem>>, vector<1x1x4x128xbf16>
    %412 = vector.shape_cast %411 : vector<1x1x4x128xbf16> to vector<4x128xbf16>
    %c16_622 = arith.constant 16 : index
    %c1280_623 = arith.constant 1280 : index
    %413 = vector.load %arg15[%c16_622, %c1280_623] : memref<32x1536xbf16, #tpu.memory_space<vmem>>, vector<4x128xbf16>
    tpu.vector_store %arg15[%c16_622, %c1280_623], %412 {strides = array<i32>} : memref<32x1536xbf16, #tpu.memory_space<vmem>>, vector<4x128xbf16>,
    %c1_624 = arith.constant 1 : index
    %c15_625 = arith.constant 15 : index
    %c0_626 = arith.constant 0 : index
    %c0_627 = arith.constant 0 : index
    %414 = vector.load %arg14[%c1_624, %c15_625, %c0_626, %c0_627] : memref<2x20x5x128xbf16, #tpu.memory_space<vmem>>, vector<1x1x4x128xbf16>
    %415 = vector.shape_cast %414 : vector<1x1x4x128xbf16> to vector<4x128xbf16>
    %c20_628 = arith.constant 20 : index
    %c1280_629 = arith.constant 1280 : index
    %416 = vector.load %arg15[%c20_628, %c1280_629] : memref<32x1536xbf16, #tpu.memory_space<vmem>>, vector<4x128xbf16>
    tpu.vector_store %arg15[%c20_628, %c1280_629], %415 {strides = array<i32>} : memref<32x1536xbf16, #tpu.memory_space<vmem>>, vector<4x128xbf16>,
    %c1_630 = arith.constant 1 : index
    %c17_631 = arith.constant 17 : index
    %c0_632 = arith.constant 0 : index
    %c0_633 = arith.constant 0 : index
    %417 = vector.load %arg14[%c1_630, %c17_631, %c0_632, %c0_633] : memref<2x20x5x128xbf16, #tpu.memory_space<vmem>>, vector<1x1x4x128xbf16>
    %418 = vector.shape_cast %417 : vector<1x1x4x128xbf16> to vector<4x128xbf16>
    %c24_634 = arith.constant 24 : index
    %c1280_635 = arith.constant 1280 : index
    %419 = vector.load %arg15[%c24_634, %c1280_635] : memref<32x1536xbf16, #tpu.memory_space<vmem>>, vector<4x128xbf16>
    tpu.vector_store %arg15[%c24_634, %c1280_635], %418 {strides = array<i32>} : memref<32x1536xbf16, #tpu.memory_space<vmem>>, vector<4x128xbf16>,
    %c1_636 = arith.constant 1 : index
    %c19_637 = arith.constant 19 : index
    %c0_638 = arith.constant 0 : index
    %c0_639 = arith.constant 0 : index
    %420 = vector.load %arg14[%c1_636, %c19_637, %c0_638, %c0_639] : memref<2x20x5x128xbf16, #tpu.memory_space<vmem>>, vector<1x1x4x128xbf16>
    %421 = vector.shape_cast %420 : vector<1x1x4x128xbf16> to vector<4x128xbf16>
    %c28_640 = arith.constant 28 : index
    %c1280_641 = arith.constant 1280 : index
    %422 = vector.load %arg15[%c28_640, %c1280_641] : memref<32x1536xbf16, #tpu.memory_space<vmem>>, vector<4x128xbf16>
    tpu.vector_store %arg15[%c28_640, %c1280_641], %421 {strides = array<i32>} : memref<32x1536xbf16, #tpu.memory_space<vmem>>, vector<4x128xbf16>,
    %c0_642 = arith.constant 0 : index
    %c3_643 = arith.constant 3 : index
    %c1_644 = arith.constant 1 : index
    %c0_645 = arith.constant 0 : index
    %423 = vector.load %arg14[%c0_642, %c3_643, %c1_644, %c0_645] : memref<2x20x5x128xbf16, #tpu.memory_space<vmem>>, vector<1x1x4x128xbf16>
    %424 = vector.shape_cast %423 : vector<1x1x4x128xbf16> to vector<4x128xbf16>
    %c0_646 = arith.constant 0 : index
    %c1408 = arith.constant 1408 : index
    %425 = vector.load %arg15[%c0_646, %c1408] : memref<32x1536xbf16, #tpu.memory_space<vmem>>, vector<4x128xbf16>
    tpu.vector_store %arg15[%c0_646, %c1408], %424 {strides = array<i32>} : memref<32x1536xbf16, #tpu.memory_space<vmem>>, vector<4x128xbf16>,
    %c0_647 = arith.constant 0 : index
    %c5_648 = arith.constant 5 : index
    %c1_649 = arith.constant 1 : index
    %c0_650 = arith.constant 0 : index
    %426 = vector.load %arg14[%c0_647, %c5_648, %c1_649, %c0_650] : memref<2x20x5x128xbf16, #tpu.memory_space<vmem>>, vector<1x1x4x128xbf16>
    %427 = vector.shape_cast %426 : vector<1x1x4x128xbf16> to vector<4x128xbf16>
    %c4_651 = arith.constant 4 : index
    %c1408_652 = arith.constant 1408 : index
    %428 = vector.load %arg15[%c4_651, %c1408_652] : memref<32x1536xbf16, #tpu.memory_space<vmem>>, vector<4x128xbf16>
    tpu.vector_store %arg15[%c4_651, %c1408_652], %427 {strides = array<i32>} : memref<32x1536xbf16, #tpu.memory_space<vmem>>, vector<4x128xbf16>,
    %c0_653 = arith.constant 0 : index
    %c7_654 = arith.constant 7 : index
    %c1_655 = arith.constant 1 : index
    %c0_656 = arith.constant 0 : index
    %429 = vector.load %arg14[%c0_653, %c7_654, %c1_655, %c0_656] : memref<2x20x5x128xbf16, #tpu.memory_space<vmem>>, vector<1x1x4x128xbf16>
    %430 = vector.shape_cast %429 : vector<1x1x4x128xbf16> to vector<4x128xbf16>
    %c8_657 = arith.constant 8 : index
    %c1408_658 = arith.constant 1408 : index
    %431 = vector.load %arg15[%c8_657, %c1408_658] : memref<32x1536xbf16, #tpu.memory_space<vmem>>, vector<4x128xbf16>
    tpu.vector_store %arg15[%c8_657, %c1408_658], %430 {strides = array<i32>} : memref<32x1536xbf16, #tpu.memory_space<vmem>>, vector<4x128xbf16>,
    %c0_659 = arith.constant 0 : index
    %c9_660 = arith.constant 9 : index
    %c1_661 = arith.constant 1 : index
    %c0_662 = arith.constant 0 : index
    %432 = vector.load %arg14[%c0_659, %c9_660, %c1_661, %c0_662] : memref<2x20x5x128xbf16, #tpu.memory_space<vmem>>, vector<1x1x4x128xbf16>
    %433 = vector.shape_cast %432 : vector<1x1x4x128xbf16> to vector<4x128xbf16>
    %c12_663 = arith.constant 12 : index
    %c1408_664 = arith.constant 1408 : index
    %434 = vector.load %arg15[%c12_663, %c1408_664] : memref<32x1536xbf16, #tpu.memory_space<vmem>>, vector<4x128xbf16>
    tpu.vector_store %arg15[%c12_663, %c1408_664], %433 {strides = array<i32>} : memref<32x1536xbf16, #tpu.memory_space<vmem>>, vector<4x128xbf16>,
    %c0_665 = arith.constant 0 : index
    %c13_666 = arith.constant 13 : index
    %c1_667 = arith.constant 1 : index
    %c0_668 = arith.constant 0 : index
    %435 = vector.load %arg14[%c0_665, %c13_666, %c1_667, %c0_668] : memref<2x20x5x128xbf16, #tpu.memory_space<vmem>>, vector<1x1x4x128xbf16>
    %436 = vector.shape_cast %435 : vector<1x1x4x128xbf16> to vector<4x128xbf16>
    %c16_669 = arith.constant 16 : index
    %c1408_670 = arith.constant 1408 : index
    %437 = vector.load %arg15[%c16_669, %c1408_670] : memref<32x1536xbf16, #tpu.memory_space<vmem>>, vector<4x128xbf16>
    tpu.vector_store %arg15[%c16_669, %c1408_670], %436 {strides = array<i32>} : memref<32x1536xbf16, #tpu.memory_space<vmem>>, vector<4x128xbf16>,
    %c0_671 = arith.constant 0 : index
    %c15_672 = arith.constant 15 : index
    %c1_673 = arith.constant 1 : index
    %c0_674 = arith.constant 0 : index
    %438 = vector.load %arg14[%c0_671, %c15_672, %c1_673, %c0_674] : memref<2x20x5x128xbf16, #tpu.memory_space<vmem>>, vector<1x1x4x128xbf16>
    %439 = vector.shape_cast %438 : vector<1x1x4x128xbf16> to vector<4x128xbf16>
    %c20_675 = arith.constant 20 : index
    %c1408_676 = arith.constant 1408 : index
    %440 = vector.load %arg15[%c20_675, %c1408_676] : memref<32x1536xbf16, #tpu.memory_space<vmem>>, vector<4x128xbf16>
    tpu.vector_store %arg15[%c20_675, %c1408_676], %439 {strides = array<i32>} : memref<32x1536xbf16, #tpu.memory_space<vmem>>, vector<4x128xbf16>,
    %c0_677 = arith.constant 0 : index
    %c17_678 = arith.constant 17 : index
    %c1_679 = arith.constant 1 : index
    %c0_680 = arith.constant 0 : index
    %441 = vector.load %arg14[%c0_677, %c17_678, %c1_679, %c0_680] : memref<2x20x5x128xbf16, #tpu.memory_space<vmem>>, vector<1x1x4x128xbf16>
    %442 = vector.shape_cast %441 : vector<1x1x4x128xbf16> to vector<4x128xbf16>
    %c24_681 = arith.constant 24 : index
    %c1408_682 = arith.constant 1408 : index
    %443 = vector.load %arg15[%c24_681, %c1408_682] : memref<32x1536xbf16, #tpu.memory_space<vmem>>, vector<4x128xbf16>
    tpu.vector_store %arg15[%c24_681, %c1408_682], %442 {strides = array<i32>} : memref<32x1536xbf16, #tpu.memory_space<vmem>>, vector<4x128xbf16>,
    %c0_683 = arith.constant 0 : index
    %c19_684 = arith.constant 19 : index
    %c1_685 = arith.constant 1 : index
    %c0_686 = arith.constant 0 : index
    %444 = vector.load %arg14[%c0_683, %c19_684, %c1_685, %c0_686] : memref<2x20x5x128xbf16, #tpu.memory_space<vmem>>, vector<1x1x4x128xbf16>
    %445 = vector.shape_cast %444 : vector<1x1x4x128xbf16> to vector<4x128xbf16>
    %c28_687 = arith.constant 28 : index
    %c1408_688 = arith.constant 1408 : index
    %446 = vector.load %arg15[%c28_687, %c1408_688] : memref<32x1536xbf16, #tpu.memory_space<vmem>>, vector<4x128xbf16>
    tpu.vector_store %arg15[%c28_687, %c1408_688], %445 {strides = array<i32>} : memref<32x1536xbf16, #tpu.memory_space<vmem>>, vector<4x128xbf16>,
    %c0_689 = arith.constant 0 : index
    %c0_690 = arith.constant 0 : index
    %447 = vector.load %arg15[%c0_689, %c0_690] : memref<32x1536xbf16, #tpu.memory_space<vmem>>, vector<32x1536xbf16>
    %c0_691 = arith.constant 0 : index
    %c0_692 = arith.constant 0 : index
    %448 = vector.load %arg5[%c0_691, %c0_692] : memref<1536x128xbf16, #tpu.memory_space<vmem>>, vector<1536x128xbf16>
    %cst_693 = arith.constant dense<0.000000e+00> : vector<32x128xf32>
    %449 = tpu.matmul %447, %448, %cst_693 {dimension_numbers = #tpu.dot_dimension_numbers<[1], [0], [0], [1], [0, 0, 1, 1], [], []>} : vector<32x1536xbf16>, vector<1536x128xbf16>, vector<32x128xf32> -> vector<32x128xf32>
    %c0_694 = arith.constant 0 : index
    %c0_695 = arith.constant 0 : index
    %450 = vector.load %arg6[%c0_694, %c0_695] : memref<1x128xf32, #tpu.memory_space<vmem>>, vector<1x128xf32>
    %c0_696 = arith.constant 0 : index
    %c0_697 = arith.constant 0 : index
    %451 = vector.load %arg7[%c0_696, %c0_697] : memref<1x128xf32, #tpu.memory_space<vmem>>, vector<1x128xf32>
    %cst_698 = arith.constant dense<0.000000e+00> : vector<128xf32>
    %452 = vector.multi_reduction <add>, %449, %cst_698 [0] : vector<32x128xf32> to vector<128xf32>
    %453 = vector.shape_cast %452 : vector<128xf32> to vector<1x128xf32>
    %cst_699 = arith.constant 3.125000e-02 : f32
    %454 = vector.broadcast %cst_699 : f32 to vector<1x128xf32>
    %455 = arith.mulf %453, %454 : vector<1x128xf32>
    %456 = arith.mulf %449, %449 : vector<32x128xf32>
    %cst_700 = arith.constant dense<0.000000e+00> : vector<128xf32>
    %457 = vector.multi_reduction <add>, %456, %cst_700 [0] : vector<32x128xf32> to vector<128xf32>
    %458 = vector.shape_cast %457 : vector<128xf32> to vector<1x128xf32>
    %cst_701 = arith.constant 3.125000e-02 : f32
    %459 = vector.broadcast %cst_701 : f32 to vector<1x128xf32>
    %460 = arith.mulf %458, %459 : vector<1x128xf32>
    %461 = arith.mulf %455, %455 : vector<1x128xf32>
    %462 = arith.subf %460, %461 : vector<1x128xf32>
    %cst_702 = arith.constant 9.99999974E-6 : f32
    %463 = vector.broadcast %cst_702 : f32 to vector<1x128xf32>
    %464 = arith.addf %462, %463 : vector<1x128xf32>
    %465 = math.rsqrt %464 : vector<1x128xf32>
    %466 = arith.mulf %450, %465 : vector<1x128xf32>
    %467 = arith.mulf %455, %466 : vector<1x128xf32>
    %468 = arith.subf %451, %467 : vector<1x128xf32>
    %469 = vector.broadcast %466 : vector<1x128xf32> to vector<32x128xf32>
    %470 = arith.mulf %449, %469 : vector<32x128xf32>
    %471 = vector.broadcast %468 : vector<1x128xf32> to vector<32x128xf32>
    %472 = arith.addf %470, %471 : vector<32x128xf32>
    %cst_703 = arith.constant 0.000000e+00 : f32
    %473 = vector.broadcast %cst_703 : f32 to vector<32x128xf32>
    %474 = arith.maximumf %472, %473 : vector<32x128xf32>
    %475 = arith.truncf %474 : vector<32x128xf32> to vector<32x128xbf16>
    %cst_704 = arith.constant 0.000000e+00 : bf16
    %476 = vector.broadcast %cst_704 : bf16 to vector<12x6x128xbf16>
    %c0_705 = arith.constant 0 : index
    %c0_706 = arith.constant 0 : index
    %c0_707 = arith.constant 0 : index
    %477 = vector.load %arg16[%c0_705, %c0_706, %c0_707] : memref<12x6x128xbf16, #tpu.memory_space<vmem>>, vector<12x6x128xbf16>
    tpu.vector_store %arg16[%c0_705, %c0_706, %c0_707], %476 {strides = array<i32>} : memref<12x6x128xbf16, #tpu.memory_space<vmem>>, vector<12x6x128xbf16>,
    %478 = vector.extract_strided_slice %475 {offsets = [0, 0], sizes = [4, 128], strides = [1, 1]} : vector<32x128xbf16> to vector<4x128xbf16>
    %c1_708 = arith.constant 1 : index
    %c1_709 = arith.constant 1 : index
    %c0_710 = arith.constant 0 : index
    %479 = vector.load %arg16[%c1_708, %c1_709, %c0_710] : memref<12x6x128xbf16, #tpu.memory_space<vmem>>, vector<1x4x128xbf16>
    %480 = vector.shape_cast %479 : vector<1x4x128xbf16> to vector<4x128xbf16>
    %481 = vector.shape_cast %478 : vector<4x128xbf16> to vector<1x4x128xbf16>
    tpu.vector_store %arg16[%c1_708, %c1_709, %c0_710], %481 {strides = array<i32>} : memref<12x6x128xbf16, #tpu.memory_space<vmem>>, vector<1x4x128xbf16>,
    %482 = vector.extract_strided_slice %475 {offsets = [4, 0], sizes = [4, 128], strides = [1, 1]} : vector<32x128xbf16> to vector<4x128xbf16>
    %c2_711 = arith.constant 2 : index
    %c1_712 = arith.constant 1 : index
    %c0_713 = arith.constant 0 : index
    %483 = vector.load %arg16[%c2_711, %c1_712, %c0_713] : memref<12x6x128xbf16, #tpu.memory_space<vmem>>, vector<1x4x128xbf16>
    %484 = vector.shape_cast %483 : vector<1x4x128xbf16> to vector<4x128xbf16>
    %485 = vector.shape_cast %482 : vector<4x128xbf16> to vector<1x4x128xbf16>
    tpu.vector_store %arg16[%c2_711, %c1_712, %c0_713], %485 {strides = array<i32>} : memref<12x6x128xbf16, #tpu.memory_space<vmem>>, vector<1x4x128xbf16>,
    %486 = vector.extract_strided_slice %475 {offsets = [8, 0], sizes = [4, 128], strides = [1, 1]} : vector<32x128xbf16> to vector<4x128xbf16>
    %c3_714 = arith.constant 3 : index
    %c1_715 = arith.constant 1 : index
    %c0_716 = arith.constant 0 : index
    %487 = vector.load %arg16[%c3_714, %c1_715, %c0_716] : memref<12x6x128xbf16, #tpu.memory_space<vmem>>, vector<1x4x128xbf16>
    %488 = vector.shape_cast %487 : vector<1x4x128xbf16> to vector<4x128xbf16>
    %489 = vector.shape_cast %486 : vector<4x128xbf16> to vector<1x4x128xbf16>
    tpu.vector_store %arg16[%c3_714, %c1_715, %c0_716], %489 {strides = array<i32>} : memref<12x6x128xbf16, #tpu.memory_space<vmem>>, vector<1x4x128xbf16>,
    %490 = vector.extract_strided_slice %475 {offsets = [12, 0], sizes = [4, 128], strides = [1, 1]} : vector<32x128xbf16> to vector<4x128xbf16>
    %c4_717 = arith.constant 4 : index
    %c1_718 = arith.constant 1 : index
    %c0_719 = arith.constant 0 : index
    %491 = vector.load %arg16[%c4_717, %c1_718, %c0_719] : memref<12x6x128xbf16, #tpu.memory_space<vmem>>, vector<1x4x128xbf16>
    %492 = vector.shape_cast %491 : vector<1x4x128xbf16> to vector<4x128xbf16>
    %493 = vector.shape_cast %490 : vector<4x128xbf16> to vector<1x4x128xbf16>
    tpu.vector_store %arg16[%c4_717, %c1_718, %c0_719], %493 {strides = array<i32>} : memref<12x6x128xbf16, #tpu.memory_space<vmem>>, vector<1x4x128xbf16>,
    %494 = vector.extract_strided_slice %475 {offsets = [16, 0], sizes = [4, 128], strides = [1, 1]} : vector<32x128xbf16> to vector<4x128xbf16>
    %c7_720 = arith.constant 7 : index
    %c1_721 = arith.constant 1 : index
    %c0_722 = arith.constant 0 : index
    %495 = vector.load %arg16[%c7_720, %c1_721, %c0_722] : memref<12x6x128xbf16, #tpu.memory_space<vmem>>, vector<1x4x128xbf16>
    %496 = vector.shape_cast %495 : vector<1x4x128xbf16> to vector<4x128xbf16>
    %497 = vector.shape_cast %494 : vector<4x128xbf16> to vector<1x4x128xbf16>
    tpu.vector_store %arg16[%c7_720, %c1_721, %c0_722], %497 {strides = array<i32>} : memref<12x6x128xbf16, #tpu.memory_space<vmem>>, vector<1x4x128xbf16>,
    %498 = vector.extract_strided_slice %475 {offsets = [20, 0], sizes = [4, 128], strides = [1, 1]} : vector<32x128xbf16> to vector<4x128xbf16>
    %c8_723 = arith.constant 8 : index
    %c1_724 = arith.constant 1 : index
    %c0_725 = arith.constant 0 : index
    %499 = vector.load %arg16[%c8_723, %c1_724, %c0_725] : memref<12x6x128xbf16, #tpu.memory_space<vmem>>, vector<1x4x128xbf16>
    %500 = vector.shape_cast %499 : vector<1x4x128xbf16> to vector<4x128xbf16>
    %501 = vector.shape_cast %498 : vector<4x128xbf16> to vector<1x4x128xbf16>
    tpu.vector_store %arg16[%c8_723, %c1_724, %c0_725], %501 {strides = array<i32>} : memref<12x6x128xbf16, #tpu.memory_space<vmem>>, vector<1x4x128xbf16>,
    %502 = vector.extract_strided_slice %475 {offsets = [24, 0], sizes = [4, 128], strides = [1, 1]} : vector<32x128xbf16> to vector<4x128xbf16>
    %c9_726 = arith.constant 9 : index
    %c1_727 = arith.constant 1 : index
    %c0_728 = arith.constant 0 : index
    %503 = vector.load %arg16[%c9_726, %c1_727, %c0_728] : memref<12x6x128xbf16, #tpu.memory_space<vmem>>, vector<1x4x128xbf16>
    %504 = vector.shape_cast %503 : vector<1x4x128xbf16> to vector<4x128xbf16>
    %505 = vector.shape_cast %502 : vector<4x128xbf16> to vector<1x4x128xbf16>
    tpu.vector_store %arg16[%c9_726, %c1_727, %c0_728], %505 {strides = array<i32>} : memref<12x6x128xbf16, #tpu.memory_space<vmem>>, vector<1x4x128xbf16>,
    %506 = vector.extract_strided_slice %475 {offsets = [28, 0], sizes = [4, 128], strides = [1, 1]} : vector<32x128xbf16> to vector<4x128xbf16>
    %c10_729 = arith.constant 10 : index
    %c1_730 = arith.constant 1 : index
    %c0_731 = arith.constant 0 : index
    %507 = vector.load %arg16[%c10_729, %c1_730, %c0_731] : memref<12x6x128xbf16, #tpu.memory_space<vmem>>, vector<1x4x128xbf16>
    %508 = vector.shape_cast %507 : vector<1x4x128xbf16> to vector<4x128xbf16>
    %509 = vector.shape_cast %506 : vector<4x128xbf16> to vector<1x4x128xbf16>
    tpu.vector_store %arg16[%c10_729, %c1_730, %c0_731], %509 {strides = array<i32>} : memref<12x6x128xbf16, #tpu.memory_space<vmem>>, vector<1x4x128xbf16>,
    %c0_732 = arith.constant 0 : index
    %c0_733 = arith.constant 0 : index
    %c0_734 = arith.constant 0 : index
    %510 = vector.load %arg16[%c0_732, %c0_733, %c0_734] : memref<12x6x128xbf16, #tpu.memory_space<vmem>>, vector<1x4x128xbf16>
    %511 = vector.shape_cast %510 : vector<1x4x128xbf16> to vector<4x128xbf16>
    %c0_735 = arith.constant 0 : index
    %c0_736 = arith.constant 0 : index
    %512 = vector.load %arg17[%c0_735, %c0_736] : memref<32x1152xbf16, #tpu.memory_space<vmem>>, vector<4x128xbf16>
    tpu.vector_store %arg17[%c0_735, %c0_736], %511 {strides = array<i32>} : memref<32x1152xbf16, #tpu.memory_space<vmem>>, vector<4x128xbf16>,
    %c1_737 = arith.constant 1 : index
    %c0_738 = arith.constant 0 : index
    %c0_739 = arith.constant 0 : index
    %513 = vector.load %arg16[%c1_737, %c0_738, %c0_739] : memref<12x6x128xbf16, #tpu.memory_space<vmem>>, vector<1x4x128xbf16>
    %514 = vector.shape_cast %513 : vector<1x4x128xbf16> to vector<4x128xbf16>
    %c4_740 = arith.constant 4 : index
    %c0_741 = arith.constant 0 : index
    %515 = vector.load %arg17[%c4_740, %c0_741] : memref<32x1152xbf16, #tpu.memory_space<vmem>>, vector<4x128xbf16>
    tpu.vector_store %arg17[%c4_740, %c0_741], %514 {strides = array<i32>} : memref<32x1152xbf16, #tpu.memory_space<vmem>>, vector<4x128xbf16>,
    %c2_742 = arith.constant 2 : index
    %c0_743 = arith.constant 0 : index
    %c0_744 = arith.constant 0 : index
    %516 = vector.load %arg16[%c2_742, %c0_743, %c0_744] : memref<12x6x128xbf16, #tpu.memory_space<vmem>>, vector<1x4x128xbf16>
    %517 = vector.shape_cast %516 : vector<1x4x128xbf16> to vector<4x128xbf16>
    %c8_745 = arith.constant 8 : index
    %c0_746 = arith.constant 0 : index
    %518 = vector.load %arg17[%c8_745, %c0_746] : memref<32x1152xbf16, #tpu.memory_space<vmem>>, vector<4x128xbf16>
    tpu.vector_store %arg17[%c8_745, %c0_746], %517 {strides = array<i32>} : memref<32x1152xbf16, #tpu.memory_space<vmem>>, vector<4x128xbf16>,
    %c3_747 = arith.constant 3 : index
    %c0_748 = arith.constant 0 : index
    %c0_749 = arith.constant 0 : index
    %519 = vector.load %arg16[%c3_747, %c0_748, %c0_749] : memref<12x6x128xbf16, #tpu.memory_space<vmem>>, vector<1x4x128xbf16>
    %520 = vector.shape_cast %519 : vector<1x4x128xbf16> to vector<4x128xbf16>
    %c12_750 = arith.constant 12 : index
    %c0_751 = arith.constant 0 : index
    %521 = vector.load %arg17[%c12_750, %c0_751] : memref<32x1152xbf16, #tpu.memory_space<vmem>>, vector<4x128xbf16>
    tpu.vector_store %arg17[%c12_750, %c0_751], %520 {strides = array<i32>} : memref<32x1152xbf16, #tpu.memory_space<vmem>>, vector<4x128xbf16>,
    %c6_752 = arith.constant 6 : index
    %c0_753 = arith.constant 0 : index
    %c0_754 = arith.constant 0 : index
    %522 = vector.load %arg16[%c6_752, %c0_753, %c0_754] : memref<12x6x128xbf16, #tpu.memory_space<vmem>>, vector<1x4x128xbf16>
    %523 = vector.shape_cast %522 : vector<1x4x128xbf16> to vector<4x128xbf16>
    %c16_755 = arith.constant 16 : index
    %c0_756 = arith.constant 0 : index
    %524 = vector.load %arg17[%c16_755, %c0_756] : memref<32x1152xbf16, #tpu.memory_space<vmem>>, vector<4x128xbf16>
    tpu.vector_store %arg17[%c16_755, %c0_756], %523 {strides = array<i32>} : memref<32x1152xbf16, #tpu.memory_space<vmem>>, vector<4x128xbf16>,
    %c7_757 = arith.constant 7 : index
    %c0_758 = arith.constant 0 : index
    %c0_759 = arith.constant 0 : index
    %525 = vector.load %arg16[%c7_757, %c0_758, %c0_759] : memref<12x6x128xbf16, #tpu.memory_space<vmem>>, vector<1x4x128xbf16>
    %526 = vector.shape_cast %525 : vector<1x4x128xbf16> to vector<4x128xbf16>
    %c20_760 = arith.constant 20 : index
    %c0_761 = arith.constant 0 : index
    %527 = vector.load %arg17[%c20_760, %c0_761] : memref<32x1152xbf16, #tpu.memory_space<vmem>>, vector<4x128xbf16>
    tpu.vector_store %arg17[%c20_760, %c0_761], %526 {strides = array<i32>} : memref<32x1152xbf16, #tpu.memory_space<vmem>>, vector<4x128xbf16>,
    %c8_762 = arith.constant 8 : index
    %c0_763 = arith.constant 0 : index
    %c0_764 = arith.constant 0 : index
    %528 = vector.load %arg16[%c8_762, %c0_763, %c0_764] : memref<12x6x128xbf16, #tpu.memory_space<vmem>>, vector<1x4x128xbf16>
    %529 = vector.shape_cast %528 : vector<1x4x128xbf16> to vector<4x128xbf16>
    %c24_765 = arith.constant 24 : index
    %c0_766 = arith.constant 0 : index
    %530 = vector.load %arg17[%c24_765, %c0_766] : memref<32x1152xbf16, #tpu.memory_space<vmem>>, vector<4x128xbf16>
    tpu.vector_store %arg17[%c24_765, %c0_766], %529 {strides = array<i32>} : memref<32x1152xbf16, #tpu.memory_space<vmem>>, vector<4x128xbf16>,
    %c9_767 = arith.constant 9 : index
    %c0_768 = arith.constant 0 : index
    %c0_769 = arith.constant 0 : index
    %531 = vector.load %arg16[%c9_767, %c0_768, %c0_769] : memref<12x6x128xbf16, #tpu.memory_space<vmem>>, vector<1x4x128xbf16>
    %532 = vector.shape_cast %531 : vector<1x4x128xbf16> to vector<4x128xbf16>
    %c28_770 = arith.constant 28 : index
    %c0_771 = arith.constant 0 : index
    %533 = vector.load %arg17[%c28_770, %c0_771] : memref<32x1152xbf16, #tpu.memory_space<vmem>>, vector<4x128xbf16>
    tpu.vector_store %arg17[%c28_770, %c0_771], %532 {strides = array<i32>} : memref<32x1152xbf16, #tpu.memory_space<vmem>>, vector<4x128xbf16>,
    %c0_772 = arith.constant 0 : index
    %c1_773 = arith.constant 1 : index
    %c0_774 = arith.constant 0 : index
    %534 = vector.load %arg16[%c0_772, %c1_773, %c0_774] : memref<12x6x128xbf16, #tpu.memory_space<vmem>>, vector<1x4x128xbf16>
    %535 = vector.shape_cast %534 : vector<1x4x128xbf16> to vector<4x128xbf16>
    %c0_775 = arith.constant 0 : index
    %c128_776 = arith.constant 128 : index
    %536 = vector.load %arg17[%c0_775, %c128_776] : memref<32x1152xbf16, #tpu.memory_space<vmem>>, vector<4x128xbf16>
    tpu.vector_store %arg17[%c0_775, %c128_776], %535 {strides = array<i32>} : memref<32x1152xbf16, #tpu.memory_space<vmem>>, vector<4x128xbf16>,
    %c1_777 = arith.constant 1 : index
    %c1_778 = arith.constant 1 : index
    %c0_779 = arith.constant 0 : index
    %537 = vector.load %arg16[%c1_777, %c1_778, %c0_779] : memref<12x6x128xbf16, #tpu.memory_space<vmem>>, vector<1x4x128xbf16>
    %538 = vector.shape_cast %537 : vector<1x4x128xbf16> to vector<4x128xbf16>
    %c4_780 = arith.constant 4 : index
    %c128_781 = arith.constant 128 : index
    %539 = vector.load %arg17[%c4_780, %c128_781] : memref<32x1152xbf16, #tpu.memory_space<vmem>>, vector<4x128xbf16>
    tpu.vector_store %arg17[%c4_780, %c128_781], %538 {strides = array<i32>} : memref<32x1152xbf16, #tpu.memory_space<vmem>>, vector<4x128xbf16>,
    %c2_782 = arith.constant 2 : index
    %c1_783 = arith.constant 1 : index
    %c0_784 = arith.constant 0 : index
    %540 = vector.load %arg16[%c2_782, %c1_783, %c0_784] : memref<12x6x128xbf16, #tpu.memory_space<vmem>>, vector<1x4x128xbf16>
    %541 = vector.shape_cast %540 : vector<1x4x128xbf16> to vector<4x128xbf16>
    %c8_785 = arith.constant 8 : index
    %c128_786 = arith.constant 128 : index
    %542 = vector.load %arg17[%c8_785, %c128_786] : memref<32x1152xbf16, #tpu.memory_space<vmem>>, vector<4x128xbf16>
    tpu.vector_store %arg17[%c8_785, %c128_786], %541 {strides = array<i32>} : memref<32x1152xbf16, #tpu.memory_space<vmem>>, vector<4x128xbf16>,
    %c3_787 = arith.constant 3 : index
    %c1_788 = arith.constant 1 : index
    %c0_789 = arith.constant 0 : index
    %543 = vector.load %arg16[%c3_787, %c1_788, %c0_789] : memref<12x6x128xbf16, #tpu.memory_space<vmem>>, vector<1x4x128xbf16>
    %544 = vector.shape_cast %543 : vector<1x4x128xbf16> to vector<4x128xbf16>
    %c12_790 = arith.constant 12 : index
    %c128_791 = arith.constant 128 : index
    %545 = vector.load %arg17[%c12_790, %c128_791] : memref<32x1152xbf16, #tpu.memory_space<vmem>>, vector<4x128xbf16>
    tpu.vector_store %arg17[%c12_790, %c128_791], %544 {strides = array<i32>} : memref<32x1152xbf16, #tpu.memory_space<vmem>>, vector<4x128xbf16>,
    %c6_792 = arith.constant 6 : index
    %c1_793 = arith.constant 1 : index
    %c0_794 = arith.constant 0 : index
    %546 = vector.load %arg16[%c6_792, %c1_793, %c0_794] : memref<12x6x128xbf16, #tpu.memory_space<vmem>>, vector<1x4x128xbf16>
    %547 = vector.shape_cast %546 : vector<1x4x128xbf16> to vector<4x128xbf16>
    %c16_795 = arith.constant 16 : index
    %c128_796 = arith.constant 128 : index
    %548 = vector.load %arg17[%c16_795, %c128_796] : memref<32x1152xbf16, #tpu.memory_space<vmem>>, vector<4x128xbf16>
    tpu.vector_store %arg17[%c16_795, %c128_796], %547 {strides = array<i32>} : memref<32x1152xbf16, #tpu.memory_space<vmem>>, vector<4x128xbf16>,
    %c7_797 = arith.constant 7 : index
    %c1_798 = arith.constant 1 : index
    %c0_799 = arith.constant 0 : index
    %549 = vector.load %arg16[%c7_797, %c1_798, %c0_799] : memref<12x6x128xbf16, #tpu.memory_space<vmem>>, vector<1x4x128xbf16>
    %550 = vector.shape_cast %549 : vector<1x4x128xbf16> to vector<4x128xbf16>
    %c20_800 = arith.constant 20 : index
    %c128_801 = arith.constant 128 : index
    %551 = vector.load %arg17[%c20_800, %c128_801] : memref<32x1152xbf16, #tpu.memory_space<vmem>>, vector<4x128xbf16>
    tpu.vector_store %arg17[%c20_800, %c128_801], %550 {strides = array<i32>} : memref<32x1152xbf16, #tpu.memory_space<vmem>>, vector<4x128xbf16>,
    %c8_802 = arith.constant 8 : index
    %c1_803 = arith.constant 1 : index
    %c0_804 = arith.constant 0 : index
    %552 = vector.load %arg16[%c8_802, %c1_803, %c0_804] : memref<12x6x128xbf16, #tpu.memory_space<vmem>>, vector<1x4x128xbf16>
    %553 = vector.shape_cast %552 : vector<1x4x128xbf16> to vector<4x128xbf16>
    %c24_805 = arith.constant 24 : index
    %c128_806 = arith.constant 128 : index
    %554 = vector.load %arg17[%c24_805, %c128_806] : memref<32x1152xbf16, #tpu.memory_space<vmem>>, vector<4x128xbf16>
    tpu.vector_store %arg17[%c24_805, %c128_806], %553 {strides = array<i32>} : memref<32x1152xbf16, #tpu.memory_space<vmem>>, vector<4x128xbf16>,
    %c9_807 = arith.constant 9 : index
    %c1_808 = arith.constant 1 : index
    %c0_809 = arith.constant 0 : index
    %555 = vector.load %arg16[%c9_807, %c1_808, %c0_809] : memref<12x6x128xbf16, #tpu.memory_space<vmem>>, vector<1x4x128xbf16>
    %556 = vector.shape_cast %555 : vector<1x4x128xbf16> to vector<4x128xbf16>
    %c28_810 = arith.constant 28 : index
    %c128_811 = arith.constant 128 : index
    %557 = vector.load %arg17[%c28_810, %c128_811] : memref<32x1152xbf16, #tpu.memory_space<vmem>>, vector<4x128xbf16>
    tpu.vector_store %arg17[%c28_810, %c128_811], %556 {strides = array<i32>} : memref<32x1152xbf16, #tpu.memory_space<vmem>>, vector<4x128xbf16>,
    %c0_812 = arith.constant 0 : index
    %c2_813 = arith.constant 2 : index
    %c0_814 = arith.constant 0 : index
    %558 = vector.load %arg16[%c0_812, %c2_813, %c0_814] : memref<12x6x128xbf16, #tpu.memory_space<vmem>>, vector<1x4x128xbf16>
    %559 = vector.shape_cast %558 : vector<1x4x128xbf16> to vector<4x128xbf16>
    %c0_815 = arith.constant 0 : index
    %c256_816 = arith.constant 256 : index
    %560 = vector.load %arg17[%c0_815, %c256_816] : memref<32x1152xbf16, #tpu.memory_space<vmem>>, vector<4x128xbf16>
    tpu.vector_store %arg17[%c0_815, %c256_816], %559 {strides = array<i32>} : memref<32x1152xbf16, #tpu.memory_space<vmem>>, vector<4x128xbf16>,
    %c1_817 = arith.constant 1 : index
    %c2_818 = arith.constant 2 : index
    %c0_819 = arith.constant 0 : index
    %561 = vector.load %arg16[%c1_817, %c2_818, %c0_819] : memref<12x6x128xbf16, #tpu.memory_space<vmem>>, vector<1x4x128xbf16>
    %562 = vector.shape_cast %561 : vector<1x4x128xbf16> to vector<4x128xbf16>
    %c4_820 = arith.constant 4 : index
    %c256_821 = arith.constant 256 : index
    %563 = vector.load %arg17[%c4_820, %c256_821] : memref<32x1152xbf16, #tpu.memory_space<vmem>>, vector<4x128xbf16>
    tpu.vector_store %arg17[%c4_820, %c256_821], %562 {strides = array<i32>} : memref<32x1152xbf16, #tpu.memory_space<vmem>>, vector<4x128xbf16>,
    %c2_822 = arith.constant 2 : index
    %c2_823 = arith.constant 2 : index
    %c0_824 = arith.constant 0 : index
    %564 = vector.load %arg16[%c2_822, %c2_823, %c0_824] : memref<12x6x128xbf16, #tpu.memory_space<vmem>>, vector<1x4x128xbf16>
    %565 = vector.shape_cast %564 : vector<1x4x128xbf16> to vector<4x128xbf16>
    %c8_825 = arith.constant 8 : index
    %c256_826 = arith.constant 256 : index
    %566 = vector.load %arg17[%c8_825, %c256_826] : memref<32x1152xbf16, #tpu.memory_space<vmem>>, vector<4x128xbf16>
    tpu.vector_store %arg17[%c8_825, %c256_826], %565 {strides = array<i32>} : memref<32x1152xbf16, #tpu.memory_space<vmem>>, vector<4x128xbf16>,
    %c3_827 = arith.constant 3 : index
    %c2_828 = arith.constant 2 : index
    %c0_829 = arith.constant 0 : index
    %567 = vector.load %arg16[%c3_827, %c2_828, %c0_829] : memref<12x6x128xbf16, #tpu.memory_space<vmem>>, vector<1x4x128xbf16>
    %568 = vector.shape_cast %567 : vector<1x4x128xbf16> to vector<4x128xbf16>
    %c12_830 = arith.constant 12 : index
    %c256_831 = arith.constant 256 : index
    %569 = vector.load %arg17[%c12_830, %c256_831] : memref<32x1152xbf16, #tpu.memory_space<vmem>>, vector<4x128xbf16>
    tpu.vector_store %arg17[%c12_830, %c256_831], %568 {strides = array<i32>} : memref<32x1152xbf16, #tpu.memory_space<vmem>>, vector<4x128xbf16>,
    %c6_832 = arith.constant 6 : index
    %c2_833 = arith.constant 2 : index
    %c0_834 = arith.constant 0 : index
    %570 = vector.load %arg16[%c6_832, %c2_833, %c0_834] : memref<12x6x128xbf16, #tpu.memory_space<vmem>>, vector<1x4x128xbf16>
    %571 = vector.shape_cast %570 : vector<1x4x128xbf16> to vector<4x128xbf16>
    %c16_835 = arith.constant 16 : index
    %c256_836 = arith.constant 256 : index
    %572 = vector.load %arg17[%c16_835, %c256_836] : memref<32x1152xbf16, #tpu.memory_space<vmem>>, vector<4x128xbf16>
    tpu.vector_store %arg17[%c16_835, %c256_836], %571 {strides = array<i32>} : memref<32x1152xbf16, #tpu.memory_space<vmem>>, vector<4x128xbf16>,
    %c7_837 = arith.constant 7 : index
    %c2_838 = arith.constant 2 : index
    %c0_839 = arith.constant 0 : index
    %573 = vector.load %arg16[%c7_837, %c2_838, %c0_839] : memref<12x6x128xbf16, #tpu.memory_space<vmem>>, vector<1x4x128xbf16>
    %574 = vector.shape_cast %573 : vector<1x4x128xbf16> to vector<4x128xbf16>
    %c20_840 = arith.constant 20 : index
    %c256_841 = arith.constant 256 : index
    %575 = vector.load %arg17[%c20_840, %c256_841] : memref<32x1152xbf16, #tpu.memory_space<vmem>>, vector<4x128xbf16>
    tpu.vector_store %arg17[%c20_840, %c256_841], %574 {strides = array<i32>} : memref<32x1152xbf16, #tpu.memory_space<vmem>>, vector<4x128xbf16>,
    %c8_842 = arith.constant 8 : index
    %c2_843 = arith.constant 2 : index
    %c0_844 = arith.constant 0 : index
    %576 = vector.load %arg16[%c8_842, %c2_843, %c0_844] : memref<12x6x128xbf16, #tpu.memory_space<vmem>>, vector<1x4x128xbf16>
    %577 = vector.shape_cast %576 : vector<1x4x128xbf16> to vector<4x128xbf16>
    %c24_845 = arith.constant 24 : index
    %c256_846 = arith.constant 256 : index
    %578 = vector.load %arg17[%c24_845, %c256_846] : memref<32x1152xbf16, #tpu.memory_space<vmem>>, vector<4x128xbf16>
    tpu.vector_store %arg17[%c24_845, %c256_846], %577 {strides = array<i32>} : memref<32x1152xbf16, #tpu.memory_space<vmem>>, vector<4x128xbf16>,
    %c9_847 = arith.constant 9 : index
    %c2_848 = arith.constant 2 : index
    %c0_849 = arith.constant 0 : index
    %579 = vector.load %arg16[%c9_847, %c2_848, %c0_849] : memref<12x6x128xbf16, #tpu.memory_space<vmem>>, vector<1x4x128xbf16>
    %580 = vector.shape_cast %579 : vector<1x4x128xbf16> to vector<4x128xbf16>
    %c28_850 = arith.constant 28 : index
    %c256_851 = arith.constant 256 : index
    %581 = vector.load %arg17[%c28_850, %c256_851] : memref<32x1152xbf16, #tpu.memory_space<vmem>>, vector<4x128xbf16>
    tpu.vector_store %arg17[%c28_850, %c256_851], %580 {strides = array<i32>} : memref<32x1152xbf16, #tpu.memory_space<vmem>>, vector<4x128xbf16>,
    %c1_852 = arith.constant 1 : index
    %c0_853 = arith.constant 0 : index
    %c0_854 = arith.constant 0 : index
    %582 = vector.load %arg16[%c1_852, %c0_853, %c0_854] : memref<12x6x128xbf16, #tpu.memory_space<vmem>>, vector<1x4x128xbf16>
    %583 = vector.shape_cast %582 : vector<1x4x128xbf16> to vector<4x128xbf16>
    %c0_855 = arith.constant 0 : index
    %c384_856 = arith.constant 384 : index
    %584 = vector.load %arg17[%c0_855, %c384_856] : memref<32x1152xbf16, #tpu.memory_space<vmem>>, vector<4x128xbf16>
    tpu.vector_store %arg17[%c0_855, %c384_856], %583 {strides = array<i32>} : memref<32x1152xbf16, #tpu.memory_space<vmem>>, vector<4x128xbf16>,
    %c2_857 = arith.constant 2 : index
    %c0_858 = arith.constant 0 : index
    %c0_859 = arith.constant 0 : index
    %585 = vector.load %arg16[%c2_857, %c0_858, %c0_859] : memref<12x6x128xbf16, #tpu.memory_space<vmem>>, vector<1x4x128xbf16>
    %586 = vector.shape_cast %585 : vector<1x4x128xbf16> to vector<4x128xbf16>
    %c4_860 = arith.constant 4 : index
    %c384_861 = arith.constant 384 : index
    %587 = vector.load %arg17[%c4_860, %c384_861] : memref<32x1152xbf16, #tpu.memory_space<vmem>>, vector<4x128xbf16>
    tpu.vector_store %arg17[%c4_860, %c384_861], %586 {strides = array<i32>} : memref<32x1152xbf16, #tpu.memory_space<vmem>>, vector<4x128xbf16>,
    %c3_862 = arith.constant 3 : index
    %c0_863 = arith.constant 0 : index
    %c0_864 = arith.constant 0 : index
    %588 = vector.load %arg16[%c3_862, %c0_863, %c0_864] : memref<12x6x128xbf16, #tpu.memory_space<vmem>>, vector<1x4x128xbf16>
    %589 = vector.shape_cast %588 : vector<1x4x128xbf16> to vector<4x128xbf16>
    %c8_865 = arith.constant 8 : index
    %c384_866 = arith.constant 384 : index
    %590 = vector.load %arg17[%c8_865, %c384_866] : memref<32x1152xbf16, #tpu.memory_space<vmem>>, vector<4x128xbf16>
    tpu.vector_store %arg17[%c8_865, %c384_866], %589 {strides = array<i32>} : memref<32x1152xbf16, #tpu.memory_space<vmem>>, vector<4x128xbf16>,
    %c4_867 = arith.constant 4 : index
    %c0_868 = arith.constant 0 : index
    %c0_869 = arith.constant 0 : index
    %591 = vector.load %arg16[%c4_867, %c0_868, %c0_869] : memref<12x6x128xbf16, #tpu.memory_space<vmem>>, vector<1x4x128xbf16>
    %592 = vector.shape_cast %591 : vector<1x4x128xbf16> to vector<4x128xbf16>
    %c12_870 = arith.constant 12 : index
    %c384_871 = arith.constant 384 : index
    %593 = vector.load %arg17[%c12_870, %c384_871] : memref<32x1152xbf16, #tpu.memory_space<vmem>>, vector<4x128xbf16>
    tpu.vector_store %arg17[%c12_870, %c384_871], %592 {strides = array<i32>} : memref<32x1152xbf16, #tpu.memory_space<vmem>>, vector<4x128xbf16>,
    %c7_872 = arith.constant 7 : index
    %c0_873 = arith.constant 0 : index
    %c0_874 = arith.constant 0 : index
    %594 = vector.load %arg16[%c7_872, %c0_873, %c0_874] : memref<12x6x128xbf16, #tpu.memory_space<vmem>>, vector<1x4x128xbf16>
    %595 = vector.shape_cast %594 : vector<1x4x128xbf16> to vector<4x128xbf16>
    %c16_875 = arith.constant 16 : index
    %c384_876 = arith.constant 384 : index
    %596 = vector.load %arg17[%c16_875, %c384_876] : memref<32x1152xbf16, #tpu.memory_space<vmem>>, vector<4x128xbf16>
    tpu.vector_store %arg17[%c16_875, %c384_876], %595 {strides = array<i32>} : memref<32x1152xbf16, #tpu.memory_space<vmem>>, vector<4x128xbf16>,
    %c8_877 = arith.constant 8 : index
    %c0_878 = arith.constant 0 : index
    %c0_879 = arith.constant 0 : index
    %597 = vector.load %arg16[%c8_877, %c0_878, %c0_879] : memref<12x6x128xbf16, #tpu.memory_space<vmem>>, vector<1x4x128xbf16>
    %598 = vector.shape_cast %597 : vector<1x4x128xbf16> to vector<4x128xbf16>
    %c20_880 = arith.constant 20 : index
    %c384_881 = arith.constant 384 : index
    %599 = vector.load %arg17[%c20_880, %c384_881] : memref<32x1152xbf16, #tpu.memory_space<vmem>>, vector<4x128xbf16>
    tpu.vector_store %arg17[%c20_880, %c384_881], %598 {strides = array<i32>} : memref<32x1152xbf16, #tpu.memory_space<vmem>>, vector<4x128xbf16>,
    %c9_882 = arith.constant 9 : index
    %c0_883 = arith.constant 0 : index
    %c0_884 = arith.constant 0 : index
    %600 = vector.load %arg16[%c9_882, %c0_883, %c0_884] : memref<12x6x128xbf16, #tpu.memory_space<vmem>>, vector<1x4x128xbf16>
    %601 = vector.shape_cast %600 : vector<1x4x128xbf16> to vector<4x128xbf16>
    %c24_885 = arith.constant 24 : index
    %c384_886 = arith.constant 384 : index
    %602 = vector.load %arg17[%c24_885, %c384_886] : memref<32x1152xbf16, #tpu.memory_space<vmem>>, vector<4x128xbf16>
    tpu.vector_store %arg17[%c24_885, %c384_886], %601 {strides = array<i32>} : memref<32x1152xbf16, #tpu.memory_space<vmem>>, vector<4x128xbf16>,
    %c10_887 = arith.constant 10 : index
    %c0_888 = arith.constant 0 : index
    %c0_889 = arith.constant 0 : index
    %603 = vector.load %arg16[%c10_887, %c0_888, %c0_889] : memref<12x6x128xbf16, #tpu.memory_space<vmem>>, vector<1x4x128xbf16>
    %604 = vector.shape_cast %603 : vector<1x4x128xbf16> to vector<4x128xbf16>
    %c28_890 = arith.constant 28 : index
    %c384_891 = arith.constant 384 : index
    %605 = vector.load %arg17[%c28_890, %c384_891] : memref<32x1152xbf16, #tpu.memory_space<vmem>>, vector<4x128xbf16>
    tpu.vector_store %arg17[%c28_890, %c384_891], %604 {strides = array<i32>} : memref<32x1152xbf16, #tpu.memory_space<vmem>>, vector<4x128xbf16>,
    %c1_892 = arith.constant 1 : index
    %c1_893 = arith.constant 1 : index
    %c0_894 = arith.constant 0 : index
    %606 = vector.load %arg16[%c1_892, %c1_893, %c0_894] : memref<12x6x128xbf16, #tpu.memory_space<vmem>>, vector<1x4x128xbf16>
    %607 = vector.shape_cast %606 : vector<1x4x128xbf16> to vector<4x128xbf16>
    %c0_895 = arith.constant 0 : index
    %c512_896 = arith.constant 512 : index
    %608 = vector.load %arg17[%c0_895, %c512_896] : memref<32x1152xbf16, #tpu.memory_space<vmem>>, vector<4x128xbf16>
    tpu.vector_store %arg17[%c0_895, %c512_896], %607 {strides = array<i32>} : memref<32x1152xbf16, #tpu.memory_space<vmem>>, vector<4x128xbf16>,
    %c2_897 = arith.constant 2 : index
    %c1_898 = arith.constant 1 : index
    %c0_899 = arith.constant 0 : index
    %609 = vector.load %arg16[%c2_897, %c1_898, %c0_899] : memref<12x6x128xbf16, #tpu.memory_space<vmem>>, vector<1x4x128xbf16>
    %610 = vector.shape_cast %609 : vector<1x4x128xbf16> to vector<4x128xbf16>
    %c4_900 = arith.constant 4 : index
    %c512_901 = arith.constant 512 : index
    %611 = vector.load %arg17[%c4_900, %c512_901] : memref<32x1152xbf16, #tpu.memory_space<vmem>>, vector<4x128xbf16>
    tpu.vector_store %arg17[%c4_900, %c512_901], %610 {strides = array<i32>} : memref<32x1152xbf16, #tpu.memory_space<vmem>>, vector<4x128xbf16>,
    %c3_902 = arith.constant 3 : index
    %c1_903 = arith.constant 1 : index
    %c0_904 = arith.constant 0 : index
    %612 = vector.load %arg16[%c3_902, %c1_903, %c0_904] : memref<12x6x128xbf16, #tpu.memory_space<vmem>>, vector<1x4x128xbf16>
    %613 = vector.shape_cast %612 : vector<1x4x128xbf16> to vector<4x128xbf16>
    %c8_905 = arith.constant 8 : index
    %c512_906 = arith.constant 512 : index
    %614 = vector.load %arg17[%c8_905, %c512_906] : memref<32x1152xbf16, #tpu.memory_space<vmem>>, vector<4x128xbf16>
    tpu.vector_store %arg17[%c8_905, %c512_906], %613 {strides = array<i32>} : memref<32x1152xbf16, #tpu.memory_space<vmem>>, vector<4x128xbf16>,
    %c4_907 = arith.constant 4 : index
    %c1_908 = arith.constant 1 : index
    %c0_909 = arith.constant 0 : index
    %615 = vector.load %arg16[%c4_907, %c1_908, %c0_909] : memref<12x6x128xbf16, #tpu.memory_space<vmem>>, vector<1x4x128xbf16>
    %616 = vector.shape_cast %615 : vector<1x4x128xbf16> to vector<4x128xbf16>
    %c12_910 = arith.constant 12 : index
    %c512_911 = arith.constant 512 : index
    %617 = vector.load %arg17[%c12_910, %c512_911] : memref<32x1152xbf16, #tpu.memory_space<vmem>>, vector<4x128xbf16>
    tpu.vector_store %arg17[%c12_910, %c512_911], %616 {strides = array<i32>} : memref<32x1152xbf16, #tpu.memory_space<vmem>>, vector<4x128xbf16>,
    %c7_912 = arith.constant 7 : index
    %c1_913 = arith.constant 1 : index
    %c0_914 = arith.constant 0 : index
    %618 = vector.load %arg16[%c7_912, %c1_913, %c0_914] : memref<12x6x128xbf16, #tpu.memory_space<vmem>>, vector<1x4x128xbf16>
    %619 = vector.shape_cast %618 : vector<1x4x128xbf16> to vector<4x128xbf16>
    %c16_915 = arith.constant 16 : index
    %c512_916 = arith.constant 512 : index
    %620 = vector.load %arg17[%c16_915, %c512_916] : memref<32x1152xbf16, #tpu.memory_space<vmem>>, vector<4x128xbf16>
    tpu.vector_store %arg17[%c16_915, %c512_916], %619 {strides = array<i32>} : memref<32x1152xbf16, #tpu.memory_space<vmem>>, vector<4x128xbf16>,
    %c8_917 = arith.constant 8 : index
    %c1_918 = arith.constant 1 : index
    %c0_919 = arith.constant 0 : index
    %621 = vector.load %arg16[%c8_917, %c1_918, %c0_919] : memref<12x6x128xbf16, #tpu.memory_space<vmem>>, vector<1x4x128xbf16>
    %622 = vector.shape_cast %621 : vector<1x4x128xbf16> to vector<4x128xbf16>
    %c20_920 = arith.constant 20 : index
    %c512_921 = arith.constant 512 : index
    %623 = vector.load %arg17[%c20_920, %c512_921] : memref<32x1152xbf16, #tpu.memory_space<vmem>>, vector<4x128xbf16>
    tpu.vector_store %arg17[%c20_920, %c512_921], %622 {strides = array<i32>} : memref<32x1152xbf16, #tpu.memory_space<vmem>>, vector<4x128xbf16>,
    %c9_922 = arith.constant 9 : index
    %c1_923 = arith.constant 1 : index
    %c0_924 = arith.constant 0 : index
    %624 = vector.load %arg16[%c9_922, %c1_923, %c0_924] : memref<12x6x128xbf16, #tpu.memory_space<vmem>>, vector<1x4x128xbf16>
    %625 = vector.shape_cast %624 : vector<1x4x128xbf16> to vector<4x128xbf16>
    %c24_925 = arith.constant 24 : index
    %c512_926 = arith.constant 512 : index
    %626 = vector.load %arg17[%c24_925, %c512_926] : memref<32x1152xbf16, #tpu.memory_space<vmem>>, vector<4x128xbf16>
    tpu.vector_store %arg17[%c24_925, %c512_926], %625 {strides = array<i32>} : memref<32x1152xbf16, #tpu.memory_space<vmem>>, vector<4x128xbf16>,
    %c10_927 = arith.constant 10 : index
    %c1_928 = arith.constant 1 : index
    %c0_929 = arith.constant 0 : index
    %627 = vector.load %arg16[%c10_927, %c1_928, %c0_929] : memref<12x6x128xbf16, #tpu.memory_space<vmem>>, vector<1x4x128xbf16>
    %628 = vector.shape_cast %627 : vector<1x4x128xbf16> to vector<4x128xbf16>
    %c28_930 = arith.constant 28 : index
    %c512_931 = arith.constant 512 : index
    %629 = vector.load %arg17[%c28_930, %c512_931] : memref<32x1152xbf16, #tpu.memory_space<vmem>>, vector<4x128xbf16>
    tpu.vector_store %arg17[%c28_930, %c512_931], %628 {strides = array<i32>} : memref<32x1152xbf16, #tpu.memory_space<vmem>>, vector<4x128xbf16>,
    %c1_932 = arith.constant 1 : index
    %c2_933 = arith.constant 2 : index
    %c0_934 = arith.constant 0 : index
    %630 = vector.load %arg16[%c1_932, %c2_933, %c0_934] : memref<12x6x128xbf16, #tpu.memory_space<vmem>>, vector<1x4x128xbf16>
    %631 = vector.shape_cast %630 : vector<1x4x128xbf16> to vector<4x128xbf16>
    %c0_935 = arith.constant 0 : index
    %c640_936 = arith.constant 640 : index
    %632 = vector.load %arg17[%c0_935, %c640_936] : memref<32x1152xbf16, #tpu.memory_space<vmem>>, vector<4x128xbf16>
    tpu.vector_store %arg17[%c0_935, %c640_936], %631 {strides = array<i32>} : memref<32x1152xbf16, #tpu.memory_space<vmem>>, vector<4x128xbf16>,
    %c2_937 = arith.constant 2 : index
    %c2_938 = arith.constant 2 : index
    %c0_939 = arith.constant 0 : index
    %633 = vector.load %arg16[%c2_937, %c2_938, %c0_939] : memref<12x6x128xbf16, #tpu.memory_space<vmem>>, vector<1x4x128xbf16>
    %634 = vector.shape_cast %633 : vector<1x4x128xbf16> to vector<4x128xbf16>
    %c4_940 = arith.constant 4 : index
    %c640_941 = arith.constant 640 : index
    %635 = vector.load %arg17[%c4_940, %c640_941] : memref<32x1152xbf16, #tpu.memory_space<vmem>>, vector<4x128xbf16>
    tpu.vector_store %arg17[%c4_940, %c640_941], %634 {strides = array<i32>} : memref<32x1152xbf16, #tpu.memory_space<vmem>>, vector<4x128xbf16>,
    %c3_942 = arith.constant 3 : index
    %c2_943 = arith.constant 2 : index
    %c0_944 = arith.constant 0 : index
    %636 = vector.load %arg16[%c3_942, %c2_943, %c0_944] : memref<12x6x128xbf16, #tpu.memory_space<vmem>>, vector<1x4x128xbf16>
    %637 = vector.shape_cast %636 : vector<1x4x128xbf16> to vector<4x128xbf16>
    %c8_945 = arith.constant 8 : index
    %c640_946 = arith.constant 640 : index
    %638 = vector.load %arg17[%c8_945, %c640_946] : memref<32x1152xbf16, #tpu.memory_space<vmem>>, vector<4x128xbf16>
    tpu.vector_store %arg17[%c8_945, %c640_946], %637 {strides = array<i32>} : memref<32x1152xbf16, #tpu.memory_space<vmem>>, vector<4x128xbf16>,
    %c4_947 = arith.constant 4 : index
    %c2_948 = arith.constant 2 : index
    %c0_949 = arith.constant 0 : index
    %639 = vector.load %arg16[%c4_947, %c2_948, %c0_949] : memref<12x6x128xbf16, #tpu.memory_space<vmem>>, vector<1x4x128xbf16>
    %640 = vector.shape_cast %639 : vector<1x4x128xbf16> to vector<4x128xbf16>
    %c12_950 = arith.constant 12 : index
    %c640_951 = arith.constant 640 : index
    %641 = vector.load %arg17[%c12_950, %c640_951] : memref<32x1152xbf16, #tpu.memory_space<vmem>>, vector<4x128xbf16>
    tpu.vector_store %arg17[%c12_950, %c640_951], %640 {strides = array<i32>} : memref<32x1152xbf16, #tpu.memory_space<vmem>>, vector<4x128xbf16>,
    %c7_952 = arith.constant 7 : index
    %c2_953 = arith.constant 2 : index
    %c0_954 = arith.constant 0 : index
    %642 = vector.load %arg16[%c7_952, %c2_953, %c0_954] : memref<12x6x128xbf16, #tpu.memory_space<vmem>>, vector<1x4x128xbf16>
    %643 = vector.shape_cast %642 : vector<1x4x128xbf16> to vector<4x128xbf16>
    %c16_955 = arith.constant 16 : index
    %c640_956 = arith.constant 640 : index
    %644 = vector.load %arg17[%c16_955, %c640_956] : memref<32x1152xbf16, #tpu.memory_space<vmem>>, vector<4x128xbf16>
    tpu.vector_store %arg17[%c16_955, %c640_956], %643 {strides = array<i32>} : memref<32x1152xbf16, #tpu.memory_space<vmem>>, vector<4x128xbf16>,
    %c8_957 = arith.constant 8 : index
    %c2_958 = arith.constant 2 : index
    %c0_959 = arith.constant 0 : index
    %645 = vector.load %arg16[%c8_957, %c2_958, %c0_959] : memref<12x6x128xbf16, #tpu.memory_space<vmem>>, vector<1x4x128xbf16>
    %646 = vector.shape_cast %645 : vector<1x4x128xbf16> to vector<4x128xbf16>
    %c20_960 = arith.constant 20 : index
    %c640_961 = arith.constant 640 : index
    %647 = vector.load %arg17[%c20_960, %c640_961] : memref<32x1152xbf16, #tpu.memory_space<vmem>>, vector<4x128xbf16>
    tpu.vector_store %arg17[%c20_960, %c640_961], %646 {strides = array<i32>} : memref<32x1152xbf16, #tpu.memory_space<vmem>>, vector<4x128xbf16>,
    %c9_962 = arith.constant 9 : index
    %c2_963 = arith.constant 2 : index
    %c0_964 = arith.constant 0 : index
    %648 = vector.load %arg16[%c9_962, %c2_963, %c0_964] : memref<12x6x128xbf16, #tpu.memory_space<vmem>>, vector<1x4x128xbf16>
    %649 = vector.shape_cast %648 : vector<1x4x128xbf16> to vector<4x128xbf16>
    %c24_965 = arith.constant 24 : index
    %c640_966 = arith.constant 640 : index
    %650 = vector.load %arg17[%c24_965, %c640_966] : memref<32x1152xbf16, #tpu.memory_space<vmem>>, vector<4x128xbf16>
    tpu.vector_store %arg17[%c24_965, %c640_966], %649 {strides = array<i32>} : memref<32x1152xbf16, #tpu.memory_space<vmem>>, vector<4x128xbf16>,
    %c10_967 = arith.constant 10 : index
    %c2_968 = arith.constant 2 : index
    %c0_969 = arith.constant 0 : index
    %651 = vector.load %arg16[%c10_967, %c2_968, %c0_969] : memref<12x6x128xbf16, #tpu.memory_space<vmem>>, vector<1x4x128xbf16>
    %652 = vector.shape_cast %651 : vector<1x4x128xbf16> to vector<4x128xbf16>
    %c28_970 = arith.constant 28 : index
    %c640_971 = arith.constant 640 : index
    %653 = vector.load %arg17[%c28_970, %c640_971] : memref<32x1152xbf16, #tpu.memory_space<vmem>>, vector<4x128xbf16>
    tpu.vector_store %arg17[%c28_970, %c640_971], %652 {strides = array<i32>} : memref<32x1152xbf16, #tpu.memory_space<vmem>>, vector<4x128xbf16>,
    %c2_972 = arith.constant 2 : index
    %c0_973 = arith.constant 0 : index
    %c0_974 = arith.constant 0 : index
    %654 = vector.load %arg16[%c2_972, %c0_973, %c0_974] : memref<12x6x128xbf16, #tpu.memory_space<vmem>>, vector<1x4x128xbf16>
    %655 = vector.shape_cast %654 : vector<1x4x128xbf16> to vector<4x128xbf16>
    %c0_975 = arith.constant 0 : index
    %c768_976 = arith.constant 768 : index
    %656 = vector.load %arg17[%c0_975, %c768_976] : memref<32x1152xbf16, #tpu.memory_space<vmem>>, vector<4x128xbf16>
    tpu.vector_store %arg17[%c0_975, %c768_976], %655 {strides = array<i32>} : memref<32x1152xbf16, #tpu.memory_space<vmem>>, vector<4x128xbf16>,
    %c3_977 = arith.constant 3 : index
    %c0_978 = arith.constant 0 : index
    %c0_979 = arith.constant 0 : index
    %657 = vector.load %arg16[%c3_977, %c0_978, %c0_979] : memref<12x6x128xbf16, #tpu.memory_space<vmem>>, vector<1x4x128xbf16>
    %658 = vector.shape_cast %657 : vector<1x4x128xbf16> to vector<4x128xbf16>
    %c4_980 = arith.constant 4 : index
    %c768_981 = arith.constant 768 : index
    %659 = vector.load %arg17[%c4_980, %c768_981] : memref<32x1152xbf16, #tpu.memory_space<vmem>>, vector<4x128xbf16>
    tpu.vector_store %arg17[%c4_980, %c768_981], %658 {strides = array<i32>} : memref<32x1152xbf16, #tpu.memory_space<vmem>>, vector<4x128xbf16>,
    %c4_982 = arith.constant 4 : index
    %c0_983 = arith.constant 0 : index
    %c0_984 = arith.constant 0 : index
    %660 = vector.load %arg16[%c4_982, %c0_983, %c0_984] : memref<12x6x128xbf16, #tpu.memory_space<vmem>>, vector<1x4x128xbf16>
    %661 = vector.shape_cast %660 : vector<1x4x128xbf16> to vector<4x128xbf16>
    %c8_985 = arith.constant 8 : index
    %c768_986 = arith.constant 768 : index
    %662 = vector.load %arg17[%c8_985, %c768_986] : memref<32x1152xbf16, #tpu.memory_space<vmem>>, vector<4x128xbf16>
    tpu.vector_store %arg17[%c8_985, %c768_986], %661 {strides = array<i32>} : memref<32x1152xbf16, #tpu.memory_space<vmem>>, vector<4x128xbf16>,
    %c5_987 = arith.constant 5 : index
    %c0_988 = arith.constant 0 : index
    %c0_989 = arith.constant 0 : index
    %663 = vector.load %arg16[%c5_987, %c0_988, %c0_989] : memref<12x6x128xbf16, #tpu.memory_space<vmem>>, vector<1x4x128xbf16>
    %664 = vector.shape_cast %663 : vector<1x4x128xbf16> to vector<4x128xbf16>
    %c12_990 = arith.constant 12 : index
    %c768_991 = arith.constant 768 : index
    %665 = vector.load %arg17[%c12_990, %c768_991] : memref<32x1152xbf16, #tpu.memory_space<vmem>>, vector<4x128xbf16>
    tpu.vector_store %arg17[%c12_990, %c768_991], %664 {strides = array<i32>} : memref<32x1152xbf16, #tpu.memory_space<vmem>>, vector<4x128xbf16>,
    %c8_992 = arith.constant 8 : index
    %c0_993 = arith.constant 0 : index
    %c0_994 = arith.constant 0 : index
    %666 = vector.load %arg16[%c8_992, %c0_993, %c0_994] : memref<12x6x128xbf16, #tpu.memory_space<vmem>>, vector<1x4x128xbf16>
    %667 = vector.shape_cast %666 : vector<1x4x128xbf16> to vector<4x128xbf16>
    %c16_995 = arith.constant 16 : index
    %c768_996 = arith.constant 768 : index
    %668 = vector.load %arg17[%c16_995, %c768_996] : memref<32x1152xbf16, #tpu.memory_space<vmem>>, vector<4x128xbf16>
    tpu.vector_store %arg17[%c16_995, %c768_996], %667 {strides = array<i32>} : memref<32x1152xbf16, #tpu.memory_space<vmem>>, vector<4x128xbf16>,
    %c9_997 = arith.constant 9 : index
    %c0_998 = arith.constant 0 : index
    %c0_999 = arith.constant 0 : index
    %669 = vector.load %arg16[%c9_997, %c0_998, %c0_999] : memref<12x6x128xbf16, #tpu.memory_space<vmem>>, vector<1x4x128xbf16>
    %670 = vector.shape_cast %669 : vector<1x4x128xbf16> to vector<4x128xbf16>
    %c20_1000 = arith.constant 20 : index
    %c768_1001 = arith.constant 768 : index
    %671 = vector.load %arg17[%c20_1000, %c768_1001] : memref<32x1152xbf16, #tpu.memory_space<vmem>>, vector<4x128xbf16>
    tpu.vector_store %arg17[%c20_1000, %c768_1001], %670 {strides = array<i32>} : memref<32x1152xbf16, #tpu.memory_space<vmem>>, vector<4x128xbf16>,
    %c10_1002 = arith.constant 10 : index
    %c0_1003 = arith.constant 0 : index
    %c0_1004 = arith.constant 0 : index
    %672 = vector.load %arg16[%c10_1002, %c0_1003, %c0_1004] : memref<12x6x128xbf16, #tpu.memory_space<vmem>>, vector<1x4x128xbf16>
    %673 = vector.shape_cast %672 : vector<1x4x128xbf16> to vector<4x128xbf16>
    %c24_1005 = arith.constant 24 : index
    %c768_1006 = arith.constant 768 : index
    %674 = vector.load %arg17[%c24_1005, %c768_1006] : memref<32x1152xbf16, #tpu.memory_space<vmem>>, vector<4x128xbf16>
    tpu.vector_store %arg17[%c24_1005, %c768_1006], %673 {strides = array<i32>} : memref<32x1152xbf16, #tpu.memory_space<vmem>>, vector<4x128xbf16>,
    %c11_1007 = arith.constant 11 : index
    %c0_1008 = arith.constant 0 : index
    %c0_1009 = arith.constant 0 : index
    %675 = vector.load %arg16[%c11_1007, %c0_1008, %c0_1009] : memref<12x6x128xbf16, #tpu.memory_space<vmem>>, vector<1x4x128xbf16>
    %676 = vector.shape_cast %675 : vector<1x4x128xbf16> to vector<4x128xbf16>
    %c28_1010 = arith.constant 28 : index
    %c768_1011 = arith.constant 768 : index
    %677 = vector.load %arg17[%c28_1010, %c768_1011] : memref<32x1152xbf16, #tpu.memory_space<vmem>>, vector<4x128xbf16>
    tpu.vector_store %arg17[%c28_1010, %c768_1011], %676 {strides = array<i32>} : memref<32x1152xbf16, #tpu.memory_space<vmem>>, vector<4x128xbf16>,
    %c2_1012 = arith.constant 2 : index
    %c1_1013 = arith.constant 1 : index
    %c0_1014 = arith.constant 0 : index
    %678 = vector.load %arg16[%c2_1012, %c1_1013, %c0_1014] : memref<12x6x128xbf16, #tpu.memory_space<vmem>>, vector<1x4x128xbf16>
    %679 = vector.shape_cast %678 : vector<1x4x128xbf16> to vector<4x128xbf16>
    %c0_1015 = arith.constant 0 : index
    %c896_1016 = arith.constant 896 : index
    %680 = vector.load %arg17[%c0_1015, %c896_1016] : memref<32x1152xbf16, #tpu.memory_space<vmem>>, vector<4x128xbf16>
    tpu.vector_store %arg17[%c0_1015, %c896_1016], %679 {strides = array<i32>} : memref<32x1152xbf16, #tpu.memory_space<vmem>>, vector<4x128xbf16>,
    %c3_1017 = arith.constant 3 : index
    %c1_1018 = arith.constant 1 : index
    %c0_1019 = arith.constant 0 : index
    %681 = vector.load %arg16[%c3_1017, %c1_1018, %c0_1019] : memref<12x6x128xbf16, #tpu.memory_space<vmem>>, vector<1x4x128xbf16>
    %682 = vector.shape_cast %681 : vector<1x4x128xbf16> to vector<4x128xbf16>
    %c4_1020 = arith.constant 4 : index
    %c896_1021 = arith.constant 896 : index
    %683 = vector.load %arg17[%c4_1020, %c896_1021] : memref<32x1152xbf16, #tpu.memory_space<vmem>>, vector<4x128xbf16>
    tpu.vector_store %arg17[%c4_1020, %c896_1021], %682 {strides = array<i32>} : memref<32x1152xbf16, #tpu.memory_space<vmem>>, vector<4x128xbf16>,
    %c4_1022 = arith.constant 4 : index
    %c1_1023 = arith.constant 1 : index
    %c0_1024 = arith.constant 0 : index
    %684 = vector.load %arg16[%c4_1022, %c1_1023, %c0_1024] : memref<12x6x128xbf16, #tpu.memory_space<vmem>>, vector<1x4x128xbf16>
    %685 = vector.shape_cast %684 : vector<1x4x128xbf16> to vector<4x128xbf16>
    %c8_1025 = arith.constant 8 : index
    %c896_1026 = arith.constant 896 : index
    %686 = vector.load %arg17[%c8_1025, %c896_1026] : memref<32x1152xbf16, #tpu.memory_space<vmem>>, vector<4x128xbf16>
    tpu.vector_store %arg17[%c8_1025, %c896_1026], %685 {strides = array<i32>} : memref<32x1152xbf16, #tpu.memory_space<vmem>>, vector<4x128xbf16>,
    %c5_1027 = arith.constant 5 : index
    %c1_1028 = arith.constant 1 : index
    %c0_1029 = arith.constant 0 : index
    %687 = vector.load %arg16[%c5_1027, %c1_1028, %c0_1029] : memref<12x6x128xbf16, #tpu.memory_space<vmem>>, vector<1x4x128xbf16>
    %688 = vector.shape_cast %687 : vector<1x4x128xbf16> to vector<4x128xbf16>
    %c12_1030 = arith.constant 12 : index
    %c896_1031 = arith.constant 896 : index
    %689 = vector.load %arg17[%c12_1030, %c896_1031] : memref<32x1152xbf16, #tpu.memory_space<vmem>>, vector<4x128xbf16>
    tpu.vector_store %arg17[%c12_1030, %c896_1031], %688 {strides = array<i32>} : memref<32x1152xbf16, #tpu.memory_space<vmem>>, vector<4x128xbf16>,
    %c8_1032 = arith.constant 8 : index
    %c1_1033 = arith.constant 1 : index
    %c0_1034 = arith.constant 0 : index
    %690 = vector.load %arg16[%c8_1032, %c1_1033, %c0_1034] : memref<12x6x128xbf16, #tpu.memory_space<vmem>>, vector<1x4x128xbf16>
    %691 = vector.shape_cast %690 : vector<1x4x128xbf16> to vector<4x128xbf16>
    %c16_1035 = arith.constant 16 : index
    %c896_1036 = arith.constant 896 : index
    %692 = vector.load %arg17[%c16_1035, %c896_1036] : memref<32x1152xbf16, #tpu.memory_space<vmem>>, vector<4x128xbf16>
    tpu.vector_store %arg17[%c16_1035, %c896_1036], %691 {strides = array<i32>} : memref<32x1152xbf16, #tpu.memory_space<vmem>>, vector<4x128xbf16>,
    %c9_1037 = arith.constant 9 : index
    %c1_1038 = arith.constant 1 : index
    %c0_1039 = arith.constant 0 : index
    %693 = vector.load %arg16[%c9_1037, %c1_1038, %c0_1039] : memref<12x6x128xbf16, #tpu.memory_space<vmem>>, vector<1x4x128xbf16>
    %694 = vector.shape_cast %693 : vector<1x4x128xbf16> to vector<4x128xbf16>
    %c20_1040 = arith.constant 20 : index
    %c896_1041 = arith.constant 896 : index
    %695 = vector.load %arg17[%c20_1040, %c896_1041] : memref<32x1152xbf16, #tpu.memory_space<vmem>>, vector<4x128xbf16>
    tpu.vector_store %arg17[%c20_1040, %c896_1041], %694 {strides = array<i32>} : memref<32x1152xbf16, #tpu.memory_space<vmem>>, vector<4x128xbf16>,
    %c10_1042 = arith.constant 10 : index
    %c1_1043 = arith.constant 1 : index
    %c0_1044 = arith.constant 0 : index
    %696 = vector.load %arg16[%c10_1042, %c1_1043, %c0_1044] : memref<12x6x128xbf16, #tpu.memory_space<vmem>>, vector<1x4x128xbf16>
    %697 = vector.shape_cast %696 : vector<1x4x128xbf16> to vector<4x128xbf16>
    %c24_1045 = arith.constant 24 : index
    %c896_1046 = arith.constant 896 : index
    %698 = vector.load %arg17[%c24_1045, %c896_1046] : memref<32x1152xbf16, #tpu.memory_space<vmem>>, vector<4x128xbf16>
    tpu.vector_store %arg17[%c24_1045, %c896_1046], %697 {strides = array<i32>} : memref<32x1152xbf16, #tpu.memory_space<vmem>>, vector<4x128xbf16>,
    %c11_1047 = arith.constant 11 : index
    %c1_1048 = arith.constant 1 : index
    %c0_1049 = arith.constant 0 : index
    %699 = vector.load %arg16[%c11_1047, %c1_1048, %c0_1049] : memref<12x6x128xbf16, #tpu.memory_space<vmem>>, vector<1x4x128xbf16>
    %700 = vector.shape_cast %699 : vector<1x4x128xbf16> to vector<4x128xbf16>
    %c28_1050 = arith.constant 28 : index
    %c896_1051 = arith.constant 896 : index
    %701 = vector.load %arg17[%c28_1050, %c896_1051] : memref<32x1152xbf16, #tpu.memory_space<vmem>>, vector<4x128xbf16>
    tpu.vector_store %arg17[%c28_1050, %c896_1051], %700 {strides = array<i32>} : memref<32x1152xbf16, #tpu.memory_space<vmem>>, vector<4x128xbf16>,
    %c2_1052 = arith.constant 2 : index
    %c2_1053 = arith.constant 2 : index
    %c0_1054 = arith.constant 0 : index
    %702 = vector.load %arg16[%c2_1052, %c2_1053, %c0_1054] : memref<12x6x128xbf16, #tpu.memory_space<vmem>>, vector<1x4x128xbf16>
    %703 = vector.shape_cast %702 : vector<1x4x128xbf16> to vector<4x128xbf16>
    %c0_1055 = arith.constant 0 : index
    %c1024_1056 = arith.constant 1024 : index
    %704 = vector.load %arg17[%c0_1055, %c1024_1056] : memref<32x1152xbf16, #tpu.memory_space<vmem>>, vector<4x128xbf16>
    tpu.vector_store %arg17[%c0_1055, %c1024_1056], %703 {strides = array<i32>} : memref<32x1152xbf16, #tpu.memory_space<vmem>>, vector<4x128xbf16>,
    %c3_1057 = arith.constant 3 : index
    %c2_1058 = arith.constant 2 : index
    %c0_1059 = arith.constant 0 : index
    %705 = vector.load %arg16[%c3_1057, %c2_1058, %c0_1059] : memref<12x6x128xbf16, #tpu.memory_space<vmem>>, vector<1x4x128xbf16>
    %706 = vector.shape_cast %705 : vector<1x4x128xbf16> to vector<4x128xbf16>
    %c4_1060 = arith.constant 4 : index
    %c1024_1061 = arith.constant 1024 : index
    %707 = vector.load %arg17[%c4_1060, %c1024_1061] : memref<32x1152xbf16, #tpu.memory_space<vmem>>, vector<4x128xbf16>
    tpu.vector_store %arg17[%c4_1060, %c1024_1061], %706 {strides = array<i32>} : memref<32x1152xbf16, #tpu.memory_space<vmem>>, vector<4x128xbf16>,
    %c4_1062 = arith.constant 4 : index
    %c2_1063 = arith.constant 2 : index
    %c0_1064 = arith.constant 0 : index
    %708 = vector.load %arg16[%c4_1062, %c2_1063, %c0_1064] : memref<12x6x128xbf16, #tpu.memory_space<vmem>>, vector<1x4x128xbf16>
    %709 = vector.shape_cast %708 : vector<1x4x128xbf16> to vector<4x128xbf16>
    %c8_1065 = arith.constant 8 : index
    %c1024_1066 = arith.constant 1024 : index
    %710 = vector.load %arg17[%c8_1065, %c1024_1066] : memref<32x1152xbf16, #tpu.memory_space<vmem>>, vector<4x128xbf16>
    tpu.vector_store %arg17[%c8_1065, %c1024_1066], %709 {strides = array<i32>} : memref<32x1152xbf16, #tpu.memory_space<vmem>>, vector<4x128xbf16>,
    %c5_1067 = arith.constant 5 : index
    %c2_1068 = arith.constant 2 : index
    %c0_1069 = arith.constant 0 : index
    %711 = vector.load %arg16[%c5_1067, %c2_1068, %c0_1069] : memref<12x6x128xbf16, #tpu.memory_space<vmem>>, vector<1x4x128xbf16>
    %712 = vector.shape_cast %711 : vector<1x4x128xbf16> to vector<4x128xbf16>
    %c12_1070 = arith.constant 12 : index
    %c1024_1071 = arith.constant 1024 : index
    %713 = vector.load %arg17[%c12_1070, %c1024_1071] : memref<32x1152xbf16, #tpu.memory_space<vmem>>, vector<4x128xbf16>
    tpu.vector_store %arg17[%c12_1070, %c1024_1071], %712 {strides = array<i32>} : memref<32x1152xbf16, #tpu.memory_space<vmem>>, vector<4x128xbf16>,
    %c8_1072 = arith.constant 8 : index
    %c2_1073 = arith.constant 2 : index
    %c0_1074 = arith.constant 0 : index
    %714 = vector.load %arg16[%c8_1072, %c2_1073, %c0_1074] : memref<12x6x128xbf16, #tpu.memory_space<vmem>>, vector<1x4x128xbf16>
    %715 = vector.shape_cast %714 : vector<1x4x128xbf16> to vector<4x128xbf16>
    %c16_1075 = arith.constant 16 : index
    %c1024_1076 = arith.constant 1024 : index
    %716 = vector.load %arg17[%c16_1075, %c1024_1076] : memref<32x1152xbf16, #tpu.memory_space<vmem>>, vector<4x128xbf16>
    tpu.vector_store %arg17[%c16_1075, %c1024_1076], %715 {strides = array<i32>} : memref<32x1152xbf16, #tpu.memory_space<vmem>>, vector<4x128xbf16>,
    %c9_1077 = arith.constant 9 : index
    %c2_1078 = arith.constant 2 : index
    %c0_1079 = arith.constant 0 : index
    %717 = vector.load %arg16[%c9_1077, %c2_1078, %c0_1079] : memref<12x6x128xbf16, #tpu.memory_space<vmem>>, vector<1x4x128xbf16>
    %718 = vector.shape_cast %717 : vector<1x4x128xbf16> to vector<4x128xbf16>
    %c20_1080 = arith.constant 20 : index
    %c1024_1081 = arith.constant 1024 : index
    %719 = vector.load %arg17[%c20_1080, %c1024_1081] : memref<32x1152xbf16, #tpu.memory_space<vmem>>, vector<4x128xbf16>
    tpu.vector_store %arg17[%c20_1080, %c1024_1081], %718 {strides = array<i32>} : memref<32x1152xbf16, #tpu.memory_space<vmem>>, vector<4x128xbf16>,
    %c10_1082 = arith.constant 10 : index
    %c2_1083 = arith.constant 2 : index
    %c0_1084 = arith.constant 0 : index
    %720 = vector.load %arg16[%c10_1082, %c2_1083, %c0_1084] : memref<12x6x128xbf16, #tpu.memory_space<vmem>>, vector<1x4x128xbf16>
    %721 = vector.shape_cast %720 : vector<1x4x128xbf16> to vector<4x128xbf16>
    %c24_1085 = arith.constant 24 : index
    %c1024_1086 = arith.constant 1024 : index
    %722 = vector.load %arg17[%c24_1085, %c1024_1086] : memref<32x1152xbf16, #tpu.memory_space<vmem>>, vector<4x128xbf16>
    tpu.vector_store %arg17[%c24_1085, %c1024_1086], %721 {strides = array<i32>} : memref<32x1152xbf16, #tpu.memory_space<vmem>>, vector<4x128xbf16>,
    %c11_1087 = arith.constant 11 : index
    %c2_1088 = arith.constant 2 : index
    %c0_1089 = arith.constant 0 : index
    %723 = vector.load %arg16[%c11_1087, %c2_1088, %c0_1089] : memref<12x6x128xbf16, #tpu.memory_space<vmem>>, vector<1x4x128xbf16>
    %724 = vector.shape_cast %723 : vector<1x4x128xbf16> to vector<4x128xbf16>
    %c28_1090 = arith.constant 28 : index
    %c1024_1091 = arith.constant 1024 : index
    %725 = vector.load %arg17[%c28_1090, %c1024_1091] : memref<32x1152xbf16, #tpu.memory_space<vmem>>, vector<4x128xbf16>
    tpu.vector_store %arg17[%c28_1090, %c1024_1091], %724 {strides = array<i32>} : memref<32x1152xbf16, #tpu.memory_space<vmem>>, vector<4x128xbf16>,
    %c0_1092 = arith.constant 0 : index
    %c0_1093 = arith.constant 0 : index
    %726 = vector.load %arg17[%c0_1092, %c0_1093] : memref<32x1152xbf16, #tpu.memory_space<vmem>>, vector<32x1152xbf16>
    %c0_1094 = arith.constant 0 : index
    %c0_1095 = arith.constant 0 : index
    %727 = vector.load %arg8[%c0_1094, %c0_1095] : memref<1152x128xbf16, #tpu.memory_space<vmem>>, vector<1152x128xbf16>
    %cst_1096 = arith.constant dense<0.000000e+00> : vector<32x128xf32>
    %728 = tpu.matmul %726, %727, %cst_1096 {dimension_numbers = #tpu.dot_dimension_numbers<[1], [0], [0], [1], [0, 0, 1, 1], [], []>} : vector<32x1152xbf16>, vector<1152x128xbf16>, vector<32x128xf32> -> vector<32x128xf32>
    %c0_1097 = arith.constant 0 : index
    %c0_1098 = arith.constant 0 : index
    %729 = vector.load %arg9[%c0_1097, %c0_1098] : memref<1x128xf32, #tpu.memory_space<vmem>>, vector<1x128xf32>
    %c0_1099 = arith.constant 0 : index
    %c0_1100 = arith.constant 0 : index
    %730 = vector.load %arg10[%c0_1099, %c0_1100] : memref<1x128xf32, #tpu.memory_space<vmem>>, vector<1x128xf32>
    %cst_1101 = arith.constant dense<0.000000e+00> : vector<128xf32>
    %731 = vector.multi_reduction <add>, %728, %cst_1101 [0] : vector<32x128xf32> to vector<128xf32>
    %732 = vector.shape_cast %731 : vector<128xf32> to vector<1x128xf32>
    %cst_1102 = arith.constant 3.125000e-02 : f32
    %733 = vector.broadcast %cst_1102 : f32 to vector<1x128xf32>
    %734 = arith.mulf %732, %733 : vector<1x128xf32>
    %735 = arith.mulf %728, %728 : vector<32x128xf32>
    %cst_1103 = arith.constant dense<0.000000e+00> : vector<128xf32>
    %736 = vector.multi_reduction <add>, %735, %cst_1103 [0] : vector<32x128xf32> to vector<128xf32>
    %737 = vector.shape_cast %736 : vector<128xf32> to vector<1x128xf32>
    %cst_1104 = arith.constant 3.125000e-02 : f32
    %738 = vector.broadcast %cst_1104 : f32 to vector<1x128xf32>
    %739 = arith.mulf %737, %738 : vector<1x128xf32>
    %740 = arith.mulf %734, %734 : vector<1x128xf32>
    %741 = arith.subf %739, %740 : vector<1x128xf32>
    %cst_1105 = arith.constant 9.99999974E-6 : f32
    %742 = vector.broadcast %cst_1105 : f32 to vector<1x128xf32>
    %743 = arith.addf %741, %742 : vector<1x128xf32>
    %744 = math.rsqrt %743 : vector<1x128xf32>
    %745 = arith.mulf %729, %744 : vector<1x128xf32>
    %746 = arith.mulf %734, %745 : vector<1x128xf32>
    %747 = arith.subf %730, %746 : vector<1x128xf32>
    %748 = vector.broadcast %745 : vector<1x128xf32> to vector<32x128xf32>
    %749 = arith.mulf %728, %748 : vector<32x128xf32>
    %750 = vector.broadcast %747 : vector<1x128xf32> to vector<32x128xf32>
    %751 = arith.addf %749, %750 : vector<32x128xf32>
    %cst_1106 = arith.constant 0.000000e+00 : f32
    %752 = vector.broadcast %cst_1106 : f32 to vector<32x128xf32>
    %753 = arith.maximumf %751, %752 : vector<32x128xf32>
    %754 = arith.truncf %753 : vector<32x128xf32> to vector<32x128xbf16>
    %c0_1107 = arith.constant 0 : index
    %c0_1108 = arith.constant 0 : index
    %755 = vector.load %arg11[%c0_1107, %c0_1108] : memref<128x128xbf16, #tpu.memory_space<vmem>>, vector<128x128xbf16>
    %cst_1109 = arith.constant dense<0.000000e+00> : vector<32x128xf32>
    %756 = tpu.matmul %754, %755, %cst_1109 {dimension_numbers = #tpu.dot_dimension_numbers<[1], [0], [0], [1], [0, 0, 1, 1], [], []>} : vector<32x128xbf16>, vector<128x128xbf16>, vector<32x128xf32> -> vector<32x128xf32>
    %c0_1110 = arith.constant 0 : index
    %c0_1111 = arith.constant 0 : index
    %757 = vector.load %arg12[%c0_1110, %c0_1111] : memref<1x128xf32, #tpu.memory_space<vmem>>, vector<1x128xf32>
    %758 = vector.broadcast %757 : vector<1x128xf32> to vector<32x128xf32>
    %759 = arith.addf %756, %758 : vector<32x128xf32>
    %c0_1112 = arith.constant 0 : index
    %c0_1113 = arith.constant 0 : index
    %760 = vector.load %arg13[%c0_1112, %c0_1113] : memref<32x128xf32, #tpu.memory_space<vmem>>, vector<32x128xf32>
    tpu.vector_store %arg13[%c0_1112, %c0_1113], %759 {strides = array<i32>} : memref<32x128xf32, #tpu.memory_space<vmem>>, vector<32x128xf32>,
    return
  }
  func.func @transform_0(%arg0: i32) -> (i32, i32) {
    %c0_i32 = arith.constant 0 : i32
    %c0_i32_0 = arith.constant 0 : i32
    %c0_i32_1 = arith.constant 0 : i32
    return %c0_i32, %c0_i32_0 : i32, i32
  }
  func.func @transform_1(%arg0: i32) -> (i32, i32) {
    %c0_i32 = arith.constant 0 : i32
    %c0_i32_0 = arith.constant 0 : i32
    %c0_i32_1 = arith.constant 0 : i32
    return %c0_i32, %c0_i32_0 : i32, i32
  }
  func.func @transform_2(%arg0: i32) -> (i32, i32) {
    %c0_i32 = arith.constant 0 : i32
    %c0_i32_0 = arith.constant 0 : i32
    %c0_i32_1 = arith.constant 0 : i32
    return %c0_i32, %c0_i32_0 : i32, i32
  }
  func.func @transform_3(%arg0: i32) -> (i32, i32) {
    %c0_i32 = arith.constant 0 : i32
    %c0_i32_0 = arith.constant 0 : i32
    %c0_i32_1 = arith.constant 0 : i32
    return %c0_i32, %c0_i32_0 : i32, i32
  }
  func.func @transform_4(%arg0: i32) -> (i32, i32) {
    %c0_i32 = arith.constant 0 : i32
    %c0_i32_0 = arith.constant 0 : i32
    %c0_i32_1 = arith.constant 0 : i32
    return %c0_i32, %c0_i32_0 : i32, i32
  }
  func.func @transform_5(%arg0: i32) -> (i32, i32) {
    %c0_i32 = arith.constant 0 : i32
    %c0_i32_0 = arith.constant 0 : i32
    %c0_i32_1 = arith.constant 0 : i32
    return %c0_i32, %c0_i32_0 : i32, i32
  }
  func.func @transform_6(%arg0: i32) -> (i32, i32) {
    %c0_i32 = arith.constant 0 : i32
    %c0_i32_0 = arith.constant 0 : i32
    %c0_i32_1 = arith.constant 0 : i32
    return %c0_i32, %c0_i32_0 : i32, i32
  }
  func.func @transform_7(%arg0: i32) -> (i32, i32) {
    %c0_i32 = arith.constant 0 : i32
    %c0_i32_0 = arith.constant 0 : i32
    %c0_i32_1 = arith.constant 0 : i32
    return %c0_i32, %c0_i32_0 : i32, i32
  }
  func.func @transform_8(%arg0: i32) -> (i32, i32) {
    %c0_i32 = arith.constant 0 : i32
    %c0_i32_0 = arith.constant 0 : i32
    %c0_i32_1 = arith.constant 0 : i32
    return %c0_i32, %c0_i32_0 : i32, i32
  }
  func.func @transform_9(%arg0: i32) -> (i32, i32) {
    %c0_i32 = arith.constant 0 : i32
    %c0_i32_0 = arith.constant 0 : i32
    %c0_i32_1 = arith.constant 0 : i32
    return %c0_i32, %c0_i32_0 : i32, i32
  }
  func.func @transform_10(%arg0: i32) -> (i32, i32) {
    %c0_i32 = arith.constant 0 : i32
    %c0_i32_0 = arith.constant 0 : i32
    %c0_i32_1 = arith.constant 0 : i32
    return %c0_i32, %c0_i32_0 : i32, i32
  }
  func.func @transform_11(%arg0: i32) -> (i32, i32) {
    %c0_i32 = arith.constant 0 : i32
    %c0_i32_0 = arith.constant 0 : i32
    %c0_i32_1 = arith.constant 0 : i32
    return %c0_i32, %c0_i32_0 : i32, i32
  }
  func.func @transform_12(%arg0: i32) -> (i32, i32) {
    %c0_i32 = arith.constant 0 : i32
    %c0_i32_0 = arith.constant 0 : i32
    %c0_i32_1 = arith.constant 0 : i32
    return %c0_i32, %c0_i32_0 : i32, i32
  }
}

</mosaic_0001>

<llo_original>
// kernel: encoder_forward.1
$region0: #{encoder_forward.1}
  #allocation0 [shape = 'u32[]', space=smem, size = 0x4, offset = 0x4, fixed_abs, tag = 'smem constant byte address 0x4 - core index']
  #allocation1 [shape = 'u32[144,128]{1,0:T(1,128)}', space=vmem, size = 0x12000, scoped, tag = 'internal scratch']
  #allocation2 [shape = 'bf16[2,20,5,128]{3,2,1,0:T(8,128)(2,1)}', space=vmem, size = 0x14000, scoped, tag = 'scratch operand']
  #allocation3 [shape = 'bf16[32,1536]{1,0:T(16,128)(2,1)}', space=vmem, size = 0x18000, scoped, tag = 'scratch operand']
  #allocation4 [shape = 'bf16[12,6,128]{2,1,0:T(8,128)(2,1)}', space=vmem, size = 0x6000, scoped, tag = 'scratch operand']
  #allocation5 [shape = 'bf16[32,1152]{1,0:T(16,128)(2,1)}', space=vmem, size = 0x12000, scoped, tag = 'scratch operand']
  %s0 = inlined_call_operand.vmem [shape: bf16[128,1536], index: 0, kind: input, shape index: {}]
  %s1 = inlined_call_operand.vmem [shape: bf16[1536,128], index: 1, kind: input, shape index: {}]
  %s2 = inlined_call_operand.vmem [shape: f32[1,128], index: 2, kind: input, shape index: {}]
  %s3 = inlined_call_operand.vmem [shape: f32[1,128], index: 3, kind: input, shape index: {}]
  %s4 = inlined_call_operand.vmem [shape: bf16[1536,128], index: 4, kind: input, shape index: {}]
  %s5 = inlined_call_operand.vmem [shape: f32[1,128], index: 5, kind: input, shape index: {}]
  %s6 = inlined_call_operand.vmem [shape: f32[1,128], index: 6, kind: input, shape index: {}]
  %s7 = inlined_call_operand.vmem [shape: bf16[1152,128], index: 7, kind: input, shape index: {}]
  %s8 = inlined_call_operand.vmem [shape: f32[1,128], index: 8, kind: input, shape index: {}]
  %s9 = inlined_call_operand.vmem [shape: f32[1,128], index: 9, kind: input, shape index: {}]
  %s10 = inlined_call_operand.vmem [shape: bf16[128,128], index: 10, kind: input, shape index: {}]
  %s11 = inlined_call_operand.vmem [shape: f32[1,128], index: 11, kind: input, shape index: {}]
  %s12 = inlined_call_operand.hbm [shape: f32[32,128], index: 12, kind: output, shape index: {}]
  %s13 = sld [smem:[#allocation0]]
  $region58: #{encoder_forward.1} parent=0
    _
  %s15 = ssub.s32 1, %s13
  %s16 = scalar_select 0, %s15, %s13
  $region1: #{encoder_forward.1} parent=0
    #allocation6 [shape = 'u8[16384]{0}', space=vmem, size = 0x4000, scoped, tag = 'output window, operand 0, single buffered']
    #allocation7 [shape = 's32[1]{0}', space=sflag, size = 0x4, scoped, tag = 'scoped memory for encoder_forward.1']
    %17 = vsyncpa [#allocation7], 0
    // Predicated region
    $region2: #{encoder_forward.1} parent=1 // pred_check
      _
    $region3: #{encoder_forward.1} parent=1 // pred_check_branch
      %19 = sbr.rel (0) target = $region5
    $region4: #{encoder_forward.1} parent=1 // pred_region
      _
    $region5: #{encoder_forward.1} parent=1 // pred_fallthru
      _
    // Predicated region
    $region6: #{encoder_forward.1} parent=1 // pred_check
      _
    $region7: #{encoder_forward.1} parent=1 // pred_check_branch
      %21 = sbr.rel (0) target = $region9
    $region8: #{encoder_forward.1} parent=1 // pred_region
      _
    $region9: #{encoder_forward.1} parent=1 // pred_fallthru
      _
    // Predicated region
    $region10: #{encoder_forward.1} parent=1 // pred_check
      _
    $region11: #{encoder_forward.1} parent=1 // pred_check_branch
      %23 = sbr.rel (0) target = $region13
    $region12: #{encoder_forward.1} parent=1 // pred_region
      _
    $region13: #{encoder_forward.1} parent=1 // pred_fallthru
      _
    // Predicated region
    $region14: #{encoder_forward.1} parent=1 // pred_check
      _
    $region15: #{encoder_forward.1} parent=1 // pred_check_branch
      %25 = sbr.rel (0) target = $region17
    $region16: #{encoder_forward.1} parent=1 // pred_region
      _
    $region17: #{encoder_forward.1} parent=1 // pred_fallthru
      _
    // Predicated region
    $region18: #{encoder_forward.1} parent=1 // pred_check
      _
    $region19: #{encoder_forward.1} parent=1 // pred_check_branch
      %27 = sbr.rel (0) target = $region21
    $region20: #{encoder_forward.1} parent=1 // pred_region
      _
    $region21: #{encoder_forward.1} parent=1 // pred_fallthru
      _
    // Predicated region
    $region22: #{encoder_forward.1} parent=1 // pred_check
      _
    $region23: #{encoder_forward.1} parent=1 // pred_check_branch
      %29 = sbr.rel (0) target = $region25
    $region24: #{encoder_forward.1} parent=1 // pred_region
      _
    $region25: #{encoder_forward.1} parent=1 // pred_fallthru
      _
    // Predicated region
    $region26: #{encoder_forward.1} parent=1 // pred_check
      _
    $region27: #{encoder_forward.1} parent=1 // pred_check_branch
      %31 = sbr.rel (0) target = $region29
    $region28: #{encoder_forward.1} parent=1 // pred_region
      _
    $region29: #{encoder_forward.1} parent=1 // pred_fallthru
      _
    // Predicated region
    $region30: #{encoder_forward.1} parent=1 // pred_check
      _
    $region31: #{encoder_forward.1} parent=1 // pred_check_branch
      %33 = sbr.rel (0) target = $region33
    $region32: #{encoder_forward.1} parent=1 // pred_region
      _
    $region33: #{encoder_forward.1} parent=1 // pred_fallthru
      _
    // Predicated region
    $region34: #{encoder_forward.1} parent=1 // pred_check
      _
    $region35: #{encoder_forward.1} parent=1 // pred_check_branch
      %35 = sbr.rel (0) target = $region37
    $region36: #{encoder_forward.1} parent=1 // pred_region
      _
    $region37: #{encoder_forward.1} parent=1 // pred_fallthru
      _
    // Predicated region
    $region38: #{encoder_forward.1} parent=1 // pred_check
      _
    $region39: #{encoder_forward.1} parent=1 // pred_check_branch
      %37 = sbr.rel (0) target = $region41
    $region40: #{encoder_forward.1} parent=1 // pred_region
      _
    $region41: #{encoder_forward.1} parent=1 // pred_fallthru
      _
    // Predicated region
    $region42: #{encoder_forward.1} parent=1 // pred_check
      _
    $region43: #{encoder_forward.1} parent=1 // pred_check_branch
      %39 = sbr.rel (0) target = $region45
    $region44: #{encoder_forward.1} parent=1 // pred_region
      _
    $region45: #{encoder_forward.1} parent=1 // pred_fallthru
      _
    // Predicated region
    $region46: #{encoder_forward.1} parent=1 // pred_check
      _
    $region47: #{encoder_forward.1} parent=1 // pred_check_branch
      %41 = sbr.rel (0) target = $region49
    $region48: #{encoder_forward.1} parent=1 // pred_region
      _
    $region49: #{encoder_forward.1} parent=1 // pred_fallthru
      _
    %v43 = vld [vmem:[%s0] sm:$0xff]
    %v44 = vld [vmem:[%s0 + $0x8] sm:$0xff]
    %v45 = vld [vmem:[%s0 + $0x10] sm:$0xff]
    %v46 = vld [vmem:[%s0 + $0x18] sm:$0xff]
    %v47 = vld [vmem:[%s0 + $0x20] sm:$0xff]
    %v48 = vld [vmem:[%s0 + $0x28] sm:$0xff]
    %v49 = vld [vmem:[%s0 + $0x30] sm:$0xff]
    %v50 = vld [vmem:[%s0 + $0x38] sm:$0xff]
    %v51 = vld [vmem:[%s0 + $0x40] sm:$0xff]
    %v52 = vld [vmem:[%s0 + $0x48] sm:$0xff]
    %v53 = vld [vmem:[%s0 + $0x50] sm:$0xff]
    %v54 = vld [vmem:[%s0 + $0x58] sm:$0xff]
    %v55 = vld [vmem:[%s0 + $0x60] sm:$0xff]
    %v56 = vld [vmem:[%s0 + $0x68] sm:$0xff]
    %v57 = vld [vmem:[%s0 + $0x70] sm:$0xff]
    %v58 = vld [vmem:[%s0 + $0x78] sm:$0xff]
    %v59 = vld [vmem:[%s0 + $0x80] sm:$0xff]
    %v60 = vld [vmem:[%s0 + $0x88] sm:$0xff]
    %v61 = vld [vmem:[%s0 + $0x90] sm:$0xff]
    %v62 = vld [vmem:[%s0 + $0x98] sm:$0xff]
    %v63 = vld [vmem:[%s0 + $0xa0] sm:$0xff]
    %v64 = vld [vmem:[%s0 + $0xa8] sm:$0xff]
    %v65 = vld [vmem:[%s0 + $0xb0] sm:$0xff]
    %v66 = vld [vmem:[%s0 + $0xb8] sm:$0xff]
    %v67 = vld [vmem:[%s0 + $0xc0] sm:$0xff]
    %v68 = vld [vmem:[%s0 + $0xc8] sm:$0xff]
    %v69 = vld [vmem:[%s0 + $0xd0] sm:$0xff]
    %v70 = vld [vmem:[%s0 + $0xd8] sm:$0xff]
    %v71 = vld [vmem:[%s0 + $0xe0] sm:$0xff]
    %v72 = vld [vmem:[%s0 + $0xe8] sm:$0xff]
    %v73 = vld [vmem:[%s0 + $0xf0] sm:$0xff]
    %v74 = vld [vmem:[%s0 + $0xf8] sm:$0xff]
    %v75 = vld [vmem:[%s0 + $0x100] sm:$0xff]
    %v76 = vld [vmem:[%s0 + $0x108] sm:$0xff]
    %v77 = vld [vmem:[%s0 + $0x110] sm:$0xff]
    %v78 = vld [vmem:[%s0 + $0x118] sm:$0xff]
    %v79 = vld [vmem:[%s0 + $0x120] sm:$0xff]
    %v80 = vld [vmem:[%s0 + $0x128] sm:$0xff]
    %v81 = vld [vmem:[%s0 + $0x130] sm:$0xff]
    %v82 = vld [vmem:[%s0 + $0x138] sm:$0xff]
    %v83 = vld [vmem:[%s0 + $0x140] sm:$0xff]
    %v84 = vld [vmem:[%s0 + $0x148] sm:$0xff]
    %v85 = vld [vmem:[%s0 + $0x150] sm:$0xff]
    %v86 = vld [vmem:[%s0 + $0x158] sm:$0xff]
    %v87 = vld [vmem:[%s0 + $0x160] sm:$0xff]
    %v88 = vld [vmem:[%s0 + $0x168] sm:$0xff]
    %v89 = vld [vmem:[%s0 + $0x170] sm:$0xff]
    %v90 = vld [vmem:[%s0 + $0x178] sm:$0xff]
    %v91 = vld [vmem:[%s0 + $0x180] sm:$0xff]
    %v92 = vld [vmem:[%s0 + $0x188] sm:$0xff]
    %v93 = vld [vmem:[%s0 + $0x190] sm:$0xff]
    %v94 = vld [vmem:[%s0 + $0x198] sm:$0xff]
    %v95 = vld [vmem:[%s0 + $0x1a0] sm:$0xff]
    %v96 = vld [vmem:[%s0 + $0x1a8] sm:$0xff]
    %v97 = vld [vmem:[%s0 + $0x1b0] sm:$0xff]
    %v98 = vld [vmem:[%s0 + $0x1b8] sm:$0xff]
    %v99 = vld [vmem:[%s0 + $0x1c0] sm:$0xff]
    %v100 = vld [vmem:[%s0 + $0x1c8] sm:$0xff]
    %v101 = vld [vmem:[%s0 + $0x1d0] sm:$0xff]
    %v102 = vld [vmem:[%s0 + $0x1d8] sm:$0xff]
    %v103 = vld [vmem:[%s0 + $0x1e0] sm:$0xff]
    %v104 = vld [vmem:[%s0 + $0x1e8] sm:$0xff]
    %v105 = vld [vmem:[%s0 + $0x1f0] sm:$0xff]
    %v106 = vld [vmem:[%s0 + $0x1f8] sm:$0xff]
    %v107 = vld [vmem:[%s0 + $0x200] sm:$0xff]
    %v108 = vld [vmem:[%s0 + $0x208] sm:$0xff]
    %v109 = vld [vmem:[%s0 + $0x210] sm:$0xff]
    %v110 = vld [vmem:[%s0 + $0x218] sm:$0xff]
    %v111 = vld [vmem:[%s0 + $0x220] sm:$0xff]
    %v112 = vld [vmem:[%s0 + $0x228] sm:$0xff]
    %v113 = vld [vmem:[%s0 + $0x230] sm:$0xff]
    %v114 = vld [vmem:[%s0 + $0x238] sm:$0xff]
    %v115 = vld [vmem:[%s0 + $0x240] sm:$0xff]
    %v116 = vld [vmem:[%s0 + $0x248] sm:$0xff]
    %v117 = vld [vmem:[%s0 + $0x250] sm:$0xff]
    %v118 = vld [vmem:[%s0 + $0x258] sm:$0xff]
    %v119 = vld [vmem:[%s0 + $0x260] sm:$0xff]
    %v120 = vld [vmem:[%s0 + $0x268] sm:$0xff]
    %v121 = vld [vmem:[%s0 + $0x270] sm:$0xff]
    %v122 = vld [vmem:[%s0 + $0x278] sm:$0xff]
    %v123 = vld [vmem:[%s0 + $0x280] sm:$0xff]
    %v124 = vld [vmem:[%s0 + $0x288] sm:$0xff]
    %v125 = vld [vmem:[%s0 + $0x290] sm:$0xff]
    %v126 = vld [vmem:[%s0 + $0x298] sm:$0xff]
    %v127 = vld [vmem:[%s0 + $0x2a0] sm:$0xff]
    %v128 = vld [vmem:[%s0 + $0x2a8] sm:$0xff]
    %v129 = vld [vmem:[%s0 + $0x2b0] sm:$0xff]
    %v130 = vld [vmem:[%s0 + $0x2b8] sm:$0xff]
    %v131 = vld [vmem:[%s0 + $0x2c0] sm:$0xff]
    %v132 = vld [vmem:[%s0 + $0x2c8] sm:$0xff]
    %v133 = vld [vmem:[%s0 + $0x2d0] sm:$0xff]
    %v134 = vld [vmem:[%s0 + $0x2d8] sm:$0xff]
    %v135 = vld [vmem:[%s0 + $0x2e0] sm:$0xff]
    %v136 = vld [vmem:[%s0 + $0x2e8] sm:$0xff]
    %v137 = vld [vmem:[%s0 + $0x2f0] sm:$0xff]
    %v138 = vld [vmem:[%s0 + $0x2f8] sm:$0xff]
    %v139 = vld [vmem:[%s1] sm:$0xf]
    %v140 = vld [vmem:[%s1 + $0x4] sm:$0xf]
    %v141 = vld [vmem:[%s1 + $0x8] sm:$0xf]
    %v142 = vld [vmem:[%s1 + $0xc] sm:$0xf]
    %v143 = vld [vmem:[%s1 + $0x10] sm:$0xf]
    %v144 = vld [vmem:[%s1 + $0x14] sm:$0xf]
    %v145 = vld [vmem:[%s1 + $0x18] sm:$0xf]
    %v146 = vld [vmem:[%s1 + $0x1c] sm:$0xf]
    %v147 = vld [vmem:[%s1 + $0x20] sm:$0xf]
    %v148 = vld [vmem:[%s1 + $0x24] sm:$0xf]
    %v149 = vld [vmem:[%s1 + $0x28] sm:$0xf]
    %v150 = vld [vmem:[%s1 + $0x2c] sm:$0xf]
    %v151 = vld [vmem:[%s1 + $0x30] sm:$0xf]
    %v152 = vld [vmem:[%s1 + $0x34] sm:$0xf]
    %v153 = vld [vmem:[%s1 + $0x38] sm:$0xf]
    %v154 = vld [vmem:[%s1 + $0x3c] sm:$0xf]
    %v155 = vld [vmem:[%s1 + $0x40] sm:$0xf]
    %v156 = vld [vmem:[%s1 + $0x44] sm:$0xf]
    %v157 = vld [vmem:[%s1 + $0x48] sm:$0xf]
    %v158 = vld [vmem:[%s1 + $0x4c] sm:$0xf]
    %v159 = vld [vmem:[%s1 + $0x50] sm:$0xf]
    %v160 = vld [vmem:[%s1 + $0x54] sm:$0xf]
    %v161 = vld [vmem:[%s1 + $0x58] sm:$0xf]
    %v162 = vld [vmem:[%s1 + $0x5c] sm:$0xf]
    %v163 = vld [vmem:[%s1 + $0x60] sm:$0xf]
    %v164 = vld [vmem:[%s1 + $0x64] sm:$0xf]
    %v165 = vld [vmem:[%s1 + $0x68] sm:$0xf]
    %v166 = vld [vmem:[%s1 + $0x6c] sm:$0xf]
    %v167 = vld [vmem:[%s1 + $0x70] sm:$0xf]
    %v168 = vld [vmem:[%s1 + $0x74] sm:$0xf]
    %v169 = vld [vmem:[%s1 + $0x78] sm:$0xf]
    %v170 = vld [vmem:[%s1 + $0x7c] sm:$0xf]
    %v171 = vld [vmem:[%s1 + $0x80] sm:$0xf]
    %v172 = vld [vmem:[%s1 + $0x84] sm:$0xf]
    %v173 = vld [vmem:[%s1 + $0x88] sm:$0xf]
    %v174 = vld [vmem:[%s1 + $0x8c] sm:$0xf]
    %v175 = vld [vmem:[%s1 + $0x90] sm:$0xf]
    %v176 = vld [vmem:[%s1 + $0x94] sm:$0xf]
    %v177 = vld [vmem:[%s1 + $0x98] sm:$0xf]
    %v178 = vld [vmem:[%s1 + $0x9c] sm:$0xf]
    %v179 = vld [vmem:[%s1 + $0xa0] sm:$0xf]
    %v180 = vld [vmem:[%s1 + $0xa4] sm:$0xf]
    %v181 = vld [vmem:[%s1 + $0xa8] sm:$0xf]
    %v182 = vld [vmem:[%s1 + $0xac] sm:$0xf]
    %v183 = vld [vmem:[%s1 + $0xb0] sm:$0xf]
    %v184 = vld [vmem:[%s1 + $0xb4] sm:$0xf]
    %v185 = vld [vmem:[%s1 + $0xb8] sm:$0xf]
    %v186 = vld [vmem:[%s1 + $0xbc] sm:$0xf]
    %v187 = vld [vmem:[%s1 + $0xc0] sm:$0xf]
    %v188 = vld [vmem:[%s1 + $0xc4] sm:$0xf]
    %v189 = vld [vmem:[%s1 + $0xc8] sm:$0xf]
    %v190 = vld [vmem:[%s1 + $0xcc] sm:$0xf]
    %v191 = vld [vmem:[%s1 + $0xd0] sm:$0xf]
    %v192 = vld [vmem:[%s1 + $0xd4] sm:$0xf]
    %v193 = vld [vmem:[%s1 + $0xd8] sm:$0xf]
    %v194 = vld [vmem:[%s1 + $0xdc] sm:$0xf]
    %v195 = vld [vmem:[%s1 + $0xe0] sm:$0xf]
    %v196 = vld [vmem:[%s1 + $0xe4] sm:$0xf]
    %v197 = vld [vmem:[%s1 + $0xe8] sm:$0xf]
    %v198 = vld [vmem:[%s1 + $0xec] sm:$0xf]
    %v199 = vld [vmem:[%s1 + $0xf0] sm:$0xf]
    %v200 = vld [vmem:[%s1 + $0xf4] sm:$0xf]
    %v201 = vld [vmem:[%s1 + $0xf8] sm:$0xf]
    %v202 = vld [vmem:[%s1 + $0xfc] sm:$0xf]
    %v203 = vld [vmem:[%s1 + $0x100] sm:$0xf]
    %v204 = vld [vmem:[%s1 + $0x104] sm:$0xf]
    %v205 = vld [vmem:[%s1 + $0x108] sm:$0xf]
    %v206 = vld [vmem:[%s1 + $0x10c] sm:$0xf]
    %v207 = vld [vmem:[%s1 + $0x110] sm:$0xf]
    %v208 = vld [vmem:[%s1 + $0x114] sm:$0xf]
    %v209 = vld [vmem:[%s1 + $0x118] sm:$0xf]
    %v210 = vld [vmem:[%s1 + $0x11c] sm:$0xf]
    %v211 = vld [vmem:[%s1 + $0x120] sm:$0xf]
    %v212 = vld [vmem:[%s1 + $0x124] sm:$0xf]
    %v213 = vld [vmem:[%s1 + $0x128] sm:$0xf]
    %v214 = vld [vmem:[%s1 + $0x12c] sm:$0xf]
    %v215 = vld [vmem:[%s1 + $0x130] sm:$0xf]
    %v216 = vld [vmem:[%s1 + $0x134] sm:$0xf]
    %v217 = vld [vmem:[%s1 + $0x138] sm:$0xf]
    %v218 = vld [vmem:[%s1 + $0x13c] sm:$0xf]
    %v219 = vld [vmem:[%s1 + $0x140] sm:$0xf]
    %v220 = vld [vmem:[%s1 + $0x144] sm:$0xf]
    %v221 = vld [vmem:[%s1 + $0x148] sm:$0xf]
    %v222 = vld [vmem:[%s1 + $0x14c] sm:$0xf]
    %v223 = vld [vmem:[%s1 + $0x150] sm:$0xf]
    %v224 = vld [vmem:[%s1 + $0x154] sm:$0xf]
    %v225 = vld [vmem:[%s1 + $0x158] sm:$0xf]
    %v226 = vld [vmem:[%s1 + $0x15c] sm:$0xf]
    %v227 = vld [vmem:[%s1 + $0x160] sm:$0xf]
    %v228 = vld [vmem:[%s1 + $0x164] sm:$0xf]
    %v229 = vld [vmem:[%s1 + $0x168] sm:$0xf]
    %v230 = vld [vmem:[%s1 + $0x16c] sm:$0xf]
    %v231 = vld [vmem:[%s1 + $0x170] sm:$0xf]
    %v232 = vld [vmem:[%s1 + $0x174] sm:$0xf]
    %v233 = vld [vmem:[%s1 + $0x178] sm:$0xf]
    %v234 = vld [vmem:[%s1 + $0x17c] sm:$0xf]
    %v235 = vld [vmem:[%s1 + $0x180] sm:$0xf]
    %v236 = vld [vmem:[%s1 + $0x184] sm:$0xf]
    %v237 = vld [vmem:[%s1 + $0x188] sm:$0xf]
    %v238 = vld [vmem:[%s1 + $0x18c] sm:$0xf]
    %v239 = vld [vmem:[%s1 + $0x190] sm:$0xf]
    %v240 = vld [vmem:[%s1 + $0x194] sm:$0xf]
    %v241 = vld [vmem:[%s1 + $0x198] sm:$0xf]
    %v242 = vld [vmem:[%s1 + $0x19c] sm:$0xf]
    %v243 = vld [vmem:[%s1 + $0x1a0] sm:$0xf]
    %v244 = vld [vmem:[%s1 + $0x1a4] sm:$0xf]
    %v245 = vld [vmem:[%s1 + $0x1a8] sm:$0xf]
    %v246 = vld [vmem:[%s1 + $0x1ac] sm:$0xf]
    %v247 = vld [vmem:[%s1 + $0x1b0] sm:$0xf]
    %v248 = vld [vmem:[%s1 + $0x1b4] sm:$0xf]
    %v249 = vld [vmem:[%s1 + $0x1b8] sm:$0xf]
    %v250 = vld [vmem:[%s1 + $0x1bc] sm:$0xf]
    %v251 = vld [vmem:[%s1 + $0x1c0] sm:$0xf]
    %v252 = vld [vmem:[%s1 + $0x1c4] sm:$0xf]
    %v253 = vld [vmem:[%s1 + $0x1c8] sm:$0xf]
    %v254 = vld [vmem:[%s1 + $0x1cc] sm:$0xf]
    %v255 = vld [vmem:[%s1 + $0x1d0] sm:$0xf]
    %v256 = vld [vmem:[%s1 + $0x1d4] sm:$0xf]
    %v257 = vld [vmem:[%s1 + $0x1d8] sm:$0xf]
    %v258 = vld [vmem:[%s1 + $0x1dc] sm:$0xf]
    %v259 = vld [vmem:[%s1 + $0x1e0] sm:$0xf]
    %v260 = vld [vmem:[%s1 + $0x1e4] sm:$0xf]
    %v261 = vld [vmem:[%s1 + $0x1e8] sm:$0xf]
    %v262 = vld [vmem:[%s1 + $0x1ec] sm:$0xf]
    %v263 = vld [vmem:[%s1 + $0x1f0] sm:$0xf]
    %v264 = vld [vmem:[%s1 + $0x1f4] sm:$0xf]
    %v265 = vld [vmem:[%s1 + $0x1f8] sm:$0xf]
    %v266 = vld [vmem:[%s1 + $0x1fc] sm:$0xf]
    %v267 = vld [vmem:[%s1 + $0x200] sm:$0xf]
    %v268 = vld [vmem:[%s1 + $0x204] sm:$0xf]
    %v269 = vld [vmem:[%s1 + $0x208] sm:$0xf]
    %v270 = vld [vmem:[%s1 + $0x20c] sm:$0xf]
    %v271 = vld [vmem:[%s1 + $0x210] sm:$0xf]
    %v272 = vld [vmem:[%s1 + $0x214] sm:$0xf]
    %v273 = vld [vmem:[%s1 + $0x218] sm:$0xf]
    %v274 = vld [vmem:[%s1 + $0x21c] sm:$0xf]
    %v275 = vld [vmem:[%s1 + $0x220] sm:$0xf]
    %v276 = vld [vmem:[%s1 + $0x224] sm:$0xf]
    %v277 = vld [vmem:[%s1 + $0x228] sm:$0xf]
    %v278 = vld [vmem:[%s1 + $0x22c] sm:$0xf]
    %v279 = vld [vmem:[%s1 + $0x230] sm:$0xf]
    %v280 = vld [vmem:[%s1 + $0x234] sm:$0xf]
    %v281 = vld [vmem:[%s1 + $0x238] sm:$0xf]
    %v282 = vld [vmem:[%s1 + $0x23c] sm:$0xf]
    %v283 = vld [vmem:[%s1 + $0x240] sm:$0xf]
    %v284 = vld [vmem:[%s1 + $0x244] sm:$0xf]
    %v285 = vld [vmem:[%s1 + $0x248] sm:$0xf]
    %v286 = vld [vmem:[%s1 + $0x24c] sm:$0xf]
    %v287 = vld [vmem:[%s1 + $0x250] sm:$0xf]
    %v288 = vld [vmem:[%s1 + $0x254] sm:$0xf]
    %v289 = vld [vmem:[%s1 + $0x258] sm:$0xf]
    %v290 = vld [vmem:[%s1 + $0x25c] sm:$0xf]
    %v291 = vld [vmem:[%s1 + $0x260] sm:$0xf]
    %v292 = vld [vmem:[%s1 + $0x264] sm:$0xf]
    %v293 = vld [vmem:[%s1 + $0x268] sm:$0xf]
    %v294 = vld [vmem:[%s1 + $0x26c] sm:$0xf]
    %v295 = vld [vmem:[%s1 + $0x270] sm:$0xf]
    %v296 = vld [vmem:[%s1 + $0x274] sm:$0xf]
    %v297 = vld [vmem:[%s1 + $0x278] sm:$0xf]
    %v298 = vld [vmem:[%s1 + $0x27c] sm:$0xf]
    %v299 = vld [vmem:[%s1 + $0x280] sm:$0xf]
    %v300 = vld [vmem:[%s1 + $0x284] sm:$0xf]
    %v301 = vld [vmem:[%s1 + $0x288] sm:$0xf]
    %v302 = vld [vmem:[%s1 + $0x28c] sm:$0xf]
    %v303 = vld [vmem:[%s1 + $0x290] sm:$0xf]
    %v304 = vld [vmem:[%s1 + $0x294] sm:$0xf]
    %v305 = vld [vmem:[%s1 + $0x298] sm:$0xf]
    %v306 = vld [vmem:[%s1 + $0x29c] sm:$0xf]
    %v307 = vld [vmem:[%s1 + $0x2a0] sm:$0xf]
    %v308 = vld [vmem:[%s1 + $0x2a4] sm:$0xf]
    %v309 = vld [vmem:[%s1 + $0x2a8] sm:$0xf]
    %v310 = vld [vmem:[%s1 + $0x2ac] sm:$0xf]
    %v311 = vld [vmem:[%s1 + $0x2b0] sm:$0xf]
    %v312 = vld [vmem:[%s1 + $0x2b4] sm:$0xf]
    %v313 = vld [vmem:[%s1 + $0x2b8] sm:$0xf]
    %v314 = vld [vmem:[%s1 + $0x2bc] sm:$0xf]
    %v315 = vld [vmem:[%s1 + $0x2c0] sm:$0xf]
    %v316 = vld [vmem:[%s1 + $0x2c4] sm:$0xf]
    %v317 = vld [vmem:[%s1 + $0x2c8] sm:$0xf]
    %v318 = vld [vmem:[%s1 + $0x2cc] sm:$0xf]
    %v319 = vld [vmem:[%s1 + $0x2d0] sm:$0xf]
    %v320 = vld [vmem:[%s1 + $0x2d4] sm:$0xf]
    %v321 = vld [vmem:[%s1 + $0x2d8] sm:$0xf]
    %v322 = vld [vmem:[%s1 + $0x2dc] sm:$0xf]
    %v323 = vld [vmem:[%s1 + $0x2e0] sm:$0xf]
    %v324 = vld [vmem:[%s1 + $0x2e4] sm:$0xf]
    %v325 = vld [vmem:[%s1 + $0x2e8] sm:$0xf]
    %v326 = vld [vmem:[%s1 + $0x2ec] sm:$0xf]
    %v327 = vld [vmem:[%s1 + $0x2f0] sm:$0xf]
    %v328 = vld [vmem:[%s1 + $0x2f4] sm:$0xf]
    %v329 = vld [vmem:[%s1 + $0x2f8] sm:$0xf]
    %v330 = vld [vmem:[%s1 + $0x2fc] sm:$0xf]
    %v427 = vunpack.c.l.b16 %v43
    %v428 = vunpack.c.h.b16 %v43
    %v429 = vunpack.c.l.b16 %v44
    %v430 = vunpack.c.h.b16 %v44
    %v431 = vunpack.c.l.b16 %v45
    %v432 = vunpack.c.h.b16 %v45
    %v433 = vunpack.c.l.b16 %v46
    %v434 = vunpack.c.h.b16 %v46
    %v435 = vunpack.c.l.b16 %v47
    %v436 = vunpack.c.h.b16 %v47
    %v437 = vunpack.c.l.b16 %v48
    %v438 = vunpack.c.h.b16 %v48
    %v439 = vunpack.c.l.b16 %v49
    %v440 = vunpack.c.h.b16 %v49
    %v441 = vunpack.c.l.b16 %v50
    %v442 = vunpack.c.h.b16 %v50
    %v443 = vunpack.c.l.b16 %v51
    %v444 = vunpack.c.h.b16 %v51
    %v445 = vunpack.c.l.b16 %v52
    %v446 = vunpack.c.h.b16 %v52
    %v447 = vunpack.c.l.b16 %v53
    %v448 = vunpack.c.h.b16 %v53
    %v449 = vunpack.c.l.b16 %v54
    %v450 = vunpack.c.h.b16 %v54
    %v451 = vunpack.c.l.b16 %v55
    %v452 = vunpack.c.h.b16 %v55
    %v453 = vunpack.c.l.b16 %v56
    %v454 = vunpack.c.h.b16 %v56
    %v455 = vunpack.c.l.b16 %v57
    %v456 = vunpack.c.h.b16 %v57
    %v457 = vunpack.c.l.b16 %v58
    %v458 = vunpack.c.h.b16 %v58
    %v459 = vunpack.c.l.b16 %v59
    %v460 = vunpack.c.h.b16 %v59
    %v461 = vunpack.c.l.b16 %v60
    %v462 = vunpack.c.h.b16 %v60
    %v463 = vunpack.c.l.b16 %v61
    %v464 = vunpack.c.h.b16 %v61
    %v465 = vunpack.c.l.b16 %v62
    %v466 = vunpack.c.h.b16 %v62
    %v467 = vunpack.c.l.b16 %v63
    %v468 = vunpack.c.h.b16 %v63
    %v469 = vunpack.c.l.b16 %v64
    %v470 = vunpack.c.h.b16 %v64
    %v471 = vunpack.c.l.b16 %v65
    %v472 = vunpack.c.h.b16 %v65
    %v473 = vunpack.c.l.b16 %v66
    %v474 = vunpack.c.h.b16 %v66
    %v475 = vunpack.c.l.b16 %v67
    %v476 = vunpack.c.h.b16 %v67
    %v477 = vunpack.c.l.b16 %v68
    %v478 = vunpack.c.h.b16 %v68
    %v479 = vunpack.c.l.b16 %v69
    %v480 = vunpack.c.h.b16 %v69
    %v481 = vunpack.c.l.b16 %v70
    %v482 = vunpack.c.h.b16 %v70
    %v483 = vunpack.c.l.b16 %v71
    %v484 = vunpack.c.h.b16 %v71
    %v485 = vunpack.c.l.b16 %v72
    %v486 = vunpack.c.h.b16 %v72
    %v487 = vunpack.c.l.b16 %v73
    %v488 = vunpack.c.h.b16 %v73
    %v489 = vunpack.c.l.b16 %v74
    %v490 = vunpack.c.h.b16 %v74
    %v491 = vunpack.c.l.b16 %v75
    %v492 = vunpack.c.h.b16 %v75
    %v493 = vunpack.c.l.b16 %v76
    %v494 = vunpack.c.h.b16 %v76
    %v495 = vunpack.c.l.b16 %v77
    %v496 = vunpack.c.h.b16 %v77
    %v497 = vunpack.c.l.b16 %v78
    %v498 = vunpack.c.h.b16 %v78
    %v499 = vunpack.c.l.b16 %v79
    %v500 = vunpack.c.h.b16 %v79
    %v501 = vunpack.c.l.b16 %v80
    %v502 = vunpack.c.h.b16 %v80
    %v503 = vunpack.c.l.b16 %v81
    %v504 = vunpack.c.h.b16 %v81
    %v505 = vunpack.c.l.b16 %v82
    %v506 = vunpack.c.h.b16 %v82
    %v507 = vunpack.c.l.b16 %v83
    %v508 = vunpack.c.h.b16 %v83
    %v509 = vunpack.c.l.b16 %v84
    %v510 = vunpack.c.h.b16 %v84
    %v511 = vunpack.c.l.b16 %v85
    %v512 = vunpack.c.h.b16 %v85
    %v513 = vunpack.c.l.b16 %v86
    %v514 = vunpack.c.h.b16 %v86
    %v515 = vunpack.c.l.b16 %v87
    %v516 = vunpack.c.h.b16 %v87
    %v517 = vunpack.c.l.b16 %v88
    %v518 = vunpack.c.h.b16 %v88
    %v519 = vunpack.c.l.b16 %v89
    %v520 = vunpack.c.h.b16 %v89
    %v521 = vunpack.c.l.b16 %v90
    %v522 = vunpack.c.h.b16 %v90
    %v523 = vunpack.c.l.b16 %v91
    %v524 = vunpack.c.h.b16 %v91
    %v525 = vunpack.c.l.b16 %v92
    %v526 = vunpack.c.h.b16 %v92
    %v527 = vunpack.c.l.b16 %v93
    %v528 = vunpack.c.h.b16 %v93
    %v529 = vunpack.c.l.b16 %v94
    %v530 = vunpack.c.h.b16 %v94
    %v531 = vunpack.c.l.b16 %v95
    %v532 = vunpack.c.h.b16 %v95
    %v533 = vunpack.c.l.b16 %v96
    %v534 = vunpack.c.h.b16 %v96
    %v535 = vunpack.c.l.b16 %v97
    %v536 = vunpack.c.h.b16 %v97
    %v537 = vunpack.c.l.b16 %v98
    %v538 = vunpack.c.h.b16 %v98
    %v539 = vunpack.c.l.b16 %v99
    %v540 = vunpack.c.h.b16 %v99
    %v541 = vunpack.c.l.b16 %v100
    %v542 = vunpack.c.h.b16 %v100
    %v543 = vunpack.c.l.b16 %v101
    %v544 = vunpack.c.h.b16 %v101
    %v545 = vunpack.c.l.b16 %v102
    %v546 = vunpack.c.h.b16 %v102
    %v547 = vunpack.c.l.b16 %v103
    %v548 = vunpack.c.h.b16 %v103
    %v549 = vunpack.c.l.b16 %v104
    %v550 = vunpack.c.h.b16 %v104
    %v551 = vunpack.c.l.b16 %v105
    %v552 = vunpack.c.h.b16 %v105
    %v553 = vunpack.c.l.b16 %v106
    %v554 = vunpack.c.h.b16 %v106
    %v555 = vunpack.c.l.b16 %v107
    %v556 = vunpack.c.h.b16 %v107
    %v557 = vunpack.c.l.b16 %v108
    %v558 = vunpack.c.h.b16 %v108
    %v559 = vunpack.c.l.b16 %v109
    %v560 = vunpack.c.h.b16 %v109
    %v561 = vunpack.c.l.b16 %v110
    %v562 = vunpack.c.h.b16 %v110
    %v563 = vunpack.c.l.b16 %v111
    %v564 = vunpack.c.h.b16 %v111
    %v565 = vunpack.c.l.b16 %v112
    %v566 = vunpack.c.h.b16 %v112
    %v567 = vunpack.c.l.b16 %v113
    %v568 = vunpack.c.h.b16 %v113
    %v569 = vunpack.c.l.b16 %v114
    %v570 = vunpack.c.h.b16 %v114
    %v571 = vunpack.c.l.b16 %v115
    %v572 = vunpack.c.h.b16 %v115
    %v573 = vunpack.c.l.b16 %v116
    %v574 = vunpack.c.h.b16 %v116
    %v575 = vunpack.c.l.b16 %v117
    %v576 = vunpack.c.h.b16 %v117
    %v577 = vunpack.c.l.b16 %v118
    %v578 = vunpack.c.h.b16 %v118
    %v579 = vunpack.c.l.b16 %v119
    %v580 = vunpack.c.h.b16 %v119
    %v581 = vunpack.c.l.b16 %v120
    %v582 = vunpack.c.h.b16 %v120
    %v583 = vunpack.c.l.b16 %v121
    %v584 = vunpack.c.h.b16 %v121
    %v585 = vunpack.c.l.b16 %v122
    %v586 = vunpack.c.h.b16 %v122
    %v587 = vunpack.c.l.b16 %v123
    %v588 = vunpack.c.h.b16 %v123
    %v589 = vunpack.c.l.b16 %v124
    %v590 = vunpack.c.h.b16 %v124
    %v591 = vunpack.c.l.b16 %v125
    %v592 = vunpack.c.h.b16 %v125
    %v593 = vunpack.c.l.b16 %v126
    %v594 = vunpack.c.h.b16 %v126
    %v595 = vunpack.c.l.b16 %v127
    %v596 = vunpack.c.h.b16 %v127
    %v597 = vunpack.c.l.b16 %v128
    %v598 = vunpack.c.h.b16 %v128
    %v599 = vunpack.c.l.b16 %v129
    %v600 = vunpack.c.h.b16 %v129
    %v601 = vunpack.c.l.b16 %v130
    %v602 = vunpack.c.h.b16 %v130
    %v603 = vunpack.c.l.b16 %v131
    %v604 = vunpack.c.h.b16 %v131
    %v605 = vunpack.c.l.b16 %v132
    %v606 = vunpack.c.h.b16 %v132
    %v607 = vunpack.c.l.b16 %v133
    %v608 = vunpack.c.h.b16 %v133
    %v609 = vunpack.c.l.b16 %v134
    %v610 = vunpack.c.h.b16 %v134
    %v611 = vunpack.c.l.b16 %v135
    %v612 = vunpack.c.h.b16 %v135
    %v613 = vunpack.c.l.b16 %v136
    %v614 = vunpack.c.h.b16 %v136
    %v615 = vunpack.c.l.b16 %v137
    %v616 = vunpack.c.h.b16 %v137
    %v617 = vunpack.c.l.b16 %v138
    %v618 = vunpack.c.h.b16 %v138
    %v619 = vpack.c.b16 %v439, %v427
    %v620 = vpack.c.b16 %v440, %v428
    %v621 = vpack.c.b16 %v441, %v429
    %v622 = vpack.c.b16 %v442, %v430
    %v623 = vpack.c.b16 %v443, %v431
    %v624 = vpack.c.b16 %v444, %v432
    %v625 = vpack.c.b16 %v445, %v433
    %v626 = vpack.c.b16 %v446, %v434
    %v627 = vpack.c.b16 %v447, %v435
    %v628 = vpack.c.b16 %v448, %v436
    %v629 = vpack.c.b16 %v449, %v437
    %v630 = vpack.c.b16 %v450, %v438
    %v631 = vpack.c.b16 %v463, %v451
    %v632 = vpack.c.b16 %v464, %v452
    %v633 = vpack.c.b16 %v465, %v453
    %v634 = vpack.c.b16 %v466, %v454
    %v635 = vpack.c.b16 %v467, %v455
    %v636 = vpack.c.b16 %v468, %v456
    %v637 = vpack.c.b16 %v469, %v457
    %v638 = vpack.c.b16 %v470, %v458
    %v639 = vpack.c.b16 %v471, %v459
    %v640 = vpack.c.b16 %v472, %v460
    %v641 = vpack.c.b16 %v473, %v461
    %v642 = vpack.c.b16 %v474, %v462
    %v643 = vpack.c.b16 %v487, %v475
    %v644 = vpack.c.b16 %v488, %v476
    %v645 = vpack.c.b16 %v489, %v477
    %v646 = vpack.c.b16 %v490, %v478
    %v647 = vpack.c.b16 %v491, %v479
    %v648 = vpack.c.b16 %v492, %v480
    %v649 = vpack.c.b16 %v493, %v481
    %v650 = vpack.c.b16 %v494, %v482
    %v651 = vpack.c.b16 %v495, %v483
    %v652 = vpack.c.b16 %v496, %v484
    %v653 = vpack.c.b16 %v497, %v485
    %v654 = vpack.c.b16 %v498, %v486
    %v655 = vpack.c.b16 %v511, %v499
    %v656 = vpack.c.b16 %v512, %v500
    %v657 = vpack.c.b16 %v513, %v501
    %v658 = vpack.c.b16 %v514, %v502
    %v659 = vpack.c.b16 %v515, %v503
    %v660 = vpack.c.b16 %v516, %v504
    %v661 = vpack.c.b16 %v517, %v505
    %v662 = vpack.c.b16 %v518, %v506
    %v663 = vpack.c.b16 %v519, %v507
    %v664 = vpack.c.b16 %v520, %v508
    %v665 = vpack.c.b16 %v521, %v509
    %v666 = vpack.c.b16 %v522, %v510
    %v667 = vpack.c.b16 %v535, %v523
    %v668 = vpack.c.b16 %v536, %v524
    %v669 = vpack.c.b16 %v537, %v525
    %v670 = vpack.c.b16 %v538, %v526
    %v671 = vpack.c.b16 %v539, %v527
    %v672 = vpack.c.b16 %v540, %v528
    %v673 = vpack.c.b16 %v541, %v529
    %v674 = vpack.c.b16 %v542, %v530
    %v675 = vpack.c.b16 %v543, %v531
    %v676 = vpack.c.b16 %v544, %v532
    %v677 = vpack.c.b16 %v545, %v533
    %v678 = vpack.c.b16 %v546, %v534
    %v679 = vpack.c.b16 %v559, %v547
    %v680 = vpack.c.b16 %v560, %v548
    %v681 = vpack.c.b16 %v561, %v549
    %v682 = vpack.c.b16 %v562, %v550
    %v683 = vpack.c.b16 %v563, %v551
    %v684 = vpack.c.b16 %v564, %v552
    %v685 = vpack.c.b16 %v565, %v553
    %v686 = vpack.c.b16 %v566, %v554
    %v687 = vpack.c.b16 %v567, %v555
    %v688 = vpack.c.b16 %v568, %v556
    %v689 = vpack.c.b16 %v569, %v557
    %v690 = vpack.c.b16 %v570, %v558
    %v691 = vpack.c.b16 %v583, %v571
    %v692 = vpack.c.b16 %v584, %v572
    %v693 = vpack.c.b16 %v585, %v573
    %v694 = vpack.c.b16 %v586, %v574
    %v695 = vpack.c.b16 %v587, %v575
    %v696 = vpack.c.b16 %v588, %v576
    %v697 = vpack.c.b16 %v589, %v577
    %v698 = vpack.c.b16 %v590, %v578
    %v699 = vpack.c.b16 %v591, %v579
    %v700 = vpack.c.b16 %v592, %v580
    %v701 = vpack.c.b16 %v593, %v581
    %v702 = vpack.c.b16 %v594, %v582
    %v703 = vpack.c.b16 %v607, %v595
    %v704 = vpack.c.b16 %v608, %v596
    %v705 = vpack.c.b16 %v609, %v597
    %v706 = vpack.c.b16 %v610, %v598
    %v707 = vpack.c.b16 %v611, %v599
    %v708 = vpack.c.b16 %v612, %v600
    %v709 = vpack.c.b16 %v613, %v601
    %v710 = vpack.c.b16 %v614, %v602
    %v711 = vpack.c.b16 %v615, %v603
    %v712 = vpack.c.b16 %v616, %v604
    %v713 = vpack.c.b16 %v617, %v605
    %v714 = vpack.c.b16 %v618, %v606
    %v1003 = vunpack.c.l.b16 %v139
    %v1004 = vunpack.c.l.b16 %v140
    %v1005 = vunpack.c.l.b16 %v141
    %v1006 = vunpack.c.l.b16 %v142
    %v1007 = vunpack.c.l.b16 %v143
    %v1008 = vunpack.c.l.b16 %v144
    %v1009 = vunpack.c.l.b16 %v145
    %v1010 = vunpack.c.l.b16 %v146
    %v1011 = vunpack.c.l.b16 %v147
    %v1012 = vunpack.c.l.b16 %v148
    %v1013 = vunpack.c.l.b16 %v149
    %v1014 = vunpack.c.l.b16 %v150
    %v1015 = vunpack.c.l.b16 %v151
    %v1016 = vunpack.c.l.b16 %v152
    %v1017 = vunpack.c.l.b16 %v153
    %v1018 = vunpack.c.l.b16 %v154
    %v1019 = vunpack.c.l.b16 %v155
    %v1020 = vunpack.c.l.b16 %v156
    %v1021 = vunpack.c.l.b16 %v157
    %v1022 = vunpack.c.l.b16 %v158
    %v1023 = vunpack.c.l.b16 %v159
    %v1024 = vunpack.c.l.b16 %v160
    %v1025 = vunpack.c.l.b16 %v161
    %v1026 = vunpack.c.l.b16 %v162
    %v1027 = vunpack.c.l.b16 %v163
    %v1028 = vunpack.c.l.b16 %v164
    %v1029 = vunpack.c.l.b16 %v165
    %v1030 = vunpack.c.l.b16 %v166
    %v1031 = vunpack.c.l.b16 %v167
    %v1032 = vunpack.c.l.b16 %v168
    %v1033 = vunpack.c.l.b16 %v169
    %v1034 = vunpack.c.l.b16 %v170
    %v1035 = vunpack.c.l.b16 %v171
    %v1036 = vunpack.c.l.b16 %v172
    %v1037 = vunpack.c.l.b16 %v173
    %v1038 = vunpack.c.l.b16 %v174
    %v1039 = vunpack.c.l.b16 %v175
    %v1040 = vunpack.c.l.b16 %v176
    %v1041 = vunpack.c.l.b16 %v177
    %v1042 = vunpack.c.l.b16 %v178
    %v1043 = vunpack.c.l.b16 %v179
    %v1044 = vunpack.c.l.b16 %v180
    %v1045 = vunpack.c.l.b16 %v181
    %v1046 = vunpack.c.l.b16 %v182
    %v1047 = vunpack.c.l.b16 %v183
    %v1048 = vunpack.c.l.b16 %v184
    %v1049 = vunpack.c.l.b16 %v185
    %v1050 = vunpack.c.l.b16 %v186
    %v1051 = vunpack.c.l.b16 %v187
    %v1052 = vunpack.c.l.b16 %v188
    %v1053 = vunpack.c.l.b16 %v189
    %v1054 = vunpack.c.l.b16 %v190
    %v1055 = vunpack.c.l.b16 %v191
    %v1056 = vunpack.c.l.b16 %v192
    %v1057 = vunpack.c.l.b16 %v193
    %v1058 = vunpack.c.l.b16 %v194
    %v1059 = vunpack.c.l.b16 %v195
    %v1060 = vunpack.c.l.b16 %v196
    %v1061 = vunpack.c.l.b16 %v197
    %v1062 = vunpack.c.l.b16 %v198
    %v1063 = vunpack.c.l.b16 %v199
    %v1064 = vunpack.c.l.b16 %v200
    %v1065 = vunpack.c.l.b16 %v201
    %v1066 = vunpack.c.l.b16 %v202
    %v1067 = vunpack.c.l.b16 %v203
    %v1068 = vunpack.c.l.b16 %v204
    %v1069 = vunpack.c.l.b16 %v205
    %v1070 = vunpack.c.l.b16 %v206
    %v1071 = vunpack.c.l.b16 %v207
    %v1072 = vunpack.c.l.b16 %v208
    %v1073 = vunpack.c.l.b16 %v209
    %v1074 = vunpack.c.l.b16 %v210
    %v1075 = vunpack.c.l.b16 %v211
    %v1076 = vunpack.c.l.b16 %v212
    %v1077 = vunpack.c.l.b16 %v213
    %v1078 = vunpack.c.l.b16 %v214
    %v1079 = vunpack.c.l.b16 %v215
    %v1080 = vunpack.c.l.b16 %v216
    %v1081 = vunpack.c.l.b16 %v217
    %v1082 = vunpack.c.l.b16 %v218
    %v1083 = vunpack.c.l.b16 %v219
    %v1084 = vunpack.c.l.b16 %v220
    %v1085 = vunpack.c.l.b16 %v221
    %v1086 = vunpack.c.l.b16 %v222
    %v1087 = vunpack.c.l.b16 %v223
    %v1088 = vunpack.c.l.b16 %v224
    %v1089 = vunpack.c.l.b16 %v225
    %v1090 = vunpack.c.l.b16 %v226
    %v1091 = vunpack.c.l.b16 %v227
    %v1092 = vunpack.c.l.b16 %v228
    %v1093 = vunpack.c.l.b16 %v229
    %v1094 = vunpack.c.l.b16 %v230
    %v1095 = vunpack.c.l.b16 %v231
    %v1096 = vunpack.c.l.b16 %v232
    %v1097 = vunpack.c.l.b16 %v233
    %v1098 = vunpack.c.l.b16 %v234
    %v1099 = vunpack.c.l.b16 %v235
    %v1100 = vunpack.c.l.b16 %v236
    %v1101 = vunpack.c.l.b16 %v237
    %v1102 = vunpack.c.l.b16 %v238
    %v1103 = vunpack.c.l.b16 %v239
    %v1104 = vunpack.c.l.b16 %v240
    %v1105 = vunpack.c.l.b16 %v241
    %v1106 = vunpack.c.l.b16 %v242
    %v1107 = vunpack.c.l.b16 %v243
    %v1108 = vunpack.c.l.b16 %v244
    %v1109 = vunpack.c.l.b16 %v245
    %v1110 = vunpack.c.l.b16 %v246
    %v1111 = vunpack.c.l.b16 %v247
    %v1112 = vunpack.c.l.b16 %v248
    %v1113 = vunpack.c.l.b16 %v249
    %v1114 = vunpack.c.l.b16 %v250
    %v1115 = vunpack.c.l.b16 %v251
    %v1116 = vunpack.c.l.b16 %v252
    %v1117 = vunpack.c.l.b16 %v253
    %v1118 = vunpack.c.l.b16 %v254
    %v1119 = vunpack.c.l.b16 %v255
    %v1120 = vunpack.c.l.b16 %v256
    %v1121 = vunpack.c.l.b16 %v257
    %v1122 = vunpack.c.l.b16 %v258
    %v1123 = vunpack.c.l.b16 %v259
    %v1124 = vunpack.c.l.b16 %v260
    %v1125 = vunpack.c.l.b16 %v261
    %v1126 = vunpack.c.l.b16 %v262
    %v1127 = vunpack.c.l.b16 %v263
    %v1128 = vunpack.c.l.b16 %v264
    %v1129 = vunpack.c.l.b16 %v265
    %v1130 = vunpack.c.l.b16 %v266
    %v1131 = vunpack.c.l.b16 %v267
    %v1132 = vunpack.c.l.b16 %v268
    %v1133 = vunpack.c.l.b16 %v269
    %v1134 = vunpack.c.l.b16 %v270
    %v1135 = vunpack.c.l.b16 %v271
    %v1136 = vunpack.c.l.b16 %v272
    %v1137 = vunpack.c.l.b16 %v273
    %v1138 = vunpack.c.l.b16 %v274
    %v1139 = vunpack.c.l.b16 %v275
    %v1140 = vunpack.c.l.b16 %v276
    %v1141 = vunpack.c.l.b16 %v277
    %v1142 = vunpack.c.l.b16 %v278
    %v1143 = vunpack.c.l.b16 %v279
    %v1144 = vunpack.c.l.b16 %v280
    %v1145 = vunpack.c.l.b16 %v281
    %v1146 = vunpack.c.l.b16 %v282
    %v1147 = vunpack.c.l.b16 %v283
    %v1148 = vunpack.c.l.b16 %v284
    %v1149 = vunpack.c.l.b16 %v285
    %v1150 = vunpack.c.l.b16 %v286
    %v1151 = vunpack.c.l.b16 %v287
    %v1152 = vunpack.c.l.b16 %v288
    %v1153 = vunpack.c.l.b16 %v289
    %v1154 = vunpack.c.l.b16 %v290
    %v1155 = vunpack.c.l.b16 %v291
    %v1156 = vunpack.c.l.b16 %v292
    %v1157 = vunpack.c.l.b16 %v293
    %v1158 = vunpack.c.l.b16 %v294
    %v1159 = vunpack.c.l.b16 %v295
    %v1160 = vunpack.c.l.b16 %v296
    %v1161 = vunpack.c.l.b16 %v297
    %v1162 = vunpack.c.l.b16 %v298
    %v1163 = vunpack.c.l.b16 %v299
    %v1164 = vunpack.c.l.b16 %v300
    %v1165 = vunpack.c.l.b16 %v301
    %v1166 = vunpack.c.l.b16 %v302
    %v1167 = vunpack.c.l.b16 %v303
    %v1168 = vunpack.c.l.b16 %v304
    %v1169 = vunpack.c.l.b16 %v305
    %v1170 = vunpack.c.l.b16 %v306
    %v1171 = vunpack.c.l.b16 %v307
    %v1172 = vunpack.c.l.b16 %v308
    %v1173 = vunpack.c.l.b16 %v309
    %v1174 = vunpack.c.l.b16 %v310
    %v1175 = vunpack.c.l.b16 %v311
    %v1176 = vunpack.c.l.b16 %v312
    %v1177 = vunpack.c.l.b16 %v313
    %v1178 = vunpack.c.l.b16 %v314
    %v1179 = vunpack.c.l.b16 %v315
    %v1180 = vunpack.c.l.b16 %v316
    %v1181 = vunpack.c.l.b16 %v317
    %v1182 = vunpack.c.l.b16 %v318
    %v1183 = vunpack.c.l.b16 %v319
    %v1184 = vunpack.c.l.b16 %v320
    %v1185 = vunpack.c.l.b16 %v321
    %v1186 = vunpack.c.l.b16 %v322
    %v1187 = vunpack.c.l.b16 %v323
    %v1188 = vunpack.c.l.b16 %v324
    %v1189 = vunpack.c.l.b16 %v325
    %v1190 = vunpack.c.l.b16 %v326
    %v1191 = vunpack.c.l.b16 %v327
    %v1192 = vunpack.c.l.b16 %v328
    %v1193 = vunpack.c.l.b16 %v329
    %v1194 = vunpack.c.l.b16 %v330
    %v1195 = vpack.c.b16 %v1004, %v1003
    %v1196 = vpack.c.b16 %v1006, %v1005
    %v1197 = vpack.c.b16 %v1008, %v1007
    %v1198 = vpack.c.b16 %v1010, %v1009
    %v1199 = vpack.c.b16 %v1012, %v1011
    %v1200 = vpack.c.b16 %v1014, %v1013
    %v1201 = vpack.c.b16 %v1016, %v1015
    %v1202 = vpack.c.b16 %v1018, %v1017
    %v1203 = vpack.c.b16 %v1020, %v1019
    %v1204 = vpack.c.b16 %v1022, %v1021
    %v1205 = vpack.c.b16 %v1024, %v1023
    %v1206 = vpack.c.b16 %v1026, %v1025
    %v1207 = vpack.c.b16 %v1028, %v1027
    %v1208 = vpack.c.b16 %v1030, %v1029
    %v1209 = vpack.c.b16 %v1032, %v1031
    %v1210 = vpack.c.b16 %v1034, %v1033
    %v1211 = vpack.c.b16 %v1036, %v1035
    %v1212 = vpack.c.b16 %v1038, %v1037
    %v1213 = vpack.c.b16 %v1040, %v1039
    %v1214 = vpack.c.b16 %v1042, %v1041
    %v1215 = vpack.c.b16 %v1044, %v1043
    %v1216 = vpack.c.b16 %v1046, %v1045
    %v1217 = vpack.c.b16 %v1048, %v1047
    %v1218 = vpack.c.b16 %v1050, %v1049
    %v1219 = vpack.c.b16 %v1052, %v1051
    %v1220 = vpack.c.b16 %v1054, %v1053
    %v1221 = vpack.c.b16 %v1056, %v1055
    %v1222 = vpack.c.b16 %v1058, %v1057
    %v1223 = vpack.c.b16 %v1060, %v1059
    %v1224 = vpack.c.b16 %v1062, %v1061
    %v1225 = vpack.c.b16 %v1064, %v1063
    %v1226 = vpack.c.b16 %v1066, %v1065
    %v1227 = vpack.c.b16 %v1068, %v1067
    %v1228 = vpack.c.b16 %v1070, %v1069
    %v1229 = vpack.c.b16 %v1072, %v1071
    %v1230 = vpack.c.b16 %v1074, %v1073
    %v1231 = vpack.c.b16 %v1076, %v1075
    %v1232 = vpack.c.b16 %v1078, %v1077
    %v1233 = vpack.c.b16 %v1080, %v1079
    %v1234 = vpack.c.b16 %v1082, %v1081
    %v1235 = vpack.c.b16 %v1084, %v1083
    %v1236 = vpack.c.b16 %v1086, %v1085
    %v1237 = vpack.c.b16 %v1088, %v1087
    %v1238 = vpack.c.b16 %v1090, %v1089
    %v1239 = vpack.c.b16 %v1092, %v1091
    %v1240 = vpack.c.b16 %v1094, %v1093
    %v1241 = vpack.c.b16 %v1096, %v1095
    %v1242 = vpack.c.b16 %v1098, %v1097
    %v1243 = vpack.c.b16 %v1100, %v1099
    %v1244 = vpack.c.b16 %v1102, %v1101
    %v1245 = vpack.c.b16 %v1104, %v1103
    %v1246 = vpack.c.b16 %v1106, %v1105
    %v1247 = vpack.c.b16 %v1108, %v1107
    %v1248 = vpack.c.b16 %v1110, %v1109
    %v1249 = vpack.c.b16 %v1112, %v1111
    %v1250 = vpack.c.b16 %v1114, %v1113
    %v1251 = vpack.c.b16 %v1116, %v1115
    %v1252 = vpack.c.b16 %v1118, %v1117
    %v1253 = vpack.c.b16 %v1120, %v1119
    %v1254 = vpack.c.b16 %v1122, %v1121
    %v1255 = vpack.c.b16 %v1124, %v1123
    %v1256 = vpack.c.b16 %v1126, %v1125
    %v1257 = vpack.c.b16 %v1128, %v1127
    %v1258 = vpack.c.b16 %v1130, %v1129
    %v1259 = vpack.c.b16 %v1132, %v1131
    %v1260 = vpack.c.b16 %v1134, %v1133
    %v1261 = vpack.c.b16 %v1136, %v1135
    %v1262 = vpack.c.b16 %v1138, %v1137
    %v1263 = vpack.c.b16 %v1140, %v1139
    %v1264 = vpack.c.b16 %v1142, %v1141
    %v1265 = vpack.c.b16 %v1144, %v1143
    %v1266 = vpack.c.b16 %v1146, %v1145
    %v1267 = vpack.c.b16 %v1148, %v1147
    %v1268 = vpack.c.b16 %v1150, %v1149
    %v1269 = vpack.c.b16 %v1152, %v1151
    %v1270 = vpack.c.b16 %v1154, %v1153
    %v1271 = vpack.c.b16 %v1156, %v1155
    %v1272 = vpack.c.b16 %v1158, %v1157
    %v1273 = vpack.c.b16 %v1160, %v1159
    %v1274 = vpack.c.b16 %v1162, %v1161
    %v1275 = vpack.c.b16 %v1164, %v1163
    %v1276 = vpack.c.b16 %v1166, %v1165
    %v1277 = vpack.c.b16 %v1168, %v1167
    %v1278 = vpack.c.b16 %v1170, %v1169
    %v1279 = vpack.c.b16 %v1172, %v1171
    %v1280 = vpack.c.b16 %v1174, %v1173
    %v1281 = vpack.c.b16 %v1176, %v1175
    %v1282 = vpack.c.b16 %v1178, %v1177
    %v1283 = vpack.c.b16 %v1180, %v1179
    %v1284 = vpack.c.b16 %v1182, %v1181
    %v1285 = vpack.c.b16 %v1184, %v1183
    %v1286 = vpack.c.b16 %v1186, %v1185
    %v1287 = vpack.c.b16 %v1188, %v1187
    %v1288 = vpack.c.b16 %v1190, %v1189
    %v1289 = vpack.c.b16 %v1192, %v1191
    %v1290 = vpack.c.b16 %v1194, %v1193
    %1387 = vmatprep.subr.bf16.mxu0 0
    %1388 = vmatpush1.bf16.msra.mxu0 %v1195
    %1389 = vmatprep.subr.bf16.mxu0 0
    %1390 = vmatpush1.bf16.msra.mxu0 %v1196
    %1391 = vmatprep.subr.bf16.mxu0 0
    %1392 = vmatpush1.bf16.msra.mxu0 %v1197
    %1393 = vmatprep.subr.bf16.mxu0 0
    %1394 = vmatpush1.bf16.msra.mxu0 %v1198
    %1395 = vmatprep.subr.bf16.mxu0 0
    %1396 = vmatpush1.bf16.msra.mxu0 %v1199
    %1397 = vmatprep.subr.bf16.mxu0 0
    %1398 = vmatpush1.bf16.msra.mxu0 %v1200
    %1399 = vmatprep.subr.bf16.mxu0 0
    %1400 = vmatpush1.bf16.msra.mxu0 %v1201
    %1401 = vmatprep.subr.bf16.mxu0 0
    %1402 = vmatpush1.bf16.msra.mxu0 %v1202
    %1403 = vmatprep.subr.bf16.mxu0 0
    %1404 = vmatpush1.bf16.msra.mxu0 %v1203
    %1405 = vmatprep.subr.bf16.mxu0 0
    %1406 = vmatpush1.bf16.msra.mxu0 %v1204
    %1407 = vmatprep.subr.bf16.mxu0 0
    %1408 = vmatpush1.bf16.msra.mxu0 %v1205
    %1409 = vmatprep.subr.bf16.mxu0 0
    %1410 = vmatpush1.bf16.msra.mxu0 %v1206
    %1411 = vmatprep.subr.bf16.mxu0 0
    %1412 = vmatpush1.bf16.msra.mxu0 %v1207
    %1413 = vmatprep.subr.bf16.mxu0 0
    %1414 = vmatpush1.bf16.msra.mxu0 %v1208
    %1415 = vmatprep.subr.bf16.mxu0 0
    %1416 = vmatpush1.bf16.msra.mxu0 %v1209
    %1417 = vmatprep.subr.bf16.mxu0 0
    %1418 = vmatpush1.bf16.msra.mxu0 %v1210
    %1419 = vmatprep.mubr.bf16.mxu0 %v620
    %1420 = vmatmul.mubr.bf16.gmra.mrb[0].mxu0 %v619
    %v1421 = vpop.f32.mrb[0].mxu0
    %v1422 = vadd.f32 0.0, %v1421
    %v1423 = vpop.f32.mrb[0].mxu0
    %v1424 = vpop.f32.mrb[0].mxu0
    %v1425 = vadd.f32 0.0, %v1424
    %v1426 = vpop.f32.mrb[0].mxu0
    %1427 = vmatprep.mubr.bf16.mxu0 %v632
    %1428 = vmatmul.mubr.bf16.gmra.mrb[0].mxu0 %v631
    %v1429 = vpop.f32.mrb[0].mxu0
    %v1430 = vadd.f32 0.0, %v1429
    %v1431 = vpop.f32.mrb[0].mxu0
    %v1432 = vpop.f32.mrb[0].mxu0
    %v1433 = vadd.f32 0.0, %v1432
    %v1434 = vpop.f32.mrb[0].mxu0
    %1435 = vmatprep.mubr.bf16.mxu0 %v644
    %1436 = vmatmul.mubr.bf16.gmra.mrb[0].mxu0 %v643
    %v1437 = vpop.f32.mrb[0].mxu0
    %v1438 = vadd.f32 0.0, %v1437
    %v1439 = vpop.f32.mrb[0].mxu0
    %v1440 = vpop.f32.mrb[0].mxu0
    %v1441 = vadd.f32 0.0, %v1440
    %v1442 = vpop.f32.mrb[0].mxu0
    %1443 = vmatprep.mubr.bf16.mxu0 %v656
    %1444 = vmatmul.mubr.bf16.gmra.mrb[0].mxu0 %v655
    %v1445 = vpop.f32.mrb[0].mxu0
    %v1446 = vadd.f32 0.0, %v1445
    %v1447 = vpop.f32.mrb[0].mxu0
    %v1448 = vpop.f32.mrb[0].mxu0
    %v1449 = vadd.f32 0.0, %v1448
    %v1450 = vpop.f32.mrb[0].mxu0
    %1451 = vmatprep.mubr.bf16.mxu0 %v668
    %1452 = vmatmul.mubr.bf16.gmra.mrb[0].mxu0 %v667
    %v1453 = vpop.f32.mrb[0].mxu0
    %v1454 = vadd.f32 0.0, %v1453
    %v1455 = vpop.f32.mrb[0].mxu0
    %v1456 = vpop.f32.mrb[0].mxu0
    %v1457 = vadd.f32 0.0, %v1456
    %v1458 = vpop.f32.mrb[0].mxu0
    %1459 = vmatprep.mubr.bf16.mxu0 %v680
    %1460 = vmatmul.mubr.bf16.gmra.mrb[0].mxu0 %v679
    %v1461 = vpop.f32.mrb[0].mxu0
    %v1462 = vadd.f32 0.0, %v1461
    %v1463 = vpop.f32.mrb[0].mxu0
    %v1464 = vpop.f32.mrb[0].mxu0
    %v1465 = vadd.f32 0.0, %v1464
    %v1466 = vpop.f32.mrb[0].mxu0
    %1467 = vmatprep.mubr.bf16.mxu0 %v692
    %1468 = vmatmul.mubr.bf16.gmra.mrb[0].mxu0 %v691
    %v1469 = vpop.f32.mrb[0].mxu0
    %v1470 = vadd.f32 0.0, %v1469
    %v1471 = vpop.f32.mrb[0].mxu0
    %v1472 = vpop.f32.mrb[0].mxu0
    %v1473 = vadd.f32 0.0, %v1472
    %v1474 = vpop.f32.mrb[0].mxu0
    %1475 = vmatprep.mubr.bf16.mxu0 %v704
    %1476 = vmatmul.mubr.bf16.gmra.mrb[0].mxu0 %v703
    %v1477 = vpop.f32.mrb[0].mxu0
    %v1478 = vadd.f32 0.0, %v1477
    %v1479 = vpop.f32.mrb[0].mxu0
    %v1480 = vpop.f32.mrb[0].mxu0
    %v1481 = vadd.f32 0.0, %v1480
    %v1482 = vpop.f32.mrb[0].mxu0
    %1483 = vdwg.mxu0
    %1484 = vmatprep.subr.bf16.mxu0 0
    %1485 = vmatpush1.bf16.msra.mxu0 %v1211
    %1486 = vmatprep.subr.bf16.mxu0 0
    %1487 = vmatpush1.bf16.msra.mxu0 %v1212
    %1488 = vmatprep.subr.bf16.mxu0 0
    %1489 = vmatpush1.bf16.msra.mxu0 %v1213
    %1490 = vmatprep.subr.bf16.mxu0 0
    %1491 = vmatpush1.bf16.msra.mxu0 %v1214
    %1492 = vmatprep.subr.bf16.mxu0 0
    %1493 = vmatpush1.bf16.msra.mxu0 %v1215
    %1494 = vmatprep.subr.bf16.mxu0 0
    %1495 = vmatpush1.bf16.msra.mxu0 %v1216
    %1496 = vmatprep.subr.bf16.mxu0 0
    %1497 = vmatpush1.bf16.msra.mxu0 %v1217
    %1498 = vmatprep.subr.bf16.mxu0 0
    %1499 = vmatpush1.bf16.msra.mxu0 %v1218
    %1500 = vmatprep.subr.bf16.mxu0 0
    %1501 = vmatpush1.bf16.msra.mxu0 %v1219
    %1502 = vmatprep.subr.bf16.mxu0 0
    %1503 = vmatpush1.bf16.msra.mxu0 %v1220
    %1504 = vmatprep.subr.bf16.mxu0 0
    %1505 = vmatpush1.bf16.msra.mxu0 %v1221
    %1506 = vmatprep.subr.bf16.mxu0 0
    %1507 = vmatpush1.bf16.msra.mxu0 %v1222
    %1508 = vmatprep.subr.bf16.mxu0 0
    %1509 = vmatpush1.bf16.msra.mxu0 %v1223
    %1510 = vmatprep.subr.bf16.mxu0 0
    %1511 = vmatpush1.bf16.msra.mxu0 %v1224
    %1512 = vmatprep.subr.bf16.mxu0 0
    %1513 = vmatpush1.bf16.msra.mxu0 %v1225
    %1514 = vmatprep.subr.bf16.mxu0 0
    %1515 = vmatpush1.bf16.msra.mxu0 %v1226
    %1516 = vmatprep.mubr.bf16.mxu0 %v622
    %1517 = vmatmul.mubr.bf16.gmra.mrb[0].mxu0 %v621
    %v1518 = vpop.f32.mrb[0].mxu0
    %v1519 = vadd.f32 %v1422, %v1518
    %v1520 = vpop.f32.mrb[0].mxu0
    %v1521 = vpop.f32.mrb[0].mxu0
    %v1522 = vadd.f32 %v1425, %v1521
    %v1523 = vpop.f32.mrb[0].mxu0
    %1524 = vmatprep.mubr.bf16.mxu0 %v634
    %1525 = vmatmul.mubr.bf16.gmra.mrb[0].mxu0 %v633
    %v1526 = vpop.f32.mrb[0].mxu0
    %v1527 = vadd.f32 %v1430, %v1526
    %v1528 = vpop.f32.mrb[0].mxu0
    %v1529 = vpop.f32.mrb[0].mxu0
    %v1530 = vadd.f32 %v1433, %v1529
    %v1531 = vpop.f32.mrb[0].mxu0
    %1532 = vmatprep.mubr.bf16.mxu0 %v646
    %1533 = vmatmul.mubr.bf16.gmra.mrb[0].mxu0 %v645
    %v1534 = vpop.f32.mrb[0].mxu0
    %v1535 = vadd.f32 %v1438, %v1534
    %v1536 = vpop.f32.mrb[0].mxu0
    %v1537 = vpop.f32.mrb[0].mxu0
    %v1538 = vadd.f32 %v1441, %v1537
    %v1539 = vpop.f32.mrb[0].mxu0
    %1540 = vmatprep.mubr.bf16.mxu0 %v658
    %1541 = vmatmul.mubr.bf16.gmra.mrb[0].mxu0 %v657
    %v1542 = vpop.f32.mrb[0].mxu0
    %v1543 = vadd.f32 %v1446, %v1542
    %v1544 = vpop.f32.mrb[0].mxu0
    %v1545 = vpop.f32.mrb[0].mxu0
    %v1546 = vadd.f32 %v1449, %v1545
    %v1547 = vpop.f32.mrb[0].mxu0
    %1548 = vmatprep.mubr.bf16.mxu0 %v670
    %1549 = vmatmul.mubr.bf16.gmra.mrb[0].mxu0 %v669
    %v1550 = vpop.f32.mrb[0].mxu0
    %v1551 = vadd.f32 %v1454, %v1550
    %v1552 = vpop.f32.mrb[0].mxu0
    %v1553 = vpop.f32.mrb[0].mxu0
    %v1554 = vadd.f32 %v1457, %v1553
    %v1555 = vpop.f32.mrb[0].mxu0
    %1556 = vmatprep.mubr.bf16.mxu0 %v682
    %1557 = vmatmul.mubr.bf16.gmra.mrb[0].mxu0 %v681
    %v1558 = vpop.f32.mrb[0].mxu0
    %v1559 = vadd.f32 %v1462, %v1558
    %v1560 = vpop.f32.mrb[0].mxu0
    %v1561 = vpop.f32.mrb[0].mxu0
    %v1562 = vadd.f32 %v1465, %v1561
    %v1563 = vpop.f32.mrb[0].mxu0
    %1564 = vmatprep.mubr.bf16.mxu0 %v694
    %1565 = vmatmul.mubr.bf16.gmra.mrb[0].mxu0 %v693
    %v1566 = vpop.f32.mrb[0].mxu0
    %v1567 = vadd.f32 %v1470, %v1566
    %v1568 = vpop.f32.mrb[0].mxu0
    %v1569 = vpop.f32.mrb[0].mxu0
    %v1570 = vadd.f32 %v1473, %v1569
    %v1571 = vpop.f32.mrb[0].mxu0
    %1572 = vmatprep.mubr.bf16.mxu0 %v706
    %1573 = vmatmul.mubr.bf16.gmra.mrb[0].mxu0 %v705
    %v1574 = vpop.f32.mrb[0].mxu0
    %v1575 = vadd.f32 %v1478, %v1574
    %v1576 = vpop.f32.mrb[0].mxu0
    %v1577 = vpop.f32.mrb[0].mxu0
    %v1578 = vadd.f32 %v1481, %v1577
    %v1579 = vpop.f32.mrb[0].mxu0
    %1580 = vdwg.mxu0
    %1581 = vmatprep.subr.bf16.mxu0 0
    %1582 = vmatpush1.bf16.msra.mxu0 %v1227
    %1583 = vmatprep.subr.bf16.mxu0 0
    %1584 = vmatpush1.bf16.msra.mxu0 %v1228
    %1585 = vmatprep.subr.bf16.mxu0 0
    %1586 = vmatpush1.bf16.msra.mxu0 %v1229
    %1587 = vmatprep.subr.bf16.mxu0 0
    %1588 = vmatpush1.bf16.msra.mxu0 %v1230
    %1589 = vmatprep.subr.bf16.mxu0 0
    %1590 = vmatpush1.bf16.msra.mxu0 %v1231
    %1591 = vmatprep.subr.bf16.mxu0 0
    %1592 = vmatpush1.bf16.msra.mxu0 %v1232
    %1593 = vmatprep.subr.bf16.mxu0 0
    %1594 = vmatpush1.bf16.msra.mxu0 %v1233
    %1595 = vmatprep.subr.bf16.mxu0 0
    %1596 = vmatpush1.bf16.msra.mxu0 %v1234
    %1597 = vmatprep.subr.bf16.mxu0 0
    %1598 = vmatpush1.bf16.msra.mxu0 %v1235
    %1599 = vmatprep.subr.bf16.mxu0 0
    %1600 = vmatpush1.bf16.msra.mxu0 %v1236
    %1601 = vmatprep.subr.bf16.mxu0 0
    %1602 = vmatpush1.bf16.msra.mxu0 %v1237
    %1603 = vmatprep.subr.bf16.mxu0 0
    %1604 = vmatpush1.bf16.msra.mxu0 %v1238
    %1605 = vmatprep.subr.bf16.mxu0 0
    %1606 = vmatpush1.bf16.msra.mxu0 %v1239
    %1607 = vmatprep.subr.bf16.mxu0 0
    %1608 = vmatpush1.bf16.msra.mxu0 %v1240
    %1609 = vmatprep.subr.bf16.mxu0 0
    %1610 = vmatpush1.bf16.msra.mxu0 %v1241
    %1611 = vmatprep.subr.bf16.mxu0 0
    %1612 = vmatpush1.bf16.msra.mxu0 %v1242
    %1613 = vmatprep.mubr.bf16.mxu0 %v624
    %1614 = vmatmul.mubr.bf16.gmra.mrb[0].mxu0 %v623
    %v1615 = vpop.f32.mrb[0].mxu0
    %v1616 = vadd.f32 %v1519, %v1615
    %v1617 = vpop.f32.mrb[0].mxu0
    %v1618 = vpop.f32.mrb[0].mxu0
    %v1619 = vadd.f32 %v1522, %v1618
    %v1620 = vpop.f32.mrb[0].mxu0
    %1621 = vmatprep.mubr.bf16.mxu0 %v636
    %1622 = vmatmul.mubr.bf16.gmra.mrb[0].mxu0 %v635
    %v1623 = vpop.f32.mrb[0].mxu0
    %v1624 = vadd.f32 %v1527, %v1623
    %v1625 = vpop.f32.mrb[0].mxu0
    %v1626 = vpop.f32.mrb[0].mxu0
    %v1627 = vadd.f32 %v1530, %v1626
    %v1628 = vpop.f32.mrb[0].mxu0
    %1629 = vmatprep.mubr.bf16.mxu0 %v648
    %1630 = vmatmul.mubr.bf16.gmra.mrb[0].mxu0 %v647
    %v1631 = vpop.f32.mrb[0].mxu0
    %v1632 = vadd.f32 %v1535, %v1631
    %v1633 = vpop.f32.mrb[0].mxu0
    %v1634 = vpop.f32.mrb[0].mxu0
    %v1635 = vadd.f32 %v1538, %v1634
    %v1636 = vpop.f32.mrb[0].mxu0
    %1637 = vmatprep.mubr.bf16.mxu0 %v660
    %1638 = vmatmul.mubr.bf16.gmra.mrb[0].mxu0 %v659
    %v1639 = vpop.f32.mrb[0].mxu0
    %v1640 = vadd.f32 %v1543, %v1639
    %v1641 = vpop.f32.mrb[0].mxu0
    %v1642 = vpop.f32.mrb[0].mxu0
    %v1643 = vadd.f32 %v1546, %v1642
    %v1644 = vpop.f32.mrb[0].mxu0
    %1645 = vmatprep.mubr.bf16.mxu0 %v672
    %1646 = vmatmul.mubr.bf16.gmra.mrb[0].mxu0 %v671
    %v1647 = vpop.f32.mrb[0].mxu0
    %v1648 = vadd.f32 %v1551, %v1647
    %v1649 = vpop.f32.mrb[0].mxu0
    %v1650 = vpop.f32.mrb[0].mxu0
    %v1651 = vadd.f32 %v1554, %v1650
    %v1652 = vpop.f32.mrb[0].mxu0
    %1653 = vmatprep.mubr.bf16.mxu0 %v684
    %1654 = vmatmul.mubr.bf16.gmra.mrb[0].mxu0 %v683
    %v1655 = vpop.f32.mrb[0].mxu0
    %v1656 = vadd.f32 %v1559, %v1655
    %v1657 = vpop.f32.mrb[0].mxu0
    %v1658 = vpop.f32.mrb[0].mxu0
    %v1659 = vadd.f32 %v1562, %v1658
    %v1660 = vpop.f32.mrb[0].mxu0
    %1661 = vmatprep.mubr.bf16.mxu0 %v696
    %1662 = vmatmul.mubr.bf16.gmra.mrb[0].mxu0 %v695
    %v1663 = vpop.f32.mrb[0].mxu0
    %v1664 = vadd.f32 %v1567, %v1663
    %v1665 = vpop.f32.mrb[0].mxu0
    %v1666 = vpop.f32.mrb[0].mxu0
    %v1667 = vadd.f32 %v1570, %v1666
    %v1668 = vpop.f32.mrb[0].mxu0
    %1669 = vmatprep.mubr.bf16.mxu0 %v708
    %1670 = vmatmul.mubr.bf16.gmra.mrb[0].mxu0 %v707
    %v1671 = vpop.f32.mrb[0].mxu0
    %v1672 = vadd.f32 %v1575, %v1671
    %v1673 = vpop.f32.mrb[0].mxu0
    %v1674 = vpop.f32.mrb[0].mxu0
    %v1675 = vadd.f32 %v1578, %v1674
    %v1676 = vpop.f32.mrb[0].mxu0
    %1677 = vdwg.mxu0
    %1678 = vmatprep.subr.bf16.mxu0 0
    %1679 = vmatpush1.bf16.msra.mxu0 %v1243
    %1680 = vmatprep.subr.bf16.mxu0 0
    %1681 = vmatpush1.bf16.msra.mxu0 %v1244
    %1682 = vmatprep.subr.bf16.mxu0 0
    %1683 = vmatpush1.bf16.msra.mxu0 %v1245
    %1684 = vmatprep.subr.bf16.mxu0 0
    %1685 = vmatpush1.bf16.msra.mxu0 %v1246
    %1686 = vmatprep.subr.bf16.mxu0 0
    %1687 = vmatpush1.bf16.msra.mxu0 %v1247
    %1688 = vmatprep.subr.bf16.mxu0 0
    %1689 = vmatpush1.bf16.msra.mxu0 %v1248
    %1690 = vmatprep.subr.bf16.mxu0 0
    %1691 = vmatpush1.bf16.msra.mxu0 %v1249
    %1692 = vmatprep.subr.bf16.mxu0 0
    %1693 = vmatpush1.bf16.msra.mxu0 %v1250
    %1694 = vmatprep.subr.bf16.mxu0 0
    %1695 = vmatpush1.bf16.msra.mxu0 %v1251
    %1696 = vmatprep.subr.bf16.mxu0 0
    %1697 = vmatpush1.bf16.msra.mxu0 %v1252
    %1698 = vmatprep.subr.bf16.mxu0 0
    %1699 = vmatpush1.bf16.msra.mxu0 %v1253
    %1700 = vmatprep.subr.bf16.mxu0 0
    %1701 = vmatpush1.bf16.msra.mxu0 %v1254
    %1702 = vmatprep.subr.bf16.mxu0 0
    %1703 = vmatpush1.bf16.msra.mxu0 %v1255
    %1704 = vmatprep.subr.bf16.mxu0 0
    %1705 = vmatpush1.bf16.msra.mxu0 %v1256
    %1706 = vmatprep.subr.bf16.mxu0 0
    %1707 = vmatpush1.bf16.msra.mxu0 %v1257
    %1708 = vmatprep.subr.bf16.mxu0 0
    %1709 = vmatpush1.bf16.msra.mxu0 %v1258
    %1710 = vmatprep.mubr.bf16.mxu0 %v626
    %1711 = vmatmul.mubr.bf16.gmra.mrb[0].mxu0 %v625
    %v1712 = vpop.f32.mrb[0].mxu0
    %v1713 = vadd.f32 %v1616, %v1712
    %v1714 = vpop.f32.mrb[0].mxu0
    %v1715 = vpop.f32.mrb[0].mxu0
    %v1716 = vadd.f32 %v1619, %v1715
    %v1717 = vpop.f32.mrb[0].mxu0
    %1718 = vmatprep.mubr.bf16.mxu0 %v638
    %1719 = vmatmul.mubr.bf16.gmra.mrb[0].mxu0 %v637
    %v1720 = vpop.f32.mrb[0].mxu0
    %v1721 = vadd.f32 %v1624, %v1720
    %v1722 = vpop.f32.mrb[0].mxu0
    %v1723 = vpop.f32.mrb[0].mxu0
    %v1724 = vadd.f32 %v1627, %v1723
    %v1725 = vpop.f32.mrb[0].mxu0
    %1726 = vmatprep.mubr.bf16.mxu0 %v650
    %1727 = vmatmul.mubr.bf16.gmra.mrb[0].mxu0 %v649
    %v1728 = vpop.f32.mrb[0].mxu0
    %v1729 = vadd.f32 %v1632, %v1728
    %v1730 = vpop.f32.mrb[0].mxu0
    %v1731 = vpop.f32.mrb[0].mxu0
    %v1732 = vadd.f32 %v1635, %v1731
    %v1733 = vpop.f32.mrb[0].mxu0
    %1734 = vmatprep.mubr.bf16.mxu0 %v662
    %1735 = vmatmul.mubr.bf16.gmra.mrb[0].mxu0 %v661
    %v1736 = vpop.f32.mrb[0].mxu0
    %v1737 = vadd.f32 %v1640, %v1736
    %v1738 = vpop.f32.mrb[0].mxu0
    %v1739 = vpop.f32.mrb[0].mxu0
    %v1740 = vadd.f32 %v1643, %v1739
    %v1741 = vpop.f32.mrb[0].mxu0
    %1742 = vmatprep.mubr.bf16.mxu0 %v674
    %1743 = vmatmul.mubr.bf16.gmra.mrb[0].mxu0 %v673
    %v1744 = vpop.f32.mrb[0].mxu0
    %v1745 = vadd.f32 %v1648, %v1744
    %v1746 = vpop.f32.mrb[0].mxu0
    %v1747 = vpop.f32.mrb[0].mxu0
    %v1748 = vadd.f32 %v1651, %v1747
    %v1749 = vpop.f32.mrb[0].mxu0
    %1750 = vmatprep.mubr.bf16.mxu0 %v686
    %1751 = vmatmul.mubr.bf16.gmra.mrb[0].mxu0 %v685
    %v1752 = vpop.f32.mrb[0].mxu0
    %v1753 = vadd.f32 %v1656, %v1752
    %v1754 = vpop.f32.mrb[0].mxu0
    %v1755 = vpop.f32.mrb[0].mxu0
    %v1756 = vadd.f32 %v1659, %v1755
    %v1757 = vpop.f32.mrb[0].mxu0
    %1758 = vmatprep.mubr.bf16.mxu0 %v698
    %1759 = vmatmul.mubr.bf16.gmra.mrb[0].mxu0 %v697
    %v1760 = vpop.f32.mrb[0].mxu0
    %v1761 = vadd.f32 %v1664, %v1760
    %v1762 = vpop.f32.mrb[0].mxu0
    %v1763 = vpop.f32.mrb[0].mxu0
    %v1764 = vadd.f32 %v1667, %v1763
    %v1765 = vpop.f32.mrb[0].mxu0
    %1766 = vmatprep.mubr.bf16.mxu0 %v710
    %1767 = vmatmul.mubr.bf16.gmra.mrb[0].mxu0 %v709
    %v1768 = vpop.f32.mrb[0].mxu0
    %v1769 = vadd.f32 %v1672, %v1768
    %v1770 = vpop.f32.mrb[0].mxu0
    %v1771 = vpop.f32.mrb[0].mxu0
    %v1772 = vadd.f32 %v1675, %v1771
    %v1773 = vpop.f32.mrb[0].mxu0
    %1774 = vdwg.mxu0
    %1775 = vmatprep.subr.bf16.mxu0 0
    %1776 = vmatpush1.bf16.msra.mxu0 %v1259
    %1777 = vmatprep.subr.bf16.mxu0 0
    %1778 = vmatpush1.bf16.msra.mxu0 %v1260
    %1779 = vmatprep.subr.bf16.mxu0 0
    %1780 = vmatpush1.bf16.msra.mxu0 %v1261
    %1781 = vmatprep.subr.bf16.mxu0 0
    %1782 = vmatpush1.bf16.msra.mxu0 %v1262
    %1783 = vmatprep.subr.bf16.mxu0 0
    %1784 = vmatpush1.bf16.msra.mxu0 %v1263
    %1785 = vmatprep.subr.bf16.mxu0 0
    %1786 = vmatpush1.bf16.msra.mxu0 %v1264
    %1787 = vmatprep.subr.bf16.mxu0 0
    %1788 = vmatpush1.bf16.msra.mxu0 %v1265
    %1789 = vmatprep.subr.bf16.mxu0 0
    %1790 = vmatpush1.bf16.msra.mxu0 %v1266
    %1791 = vmatprep.subr.bf16.mxu0 0
    %1792 = vmatpush1.bf16.msra.mxu0 %v1267
    %1793 = vmatprep.subr.bf16.mxu0 0
    %1794 = vmatpush1.bf16.msra.mxu0 %v1268
    %1795 = vmatprep.subr.bf16.mxu0 0
    %1796 = vmatpush1.bf16.msra.mxu0 %v1269
    %1797 = vmatprep.subr.bf16.mxu0 0
    %1798 = vmatpush1.bf16.msra.mxu0 %v1270
    %1799 = vmatprep.subr.bf16.mxu0 0
    %1800 = vmatpush1.bf16.msra.mxu0 %v1271
    %1801 = vmatprep.subr.bf16.mxu0 0
    %1802 = vmatpush1.bf16.msra.mxu0 %v1272
    %1803 = vmatprep.subr.bf16.mxu0 0
    %1804 = vmatpush1.bf16.msra.mxu0 %v1273
    %1805 = vmatprep.subr.bf16.mxu0 0
    %1806 = vmatpush1.bf16.msra.mxu0 %v1274
    %1807 = vmatprep.mubr.bf16.mxu0 %v628
    %1808 = vmatmul.mubr.bf16.gmra.mrb[0].mxu0 %v627
    %v1809 = vpop.f32.mrb[0].mxu0
    %v1810 = vadd.f32 %v1713, %v1809
    %v1811 = vpop.f32.mrb[0].mxu0
    %v1812 = vpop.f32.mrb[0].mxu0
    %v1813 = vadd.f32 %v1716, %v1812
    %v1814 = vpop.f32.mrb[0].mxu0
    %1815 = vmatprep.mubr.bf16.mxu0 %v640
    %1816 = vmatmul.mubr.bf16.gmra.mrb[0].mxu0 %v639
    %v1817 = vpop.f32.mrb[0].mxu0
    %v1818 = vadd.f32 %v1721, %v1817
    %v1819 = vpop.f32.mrb[0].mxu0
    %v1820 = vpop.f32.mrb[0].mxu0
    %v1821 = vadd.f32 %v1724, %v1820
    %v1822 = vpop.f32.mrb[0].mxu0
    %1823 = vmatprep.mubr.bf16.mxu0 %v652
    %1824 = vmatmul.mubr.bf16.gmra.mrb[0].mxu0 %v651
    %v1825 = vpop.f32.mrb[0].mxu0
    %v1826 = vadd.f32 %v1729, %v1825
    %v1827 = vpop.f32.mrb[0].mxu0
    %v1828 = vpop.f32.mrb[0].mxu0
    %v1829 = vadd.f32 %v1732, %v1828
    %v1830 = vpop.f32.mrb[0].mxu0
    %1831 = vmatprep.mubr.bf16.mxu0 %v664
    %1832 = vmatmul.mubr.bf16.gmra.mrb[0].mxu0 %v663
    %v1833 = vpop.f32.mrb[0].mxu0
    %v1834 = vadd.f32 %v1737, %v1833
    %v1835 = vpop.f32.mrb[0].mxu0
    %v1836 = vpop.f32.mrb[0].mxu0
    %v1837 = vadd.f32 %v1740, %v1836
    %v1838 = vpop.f32.mrb[0].mxu0
    %1839 = vmatprep.mubr.bf16.mxu0 %v676
    %1840 = vmatmul.mubr.bf16.gmra.mrb[0].mxu0 %v675
    %v1841 = vpop.f32.mrb[0].mxu0
    %v1842 = vadd.f32 %v1745, %v1841
    %v1843 = vpop.f32.mrb[0].mxu0
    %v1844 = vpop.f32.mrb[0].mxu0
    %v1845 = vadd.f32 %v1748, %v1844
    %v1846 = vpop.f32.mrb[0].mxu0
    %1847 = vmatprep.mubr.bf16.mxu0 %v688
    %1848 = vmatmul.mubr.bf16.gmra.mrb[0].mxu0 %v687
    %v1849 = vpop.f32.mrb[0].mxu0
    %v1850 = vadd.f32 %v1753, %v1849
    %v1851 = vpop.f32.mrb[0].mxu0
    %v1852 = vpop.f32.mrb[0].mxu0
    %v1853 = vadd.f32 %v1756, %v1852
    %v1854 = vpop.f32.mrb[0].mxu0
    %1855 = vmatprep.mubr.bf16.mxu0 %v700
    %1856 = vmatmul.mubr.bf16.gmra.mrb[0].mxu0 %v699
    %v1857 = vpop.f32.mrb[0].mxu0
    %v1858 = vadd.f32 %v1761, %v1857
    %v1859 = vpop.f32.mrb[0].mxu0
    %v1860 = vpop.f32.mrb[0].mxu0
    %v1861 = vadd.f32 %v1764, %v1860
    %v1862 = vpop.f32.mrb[0].mxu0
    %1863 = vmatprep.mubr.bf16.mxu0 %v712
    %1864 = vmatmul.mubr.bf16.gmra.mrb[0].mxu0 %v711
    %v1865 = vpop.f32.mrb[0].mxu0
    %v1866 = vadd.f32 %v1769, %v1865
    %v1867 = vpop.f32.mrb[0].mxu0
    %v1868 = vpop.f32.mrb[0].mxu0
    %v1869 = vadd.f32 %v1772, %v1868
    %v1870 = vpop.f32.mrb[0].mxu0
    %1871 = vdwg.mxu0
    %1872 = vmatprep.subr.bf16.mxu0 0
    %1873 = vmatpush1.bf16.msra.mxu0 %v1275
    %1874 = vmatprep.subr.bf16.mxu0 0
    %1875 = vmatpush1.bf16.msra.mxu0 %v1276
    %1876 = vmatprep.subr.bf16.mxu0 0
    %1877 = vmatpush1.bf16.msra.mxu0 %v1277
    %1878 = vmatprep.subr.bf16.mxu0 0
    %1879 = vmatpush1.bf16.msra.mxu0 %v1278
    %1880 = vmatprep.subr.bf16.mxu0 0
    %1881 = vmatpush1.bf16.msra.mxu0 %v1279
    %1882 = vmatprep.subr.bf16.mxu0 0
    %1883 = vmatpush1.bf16.msra.mxu0 %v1280
    %1884 = vmatprep.subr.bf16.mxu0 0
    %1885 = vmatpush1.bf16.msra.mxu0 %v1281
    %1886 = vmatprep.subr.bf16.mxu0 0
    %1887 = vmatpush1.bf16.msra.mxu0 %v1282
    %1888 = vmatprep.subr.bf16.mxu0 0
    %1889 = vmatpush1.bf16.msra.mxu0 %v1283
    %1890 = vmatprep.subr.bf16.mxu0 0
    %1891 = vmatpush1.bf16.msra.mxu0 %v1284
    %1892 = vmatprep.subr.bf16.mxu0 0
    %1893 = vmatpush1.bf16.msra.mxu0 %v1285
    %1894 = vmatprep.subr.bf16.mxu0 0
    %1895 = vmatpush1.bf16.msra.mxu0 %v1286
    %1896 = vmatprep.subr.bf16.mxu0 0
    %1897 = vmatpush1.bf16.msra.mxu0 %v1287
    %1898 = vmatprep.subr.bf16.mxu0 0
    %1899 = vmatpush1.bf16.msra.mxu0 %v1288
    %1900 = vmatprep.subr.bf16.mxu0 0
    %1901 = vmatpush1.bf16.msra.mxu0 %v1289
    %1902 = vmatprep.subr.bf16.mxu0 0
    %1903 = vmatpush1.bf16.msra.mxu0 %v1290
    %1904 = vmatprep.mubr.bf16.mxu0 %v630
    %1905 = vmatmul.mubr.bf16.gmra.mrb[0].mxu0 %v629
    %v1906 = vpop.f32.mrb[0].mxu0
    %v1907 = vadd.f32 %v1810, %v1906
    %v1908 = vpop.f32.mrb[0].mxu0
    %v1909 = vpop.f32.mrb[0].mxu0
    %v1910 = vadd.f32 %v1813, %v1909
    %v1911 = vpop.f32.mrb[0].mxu0
    %1912 = vmatprep.mubr.bf16.mxu0 %v642
    %1913 = vmatmul.mubr.bf16.gmra.mrb[0].mxu0 %v641
    %v1914 = vpop.f32.mrb[0].mxu0
    %v1915 = vadd.f32 %v1818, %v1914
    %v1916 = vpop.f32.mrb[0].mxu0
    %v1917 = vpop.f32.mrb[0].mxu0
    %v1918 = vadd.f32 %v1821, %v1917
    %v1919 = vpop.f32.mrb[0].mxu0
    %1920 = vmatprep.mubr.bf16.mxu0 %v654
    %1921 = vmatmul.mubr.bf16.gmra.mrb[0].mxu0 %v653
    %v1922 = vpop.f32.mrb[0].mxu0
    %v1923 = vadd.f32 %v1826, %v1922
    %v1924 = vpop.f32.mrb[0].mxu0
    %v1925 = vpop.f32.mrb[0].mxu0
    %v1926 = vadd.f32 %v1829, %v1925
    %v1927 = vpop.f32.mrb[0].mxu0
    %1928 = vmatprep.mubr.bf16.mxu0 %v666
    %1929 = vmatmul.mubr.bf16.gmra.mrb[0].mxu0 %v665
    %v1930 = vpop.f32.mrb[0].mxu0
    %v1931 = vadd.f32 %v1834, %v1930
    %v1932 = vpop.f32.mrb[0].mxu0
    %v1933 = vpop.f32.mrb[0].mxu0
    %v1934 = vadd.f32 %v1837, %v1933
    %v1935 = vpop.f32.mrb[0].mxu0
    %1936 = vmatprep.mubr.bf16.mxu0 %v678
    %1937 = vmatmul.mubr.bf16.gmra.mrb[0].mxu0 %v677
    %v1938 = vpop.f32.mrb[0].mxu0
    %v1939 = vadd.f32 %v1842, %v1938
    %v1940 = vpop.f32.mrb[0].mxu0
    %v1941 = vpop.f32.mrb[0].mxu0
    %v1942 = vadd.f32 %v1845, %v1941
    %v1943 = vpop.f32.mrb[0].mxu0
    %1944 = vmatprep.mubr.bf16.mxu0 %v690
    %1945 = vmatmul.mubr.bf16.gmra.mrb[0].mxu0 %v689
    %v1946 = vpop.f32.mrb[0].mxu0
    %v1947 = vadd.f32 %v1850, %v1946
    %v1948 = vpop.f32.mrb[0].mxu0
    %v1949 = vpop.f32.mrb[0].mxu0
    %v1950 = vadd.f32 %v1853, %v1949
    %v1951 = vpop.f32.mrb[0].mxu0
    %1952 = vmatprep.mubr.bf16.mxu0 %v702
    %1953 = vmatmul.mubr.bf16.gmra.mrb[0].mxu0 %v701
    %v1954 = vpop.f32.mrb[0].mxu0
    %v1955 = vadd.f32 %v1858, %v1954
    %v1956 = vpop.f32.mrb[0].mxu0
    %v1957 = vpop.f32.mrb[0].mxu0
    %v1958 = vadd.f32 %v1861, %v1957
    %v1959 = vpop.f32.mrb[0].mxu0
    %1960 = vmatprep.mubr.bf16.mxu0 %v714
    %1961 = vmatmul.mubr.bf16.gmra.mrb[0].mxu0 %v713
    %v1962 = vpop.f32.mrb[0].mxu0
    %v1963 = vadd.f32 %v1866, %v1962
    %v1964 = vpop.f32.mrb[0].mxu0
    %v1965 = vpop.f32.mrb[0].mxu0
    %v1966 = vadd.f32 %v1869, %v1965
    %v1967 = vpop.f32.mrb[0].mxu0
    %1968 = vdwg.mxu0
    %v1969 = vld [vmem:[%s2] sm:$0x1]
    %v1970 = vld [vmem:[%s3] sm:$0x1]
    %v1971 = vadd.f32 %v1907, %v1910
    %v1972 = vadd.f32 %v1971, %v1915
    %v1973 = vadd.f32 %v1972, %v1918
    %v1974 = vadd.f32 %v1973, %v1923
    %v1975 = vadd.f32 %v1974, %v1926
    %v1976 = vadd.f32 %v1975, %v1931
    %v1977 = vadd.f32 %v1976, %v1934
    %v1978 = vadd.f32 %v1977, %v1939
    %v1979 = vadd.f32 %v1978, %v1942
    %v1980 = vadd.f32 %v1979, %v1947
    %v1981 = vadd.f32 %v1980, %v1950
    %v1982 = vadd.f32 %v1981, %v1955
    %v1983 = vadd.f32 %v1982, %v1958
    %v1984 = vadd.f32 %v1983, %v1963
    %v1985 = vadd.f32 %v1984, %v1966
    %v1986 = vrot.slane %v1985, 4
    %v1987 = vadd.f32 %v1985, %v1986
    %v1988 = vrot.slane %v1987, 2
    %v1989 = vadd.f32 %v1987, %v1988
    %v1990 = vrot.slane %v1989, 1
    %v1991 = vadd.f32 %v1989, %v1990
    %v1992 = vmul.f32 %v1991, 0.0078125
    %v1993 = vmul.f32 %v1907, %v1907
    %v1994 = vmul.f32 %v1910, %v1910
    %v1995 = vmul.f32 %v1915, %v1915
    %v1996 = vmul.f32 %v1918, %v1918
    %v1997 = vmul.f32 %v1923, %v1923
    %v1998 = vmul.f32 %v1926, %v1926
    %v1999 = vmul.f32 %v1931, %v1931
    %v2000 = vmul.f32 %v1934, %v1934
    %v2001 = vmul.f32 %v1939, %v1939
    %v2002 = vmul.f32 %v1942, %v1942
    %v2003 = vmul.f32 %v1947, %v1947
    %v2004 = vmul.f32 %v1950, %v1950
    %v2005 = vmul.f32 %v1955, %v1955
    %v2006 = vmul.f32 %v1958, %v1958
    %v2007 = vmul.f32 %v1963, %v1963
    %v2008 = vmul.f32 %v1966, %v1966
    %v2009 = vadd.f32 %v1993, %v1994
    %v2010 = vadd.f32 %v2009, %v1995
    %v2011 = vadd.f32 %v2010, %v1996
    %v2012 = vadd.f32 %v2011, %v1997
    %v2013 = vadd.f32 %v2012, %v1998
    %v2014 = vadd.f32 %v2013, %v1999
    %v2015 = vadd.f32 %v2014, %v2000
    %v2016 = vadd.f32 %v2015, %v2001
    %v2017 = vadd.f32 %v2016, %v2002
    %v2018 = vadd.f32 %v2017, %v2003
    %v2019 = vadd.f32 %v2018, %v2004
    %v2020 = vadd.f32 %v2019, %v2005
    %v2021 = vadd.f32 %v2020, %v2006
    %v2022 = vadd.f32 %v2021, %v2007
    %v2023 = vadd.f32 %v2022, %v2008
    %v2024 = vrot.slane %v2023, 4
    %v2025 = vadd.f32 %v2023, %v2024
    %v2026 = vrot.slane %v2025, 2
    %v2027 = vadd.f32 %v2025, %v2026
    %v2028 = vrot.slane %v2027, 1
    %v2029 = vadd.f32 %v2027, %v2028
    %v2030 = vmul.f32 %v2029, 0.0078125
    %v2031 = vmul.f32 %v1992, %v1992
    %v2032 = vsub.f32 %v2030, %v2031
    %v2033 = vadd.f32 %v2032, 1e-05
    %v2034 = vrsqrt.pop %v2033
    %v2035 = vmul.f32 %v1969, %v2034
    %v2036 = vmul.f32 %v1992, %v2035
    %v2037 = vsub.f32 %v1970, %v2036
    %v2039 = vlaneseq
    %v2040 = vshrl.u32 %v2039, 7
    %v2041 = vsub.s32 0, %v2040
    %v2042 = vrot.slane %v2035, %v2041
    %v2044 = vmul.f32 %v1907, %v2042
    %v2045 = vmul.f32 %v1910, %v2042
    %v2046 = vmul.f32 %v1915, %v2042
    %v2047 = vmul.f32 %v1918, %v2042
    %v2048 = vmul.f32 %v1923, %v2042
    %v2049 = vmul.f32 %v1926, %v2042
    %v2050 = vmul.f32 %v1931, %v2042
    %v2051 = vmul.f32 %v1934, %v2042
    %v2052 = vmul.f32 %v1939, %v2042
    %v2053 = vmul.f32 %v1942, %v2042
    %v2054 = vmul.f32 %v1947, %v2042
    %v2055 = vmul.f32 %v1950, %v2042
    %v2056 = vmul.f32 %v1955, %v2042
    %v2057 = vmul.f32 %v1958, %v2042
    %v2058 = vmul.f32 %v1963, %v2042
    %v2059 = vmul.f32 %v1966, %v2042
    %v2061 = vlaneseq
    %v2062 = vshrl.u32 %v2061, 7
    %v2063 = vsub.s32 0, %v2062
    %v2064 = vrot.slane %v2037, %v2063
    %v2066 = vadd.f32 %v2044, %v2064
    %v2067 = vadd.f32 %v2045, %v2064
    %v2068 = vadd.f32 %v2046, %v2064
    %v2069 = vadd.f32 %v2047, %v2064
    %v2070 = vadd.f32 %v2048, %v2064
    %v2071 = vadd.f32 %v2049, %v2064
    %v2072 = vadd.f32 %v2050, %v2064
    %v2073 = vadd.f32 %v2051, %v2064
    %v2074 = vadd.f32 %v2052, %v2064
    %v2075 = vadd.f32 %v2053, %v2064
    %v2076 = vadd.f32 %v2054, %v2064
    %v2077 = vadd.f32 %v2055, %v2064
    %v2078 = vadd.f32 %v2056, %v2064
    %v2079 = vadd.f32 %v2057, %v2064
    %v2080 = vadd.f32 %v2058, %v2064
    %v2081 = vadd.f32 %v2059, %v2064
    %v2082 = vmax.f32 %v2066, 0.0
    %v2083 = vmax.f32 %v2067, 0.0
    %v2084 = vmax.f32 %v2068, 0.0
    %v2085 = vmax.f32 %v2069, 0.0
    %v2086 = vmax.f32 %v2070, 0.0
    %v2087 = vmax.f32 %v2071, 0.0
    %v2088 = vmax.f32 %v2072, 0.0
    %v2089 = vmax.f32 %v2073, 0.0
    %v2090 = vmax.f32 %v2074, 0.0
    %v2091 = vmax.f32 %v2075, 0.0
    %v2092 = vmax.f32 %v2076, 0.0
    %v2093 = vmax.f32 %v2077, 0.0
    %v2094 = vmax.f32 %v2078, 0.0
    %v2095 = vmax.f32 %v2079, 0.0
    %v2096 = vmax.f32 %v2080, 0.0
    %v2097 = vmax.f32 %v2081, 0.0
    %v2098 = vpack.c.bf16 %v2083, %v2082
    %v2099 = vpack.c.bf16 %v2085, %v2084
    %v2100 = vpack.c.bf16 %v2087, %v2086
    %v2101 = vpack.c.bf16 %v2089, %v2088
    %v2102 = vpack.c.bf16 %v2091, %v2090
    %v2103 = vpack.c.bf16 %v2093, %v2092
    %v2104 = vpack.c.bf16 %v2095, %v2094
    %v2105 = vpack.c.bf16 %v2097, %v2096
    %vm2106 = vcmask 1042432
    %vm2107 = vsmask.f32 2304
    %vm2108 = vmand %vm2106, %vm2107
    %v2109 = vld [vmem:[#allocation2] sm:$0x7]
    %v2110 = vsel %vm2108, 0, %v2109
    %2111 = vst [vmem:[#allocation2] sm:$0x7] %v2110
    %v2112 = vld [vmem:[#allocation2 + $0x4] sm:$0x7]
    %v2113 = vsel %vm2108, 0, %v2112
    %2114 = vst [vmem:[#allocation2 + $0x4] sm:$0x7] %v2113
    %v2115 = vld [vmem:[#allocation2 + $0x8] sm:$0x7]
    %v2116 = vsel %vm2108, 0, %v2115
    %2117 = vst [vmem:[#allocation2 + $0x8] sm:$0x7] %v2116
    %v2118 = vld [vmem:[#allocation2 + $0xc] sm:$0x7]
    %v2119 = vsel %vm2108, 0, %v2118
    %2120 = vst [vmem:[#allocation2 + $0xc] sm:$0x7] %v2119
    %v2121 = vld [vmem:[#allocation2 + $0x10] sm:$0x7]
    %v2122 = vsel %vm2108, 0, %v2121
    %2123 = vst [vmem:[#allocation2 + $0x10] sm:$0x7] %v2122
    %v2124 = vld [vmem:[#allocation2 + $0x14] sm:$0x7]
    %v2125 = vsel %vm2108, 0, %v2124
    %2126 = vst [vmem:[#allocation2 + $0x14] sm:$0x7] %v2125
    %v2127 = vld [vmem:[#allocation2 + $0x18] sm:$0x7]
    %v2128 = vsel %vm2108, 0, %v2127
    %2129 = vst [vmem:[#allocation2 + $0x18] sm:$0x7] %v2128
    %v2130 = vld [vmem:[#allocation2 + $0x1c] sm:$0x7]
    %v2131 = vsel %vm2108, 0, %v2130
    %2132 = vst [vmem:[#allocation2 + $0x1c] sm:$0x7] %v2131
    %v2133 = vld [vmem:[#allocation2 + $0x20] sm:$0x7]
    %v2134 = vsel %vm2108, 0, %v2133
    %2135 = vst [vmem:[#allocation2 + $0x20] sm:$0x7] %v2134
    %v2136 = vld [vmem:[#allocation2 + $0x24] sm:$0x7]
    %v2137 = vsel %vm2108, 0, %v2136
    %2138 = vst [vmem:[#allocation2 + $0x24] sm:$0x7] %v2137
    %v2139 = vld [vmem:[#allocation2 + $0x28] sm:$0x7]
    %v2140 = vsel %vm2108, 0, %v2139
    %2141 = vst [vmem:[#allocation2 + $0x28] sm:$0x7] %v2140
    %v2142 = vld [vmem:[#allocation2 + $0x2c] sm:$0x7]
    %v2143 = vsel %vm2108, 0, %v2142
    %2144 = vst [vmem:[#allocation2 + $0x2c] sm:$0x7] %v2143
    %v2145 = vld [vmem:[#allocation2 + $0x30] sm:$0x7]
    %v2146 = vsel %vm2108, 0, %v2145
    %2147 = vst [vmem:[#allocation2 + $0x30] sm:$0x7] %v2146
    %v2148 = vld [vmem:[#allocation2 + $0x34] sm:$0x7]
    %v2149 = vsel %vm2108, 0, %v2148
    %2150 = vst [vmem:[#allocation2 + $0x34] sm:$0x7] %v2149
    %v2151 = vld [vmem:[#allocation2 + $0x38] sm:$0x7]
    %v2152 = vsel %vm2108, 0, %v2151
    %2153 = vst [vmem:[#allocation2 + $0x38] sm:$0x7] %v2152
    %v2154 = vld [vmem:[#allocation2 + $0x3c] sm:$0x7]
    %v2155 = vsel %vm2108, 0, %v2154
    %2156 = vst [vmem:[#allocation2 + $0x3c] sm:$0x7] %v2155
    %v2157 = vld [vmem:[#allocation2 + $0x40] sm:$0x7]
    %v2158 = vsel %vm2108, 0, %v2157
    %2159 = vst [vmem:[#allocation2 + $0x40] sm:$0x7] %v2158
    %v2160 = vld [vmem:[#allocation2 + $0x44] sm:$0x7]
    %v2161 = vsel %vm2108, 0, %v2160
    %2162 = vst [vmem:[#allocation2 + $0x44] sm:$0x7] %v2161
    %v2163 = vld [vmem:[#allocation2 + $0x48] sm:$0x7]
    %v2164 = vsel %vm2108, 0, %v2163
    %2165 = vst [vmem:[#allocation2 + $0x48] sm:$0x7] %v2164
    %v2166 = vld [vmem:[#allocation2 + $0x4c] sm:$0x7]
    %v2167 = vsel %vm2108, 0, %v2166
    %2168 = vst [vmem:[#allocation2 + $0x4c] sm:$0x7] %v2167
    %v2169 = vld [vmem:[#allocation2 + $0x50] sm:$0x7]
    %v2170 = vsel %vm2108, 0, %v2169
    %2171 = vst [vmem:[#allocation2 + $0x50] sm:$0x7] %v2170
    %v2172 = vld [vmem:[#allocation2 + $0x54] sm:$0x7]
    %v2173 = vsel %vm2108, 0, %v2172
    %2174 = vst [vmem:[#allocation2 + $0x54] sm:$0x7] %v2173
    %v2175 = vld [vmem:[#allocation2 + $0x58] sm:$0x7]
    %v2176 = vsel %vm2108, 0, %v2175
    %2177 = vst [vmem:[#allocation2 + $0x58] sm:$0x7] %v2176
    %v2178 = vld [vmem:[#allocation2 + $0x5c] sm:$0x7]
    %v2179 = vsel %vm2108, 0, %v2178
    %2180 = vst [vmem:[#allocation2 + $0x5c] sm:$0x7] %v2179
    %v2181 = vld [vmem:[#allocation2 + $0x60] sm:$0x7]
    %v2182 = vsel %vm2108, 0, %v2181
    %2183 = vst [vmem:[#allocation2 + $0x60] sm:$0x7] %v2182
    %v2184 = vld [vmem:[#allocation2 + $0x64] sm:$0x7]
    %v2185 = vsel %vm2108, 0, %v2184
    %2186 = vst [vmem:[#allocation2 + $0x64] sm:$0x7] %v2185
    %v2187 = vld [vmem:[#allocation2 + $0x68] sm:$0x7]
    %v2188 = vsel %vm2108, 0, %v2187
    %2189 = vst [vmem:[#allocation2 + $0x68] sm:$0x7] %v2188
    %v2190 = vld [vmem:[#allocation2 + $0x6c] sm:$0x7]
    %v2191 = vsel %vm2108, 0, %v2190
    %2192 = vst [vmem:[#allocation2 + $0x6c] sm:$0x7] %v2191
    %v2193 = vld [vmem:[#allocation2 + $0x70] sm:$0x7]
    %v2194 = vsel %vm2108, 0, %v2193
    %2195 = vst [vmem:[#allocation2 + $0x70] sm:$0x7] %v2194
    %v2196 = vld [vmem:[#allocation2 + $0x74] sm:$0x7]
    %v2197 = vsel %vm2108, 0, %v2196
    %2198 = vst [vmem:[#allocation2 + $0x74] sm:$0x7] %v2197
    %v2199 = vld [vmem:[#allocation2 + $0x78] sm:$0x7]
    %v2200 = vsel %vm2108, 0, %v2199
    %2201 = vst [vmem:[#allocation2 + $0x78] sm:$0x7] %v2200
    %v2202 = vld [vmem:[#allocation2 + $0x7c] sm:$0x7]
    %v2203 = vsel %vm2108, 0, %v2202
    %2204 = vst [vmem:[#allocation2 + $0x7c] sm:$0x7] %v2203
    %v2205 = vld [vmem:[#allocation2 + $0x80] sm:$0x7]
    %v2206 = vsel %vm2108, 0, %v2205
    %2207 = vst [vmem:[#allocation2 + $0x80] sm:$0x7] %v2206
    %v2208 = vld [vmem:[#allocation2 + $0x84] sm:$0x7]
    %v2209 = vsel %vm2108, 0, %v2208
    %2210 = vst [vmem:[#allocation2 + $0x84] sm:$0x7] %v2209
    %v2211 = vld [vmem:[#allocation2 + $0x88] sm:$0x7]
    %v2212 = vsel %vm2108, 0, %v2211
    %2213 = vst [vmem:[#allocation2 + $0x88] sm:$0x7] %v2212
    %v2214 = vld [vmem:[#allocation2 + $0x8c] sm:$0x7]
    %v2215 = vsel %vm2108, 0, %v2214
    %2216 = vst [vmem:[#allocation2 + $0x8c] sm:$0x7] %v2215
    %v2217 = vld [vmem:[#allocation2 + $0x90] sm:$0x7]
    %v2218 = vsel %vm2108, 0, %v2217
    %2219 = vst [vmem:[#allocation2 + $0x90] sm:$0x7] %v2218
    %v2220 = vld [vmem:[#allocation2 + $0x94] sm:$0x7]
    %v2221 = vsel %vm2108, 0, %v2220
    %2222 = vst [vmem:[#allocation2 + $0x94] sm:$0x7] %v2221
    %v2223 = vld [vmem:[#allocation2 + $0x98] sm:$0x7]
    %v2224 = vsel %vm2108, 0, %v2223
    %2225 = vst [vmem:[#allocation2 + $0x98] sm:$0x7] %v2224
    %v2226 = vld [vmem:[#allocation2 + $0x9c] sm:$0x7]
    %v2227 = vsel %vm2108, 0, %v2226
    %2228 = vst [vmem:[#allocation2 + $0x9c] sm:$0x7] %v2227
    %v2230 = vunpack.c.l.b16 %v2098
    %v2231 = vpack.c.b16 %v2230, %v2230
    %v2233 = vshrl.u32 %v2231, 16
    %v2235 = vrot.slane %v2233, 7
    %v2236 = vshll.u32 %v2231, 16
    %v2238 = vor.u32 %v2235, %v2236
    %s2240 = scalar_lea.vmem [#allocation2], 4
    %vm2241 = vsmask.f32 2306
    %vm2242 = vmand %vm2106, %vm2241
    %v2243 = vld [vmem:[%s2240] sm:$0x7]
    %v2244 = vsel %vm2242, %v2238, %v2243
    %2245 = vst [vmem:[%s2240] sm:$0x7] %v2244
    %v2246 = vrot.slane %v2231, 6
    %v2247 = vrot.slane %v2246, 4
    %s2249 = scalar_lea.vmem [#allocation2], 84
    %2250 = vst [vmem:[%s2249] sm:$0x3] %v2247
    %v2251 = vunpack.c.h.b16 %v2098
    %v2252 = vpack.c.b16 %v2251, %v2251
    %v2254 = vshrl.u32 %v2252, 16
    %v2256 = vrot.slane %v2254, 7
    %v2257 = vshll.u32 %v2252, 16
    %v2259 = vor.u32 %v2256, %v2257
    %s2261 = scalar_lea.vmem [#allocation2], 8
    %v2262 = vld [vmem:[%s2261] sm:$0x7]
    %v2263 = vsel %vm2242, %v2259, %v2262
    %2264 = vst [vmem:[%s2261] sm:$0x7] %v2263
    %v2265 = vrot.slane %v2252, 6
    %v2266 = vrot.slane %v2265, 4
    %s2268 = scalar_lea.vmem [#allocation2], 88
    %2269 = vst [vmem:[%s2268] sm:$0x3] %v2266
    %v2271 = vunpack.c.l.b16 %v2099
    %v2272 = vpack.c.b16 %v2271, %v2271
    %v2274 = vshrl.u32 %v2272, 16
    %v2276 = vrot.slane %v2274, 7
    %v2277 = vshll.u32 %v2272, 16
    %v2279 = vor.u32 %v2276, %v2277
    %s2281 = scalar_lea.vmem [#allocation2], 12
    %v2282 = vld [vmem:[%s2281] sm:$0x7]
    %v2283 = vsel %vm2242, %v2279, %v2282
    %2284 = vst [vmem:[%s2281] sm:$0x7] %v2283
    %v2285 = vrot.slane %v2272, 6
    %v2286 = vrot.slane %v2285, 4
    %s2288 = scalar_lea.vmem [#allocation2], 92
    %2289 = vst [vmem:[%s2288] sm:$0x3] %v2286
    %v2290 = vunpack.c.h.b16 %v2099
    %v2291 = vpack.c.b16 %v2290, %v2290
    %v2293 = vshrl.u32 %v2291, 16
    %v2295 = vrot.slane %v2293, 7
    %v2296 = vshll.u32 %v2291, 16
    %v2298 = vor.u32 %v2295, %v2296
    %s2300 = scalar_lea.vmem [#allocation2], 16
    %v2301 = vld [vmem:[%s2300] sm:$0x7]
    %v2302 = vsel %vm2242, %v2298, %v2301
    %2303 = vst [vmem:[%s2300] sm:$0x7] %v2302
    %v2304 = vrot.slane %v2291, 6
    %v2305 = vrot.slane %v2304, 4
    %s2307 = scalar_lea.vmem [#allocation2], 96
    %2308 = vst [vmem:[%s2307] sm:$0x3] %v2305
    %v2310 = vunpack.c.l.b16 %v2100
    %v2311 = vpack.c.b16 %v2310, %v2310
    %v2313 = vshrl.u32 %v2311, 16
    %v2315 = vrot.slane %v2313, 7
    %v2316 = vshll.u32 %v2311, 16
    %v2318 = vor.u32 %v2315, %v2316
    %s2320 = scalar_lea.vmem [#allocation2], 20
    %v2321 = vld [vmem:[%s2320] sm:$0x7]
    %v2322 = vsel %vm2242, %v2318, %v2321
    %2323 = vst [vmem:[%s2320] sm:$0x7] %v2322
    %v2324 = vrot.slane %v2311, 6
    %v2325 = vrot.slane %v2324, 4
    %s2327 = scalar_lea.vmem [#allocation2], 100
    %2328 = vst [vmem:[%s2327] sm:$0x3] %v2325
    %v2329 = vunpack.c.h.b16 %v2100
    %v2330 = vpack.c.b16 %v2329, %v2329
    %v2332 = vshrl.u32 %v2330, 16
    %v2334 = vrot.slane %v2332, 7
    %v2335 = vshll.u32 %v2330, 16
    %v2337 = vor.u32 %v2334, %v2335
    %s2339 = scalar_lea.vmem [#allocation2], 24
    %v2340 = vld [vmem:[%s2339] sm:$0x7]
    %v2341 = vsel %vm2242, %v2337, %v2340
    %2342 = vst [vmem:[%s2339] sm:$0x7] %v2341
    %v2343 = vrot.slane %v2330, 6
    %v2344 = vrot.slane %v2343, 4
    %s2346 = scalar_lea.vmem [#allocation2], 104
    %2347 = vst [vmem:[%s2346] sm:$0x3] %v2344
    %v2349 = vunpack.c.l.b16 %v2101
    %v2350 = vpack.c.b16 %v2349, %v2349
    %v2352 = vshrl.u32 %v2350, 16
    %v2354 = vrot.slane %v2352, 7
    %v2355 = vshll.u32 %v2350, 16
    %v2357 = vor.u32 %v2354, %v2355
    %s2359 = scalar_lea.vmem [#allocation2], 28
    %v2360 = vld [vmem:[%s2359] sm:$0x7]
    %v2361 = vsel %vm2242, %v2357, %v2360
    %2362 = vst [vmem:[%s2359] sm:$0x7] %v2361
    %v2363 = vrot.slane %v2350, 6
    %v2364 = vrot.slane %v2363, 4
    %s2366 = scalar_lea.vmem [#allocation2], 108
    %2367 = vst [vmem:[%s2366] sm:$0x3] %v2364
    %v2368 = vunpack.c.h.b16 %v2101
    %v2369 = vpack.c.b16 %v2368, %v2368
    %v2371 = vshrl.u32 %v2369, 16
    %v2373 = vrot.slane %v2371, 7
    %v2374 = vshll.u32 %v2369, 16
    %v2376 = vor.u32 %v2373, %v2374
    %s2378 = scalar_lea.vmem [#allocation2], 32
    %v2379 = vld [vmem:[%s2378] sm:$0x7]
    %v2380 = vsel %vm2242, %v2376, %v2379
    %2381 = vst [vmem:[%s2378] sm:$0x7] %v2380
    %v2382 = vrot.slane %v2369, 6
    %v2383 = vrot.slane %v2382, 4
    %s2385 = scalar_lea.vmem [#allocation2], 112
    %2386 = vst [vmem:[%s2385] sm:$0x3] %v2383
    %v2388 = vunpack.c.l.b16 %v2102
    %v2389 = vpack.c.b16 %v2388, %v2388
    %v2391 = vshrl.u32 %v2389, 16
    %v2393 = vrot.slane %v2391, 7
    %v2394 = vshll.u32 %v2389, 16
    %v2396 = vor.u32 %v2393, %v2394
    %s2398 = scalar_lea.vmem [#allocation2], 44
    %v2399 = vld [vmem:[%s2398] sm:$0x7]
    %v2400 = vsel %vm2242, %v2396, %v2399
    %2401 = vst [vmem:[%s2398] sm:$0x7] %v2400
    %v2402 = vrot.slane %v2389, 6
    %v2403 = vrot.slane %v2402, 4
    %s2405 = scalar_lea.vmem [#allocation2], 124
    %2406 = vst [vmem:[%s2405] sm:$0x3] %v2403
    %v2407 = vunpack.c.h.b16 %v2102
    %v2408 = vpack.c.b16 %v2407, %v2407
    %v2410 = vshrl.u32 %v2408, 16
    %v2412 = vrot.slane %v2410, 7
    %v2413 = vshll.u32 %v2408, 16
    %v2415 = vor.u32 %v2412, %v2413
    %s2417 = scalar_lea.vmem [#allocation2], 48
    %v2418 = vld [vmem:[%s2417] sm:$0x7]
    %v2419 = vsel %vm2242, %v2415, %v2418
    %2420 = vst [vmem:[%s2417] sm:$0x7] %v2419
    %v2421 = vrot.slane %v2408, 6
    %v2422 = vrot.slane %v2421, 4
    %s2424 = scalar_lea.vmem [#allocation2], 128
    %2425 = vst [vmem:[%s2424] sm:$0x3] %v2422
    %v2427 = vunpack.c.l.b16 %v2103
    %v2428 = vpack.c.b16 %v2427, %v2427
    %v2430 = vshrl.u32 %v2428, 16
    %v2432 = vrot.slane %v2430, 7
    %v2433 = vshll.u32 %v2428, 16
    %v2435 = vor.u32 %v2432, %v2433
    %s2437 = scalar_lea.vmem [#allocation2], 52
    %v2438 = vld [vmem:[%s2437] sm:$0x7]
    %v2439 = vsel %vm2242, %v2435, %v2438
    %2440 = vst [vmem:[%s2437] sm:$0x7] %v2439
    %v2441 = vrot.slane %v2428, 6
    %v2442 = vrot.slane %v2441, 4
    %s2444 = scalar_lea.vmem [#allocation2], 132
    %2445 = vst [vmem:[%s2444] sm:$0x3] %v2442
    %v2446 = vunpack.c.h.b16 %v2103
    %v2447 = vpack.c.b16 %v2446, %v2446
    %v2449 = vshrl.u32 %v2447, 16
    %v2451 = vrot.slane %v2449, 7
    %v2452 = vshll.u32 %v2447, 16
    %v2454 = vor.u32 %v2451, %v2452
    %s2456 = scalar_lea.vmem [#allocation2], 56
    %v2457 = vld [vmem:[%s2456] sm:$0x7]
    %v2458 = vsel %vm2242, %v2454, %v2457
    %2459 = vst [vmem:[%s2456] sm:$0x7] %v2458
    %v2460 = vrot.slane %v2447, 6
    %v2461 = vrot.slane %v2460, 4
    %s2463 = scalar_lea.vmem [#allocation2], 136
    %2464 = vst [vmem:[%s2463] sm:$0x3] %v2461
    %v2466 = vunpack.c.l.b16 %v2104
    %v2467 = vpack.c.b16 %v2466, %v2466
    %v2469 = vshrl.u32 %v2467, 16
    %v2471 = vrot.slane %v2469, 7
    %v2472 = vshll.u32 %v2467, 16
    %v2474 = vor.u32 %v2471, %v2472
    %s2476 = scalar_lea.vmem [#allocation2], 60
    %v2477 = vld [vmem:[%s2476] sm:$0x7]
    %v2478 = vsel %vm2242, %v2474, %v2477
    %2479 = vst [vmem:[%s2476] sm:$0x7] %v2478
    %v2480 = vrot.slane %v2467, 6
    %v2481 = vrot.slane %v2480, 4
    %s2483 = scalar_lea.vmem [#allocation2], 140
    %2484 = vst [vmem:[%s2483] sm:$0x3] %v2481
    %v2485 = vunpack.c.h.b16 %v2104
    %v2486 = vpack.c.b16 %v2485, %v2485
    %v2488 = vshrl.u32 %v2486, 16
    %v2490 = vrot.slane %v2488, 7
    %v2491 = vshll.u32 %v2486, 16
    %v2493 = vor.u32 %v2490, %v2491
    %s2495 = scalar_lea.vmem [#allocation2], 64
    %v2496 = vld [vmem:[%s2495] sm:$0x7]
    %v2497 = vsel %vm2242, %v2493, %v2496
    %2498 = vst [vmem:[%s2495] sm:$0x7] %v2497
    %v2499 = vrot.slane %v2486, 6
    %v2500 = vrot.slane %v2499, 4
    %s2502 = scalar_lea.vmem [#allocation2], 144
    %2503 = vst [vmem:[%s2502] sm:$0x3] %v2500
    %v2505 = vunpack.c.l.b16 %v2105
    %v2506 = vpack.c.b16 %v2505, %v2505
    %v2508 = vshrl.u32 %v2506, 16
    %v2510 = vrot.slane %v2508, 7
    %v2511 = vshll.u32 %v2506, 16
    %v2513 = vor.u32 %v2510, %v2511
    %s2515 = scalar_lea.vmem [#allocation2], 68
    %v2516 = vld [vmem:[%s2515] sm:$0x7]
    %v2517 = vsel %vm2242, %v2513, %v2516
    %2518 = vst [vmem:[%s2515] sm:$0x7] %v2517
    %v2519 = vrot.slane %v2506, 6
    %v2520 = vrot.slane %v2519, 4
    %s2522 = scalar_lea.vmem [#allocation2], 148
    %2523 = vst [vmem:[%s2522] sm:$0x3] %v2520
    %v2524 = vunpack.c.h.b16 %v2105
    %v2525 = vpack.c.b16 %v2524, %v2524
    %v2527 = vshrl.u32 %v2525, 16
    %v2529 = vrot.slane %v2527, 7
    %v2530 = vshll.u32 %v2525, 16
    %v2532 = vor.u32 %v2529, %v2530
    %s2534 = scalar_lea.vmem [#allocation2], 72
    %v2535 = vld [vmem:[%s2534] sm:$0x7]
    %v2536 = vsel %vm2242, %v2532, %v2535
    %2537 = vst [vmem:[%s2534] sm:$0x7] %v2536
    %v2538 = vrot.slane %v2525, 6
    %v2539 = vrot.slane %v2538, 4
    %s2541 = scalar_lea.vmem [#allocation2], 152
    %2542 = vst [vmem:[%s2541] sm:$0x3] %v2539
    %v2543 = vld [vmem:[#allocation2] sm:$0x3]
    %2544 = vst [vmem:[#allocation3] sm:$0x3] %v2543
    %v2545 = vld [vmem:[%s2261] sm:$0x3]
    %v2547 = vunpack.c.l.b16 %v2545
    %v2548 = vpack.c.b16 %v2547, %v2547
    %v2549 = vrot.slane %v2548, 6
    %2551 = vst [vmem:[#allocation3] sm:$0xc] %v2549
    %v2552 = vld [vmem:[%s2300] sm:$0x3]
    %v2554 = vunpack.c.l.b16 %v2552
    %v2555 = vpack.c.b16 %v2554, %v2554
    %2557 = vst [vmem:[#allocation3] sm:$0x30] %v2555
    %v2558 = vld [vmem:[%s2339] sm:$0x3]
    %v2560 = vunpack.c.l.b16 %v2558
    %v2561 = vpack.c.b16 %v2560, %v2560
    %v2562 = vrot.slane %v2561, 2
    %2564 = vst [vmem:[#allocation3] sm:$0xc0] %v2562
    %s2565 = scalar_lea.vmem [#allocation2], 40
    %v2566 = vld [vmem:[%s2565] sm:$0x3]
    %2567 = vst [vmem:[#allocation3 + $0x60] sm:$0x3] %v2566
    %v2568 = vld [vmem:[%s2417] sm:$0x3]
    %v2570 = vunpack.c.l.b16 %v2568
    %v2571 = vpack.c.b16 %v2570, %v2570
    %v2572 = vrot.slane %v2571, 6
    %2574 = vst [vmem:[#allocation3 + $0x60] sm:$0xc] %v2572
    %v2575 = vld [vmem:[%s2456] sm:$0x3]
    %v2577 = vunpack.c.l.b16 %v2575
    %v2578 = vpack.c.b16 %v2577, %v2577
    %2580 = vst [vmem:[#allocation3 + $0x60] sm:$0x30] %v2578
    %v2581 = vld [vmem:[%s2495] sm:$0x3]
    %v2583 = vunpack.c.l.b16 %v2581
    %v2584 = vpack.c.b16 %v2583, %v2583
    %v2585 = vrot.slane %v2584, 2
    %2587 = vst [vmem:[#allocation3 + $0x60] sm:$0xc0] %v2585
    %s2588 = scalar_lea.vmem [#allocation2], 80
    %v2589 = vld [vmem:[%s2588] sm:$0x3]
    %2590 = vst [vmem:[#allocation3 + $0x8] sm:$0x3] %v2589
    %v2591 = vld [vmem:[%s2268] sm:$0x3]
    %v2593 = vunpack.c.l.b16 %v2591
    %v2594 = vpack.c.b16 %v2593, %v2593
    %v2595 = vrot.slane %v2594, 6
    %2597 = vst [vmem:[#allocation3 + $0x8] sm:$0xc] %v2595
    %v2598 = vld [vmem:[%s2307] sm:$0x3]
    %v2600 = vunpack.c.l.b16 %v2598
    %v2601 = vpack.c.b16 %v2600, %v2600
    %2603 = vst [vmem:[#allocation3 + $0x8] sm:$0x30] %v2601
    %v2604 = vld [vmem:[%s2346] sm:$0x3]
    %v2606 = vunpack.c.l.b16 %v2604
    %v2607 = vpack.c.b16 %v2606, %v2606
    %v2608 = vrot.slane %v2607, 2
    %2610 = vst [vmem:[#allocation3 + $0x8] sm:$0xc0] %v2608
    %s2611 = scalar_lea.vmem [#allocation2], 120
    %v2612 = vld [vmem:[%s2611] sm:$0x3]
    %2613 = vst [vmem:[#allocation3 + $0x68] sm:$0x3] %v2612
    %v2614 = vld [vmem:[%s2424] sm:$0x3]
    %v2616 = vunpack.c.l.b16 %v2614
    %v2617 = vpack.c.b16 %v2616, %v2616
    %v2618 = vrot.slane %v2617, 6
    %2620 = vst [vmem:[#allocation3 + $0x68] sm:$0xc] %v2618
    %v2621 = vld [vmem:[%s2463] sm:$0x3]
    %v2623 = vunpack.c.l.b16 %v2621
    %v2624 = vpack.c.b16 %v2623, %v2623
    %2626 = vst [vmem:[#allocation3 + $0x68] sm:$0x30] %v2624
    %v2627 = vld [vmem:[%s2502] sm:$0x3]
    %v2629 = vunpack.c.l.b16 %v2627
    %v2630 = vpack.c.b16 %v2629, %v2629
    %v2631 = vrot.slane %v2630, 2
    %2633 = vst [vmem:[#allocation3 + $0x68] sm:$0xc0] %v2631
    %v2634 = vld [vmem:[#allocation2] sm:$0x7]
    %v2636 = vunpack.c.l.b16 %v2634
    %v2637 = vpack.c.b16 %v2636, %v2636
    %v2639 = vshrl.u32 %v2637, 16
    %v2641 = vshll.u32 %v2637, 16
    %v2643 = vrot.slane %v2641, 1
    %v2644 = vor.u32 %v2639, %v2643
    %2646 = vst [vmem:[#allocation3 + $0x10] sm:$0x3] %v2644
    %v2647 = vld [vmem:[%s2261] sm:$0x7]
    %v2649 = vunpack.c.l.b16 %v2647
    %v2650 = vpack.c.b16 %v2649, %v2649
    %v2652 = vshrl.u32 %v2650, 16
    %v2654 = vrot.slane %v2652, 6
    %v2655 = vshll.u32 %v2650, 16
    %v2657 = vrot.slane %v2655, 7
    %v2658 = vor.u32 %v2654, %v2657
    %2660 = vst [vmem:[#allocation3 + $0x10] sm:$0xc] %v2658
    %v2661 = vld [vmem:[%s2300] sm:$0x7]
    %v2663 = vunpack.c.l.b16 %v2661
    %v2664 = vpack.c.b16 %v2663, %v2663
    %v2666 = vshrl.u32 %v2664, 16
    %v2668 = vrot.slane %v2666, 4
    %v2669 = vshll.u32 %v2664, 16
    %v2671 = vrot.slane %v2669, 5
    %v2672 = vor.u32 %v2668, %v2671
    %2674 = vst [vmem:[#allocation3 + $0x10] sm:$0x30] %v2672
    %v2675 = vld [vmem:[%s2339] sm:$0x7]
    %v2677 = vunpack.c.l.b16 %v2675
    %v2678 = vpack.c.b16 %v2677, %v2677
    %v2680 = vshrl.u32 %v2678, 16
    %v2682 = vrot.slane %v2680, 2
    %v2683 = vshll.u32 %v2678, 16
    %v2685 = vrot.slane %v2683, 3
    %v2686 = vor.u32 %v2682, %v2685
    %2688 = vst [vmem:[#allocation3 + $0x10] sm:$0xc0] %v2686
    %v2689 = vld [vmem:[%s2565] sm:$0x7]
    %v2691 = vunpack.c.l.b16 %v2689
    %v2692 = vpack.c.b16 %v2691, %v2691
    %v2694 = vshrl.u32 %v2692, 16
    %v2696 = vshll.u32 %v2692, 16
    %v2698 = vrot.slane %v2696, 1
    %v2699 = vor.u32 %v2694, %v2698
    %2701 = vst [vmem:[#allocation3 + $0x70] sm:$0x3] %v2699
    %v2702 = vld [vmem:[%s2417] sm:$0x7]
    %v2704 = vunpack.c.l.b16 %v2702
    %v2705 = vpack.c.b16 %v2704, %v2704
    %v2707 = vshrl.u32 %v2705, 16
    %v2709 = vrot.slane %v2707, 6
    %v2710 = vshll.u32 %v2705, 16
    %v2712 = vrot.slane %v2710, 7
    %v2713 = vor.u32 %v2709, %v2712
    %2715 = vst [vmem:[#allocation3 + $0x70] sm:$0xc] %v2713
    %v2716 = vld [vmem:[%s2456] sm:$0x7]
    %v2718 = vunpack.c.l.b16 %v2716
    %v2719 = vpack.c.b16 %v2718, %v2718
    %v2721 = vshrl.u32 %v2719, 16
    %v2723 = vrot.slane %v2721, 4
    %v2724 = vshll.u32 %v2719, 16
    %v2726 = vrot.slane %v2724, 5
    %v2727 = vor.u32 %v2723, %v2726
    %2729 = vst [vmem:[#allocation3 + $0x70] sm:$0x30] %v2727
    %v2730 = vld [vmem:[%s2495] sm:$0x7]
    %v2732 = vunpack.c.l.b16 %v2730
    %v2733 = vpack.c.b16 %v2732, %v2732
    %v2735 = vshrl.u32 %v2733, 16
    %v2737 = vrot.slane %v2735, 2
    %v2738 = vshll.u32 %v2733, 16
    %v2740 = vrot.slane %v2738, 3
    %v2741 = vor.u32 %v2737, %v2740
    %2743 = vst [vmem:[#allocation3 + $0x70] sm:$0xc0] %v2741
    %v2744 = vld [vmem:[%s2240] sm:$0x3]
    %2745 = vst [vmem:[#allocation3 + $0x18] sm:$0x3] %v2744
    %v2746 = vld [vmem:[%s2281] sm:$0x3]
    %v2748 = vunpack.c.l.b16 %v2746
    %v2749 = vpack.c.b16 %v2748, %v2748
    %v2750 = vrot.slane %v2749, 6
    %2752 = vst [vmem:[#allocation3 + $0x18] sm:$0xc] %v2750
    %v2753 = vld [vmem:[%s2320] sm:$0x3]
    %v2755 = vunpack.c.l.b16 %v2753
    %v2756 = vpack.c.b16 %v2755, %v2755
    %2758 = vst [vmem:[#allocation3 + $0x18] sm:$0x30] %v2756
    %v2759 = vld [vmem:[%s2359] sm:$0x3]
    %v2761 = vunpack.c.l.b16 %v2759
    %v2762 = vpack.c.b16 %v2761, %v2761
    %v2763 = vrot.slane %v2762, 2
    %2765 = vst [vmem:[#allocation3 + $0x18] sm:$0xc0] %v2763
    %v2766 = vld [vmem:[%s2398] sm:$0x3]
    %2767 = vst [vmem:[#allocation3 + $0x78] sm:$0x3] %v2766
    %v2768 = vld [vmem:[%s2437] sm:$0x3]
    %v2770 = vunpack.c.l.b16 %v2768
    %v2771 = vpack.c.b16 %v2770, %v2770
    %v2772 = vrot.slane %v2771, 6
    %2774 = vst [vmem:[#allocation3 + $0x78] sm:$0xc] %v2772
    %v2775 = vld [vmem:[%s2476] sm:$0x3]
    %v2777 = vunpack.c.l.b16 %v2775
    %v2778 = vpack.c.b16 %v2777, %v2777
    %2780 = vst [vmem:[#allocation3 + $0x78] sm:$0x30] %v2778
    %v2781 = vld [vmem:[%s2515] sm:$0x3]
    %v2783 = vunpack.c.l.b16 %v2781
    %v2784 = vpack.c.b16 %v2783, %v2783
    %v2785 = vrot.slane %v2784, 2
    %2787 = vst [vmem:[#allocation3 + $0x78] sm:$0xc0] %v2785
    %v2788 = vld [vmem:[%s2249] sm:$0x3]
    %2789 = vst [vmem:[#allocation3 + $0x20] sm:$0x3] %v2788
    %v2790 = vld [vmem:[%s2288] sm:$0x3]
    %v2792 = vunpack.c.l.b16 %v2790
    %v2793 = vpack.c.b16 %v2792, %v2792
    %v2794 = vrot.slane %v2793, 6
    %2796 = vst [vmem:[#allocation3 + $0x20] sm:$0xc] %v2794
    %v2797 = vld [vmem:[%s2327] sm:$0x3]
    %v2799 = vunpack.c.l.b16 %v2797
    %v2800 = vpack.c.b16 %v2799, %v2799
    %2802 = vst [vmem:[#allocation3 + $0x20] sm:$0x30] %v2800
    %v2803 = vld [vmem:[%s2366] sm:$0x3]
    %v2805 = vunpack.c.l.b16 %v2803
    %v2806 = vpack.c.b16 %v2805, %v2805
    %v2807 = vrot.slane %v2806, 2
    %2809 = vst [vmem:[#allocation3 + $0x20] sm:$0xc0] %v2807
    %v2810 = vld [vmem:[%s2405] sm:$0x3]
    %2811 = vst [vmem:[#allocation3 + $0x80] sm:$0x3] %v2810
    %v2812 = vld [vmem:[%s2444] sm:$0x3]
    %v2814 = vunpack.c.l.b16 %v2812
    %v2815 = vpack.c.b16 %v2814, %v2814
    %v2816 = vrot.slane %v2815, 6
    %2818 = vst [vmem:[#allocation3 + $0x80] sm:$0xc] %v2816
    %v2819 = vld [vmem:[%s2483] sm:$0x3]
    %v2821 = vunpack.c.l.b16 %v2819
    %v2822 = vpack.c.b16 %v2821, %v2821
    %2824 = vst [vmem:[#allocation3 + $0x80] sm:$0x30] %v2822
    %v2825 = vld [vmem:[%s2522] sm:$0x3]
    %v2827 = vunpack.c.l.b16 %v2825
    %v2828 = vpack.c.b16 %v2827, %v2827
    %v2829 = vrot.slane %v2828, 2
    %2831 = vst [vmem:[#allocation3 + $0x80] sm:$0xc0] %v2829
    %v2832 = vld [vmem:[%s2240] sm:$0x7]
    %v2834 = vunpack.c.l.b16 %v2832
    %v2835 = vpack.c.b16 %v2834, %v2834
    %v2837 = vshrl.u32 %v2835, 16
    %v2839 = vshll.u32 %v2835, 16
    %v2841 = vrot.slane %v2839, 1
    %v2842 = vor.u32 %v2837, %v2841
    %2844 = vst [vmem:[#allocation3 + $0x28] sm:$0x3] %v2842
    %v2845 = vld [vmem:[%s2281] sm:$0x7]
    %v2847 = vunpack.c.l.b16 %v2845
    %v2848 = vpack.c.b16 %v2847, %v2847
    %v2850 = vshrl.u32 %v2848, 16
    %v2852 = vrot.slane %v2850, 6
    %v2853 = vshll.u32 %v2848, 16
    %v2855 = vrot.slane %v2853, 7
    %v2856 = vor.u32 %v2852, %v2855
    %2858 = vst [vmem:[#allocation3 + $0x28] sm:$0xc] %v2856
    %v2859 = vld [vmem:[%s2320] sm:$0x7]
    %v2861 = vunpack.c.l.b16 %v2859
    %v2862 = vpack.c.b16 %v2861, %v2861
    %v2864 = vshrl.u32 %v2862, 16
    %v2866 = vrot.slane %v2864, 4
    %v2867 = vshll.u32 %v2862, 16
    %v2869 = vrot.slane %v2867, 5
    %v2870 = vor.u32 %v2866, %v2869
    %2872 = vst [vmem:[#allocation3 + $0x28] sm:$0x30] %v2870
    %v2873 = vld [vmem:[%s2359] sm:$0x7]
    %v2875 = vunpack.c.l.b16 %v2873
    %v2876 = vpack.c.b16 %v2875, %v2875
    %v2878 = vshrl.u32 %v2876, 16
    %v2880 = vrot.slane %v2878, 2
    %v2881 = vshll.u32 %v2876, 16
    %v2883 = vrot.slane %v2881, 3
    %v2884 = vor.u32 %v2880, %v2883
    %2886 = vst [vmem:[#allocation3 + $0x28] sm:$0xc0] %v2884
    %v2887 = vld [vmem:[%s2398] sm:$0x7]
    %v2889 = vunpack.c.l.b16 %v2887
    %v2890 = vpack.c.b16 %v2889, %v2889
    %v2892 = vshrl.u32 %v2890, 16
    %v2894 = vshll.u32 %v2890, 16
    %v2896 = vrot.slane %v2894, 1
    %v2897 = vor.u32 %v2892, %v2896
    %2899 = vst [vmem:[#allocation3 + $0x88] sm:$0x3] %v2897
    %v2900 = vld [vmem:[%s2437] sm:$0x7]
    %v2902 = vunpack.c.l.b16 %v2900
    %v2903 = vpack.c.b16 %v2902, %v2902
    %v2905 = vshrl.u32 %v2903, 16
    %v2907 = vrot.slane %v2905, 6
    %v2908 = vshll.u32 %v2903, 16
    %v2910 = vrot.slane %v2908, 7
    %v2911 = vor.u32 %v2907, %v2910
    %2913 = vst [vmem:[#allocation3 + $0x88] sm:$0xc] %v2911
    %v2914 = vld [vmem:[%s2476] sm:$0x7]
    %v2916 = vunpack.c.l.b16 %v2914
    %v2917 = vpack.c.b16 %v2916, %v2916
    %v2919 = vshrl.u32 %v2917, 16
    %v2921 = vrot.slane %v2919, 4
    %v2922 = vshll.u32 %v2917, 16
    %v2924 = vrot.slane %v2922, 5
    %v2925 = vor.u32 %v2921, %v2924
    %2927 = vst [vmem:[#allocation3 + $0x88] sm:$0x30] %v2925
    %v2928 = vld [vmem:[%s2515] sm:$0x7]
    %v2930 = vunpack.c.l.b16 %v2928
    %v2931 = vpack.c.b16 %v2930, %v2930
    %v2933 = vshrl.u32 %v2931, 16
    %v2935 = vrot.slane %v2933, 2
    %v2936 = vshll.u32 %v2931, 16
    %v2938 = vrot.slane %v2936, 3
    %v2939 = vor.u32 %v2935, %v2938
    %2941 = vst [vmem:[#allocation3 + $0x88] sm:$0xc0] %v2939
    %v2942 = vld [vmem:[%s2261] sm:$0x3]
    %2943 = vst [vmem:[#allocation3 + $0x30] sm:$0x3] %v2942
    %v2944 = vld [vmem:[%s2300] sm:$0x3]
    %v2946 = vunpack.c.l.b16 %v2944
    %v2947 = vpack.c.b16 %v2946, %v2946
    %v2948 = vrot.slane %v2947, 6
    %2950 = vst [vmem:[#allocation3 + $0x30] sm:$0xc] %v2948
    %v2951 = vld [vmem:[%s2339] sm:$0x3]
    %v2953 = vunpack.c.l.b16 %v2951
    %v2954 = vpack.c.b16 %v2953, %v2953
    %2956 = vst [vmem:[#allocation3 + $0x30] sm:$0x30] %v2954
    %v2957 = vld [vmem:[%s2378] sm:$0x3]
    %v2959 = vunpack.c.l.b16 %v2957
    %v2960 = vpack.c.b16 %v2959, %v2959
    %v2961 = vrot.slane %v2960, 2
    %2963 = vst [vmem:[#allocation3 + $0x30] sm:$0xc0] %v2961
    %v2964 = vld [vmem:[%s2417] sm:$0x3]
    %2965 = vst [vmem:[#allocation3 + $0x90] sm:$0x3] %v2964
    %v2966 = vld [vmem:[%s2456] sm:$0x3]
    %v2968 = vunpack.c.l.b16 %v2966
    %v2969 = vpack.c.b16 %v2968, %v2968
    %v2970 = vrot.slane %v2969, 6
    %2972 = vst [vmem:[#allocation3 + $0x90] sm:$0xc] %v2970
    %v2973 = vld [vmem:[%s2495] sm:$0x3]
    %v2975 = vunpack.c.l.b16 %v2973
    %v2976 = vpack.c.b16 %v2975, %v2975
    %2978 = vst [vmem:[#allocation3 + $0x90] sm:$0x30] %v2976
    %v2979 = vld [vmem:[%s2534] sm:$0x3]
    %v2981 = vunpack.c.l.b16 %v2979
    %v2982 = vpack.c.b16 %v2981, %v2981
    %v2983 = vrot.slane %v2982, 2
    %2985 = vst [vmem:[#allocation3 + $0x90] sm:$0xc0] %v2983
    %v2986 = vld [vmem:[%s2268] sm:$0x3]
    %2987 = vst [vmem:[#allocation3 + $0x38] sm:$0x3] %v2986
    %v2988 = vld [vmem:[%s2307] sm:$0x3]
    %v2990 = vunpack.c.l.b16 %v2988
    %v2991 = vpack.c.b16 %v2990, %v2990
    %v2992 = vrot.slane %v2991, 6
    %2994 = vst [vmem:[#allocation3 + $0x38] sm:$0xc] %v2992
    %v2995 = vld [vmem:[%s2346] sm:$0x3]
    %v2997 = vunpack.c.l.b16 %v2995
    %v2998 = vpack.c.b16 %v2997, %v2997
    %3000 = vst [vmem:[#allocation3 + $0x38] sm:$0x30] %v2998
    %v3001 = vld [vmem:[%s2385] sm:$0x3]
    %v3003 = vunpack.c.l.b16 %v3001
    %v3004 = vpack.c.b16 %v3003, %v3003
    %v3005 = vrot.slane %v3004, 2
    %3007 = vst [vmem:[#allocation3 + $0x38] sm:$0xc0] %v3005
    %v3008 = vld [vmem:[%s2424] sm:$0x3]
    %3009 = vst [vmem:[#allocation3 + $0x98] sm:$0x3] %v3008
    %v3010 = vld [vmem:[%s2463] sm:$0x3]
    %v3012 = vunpack.c.l.b16 %v3010
    %v3013 = vpack.c.b16 %v3012, %v3012
    %v3014 = vrot.slane %v3013, 6
    %3016 = vst [vmem:[#allocation3 + $0x98] sm:$0xc] %v3014
    %v3017 = vld [vmem:[%s2502] sm:$0x3]
    %v3019 = vunpack.c.l.b16 %v3017
    %v3020 = vpack.c.b16 %v3019, %v3019
    %3022 = vst [vmem:[#allocation3 + $0x98] sm:$0x30] %v3020
    %v3023 = vld [vmem:[%s2541] sm:$0x3]
    %v3025 = vunpack.c.l.b16 %v3023
    %v3026 = vpack.c.b16 %v3025, %v3025
    %v3027 = vrot.slane %v3026, 2
    %3029 = vst [vmem:[#allocation3 + $0x98] sm:$0xc0] %v3027
    %v3030 = vld [vmem:[%s2261] sm:$0x7]
    %v3032 = vunpack.c.l.b16 %v3030
    %v3033 = vpack.c.b16 %v3032, %v3032
    %v3035 = vshrl.u32 %v3033, 16
    %v3037 = vshll.u32 %v3033, 16
    %v3039 = vrot.slane %v3037, 1
    %v3040 = vor.u32 %v3035, %v3039
    %3042 = vst [vmem:[#allocation3 + $0x40] sm:$0x3] %v3040
    %v3043 = vld [vmem:[%s2300] sm:$0x7]
    %v3045 = vunpack.c.l.b16 %v3043
    %v3046 = vpack.c.b16 %v3045, %v3045
    %v3048 = vshrl.u32 %v3046, 16
    %v3050 = vrot.slane %v3048, 6
    %v3051 = vshll.u32 %v3046, 16
    %v3053 = vrot.slane %v3051, 7
    %v3054 = vor.u32 %v3050, %v3053
    %3056 = vst [vmem:[#allocation3 + $0x40] sm:$0xc] %v3054
    %v3057 = vld [vmem:[%s2339] sm:$0x7]
    %v3059 = vunpack.c.l.b16 %v3057
    %v3060 = vpack.c.b16 %v3059, %v3059
    %v3062 = vshrl.u32 %v3060, 16
    %v3064 = vrot.slane %v3062, 4
    %v3065 = vshll.u32 %v3060, 16
    %v3067 = vrot.slane %v3065, 5
    %v3068 = vor.u32 %v3064, %v3067
    %3070 = vst [vmem:[#allocation3 + $0x40] sm:$0x30] %v3068
    %v3071 = vld [vmem:[%s2378] sm:$0x7]
    %v3073 = vunpack.c.l.b16 %v3071
    %v3074 = vpack.c.b16 %v3073, %v3073
    %v3076 = vshrl.u32 %v3074, 16
    %v3078 = vrot.slane %v3076, 2
    %v3079 = vshll.u32 %v3074, 16
    %v3081 = vrot.slane %v3079, 3
    %v3082 = vor.u32 %v3078, %v3081
    %3084 = vst [vmem:[#allocation3 + $0x40] sm:$0xc0] %v3082
    %v3085 = vld [vmem:[%s2417] sm:$0x7]
    %v3087 = vunpack.c.l.b16 %v3085
    %v3088 = vpack.c.b16 %v3087, %v3087
    %v3090 = vshrl.u32 %v3088, 16
    %v3092 = vshll.u32 %v3088, 16
    %v3094 = vrot.slane %v3092, 1
    %v3095 = vor.u32 %v3090, %v3094
    %3097 = vst [vmem:[#allocation3 + $0xa0] sm:$0x3] %v3095
    %v3098 = vld [vmem:[%s2456] sm:$0x7]
    %v3100 = vunpack.c.l.b16 %v3098
    %v3101 = vpack.c.b16 %v3100, %v3100
    %v3103 = vshrl.u32 %v3101, 16
    %v3105 = vrot.slane %v3103, 6
    %v3106 = vshll.u32 %v3101, 16
    %v3108 = vrot.slane %v3106, 7
    %v3109 = vor.u32 %v3105, %v3108
    %3111 = vst [vmem:[#allocation3 + $0xa0] sm:$0xc] %v3109
    %v3112 = vld [vmem:[%s2495] sm:$0x7]
    %v3114 = vunpack.c.l.b16 %v3112
    %v3115 = vpack.c.b16 %v3114, %v3114
    %v3117 = vshrl.u32 %v3115, 16
    %v3119 = vrot.slane %v3117, 4
    %v3120 = vshll.u32 %v3115, 16
    %v3122 = vrot.slane %v3120, 5
    %v3123 = vor.u32 %v3119, %v3122
    %3125 = vst [vmem:[#allocation3 + $0xa0] sm:$0x30] %v3123
    %v3126 = vld [vmem:[%s2534] sm:$0x7]
    %v3128 = vunpack.c.l.b16 %v3126
    %v3129 = vpack.c.b16 %v3128, %v3128
    %v3131 = vshrl.u32 %v3129, 16
    %v3133 = vrot.slane %v3131, 2
    %v3134 = vshll.u32 %v3129, 16
    %v3136 = vrot.slane %v3134, 3
    %v3137 = vor.u32 %v3133, %v3136
    %3139 = vst [vmem:[#allocation3 + $0xa0] sm:$0xc0] %v3137
    %v3140 = vld [vmem:[%s2281] sm:$0x3]
    %3141 = vst [vmem:[#allocation3 + $0x48] sm:$0x3] %v3140
    %v3142 = vld [vmem:[%s2320] sm:$0x3]
    %v3144 = vunpack.c.l.b16 %v3142
    %v3145 = vpack.c.b16 %v3144, %v3144
    %v3146 = vrot.slane %v3145, 6
    %3148 = vst [vmem:[#allocation3 + $0x48] sm:$0xc] %v3146
    %v3149 = vld [vmem:[%s2359] sm:$0x3]
    %v3151 = vunpack.c.l.b16 %v3149
    %v3152 = vpack.c.b16 %v3151, %v3151
    %3154 = vst [vmem:[#allocation3 + $0x48] sm:$0x30] %v3152
    %s3155 = scalar_lea.vmem [#allocation2], 36
    %v3156 = vld [vmem:[%s3155] sm:$0x3]
    %v3158 = vunpack.c.l.b16 %v3156
    %v3159 = vpack.c.b16 %v3158, %v3158
    %v3160 = vrot.slane %v3159, 2
    %3162 = vst [vmem:[#allocation3 + $0x48] sm:$0xc0] %v3160
    %v3163 = vld [vmem:[%s2437] sm:$0x3]
    %3164 = vst [vmem:[#allocation3 + $0xa8] sm:$0x3] %v3163
    %v3165 = vld [vmem:[%s2476] sm:$0x3]
    %v3167 = vunpack.c.l.b16 %v3165
    %v3168 = vpack.c.b16 %v3167, %v3167
    %v3169 = vrot.slane %v3168, 6
    %3171 = vst [vmem:[#allocation3 + $0xa8] sm:$0xc] %v3169
    %v3172 = vld [vmem:[%s2515] sm:$0x3]
    %v3174 = vunpack.c.l.b16 %v3172
    %v3175 = vpack.c.b16 %v3174, %v3174
    %3177 = vst [vmem:[#allocation3 + $0xa8] sm:$0x30] %v3175
    %s3178 = scalar_lea.vmem [#allocation2], 76
    %v3179 = vld [vmem:[%s3178] sm:$0x3]
    %v3181 = vunpack.c.l.b16 %v3179
    %v3182 = vpack.c.b16 %v3181, %v3181
    %v3183 = vrot.slane %v3182, 2
    %3185 = vst [vmem:[#allocation3 + $0xa8] sm:$0xc0] %v3183
    %v3186 = vld [vmem:[%s2288] sm:$0x3]
    %3187 = vst [vmem:[#allocation3 + $0x50] sm:$0x3] %v3186
    %v3188 = vld [vmem:[%s2327] sm:$0x3]
    %v3190 = vunpack.c.l.b16 %v3188
    %v3191 = vpack.c.b16 %v3190, %v3190
    %v3192 = vrot.slane %v3191, 6
    %3194 = vst [vmem:[#allocation3 + $0x50] sm:$0xc] %v3192
    %v3195 = vld [vmem:[%s2366] sm:$0x3]
    %v3197 = vunpack.c.l.b16 %v3195
    %v3198 = vpack.c.b16 %v3197, %v3197
    %3200 = vst [vmem:[#allocation3 + $0x50] sm:$0x30] %v3198
    %s3201 = scalar_lea.vmem [#allocation2], 116
    %v3202 = vld [vmem:[%s3201] sm:$0x3]
    %v3204 = vunpack.c.l.b16 %v3202
    %v3205 = vpack.c.b16 %v3204, %v3204
    %v3206 = vrot.slane %v3205, 2
    %3208 = vst [vmem:[#allocation3 + $0x50] sm:$0xc0] %v3206
    %v3209 = vld [vmem:[%s2444] sm:$0x3]
    %3210 = vst [vmem:[#allocation3 + $0xb0] sm:$0x3] %v3209
    %v3211 = vld [vmem:[%s2483] sm:$0x3]
    %v3213 = vunpack.c.l.b16 %v3211
    %v3214 = vpack.c.b16 %v3213, %v3213
    %v3215 = vrot.slane %v3214, 6
    %3217 = vst [vmem:[#allocation3 + $0xb0] sm:$0xc] %v3215
    %v3218 = vld [vmem:[%s2522] sm:$0x3]
    %v3220 = vunpack.c.l.b16 %v3218
    %v3221 = vpack.c.b16 %v3220, %v3220
    %3223 = vst [vmem:[#allocation3 + $0xb0] sm:$0x30] %v3221
    %s3224 = scalar_lea.vmem [#allocation2], 156
    %v3225 = vld [vmem:[%s3224] sm:$0x3]
    %v3227 = vunpack.c.l.b16 %v3225
    %v3228 = vpack.c.b16 %v3227, %v3227
    %v3229 = vrot.slane %v3228, 2
    %3231 = vst [vmem:[#allocation3 + $0xb0] sm:$0xc0] %v3229
    %v3232 = vld [vmem:[%s2281] sm:$0x7]
    %v3234 = vunpack.c.l.b16 %v3232
    %v3235 = vpack.c.b16 %v3234, %v3234
    %v3237 = vshrl.u32 %v3235, 16
    %v3239 = vshll.u32 %v3235, 16
    %v3241 = vrot.slane %v3239, 1
    %v3242 = vor.u32 %v3237, %v3241
    %3244 = vst [vmem:[#allocation3 + $0x58] sm:$0x3] %v3242
    %v3245 = vld [vmem:[%s2320] sm:$0x7]
    %v3247 = vunpack.c.l.b16 %v3245
    %v3248 = vpack.c.b16 %v3247, %v3247
    %v3250 = vshrl.u32 %v3248, 16
    %v3252 = vrot.slane %v3250, 6
    %v3253 = vshll.u32 %v3248, 16
    %v3255 = vrot.slane %v3253, 7
    %v3256 = vor.u32 %v3252, %v3255
    %3258 = vst [vmem:[#allocation3 + $0x58] sm:$0xc] %v3256
    %v3259 = vld [vmem:[%s2359] sm:$0x7]
    %v3261 = vunpack.c.l.b16 %v3259
    %v3262 = vpack.c.b16 %v3261, %v3261
    %v3264 = vshrl.u32 %v3262, 16
    %v3266 = vrot.slane %v3264, 4
    %v3267 = vshll.u32 %v3262, 16
    %v3269 = vrot.slane %v3267, 5
    %v3270 = vor.u32 %v3266, %v3269
    %3272 = vst [vmem:[#allocation3 + $0x58] sm:$0x30] %v3270
    %v3273 = vld [vmem:[%s3155] sm:$0x7]
    %v3275 = vunpack.c.l.b16 %v3273
    %v3276 = vpack.c.b16 %v3275, %v3275
    %v3278 = vshrl.u32 %v3276, 16
    %v3280 = vrot.slane %v3278, 2
    %v3281 = vshll.u32 %v3276, 16
    %v3283 = vrot.slane %v3281, 3
    %v3284 = vor.u32 %v3280, %v3283
    %3286 = vst [vmem:[#allocation3 + $0x58] sm:$0xc0] %v3284
    %v3287 = vld [vmem:[%s2437] sm:$0x7]
    %v3289 = vunpack.c.l.b16 %v3287
    %v3290 = vpack.c.b16 %v3289, %v3289
    %v3292 = vshrl.u32 %v3290, 16
    %v3294 = vshll.u32 %v3290, 16
    %v3296 = vrot.slane %v3294, 1
    %v3297 = vor.u32 %v3292, %v3296
    %3299 = vst [vmem:[#allocation3 + $0xb8] sm:$0x3] %v3297
    %v3300 = vld [vmem:[%s2476] sm:$0x7]
    %v3302 = vunpack.c.l.b16 %v3300
    %v3303 = vpack.c.b16 %v3302, %v3302
    %v3305 = vshrl.u32 %v3303, 16
    %v3307 = vrot.slane %v3305, 6
    %v3308 = vshll.u32 %v3303, 16
    %v3310 = vrot.slane %v3308, 7
    %v3311 = vor.u32 %v3307, %v3310
    %3313 = vst [vmem:[#allocation3 + $0xb8] sm:$0xc] %v3311
    %v3314 = vld [vmem:[%s2515] sm:$0x7]
    %v3316 = vunpack.c.l.b16 %v3314
    %v3317 = vpack.c.b16 %v3316, %v3316
    %v3319 = vshrl.u32 %v3317, 16
    %v3321 = vrot.slane %v3319, 4
    %v3322 = vshll.u32 %v3317, 16
    %v3324 = vrot.slane %v3322, 5
    %v3325 = vor.u32 %v3321, %v3324
    %3327 = vst [vmem:[#allocation3 + $0xb8] sm:$0x30] %v3325
    %v3328 = vld [vmem:[%s3178] sm:$0x7]
    %v3330 = vunpack.c.l.b16 %v3328
    %v3331 = vpack.c.b16 %v3330, %v3330
    %v3333 = vshrl.u32 %v3331, 16
    %v3335 = vrot.slane %v3333, 2
    %v3336 = vshll.u32 %v3331, 16
    %v3338 = vrot.slane %v3336, 3
    %v3339 = vor.u32 %v3335, %v3338
    %3341 = vst [vmem:[#allocation3 + $0xb8] sm:$0xc0] %v3339
    %v3342 = vld [vmem:[#allocation3] sm:$0xff]
    %v3343 = vld [vmem:[#allocation3 + $0x8] sm:$0xff]
    %v3344 = vld [vmem:[#allocation3 + $0x10] sm:$0xff]
    %v3345 = vld [vmem:[#allocation3 + $0x18] sm:$0xff]
    %v3346 = vld [vmem:[#allocation3 + $0x20] sm:$0xff]
    %v3347 = vld [vmem:[#allocation3 + $0x28] sm:$0xff]
    %v3348 = vld [vmem:[#allocation3 + $0x30] sm:$0xff]
    %v3349 = vld [vmem:[#allocation3 + $0x38] sm:$0xff]
    %v3350 = vld [vmem:[#allocation3 + $0x40] sm:$0xff]
    %v3351 = vld [vmem:[#allocation3 + $0x48] sm:$0xff]
    %v3352 = vld [vmem:[#allocation3 + $0x50] sm:$0xff]
    %v3353 = vld [vmem:[#allocation3 + $0x58] sm:$0xff]
    %v3354 = vld [vmem:[#allocation3 + $0x60] sm:$0xff]
    %v3355 = vld [vmem:[#allocation3 + $0x68] sm:$0xff]
    %v3356 = vld [vmem:[#allocation3 + $0x70] sm:$0xff]
    %v3357 = vld [vmem:[#allocation3 + $0x78] sm:$0xff]
    %v3358 = vld [vmem:[#allocation3 + $0x80] sm:$0xff]
    %v3359 = vld [vmem:[#allocation3 + $0x88] sm:$0xff]
    %v3360 = vld [vmem:[#allocation3 + $0x90] sm:$0xff]
    %v3361 = vld [vmem:[#allocation3 + $0x98] sm:$0xff]
    %v3362 = vld [vmem:[#allocation3 + $0xa0] sm:$0xff]
    %v3363 = vld [vmem:[#allocation3 + $0xa8] sm:$0xff]
    %v3364 = vld [vmem:[#allocation3 + $0xb0] sm:$0xff]
    %v3365 = vld [vmem:[#allocation3 + $0xb8] sm:$0xff]
    %v3366 = vld [vmem:[%s4] sm:$0xf]
    %v3367 = vld [vmem:[%s4 + $0x4] sm:$0xf]
    %v3368 = vld [vmem:[%s4 + $0x8] sm:$0xf]
    %v3369 = vld [vmem:[%s4 + $0xc] sm:$0xf]
    %v3370 = vld [vmem:[%s4 + $0x10] sm:$0xf]
    %v3371 = vld [vmem:[%s4 + $0x14] sm:$0xf]
    %v3372 = vld [vmem:[%s4 + $0x18] sm:$0xf]
    %v3373 = vld [vmem:[%s4 + $0x1c] sm:$0xf]
    %v3374 = vld [vmem:[%s4 + $0x20] sm:$0xf]
    %v3375 = vld [vmem:[%s4 + $0x24] sm:$0xf]
    %v3376 = vld [vmem:[%s4 + $0x28] sm:$0xf]
    %v3377 = vld [vmem:[%s4 + $0x2c] sm:$0xf]
    %v3378 = vld [vmem:[%s4 + $0x30] sm:$0xf]
    %v3379 = vld [vmem:[%s4 + $0x34] sm:$0xf]
    %v3380 = vld [vmem:[%s4 + $0x38] sm:$0xf]
    %v3381 = vld [vmem:[%s4 + $0x3c] sm:$0xf]
    %v3382 = vld [vmem:[%s4 + $0x40] sm:$0xf]
    %v3383 = vld [vmem:[%s4 + $0x44] sm:$0xf]
    %v3384 = vld [vmem:[%s4 + $0x48] sm:$0xf]
    %v3385 = vld [vmem:[%s4 + $0x4c] sm:$0xf]
    %v3386 = vld [vmem:[%s4 + $0x50] sm:$0xf]
    %v3387 = vld [vmem:[%s4 + $0x54] sm:$0xf]
    %v3388 = vld [vmem:[%s4 + $0x58] sm:$0xf]
    %v3389 = vld [vmem:[%s4 + $0x5c] sm:$0xf]
    %v3390 = vld [vmem:[%s4 + $0x60] sm:$0xf]
    %v3391 = vld [vmem:[%s4 + $0x64] sm:$0xf]
    %v3392 = vld [vmem:[%s4 + $0x68] sm:$0xf]
    %v3393 = vld [vmem:[%s4 + $0x6c] sm:$0xf]
    %v3394 = vld [vmem:[%s4 + $0x70] sm:$0xf]
    %v3395 = vld [vmem:[%s4 + $0x74] sm:$0xf]
    %v3396 = vld [vmem:[%s4 + $0x78] sm:$0xf]
    %v3397 = vld [vmem:[%s4 + $0x7c] sm:$0xf]
    %v3398 = vld [vmem:[%s4 + $0x80] sm:$0xf]
    %v3399 = vld [vmem:[%s4 + $0x84] sm:$0xf]
    %v3400 = vld [vmem:[%s4 + $0x88] sm:$0xf]
    %v3401 = vld [vmem:[%s4 + $0x8c] sm:$0xf]
    %v3402 = vld [vmem:[%s4 + $0x90] sm:$0xf]
    %v3403 = vld [vmem:[%s4 + $0x94] sm:$0xf]
    %v3404 = vld [vmem:[%s4 + $0x98] sm:$0xf]
    %v3405 = vld [vmem:[%s4 + $0x9c] sm:$0xf]
    %v3406 = vld [vmem:[%s4 + $0xa0] sm:$0xf]
    %v3407 = vld [vmem:[%s4 + $0xa4] sm:$0xf]
    %v3408 = vld [vmem:[%s4 + $0xa8] sm:$0xf]
    %v3409 = vld [vmem:[%s4 + $0xac] sm:$0xf]
    %v3410 = vld [vmem:[%s4 + $0xb0] sm:$0xf]
    %v3411 = vld [vmem:[%s4 + $0xb4] sm:$0xf]
    %v3412 = vld [vmem:[%s4 + $0xb8] sm:$0xf]
    %v3413 = vld [vmem:[%s4 + $0xbc] sm:$0xf]
    %v3414 = vld [vmem:[%s4 + $0xc0] sm:$0xf]
    %v3415 = vld [vmem:[%s4 + $0xc4] sm:$0xf]
    %v3416 = vld [vmem:[%s4 + $0xc8] sm:$0xf]
    %v3417 = vld [vmem:[%s4 + $0xcc] sm:$0xf]
    %v3418 = vld [vmem:[%s4 + $0xd0] sm:$0xf]
    %v3419 = vld [vmem:[%s4 + $0xd4] sm:$0xf]
    %v3420 = vld [vmem:[%s4 + $0xd8] sm:$0xf]
    %v3421 = vld [vmem:[%s4 + $0xdc] sm:$0xf]
    %v3422 = vld [vmem:[%s4 + $0xe0] sm:$0xf]
    %v3423 = vld [vmem:[%s4 + $0xe4] sm:$0xf]
    %v3424 = vld [vmem:[%s4 + $0xe8] sm:$0xf]
    %v3425 = vld [vmem:[%s4 + $0xec] sm:$0xf]
    %v3426 = vld [vmem:[%s4 + $0xf0] sm:$0xf]
    %v3427 = vld [vmem:[%s4 + $0xf4] sm:$0xf]
    %v3428 = vld [vmem:[%s4 + $0xf8] sm:$0xf]
    %v3429 = vld [vmem:[%s4 + $0xfc] sm:$0xf]
    %v3430 = vld [vmem:[%s4 + $0x100] sm:$0xf]
    %v3431 = vld [vmem:[%s4 + $0x104] sm:$0xf]
    %v3432 = vld [vmem:[%s4 + $0x108] sm:$0xf]
    %v3433 = vld [vmem:[%s4 + $0x10c] sm:$0xf]
    %v3434 = vld [vmem:[%s4 + $0x110] sm:$0xf]
    %v3435 = vld [vmem:[%s4 + $0x114] sm:$0xf]
    %v3436 = vld [vmem:[%s4 + $0x118] sm:$0xf]
    %v3437 = vld [vmem:[%s4 + $0x11c] sm:$0xf]
    %v3438 = vld [vmem:[%s4 + $0x120] sm:$0xf]
    %v3439 = vld [vmem:[%s4 + $0x124] sm:$0xf]
    %v3440 = vld [vmem:[%s4 + $0x128] sm:$0xf]
    %v3441 = vld [vmem:[%s4 + $0x12c] sm:$0xf]
    %v3442 = vld [vmem:[%s4 + $0x130] sm:$0xf]
    %v3443 = vld [vmem:[%s4 + $0x134] sm:$0xf]
    %v3444 = vld [vmem:[%s4 + $0x138] sm:$0xf]
    %v3445 = vld [vmem:[%s4 + $0x13c] sm:$0xf]
    %v3446 = vld [vmem:[%s4 + $0x140] sm:$0xf]
    %v3447 = vld [vmem:[%s4 + $0x144] sm:$0xf]
    %v3448 = vld [vmem:[%s4 + $0x148] sm:$0xf]
    %v3449 = vld [vmem:[%s4 + $0x14c] sm:$0xf]
    %v3450 = vld [vmem:[%s4 + $0x150] sm:$0xf]
    %v3451 = vld [vmem:[%s4 + $0x154] sm:$0xf]
    %v3452 = vld [vmem:[%s4 + $0x158] sm:$0xf]
    %v3453 = vld [vmem:[%s4 + $0x15c] sm:$0xf]
    %v3454 = vld [vmem:[%s4 + $0x160] sm:$0xf]
    %v3455 = vld [vmem:[%s4 + $0x164] sm:$0xf]
    %v3456 = vld [vmem:[%s4 + $0x168] sm:$0xf]
    %v3457 = vld [vmem:[%s4 + $0x16c] sm:$0xf]
    %v3458 = vld [vmem:[%s4 + $0x170] sm:$0xf]
    %v3459 = vld [vmem:[%s4 + $0x174] sm:$0xf]
    %v3460 = vld [vmem:[%s4 + $0x178] sm:$0xf]
    %v3461 = vld [vmem:[%s4 + $0x17c] sm:$0xf]
    %v3462 = vld [vmem:[%s4 + $0x180] sm:$0xf]
    %v3463 = vld [vmem:[%s4 + $0x184] sm:$0xf]
    %v3464 = vld [vmem:[%s4 + $0x188] sm:$0xf]
    %v3465 = vld [vmem:[%s4 + $0x18c] sm:$0xf]
    %v3466 = vld [vmem:[%s4 + $0x190] sm:$0xf]
    %v3467 = vld [vmem:[%s4 + $0x194] sm:$0xf]
    %v3468 = vld [vmem:[%s4 + $0x198] sm:$0xf]
    %v3469 = vld [vmem:[%s4 + $0x19c] sm:$0xf]
    %v3470 = vld [vmem:[%s4 + $0x1a0] sm:$0xf]
    %v3471 = vld [vmem:[%s4 + $0x1a4] sm:$0xf]
    %v3472 = vld [vmem:[%s4 + $0x1a8] sm:$0xf]
    %v3473 = vld [vmem:[%s4 + $0x1ac] sm:$0xf]
    %v3474 = vld [vmem:[%s4 + $0x1b0] sm:$0xf]
    %v3475 = vld [vmem:[%s4 + $0x1b4] sm:$0xf]
    %v3476 = vld [vmem:[%s4 + $0x1b8] sm:$0xf]
    %v3477 = vld [vmem:[%s4 + $0x1bc] sm:$0xf]
    %v3478 = vld [vmem:[%s4 + $0x1c0] sm:$0xf]
    %v3479 = vld [vmem:[%s4 + $0x1c4] sm:$0xf]
    %v3480 = vld [vmem:[%s4 + $0x1c8] sm:$0xf]
    %v3481 = vld [vmem:[%s4 + $0x1cc] sm:$0xf]
    %v3482 = vld [vmem:[%s4 + $0x1d0] sm:$0xf]
    %v3483 = vld [vmem:[%s4 + $0x1d4] sm:$0xf]
    %v3484 = vld [vmem:[%s4 + $0x1d8] sm:$0xf]
    %v3485 = vld [vmem:[%s4 + $0x1dc] sm:$0xf]
    %v3486 = vld [vmem:[%s4 + $0x1e0] sm:$0xf]
    %v3487 = vld [vmem:[%s4 + $0x1e4] sm:$0xf]
    %v3488 = vld [vmem:[%s4 + $0x1e8] sm:$0xf]
    %v3489 = vld [vmem:[%s4 + $0x1ec] sm:$0xf]
    %v3490 = vld [vmem:[%s4 + $0x1f0] sm:$0xf]
    %v3491 = vld [vmem:[%s4 + $0x1f4] sm:$0xf]
    %v3492 = vld [vmem:[%s4 + $0x1f8] sm:$0xf]
    %v3493 = vld [vmem:[%s4 + $0x1fc] sm:$0xf]
    %v3494 = vld [vmem:[%s4 + $0x200] sm:$0xf]
    %v3495 = vld [vmem:[%s4 + $0x204] sm:$0xf]
    %v3496 = vld [vmem:[%s4 + $0x208] sm:$0xf]
    %v3497 = vld [vmem:[%s4 + $0x20c] sm:$0xf]
    %v3498 = vld [vmem:[%s4 + $0x210] sm:$0xf]
    %v3499 = vld [vmem:[%s4 + $0x214] sm:$0xf]
    %v3500 = vld [vmem:[%s4 + $0x218] sm:$0xf]
    %v3501 = vld [vmem:[%s4 + $0x21c] sm:$0xf]
    %v3502 = vld [vmem:[%s4 + $0x220] sm:$0xf]
    %v3503 = vld [vmem:[%s4 + $0x224] sm:$0xf]
    %v3504 = vld [vmem:[%s4 + $0x228] sm:$0xf]
    %v3505 = vld [vmem:[%s4 + $0x22c] sm:$0xf]
    %v3506 = vld [vmem:[%s4 + $0x230] sm:$0xf]
    %v3507 = vld [vmem:[%s4 + $0x234] sm:$0xf]
    %v3508 = vld [vmem:[%s4 + $0x238] sm:$0xf]
    %v3509 = vld [vmem:[%s4 + $0x23c] sm:$0xf]
    %v3510 = vld [vmem:[%s4 + $0x240] sm:$0xf]
    %v3511 = vld [vmem:[%s4 + $0x244] sm:$0xf]
    %v3512 = vld [vmem:[%s4 + $0x248] sm:$0xf]
    %v3513 = vld [vmem:[%s4 + $0x24c] sm:$0xf]
    %v3514 = vld [vmem:[%s4 + $0x250] sm:$0xf]
    %v3515 = vld [vmem:[%s4 + $0x254] sm:$0xf]
    %v3516 = vld [vmem:[%s4 + $0x258] sm:$0xf]
    %v3517 = vld [vmem:[%s4 + $0x25c] sm:$0xf]
    %v3518 = vld [vmem:[%s4 + $0x260] sm:$0xf]
    %v3519 = vld [vmem:[%s4 + $0x264] sm:$0xf]
    %v3520 = vld [vmem:[%s4 + $0x268] sm:$0xf]
    %v3521 = vld [vmem:[%s4 + $0x26c] sm:$0xf]
    %v3522 = vld [vmem:[%s4 + $0x270] sm:$0xf]
    %v3523 = vld [vmem:[%s4 + $0x274] sm:$0xf]
    %v3524 = vld [vmem:[%s4 + $0x278] sm:$0xf]
    %v3525 = vld [vmem:[%s4 + $0x27c] sm:$0xf]
    %v3526 = vld [vmem:[%s4 + $0x280] sm:$0xf]
    %v3527 = vld [vmem:[%s4 + $0x284] sm:$0xf]
    %v3528 = vld [vmem:[%s4 + $0x288] sm:$0xf]
    %v3529 = vld [vmem:[%s4 + $0x28c] sm:$0xf]
    %v3530 = vld [vmem:[%s4 + $0x290] sm:$0xf]
    %v3531 = vld [vmem:[%s4 + $0x294] sm:$0xf]
    %v3532 = vld [vmem:[%s4 + $0x298] sm:$0xf]
    %v3533 = vld [vmem:[%s4 + $0x29c] sm:$0xf]
    %v3534 = vld [vmem:[%s4 + $0x2a0] sm:$0xf]
    %v3535 = vld [vmem:[%s4 + $0x2a4] sm:$0xf]
    %v3536 = vld [vmem:[%s4 + $0x2a8] sm:$0xf]
    %v3537 = vld [vmem:[%s4 + $0x2ac] sm:$0xf]
    %v3538 = vld [vmem:[%s4 + $0x2b0] sm:$0xf]
    %v3539 = vld [vmem:[%s4 + $0x2b4] sm:$0xf]
    %v3540 = vld [vmem:[%s4 + $0x2b8] sm:$0xf]
    %v3541 = vld [vmem:[%s4 + $0x2bc] sm:$0xf]
    %v3542 = vld [vmem:[%s4 + $0x2c0] sm:$0xf]
    %v3543 = vld [vmem:[%s4 + $0x2c4] sm:$0xf]
    %v3544 = vld [vmem:[%s4 + $0x2c8] sm:$0xf]
    %v3545 = vld [vmem:[%s4 + $0x2cc] sm:$0xf]
    %v3546 = vld [vmem:[%s4 + $0x2d0] sm:$0xf]
    %v3547 = vld [vmem:[%s4 + $0x2d4] sm:$0xf]
    %v3548 = vld [vmem:[%s4 + $0x2d8] sm:$0xf]
    %v3549 = vld [vmem:[%s4 + $0x2dc] sm:$0xf]
    %v3550 = vld [vmem:[%s4 + $0x2e0] sm:$0xf]
    %v3551 = vld [vmem:[%s4 + $0x2e4] sm:$0xf]
    %v3552 = vld [vmem:[%s4 + $0x2e8] sm:$0xf]
    %v3553 = vld [vmem:[%s4 + $0x2ec] sm:$0xf]
    %v3554 = vld [vmem:[%s4 + $0x2f0] sm:$0xf]
    %v3555 = vld [vmem:[%s4 + $0x2f4] sm:$0xf]
    %v3556 = vld [vmem:[%s4 + $0x2f8] sm:$0xf]
    %v3557 = vld [vmem:[%s4 + $0x2fc] sm:$0xf]
    %v3750 = vunpack.c.l.b16 %v3366
    %v3751 = vunpack.c.l.b16 %v3367
    %v3752 = vunpack.c.l.b16 %v3368
    %v3753 = vunpack.c.l.b16 %v3369
    %v3754 = vunpack.c.l.b16 %v3370
    %v3755 = vunpack.c.l.b16 %v3371
    %v3756 = vunpack.c.l.b16 %v3372
    %v3757 = vunpack.c.l.b16 %v3373
    %v3758 = vunpack.c.l.b16 %v3374
    %v3759 = vunpack.c.l.b16 %v3375
    %v3760 = vunpack.c.l.b16 %v3376
    %v3761 = vunpack.c.l.b16 %v3377
    %v3762 = vunpack.c.l.b16 %v3378
    %v3763 = vunpack.c.l.b16 %v3379
    %v3764 = vunpack.c.l.b16 %v3380
    %v3765 = vunpack.c.l.b16 %v3381
    %v3766 = vunpack.c.l.b16 %v3382
    %v3767 = vunpack.c.l.b16 %v3383
    %v3768 = vunpack.c.l.b16 %v3384
    %v3769 = vunpack.c.l.b16 %v3385
    %v3770 = vunpack.c.l.b16 %v3386
    %v3771 = vunpack.c.l.b16 %v3387
    %v3772 = vunpack.c.l.b16 %v3388
    %v3773 = vunpack.c.l.b16 %v3389
    %v3774 = vunpack.c.l.b16 %v3390
    %v3775 = vunpack.c.l.b16 %v3391
    %v3776 = vunpack.c.l.b16 %v3392
    %v3777 = vunpack.c.l.b16 %v3393
    %v3778 = vunpack.c.l.b16 %v3394
    %v3779 = vunpack.c.l.b16 %v3395
    %v3780 = vunpack.c.l.b16 %v3396
    %v3781 = vunpack.c.l.b16 %v3397
    %v3782 = vunpack.c.l.b16 %v3398
    %v3783 = vunpack.c.l.b16 %v3399
    %v3784 = vunpack.c.l.b16 %v3400
    %v3785 = vunpack.c.l.b16 %v3401
    %v3786 = vunpack.c.l.b16 %v3402
    %v3787 = vunpack.c.l.b16 %v3403
    %v3788 = vunpack.c.l.b16 %v3404
    %v3789 = vunpack.c.l.b16 %v3405
    %v3790 = vunpack.c.l.b16 %v3406
    %v3791 = vunpack.c.l.b16 %v3407
    %v3792 = vunpack.c.l.b16 %v3408
    %v3793 = vunpack.c.l.b16 %v3409
    %v3794 = vunpack.c.l.b16 %v3410
    %v3795 = vunpack.c.l.b16 %v3411
    %v3796 = vunpack.c.l.b16 %v3412
    %v3797 = vunpack.c.l.b16 %v3413
    %v3798 = vunpack.c.l.b16 %v3414
    %v3799 = vunpack.c.l.b16 %v3415
    %v3800 = vunpack.c.l.b16 %v3416
    %v3801 = vunpack.c.l.b16 %v3417
    %v3802 = vunpack.c.l.b16 %v3418
    %v3803 = vunpack.c.l.b16 %v3419
    %v3804 = vunpack.c.l.b16 %v3420
    %v3805 = vunpack.c.l.b16 %v3421
    %v3806 = vunpack.c.l.b16 %v3422
    %v3807 = vunpack.c.l.b16 %v3423
    %v3808 = vunpack.c.l.b16 %v3424
    %v3809 = vunpack.c.l.b16 %v3425
    %v3810 = vunpack.c.l.b16 %v3426
    %v3811 = vunpack.c.l.b16 %v3427
    %v3812 = vunpack.c.l.b16 %v3428
    %v3813 = vunpack.c.l.b16 %v3429
    %v3814 = vunpack.c.l.b16 %v3430
    %v3815 = vunpack.c.l.b16 %v3431
    %v3816 = vunpack.c.l.b16 %v3432
    %v3817 = vunpack.c.l.b16 %v3433
    %v3818 = vunpack.c.l.b16 %v3434
    %v3819 = vunpack.c.l.b16 %v3435
    %v3820 = vunpack.c.l.b16 %v3436
    %v3821 = vunpack.c.l.b16 %v3437
    %v3822 = vunpack.c.l.b16 %v3438
    %v3823 = vunpack.c.l.b16 %v3439
    %v3824 = vunpack.c.l.b16 %v3440
    %v3825 = vunpack.c.l.b16 %v3441
    %v3826 = vunpack.c.l.b16 %v3442
    %v3827 = vunpack.c.l.b16 %v3443
    %v3828 = vunpack.c.l.b16 %v3444
    %v3829 = vunpack.c.l.b16 %v3445
    %v3830 = vunpack.c.l.b16 %v3446
    %v3831 = vunpack.c.l.b16 %v3447
    %v3832 = vunpack.c.l.b16 %v3448
    %v3833 = vunpack.c.l.b16 %v3449
    %v3834 = vunpack.c.l.b16 %v3450
    %v3835 = vunpack.c.l.b16 %v3451
    %v3836 = vunpack.c.l.b16 %v3452
    %v3837 = vunpack.c.l.b16 %v3453
    %v3838 = vunpack.c.l.b16 %v3454
    %v3839 = vunpack.c.l.b16 %v3455
    %v3840 = vunpack.c.l.b16 %v3456
    %v3841 = vunpack.c.l.b16 %v3457
    %v3842 = vunpack.c.l.b16 %v3458
    %v3843 = vunpack.c.l.b16 %v3459
    %v3844 = vunpack.c.l.b16 %v3460
    %v3845 = vunpack.c.l.b16 %v3461
    %v3846 = vunpack.c.l.b16 %v3462
    %v3847 = vunpack.c.l.b16 %v3463
    %v3848 = vunpack.c.l.b16 %v3464
    %v3849 = vunpack.c.l.b16 %v3465
    %v3850 = vunpack.c.l.b16 %v3466
    %v3851 = vunpack.c.l.b16 %v3467
    %v3852 = vunpack.c.l.b16 %v3468
    %v3853 = vunpack.c.l.b16 %v3469
    %v3854 = vunpack.c.l.b16 %v3470
    %v3855 = vunpack.c.l.b16 %v3471
    %v3856 = vunpack.c.l.b16 %v3472
    %v3857 = vunpack.c.l.b16 %v3473
    %v3858 = vunpack.c.l.b16 %v3474
    %v3859 = vunpack.c.l.b16 %v3475
    %v3860 = vunpack.c.l.b16 %v3476
    %v3861 = vunpack.c.l.b16 %v3477
    %v3862 = vunpack.c.l.b16 %v3478
    %v3863 = vunpack.c.l.b16 %v3479
    %v3864 = vunpack.c.l.b16 %v3480
    %v3865 = vunpack.c.l.b16 %v3481
    %v3866 = vunpack.c.l.b16 %v3482
    %v3867 = vunpack.c.l.b16 %v3483
    %v3868 = vunpack.c.l.b16 %v3484
    %v3869 = vunpack.c.l.b16 %v3485
    %v3870 = vunpack.c.l.b16 %v3486
    %v3871 = vunpack.c.l.b16 %v3487
    %v3872 = vunpack.c.l.b16 %v3488
    %v3873 = vunpack.c.l.b16 %v3489
    %v3874 = vunpack.c.l.b16 %v3490
    %v3875 = vunpack.c.l.b16 %v3491
    %v3876 = vunpack.c.l.b16 %v3492
    %v3877 = vunpack.c.l.b16 %v3493
    %v3878 = vunpack.c.l.b16 %v3494
    %v3879 = vunpack.c.l.b16 %v3495
    %v3880 = vunpack.c.l.b16 %v3496
    %v3881 = vunpack.c.l.b16 %v3497
    %v3882 = vunpack.c.l.b16 %v3498
    %v3883 = vunpack.c.l.b16 %v3499
    %v3884 = vunpack.c.l.b16 %v3500
    %v3885 = vunpack.c.l.b16 %v3501
    %v3886 = vunpack.c.l.b16 %v3502
    %v3887 = vunpack.c.l.b16 %v3503
    %v3888 = vunpack.c.l.b16 %v3504
    %v3889 = vunpack.c.l.b16 %v3505
    %v3890 = vunpack.c.l.b16 %v3506
    %v3891 = vunpack.c.l.b16 %v3507
    %v3892 = vunpack.c.l.b16 %v3508
    %v3893 = vunpack.c.l.b16 %v3509
    %v3894 = vunpack.c.l.b16 %v3510
    %v3895 = vunpack.c.l.b16 %v3511
    %v3896 = vunpack.c.l.b16 %v3512
    %v3897 = vunpack.c.l.b16 %v3513
    %v3898 = vunpack.c.l.b16 %v3514
    %v3899 = vunpack.c.l.b16 %v3515
    %v3900 = vunpack.c.l.b16 %v3516
    %v3901 = vunpack.c.l.b16 %v3517
    %v3902 = vunpack.c.l.b16 %v3518
    %v3903 = vunpack.c.l.b16 %v3519
    %v3904 = vunpack.c.l.b16 %v3520
    %v3905 = vunpack.c.l.b16 %v3521
    %v3906 = vunpack.c.l.b16 %v3522
    %v3907 = vunpack.c.l.b16 %v3523
    %v3908 = vunpack.c.l.b16 %v3524
    %v3909 = vunpack.c.l.b16 %v3525
    %v3910 = vunpack.c.l.b16 %v3526
    %v3911 = vunpack.c.l.b16 %v3527
    %v3912 = vunpack.c.l.b16 %v3528
    %v3913 = vunpack.c.l.b16 %v3529
    %v3914 = vunpack.c.l.b16 %v3530
    %v3915 = vunpack.c.l.b16 %v3531
    %v3916 = vunpack.c.l.b16 %v3532
    %v3917 = vunpack.c.l.b16 %v3533
    %v3918 = vunpack.c.l.b16 %v3534
    %v3919 = vunpack.c.l.b16 %v3535
    %v3920 = vunpack.c.l.b16 %v3536
    %v3921 = vunpack.c.l.b16 %v3537
    %v3922 = vunpack.c.l.b16 %v3538
    %v3923 = vunpack.c.l.b16 %v3539
    %v3924 = vunpack.c.l.b16 %v3540
    %v3925 = vunpack.c.l.b16 %v3541
    %v3926 = vunpack.c.l.b16 %v3542
    %v3927 = vunpack.c.l.b16 %v3543
    %v3928 = vunpack.c.l.b16 %v3544
    %v3929 = vunpack.c.l.b16 %v3545
    %v3930 = vunpack.c.l.b16 %v3546
    %v3931 = vunpack.c.l.b16 %v3547
    %v3932 = vunpack.c.l.b16 %v3548
    %v3933 = vunpack.c.l.b16 %v3549
    %v3934 = vunpack.c.l.b16 %v3550
    %v3935 = vunpack.c.l.b16 %v3551
    %v3936 = vunpack.c.l.b16 %v3552
    %v3937 = vunpack.c.l.b16 %v3553
    %v3938 = vunpack.c.l.b16 %v3554
    %v3939 = vunpack.c.l.b16 %v3555
    %v3940 = vunpack.c.l.b16 %v3556
    %v3941 = vunpack.c.l.b16 %v3557
    %v3942 = vpack.c.b16 %v3751, %v3750
    %v3943 = vpack.c.b16 %v3753, %v3752
    %v3944 = vpack.c.b16 %v3755, %v3754
    %v3945 = vpack.c.b16 %v3757, %v3756
    %v3946 = vpack.c.b16 %v3759, %v3758
    %v3947 = vpack.c.b16 %v3761, %v3760
    %v3948 = vpack.c.b16 %v3763, %v3762
    %v3949 = vpack.c.b16 %v3765, %v3764
    %v3950 = vpack.c.b16 %v3767, %v3766
    %v3951 = vpack.c.b16 %v3769, %v3768
    %v3952 = vpack.c.b16 %v3771, %v3770
    %v3953 = vpack.c.b16 %v3773, %v3772
    %v3954 = vpack.c.b16 %v3775, %v3774
    %v3955 = vpack.c.b16 %v3777, %v3776
    %v3956 = vpack.c.b16 %v3779, %v3778
    %v3957 = vpack.c.b16 %v3781, %v3780
    %v3958 = vpack.c.b16 %v3783, %v3782
    %v3959 = vpack.c.b16 %v3785, %v3784
    %v3960 = vpack.c.b16 %v3787, %v3786
    %v3961 = vpack.c.b16 %v3789, %v3788
    %v3962 = vpack.c.b16 %v3791, %v3790
    %v3963 = vpack.c.b16 %v3793, %v3792
    %v3964 = vpack.c.b16 %v3795, %v3794
    %v3965 = vpack.c.b16 %v3797, %v3796
    %v3966 = vpack.c.b16 %v3799, %v3798
    %v3967 = vpack.c.b16 %v3801, %v3800
    %v3968 = vpack.c.b16 %v3803, %v3802
    %v3969 = vpack.c.b16 %v3805, %v3804
    %v3970 = vpack.c.b16 %v3807, %v3806
    %v3971 = vpack.c.b16 %v3809, %v3808
    %v3972 = vpack.c.b16 %v3811, %v3810
    %v3973 = vpack.c.b16 %v3813, %v3812
    %v3974 = vpack.c.b16 %v3815, %v3814
    %v3975 = vpack.c.b16 %v3817, %v3816
    %v3976 = vpack.c.b16 %v3819, %v3818
    %v3977 = vpack.c.b16 %v3821, %v3820
    %v3978 = vpack.c.b16 %v3823, %v3822
    %v3979 = vpack.c.b16 %v3825, %v3824
    %v3980 = vpack.c.b16 %v3827, %v3826
    %v3981 = vpack.c.b16 %v3829, %v3828
    %v3982 = vpack.c.b16 %v3831, %v3830
    %v3983 = vpack.c.b16 %v3833, %v3832
    %v3984 = vpack.c.b16 %v3835, %v3834
    %v3985 = vpack.c.b16 %v3837, %v3836
    %v3986 = vpack.c.b16 %v3839, %v3838
    %v3987 = vpack.c.b16 %v3841, %v3840
    %v3988 = vpack.c.b16 %v3843, %v3842
    %v3989 = vpack.c.b16 %v3845, %v3844
    %v3990 = vpack.c.b16 %v3847, %v3846
    %v3991 = vpack.c.b16 %v3849, %v3848
    %v3992 = vpack.c.b16 %v3851, %v3850
    %v3993 = vpack.c.b16 %v3853, %v3852
    %v3994 = vpack.c.b16 %v3855, %v3854
    %v3995 = vpack.c.b16 %v3857, %v3856
    %v3996 = vpack.c.b16 %v3859, %v3858
    %v3997 = vpack.c.b16 %v3861, %v3860
    %v3998 = vpack.c.b16 %v3863, %v3862
    %v3999 = vpack.c.b16 %v3865, %v3864
    %v4000 = vpack.c.b16 %v3867, %v3866
    %v4001 = vpack.c.b16 %v3869, %v3868
    %v4002 = vpack.c.b16 %v3871, %v3870
    %v4003 = vpack.c.b16 %v3873, %v3872
    %v4004 = vpack.c.b16 %v3875, %v3874
    %v4005 = vpack.c.b16 %v3877, %v3876
    %v4006 = vpack.c.b16 %v3879, %v3878
    %v4007 = vpack.c.b16 %v3881, %v3880
    %v4008 = vpack.c.b16 %v3883, %v3882
    %v4009 = vpack.c.b16 %v3885, %v3884
    %v4010 = vpack.c.b16 %v3887, %v3886
    %v4011 = vpack.c.b16 %v3889, %v3888
    %v4012 = vpack.c.b16 %v3891, %v3890
    %v4013 = vpack.c.b16 %v3893, %v3892
    %v4014 = vpack.c.b16 %v3895, %v3894
    %v4015 = vpack.c.b16 %v3897, %v3896
    %v4016 = vpack.c.b16 %v3899, %v3898
    %v4017 = vpack.c.b16 %v3901, %v3900
    %v4018 = vpack.c.b16 %v3903, %v3902
    %v4019 = vpack.c.b16 %v3905, %v3904
    %v4020 = vpack.c.b16 %v3907, %v3906
    %v4021 = vpack.c.b16 %v3909, %v3908
    %v4022 = vpack.c.b16 %v3911, %v3910
    %v4023 = vpack.c.b16 %v3913, %v3912
    %v4024 = vpack.c.b16 %v3915, %v3914
    %v4025 = vpack.c.b16 %v3917, %v3916
    %v4026 = vpack.c.b16 %v3919, %v3918
    %v4027 = vpack.c.b16 %v3921, %v3920
    %v4028 = vpack.c.b16 %v3923, %v3922
    %v4029 = vpack.c.b16 %v3925, %v3924
    %v4030 = vpack.c.b16 %v3927, %v3926
    %v4031 = vpack.c.b16 %v3929, %v3928
    %v4032 = vpack.c.b16 %v3931, %v3930
    %v4033 = vpack.c.b16 %v3933, %v3932
    %v4034 = vpack.c.b16 %v3935, %v3934
    %v4035 = vpack.c.b16 %v3937, %v3936
    %v4036 = vpack.c.b16 %v3939, %v3938
    %v4037 = vpack.c.b16 %v3941, %v3940
    %4134 = vmatprep.subr.bf16.mxu0 0
    %4135 = vmatpush1.bf16.msra.mxu0 %v3942
    %4136 = vmatprep.subr.bf16.mxu0 0
    %4137 = vmatpush1.bf16.msra.mxu0 %v3943
    %4138 = vmatprep.subr.bf16.mxu0 0
    %4139 = vmatpush1.bf16.msra.mxu0 %v3944
    %4140 = vmatprep.subr.bf16.mxu0 0
    %4141 = vmatpush1.bf16.msra.mxu0 %v3945
    %4142 = vmatprep.subr.bf16.mxu0 0
    %4143 = vmatpush1.bf16.msra.mxu0 %v3946
    %4144 = vmatprep.subr.bf16.mxu0 0
    %4145 = vmatpush1.bf16.msra.mxu0 %v3947
    %4146 = vmatprep.subr.bf16.mxu0 0
    %4147 = vmatpush1.bf16.msra.mxu0 %v3948
    %4148 = vmatprep.subr.bf16.mxu0 0
    %4149 = vmatpush1.bf16.msra.mxu0 %v3949
    %4150 = vmatprep.subr.bf16.mxu0 0
    %4151 = vmatpush1.bf16.msra.mxu0 %v3950
    %4152 = vmatprep.subr.bf16.mxu0 0
    %4153 = vmatpush1.bf16.msra.mxu0 %v3951
    %4154 = vmatprep.subr.bf16.mxu0 0
    %4155 = vmatpush1.bf16.msra.mxu0 %v3952
    %4156 = vmatprep.subr.bf16.mxu0 0
    %4157 = vmatpush1.bf16.msra.mxu0 %v3953
    %4158 = vmatprep.subr.bf16.mxu0 0
    %4159 = vmatpush1.bf16.msra.mxu0 %v3954
    %4160 = vmatprep.subr.bf16.mxu0 0
    %4161 = vmatpush1.bf16.msra.mxu0 %v3955
    %4162 = vmatprep.subr.bf16.mxu0 0
    %4163 = vmatpush1.bf16.msra.mxu0 %v3956
    %4164 = vmatprep.subr.bf16.mxu0 0
    %4165 = vmatpush1.bf16.msra.mxu0 %v3957
    %4166 = vmatprep.mubr.bf16.mxu0 %v3343
    %4167 = vmatmul.mubr.bf16.gmra.mrb[0].mxu0 %v3342
    %v4168 = vpop.f32.mrb[0].mxu0
    %v4169 = vadd.f32 0.0, %v4168
    %v4170 = vpop.f32.mrb[0].mxu0
    %v4171 = vpop.f32.mrb[0].mxu0
    %v4172 = vadd.f32 0.0, %v4171
    %v4173 = vpop.f32.mrb[0].mxu0
    %4174 = vmatprep.mubr.bf16.mxu0 %v3355
    %4175 = vmatmul.mubr.bf16.gmra.mrb[0].mxu0 %v3354
    %v4176 = vpop.f32.mrb[0].mxu0
    %v4177 = vadd.f32 0.0, %v4176
    %v4178 = vpop.f32.mrb[0].mxu0
    %v4179 = vpop.f32.mrb[0].mxu0
    %v4180 = vadd.f32 0.0, %v4179
    %v4181 = vpop.f32.mrb[0].mxu0
    %4182 = vdwg.mxu0
    %4183 = vmatprep.subr.bf16.mxu0 0
    %4184 = vmatpush1.bf16.msra.mxu0 %v3958
    %4185 = vmatprep.subr.bf16.mxu0 0
    %4186 = vmatpush1.bf16.msra.mxu0 %v3959
    %4187 = vmatprep.subr.bf16.mxu0 0
    %4188 = vmatpush1.bf16.msra.mxu0 %v3960
    %4189 = vmatprep.subr.bf16.mxu0 0
    %4190 = vmatpush1.bf16.msra.mxu0 %v3961
    %4191 = vmatprep.subr.bf16.mxu0 0
    %4192 = vmatpush1.bf16.msra.mxu0 %v3962
    %4193 = vmatprep.subr.bf16.mxu0 0
    %4194 = vmatpush1.bf16.msra.mxu0 %v3963
    %4195 = vmatprep.subr.bf16.mxu0 0
    %4196 = vmatpush1.bf16.msra.mxu0 %v3964
    %4197 = vmatprep.subr.bf16.mxu0 0
    %4198 = vmatpush1.bf16.msra.mxu0 %v3965
    %4199 = vmatprep.subr.bf16.mxu0 0
    %4200 = vmatpush1.bf16.msra.mxu0 %v3966
    %4201 = vmatprep.subr.bf16.mxu0 0
    %4202 = vmatpush1.bf16.msra.mxu0 %v3967
    %4203 = vmatprep.subr.bf16.mxu0 0
    %4204 = vmatpush1.bf16.msra.mxu0 %v3968
    %4205 = vmatprep.subr.bf16.mxu0 0
    %4206 = vmatpush1.bf16.msra.mxu0 %v3969
    %4207 = vmatprep.subr.bf16.mxu0 0
    %4208 = vmatpush1.bf16.msra.mxu0 %v3970
    %4209 = vmatprep.subr.bf16.mxu0 0
    %4210 = vmatpush1.bf16.msra.mxu0 %v3971
    %4211 = vmatprep.subr.bf16.mxu0 0
    %4212 = vmatpush1.bf16.msra.mxu0 %v3972
    %4213 = vmatprep.subr.bf16.mxu0 0
    %4214 = vmatpush1.bf16.msra.mxu0 %v3973
    %4215 = vmatprep.mubr.bf16.mxu0 %v3345
    %4216 = vmatmul.mubr.bf16.gmra.mrb[0].mxu0 %v3344
    %v4217 = vpop.f32.mrb[0].mxu0
    %v4218 = vadd.f32 %v4169, %v4217
    %v4219 = vpop.f32.mrb[0].mxu0
    %v4220 = vpop.f32.mrb[0].mxu0
    %v4221 = vadd.f32 %v4172, %v4220
    %v4222 = vpop.f32.mrb[0].mxu0
    %4223 = vmatprep.mubr.bf16.mxu0 %v3357
    %4224 = vmatmul.mubr.bf16.gmra.mrb[0].mxu0 %v3356
    %v4225 = vpop.f32.mrb[0].mxu0
    %v4226 = vadd.f32 %v4177, %v4225
    %v4227 = vpop.f32.mrb[0].mxu0
    %v4228 = vpop.f32.mrb[0].mxu0
    %v4229 = vadd.f32 %v4180, %v4228
    %v4230 = vpop.f32.mrb[0].mxu0
    %4231 = vdwg.mxu0
    %4232 = vmatprep.subr.bf16.mxu0 0
    %4233 = vmatpush1.bf16.msra.mxu0 %v3974
    %4234 = vmatprep.subr.bf16.mxu0 0
    %4235 = vmatpush1.bf16.msra.mxu0 %v3975
    %4236 = vmatprep.subr.bf16.mxu0 0
    %4237 = vmatpush1.bf16.msra.mxu0 %v3976
    %4238 = vmatprep.subr.bf16.mxu0 0
    %4239 = vmatpush1.bf16.msra.mxu0 %v3977
    %4240 = vmatprep.subr.bf16.mxu0 0
    %4241 = vmatpush1.bf16.msra.mxu0 %v3978
    %4242 = vmatprep.subr.bf16.mxu0 0
    %4243 = vmatpush1.bf16.msra.mxu0 %v3979
    %4244 = vmatprep.subr.bf16.mxu0 0
    %4245 = vmatpush1.bf16.msra.mxu0 %v3980
    %4246 = vmatprep.subr.bf16.mxu0 0
    %4247 = vmatpush1.bf16.msra.mxu0 %v3981
    %4248 = vmatprep.subr.bf16.mxu0 0
    %4249 = vmatpush1.bf16.msra.mxu0 %v3982
    %4250 = vmatprep.subr.bf16.mxu0 0
    %4251 = vmatpush1.bf16.msra.mxu0 %v3983
    %4252 = vmatprep.subr.bf16.mxu0 0
    %4253 = vmatpush1.bf16.msra.mxu0 %v3984
    %4254 = vmatprep.subr.bf16.mxu0 0
    %4255 = vmatpush1.bf16.msra.mxu0 %v3985
    %4256 = vmatprep.subr.bf16.mxu0 0
    %4257 = vmatpush1.bf16.msra.mxu0 %v3986
    %4258 = vmatprep.subr.bf16.mxu0 0
    %4259 = vmatpush1.bf16.msra.mxu0 %v3987
    %4260 = vmatprep.subr.bf16.mxu0 0
    %4261 = vmatpush1.bf16.msra.mxu0 %v3988
    %4262 = vmatprep.subr.bf16.mxu0 0
    %4263 = vmatpush1.bf16.msra.mxu0 %v3989
    %4264 = vmatprep.mubr.bf16.mxu0 %v3347
    %4265 = vmatmul.mubr.bf16.gmra.mrb[0].mxu0 %v3346
    %v4266 = vpop.f32.mrb[0].mxu0
    %v4267 = vadd.f32 %v4218, %v4266
    %v4268 = vpop.f32.mrb[0].mxu0
    %v4269 = vpop.f32.mrb[0].mxu0
    %v4270 = vadd.f32 %v4221, %v4269
    %v4271 = vpop.f32.mrb[0].mxu0
    %4272 = vmatprep.mubr.bf16.mxu0 %v3359
    %4273 = vmatmul.mubr.bf16.gmra.mrb[0].mxu0 %v3358
    %v4274 = vpop.f32.mrb[0].mxu0
    %v4275 = vadd.f32 %v4226, %v4274
    %v4276 = vpop.f32.mrb[0].mxu0
    %v4277 = vpop.f32.mrb[0].mxu0
    %v4278 = vadd.f32 %v4229, %v4277
    %v4279 = vpop.f32.mrb[0].mxu0
    %4280 = vdwg.mxu0
    %4281 = vmatprep.subr.bf16.mxu0 0
    %4282 = vmatpush1.bf16.msra.mxu0 %v3990
    %4283 = vmatprep.subr.bf16.mxu0 0
    %4284 = vmatpush1.bf16.msra.mxu0 %v3991
    %4285 = vmatprep.subr.bf16.mxu0 0
    %4286 = vmatpush1.bf16.msra.mxu0 %v3992
    %4287 = vmatprep.subr.bf16.mxu0 0
    %4288 = vmatpush1.bf16.msra.mxu0 %v3993
    %4289 = vmatprep.subr.bf16.mxu0 0
    %4290 = vmatpush1.bf16.msra.mxu0 %v3994
    %4291 = vmatprep.subr.bf16.mxu0 0
    %4292 = vmatpush1.bf16.msra.mxu0 %v3995
    %4293 = vmatprep.subr.bf16.mxu0 0
    %4294 = vmatpush1.bf16.msra.mxu0 %v3996
    %4295 = vmatprep.subr.bf16.mxu0 0
    %4296 = vmatpush1.bf16.msra.mxu0 %v3997
    %4297 = vmatprep.subr.bf16.mxu0 0
    %4298 = vmatpush1.bf16.msra.mxu0 %v3998
    %4299 = vmatprep.subr.bf16.mxu0 0
    %4300 = vmatpush1.bf16.msra.mxu0 %v3999
    %4301 = vmatprep.subr.bf16.mxu0 0
    %4302 = vmatpush1.bf16.msra.mxu0 %v4000
    %4303 = vmatprep.subr.bf16.mxu0 0
    %4304 = vmatpush1.bf16.msra.mxu0 %v4001
    %4305 = vmatprep.subr.bf16.mxu0 0
    %4306 = vmatpush1.bf16.msra.mxu0 %v4002
    %4307 = vmatprep.subr.bf16.mxu0 0
    %4308 = vmatpush1.bf16.msra.mxu0 %v4003
    %4309 = vmatprep.subr.bf16.mxu0 0
    %4310 = vmatpush1.bf16.msra.mxu0 %v4004
    %4311 = vmatprep.subr.bf16.mxu0 0
    %4312 = vmatpush1.bf16.msra.mxu0 %v4005
    %4313 = vmatprep.mubr.bf16.mxu0 %v3349
    %4314 = vmatmul.mubr.bf16.gmra.mrb[0].mxu0 %v3348
    %v4315 = vpop.f32.mrb[0].mxu0
    %v4316 = vadd.f32 %v4267, %v4315
    %v4317 = vpop.f32.mrb[0].mxu0
    %v4318 = vpop.f32.mrb[0].mxu0
    %v4319 = vadd.f32 %v4270, %v4318
    %v4320 = vpop.f32.mrb[0].mxu0
    %4321 = vmatprep.mubr.bf16.mxu0 %v3361
    %4322 = vmatmul.mubr.bf16.gmra.mrb[0].mxu0 %v3360
    %v4323 = vpop.f32.mrb[0].mxu0
    %v4324 = vadd.f32 %v4275, %v4323
    %v4325 = vpop.f32.mrb[0].mxu0
    %v4326 = vpop.f32.mrb[0].mxu0
    %v4327 = vadd.f32 %v4278, %v4326
    %v4328 = vpop.f32.mrb[0].mxu0
    %4329 = vdwg.mxu0
    %4330 = vmatprep.subr.bf16.mxu0 0
    %4331 = vmatpush1.bf16.msra.mxu0 %v4006
    %4332 = vmatprep.subr.bf16.mxu0 0
    %4333 = vmatpush1.bf16.msra.mxu0 %v4007
    %4334 = vmatprep.subr.bf16.mxu0 0
    %4335 = vmatpush1.bf16.msra.mxu0 %v4008
    %4336 = vmatprep.subr.bf16.mxu0 0
    %4337 = vmatpush1.bf16.msra.mxu0 %v4009
    %4338 = vmatprep.subr.bf16.mxu0 0
    %4339 = vmatpush1.bf16.msra.mxu0 %v4010
    %4340 = vmatprep.subr.bf16.mxu0 0
    %4341 = vmatpush1.bf16.msra.mxu0 %v4011
    %4342 = vmatprep.subr.bf16.mxu0 0
    %4343 = vmatpush1.bf16.msra.mxu0 %v4012
    %4344 = vmatprep.subr.bf16.mxu0 0
    %4345 = vmatpush1.bf16.msra.mxu0 %v4013
    %4346 = vmatprep.subr.bf16.mxu0 0
    %4347 = vmatpush1.bf16.msra.mxu0 %v4014
    %4348 = vmatprep.subr.bf16.mxu0 0
    %4349 = vmatpush1.bf16.msra.mxu0 %v4015
    %4350 = vmatprep.subr.bf16.mxu0 0
    %4351 = vmatpush1.bf16.msra.mxu0 %v4016
    %4352 = vmatprep.subr.bf16.mxu0 0
    %4353 = vmatpush1.bf16.msra.mxu0 %v4017
    %4354 = vmatprep.subr.bf16.mxu0 0
    %4355 = vmatpush1.bf16.msra.mxu0 %v4018
    %4356 = vmatprep.subr.bf16.mxu0 0
    %4357 = vmatpush1.bf16.msra.mxu0 %v4019
    %4358 = vmatprep.subr.bf16.mxu0 0
    %4359 = vmatpush1.bf16.msra.mxu0 %v4020
    %4360 = vmatprep.subr.bf16.mxu0 0
    %4361 = vmatpush1.bf16.msra.mxu0 %v4021
    %4362 = vmatprep.mubr.bf16.mxu0 %v3351
    %4363 = vmatmul.mubr.bf16.gmra.mrb[0].mxu0 %v3350
    %v4364 = vpop.f32.mrb[0].mxu0
    %v4365 = vadd.f32 %v4316, %v4364
    %v4366 = vpop.f32.mrb[0].mxu0
    %v4367 = vpop.f32.mrb[0].mxu0
    %v4368 = vadd.f32 %v4319, %v4367
    %v4369 = vpop.f32.mrb[0].mxu0
    %4370 = vmatprep.mubr.bf16.mxu0 %v3363
    %4371 = vmatmul.mubr.bf16.gmra.mrb[0].mxu0 %v3362
    %v4372 = vpop.f32.mrb[0].mxu0
    %v4373 = vadd.f32 %v4324, %v4372
    %v4374 = vpop.f32.mrb[0].mxu0
    %v4375 = vpop.f32.mrb[0].mxu0
    %v4376 = vadd.f32 %v4327, %v4375
    %v4377 = vpop.f32.mrb[0].mxu0
    %4378 = vdwg.mxu0
    %4379 = vmatprep.subr.bf16.mxu0 0
    %4380 = vmatpush1.bf16.msra.mxu0 %v4022
    %4381 = vmatprep.subr.bf16.mxu0 0
    %4382 = vmatpush1.bf16.msra.mxu0 %v4023
    %4383 = vmatprep.subr.bf16.mxu0 0
    %4384 = vmatpush1.bf16.msra.mxu0 %v4024
    %4385 = vmatprep.subr.bf16.mxu0 0
    %4386 = vmatpush1.bf16.msra.mxu0 %v4025
    %4387 = vmatprep.subr.bf16.mxu0 0
    %4388 = vmatpush1.bf16.msra.mxu0 %v4026
    %4389 = vmatprep.subr.bf16.mxu0 0
    %4390 = vmatpush1.bf16.msra.mxu0 %v4027
    %4391 = vmatprep.subr.bf16.mxu0 0
    %4392 = vmatpush1.bf16.msra.mxu0 %v4028
    %4393 = vmatprep.subr.bf16.mxu0 0
    %4394 = vmatpush1.bf16.msra.mxu0 %v4029
    %4395 = vmatprep.subr.bf16.mxu0 0
    %4396 = vmatpush1.bf16.msra.mxu0 %v4030
    %4397 = vmatprep.subr.bf16.mxu0 0
    %4398 = vmatpush1.bf16.msra.mxu0 %v4031
    %4399 = vmatprep.subr.bf16.mxu0 0
    %4400 = vmatpush1.bf16.msra.mxu0 %v4032
    %4401 = vmatprep.subr.bf16.mxu0 0
    %4402 = vmatpush1.bf16.msra.mxu0 %v4033
    %4403 = vmatprep.subr.bf16.mxu0 0
    %4404 = vmatpush1.bf16.msra.mxu0 %v4034
    %4405 = vmatprep.subr.bf16.mxu0 0
    %4406 = vmatpush1.bf16.msra.mxu0 %v4035
    %4407 = vmatprep.subr.bf16.mxu0 0
    %4408 = vmatpush1.bf16.msra.mxu0 %v4036
    %4409 = vmatprep.subr.bf16.mxu0 0
    %4410 = vmatpush1.bf16.msra.mxu0 %v4037
    %4411 = vmatprep.mubr.bf16.mxu0 %v3353
    %4412 = vmatmul.mubr.bf16.gmra.mrb[0].mxu0 %v3352
    %v4413 = vpop.f32.mrb[0].mxu0
    %v4414 = vadd.f32 %v4365, %v4413
    %v4415 = vpop.f32.mrb[0].mxu0
    %v4416 = vpop.f32.mrb[0].mxu0
    %v4417 = vadd.f32 %v4368, %v4416
    %v4418 = vpop.f32.mrb[0].mxu0
    %4419 = vmatprep.mubr.bf16.mxu0 %v3365
    %4420 = vmatmul.mubr.bf16.gmra.mrb[0].mxu0 %v3364
    %v4421 = vpop.f32.mrb[0].mxu0
    %v4422 = vadd.f32 %v4373, %v4421
    %v4423 = vpop.f32.mrb[0].mxu0
    %v4424 = vpop.f32.mrb[0].mxu0
    %v4425 = vadd.f32 %v4376, %v4424
    %v4426 = vpop.f32.mrb[0].mxu0
    %4427 = vdwg.mxu0
    %v4428 = vld [vmem:[%s5] sm:$0x1]
    %v4429 = vld [vmem:[%s6] sm:$0x1]
    %v4430 = vadd.f32 %v4414, %v4417
    %v4431 = vadd.f32 %v4430, %v4422
    %v4432 = vadd.f32 %v4431, %v4425
    %v4433 = vrot.slane %v4432, 4
    %v4434 = vadd.f32 %v4432, %v4433
    %v4435 = vrot.slane %v4434, 2
    %v4436 = vadd.f32 %v4434, %v4435
    %v4437 = vrot.slane %v4436, 1
    %v4438 = vadd.f32 %v4436, %v4437
    %v4439 = vmul.f32 %v4438, 0.03125
    %v4440 = vmul.f32 %v4414, %v4414
    %v4441 = vmul.f32 %v4417, %v4417
    %v4442 = vmul.f32 %v4422, %v4422
    %v4443 = vmul.f32 %v4425, %v4425
    %v4444 = vadd.f32 %v4440, %v4441
    %v4445 = vadd.f32 %v4444, %v4442
    %v4446 = vadd.f32 %v4445, %v4443
    %v4447 = vrot.slane %v4446, 4
    %v4448 = vadd.f32 %v4446, %v4447
    %v4449 = vrot.slane %v4448, 2
    %v4450 = vadd.f32 %v4448, %v4449
    %v4451 = vrot.slane %v4450, 1
    %v4452 = vadd.f32 %v4450, %v4451
    %v4453 = vmul.f32 %v4452, 0.03125
    %v4454 = vmul.f32 %v4439, %v4439
    %v4455 = vsub.f32 %v4453, %v4454
    %v4456 = vadd.f32 %v4455, 1e-05
    %v4457 = vrsqrt.pop %v4456
    %v4458 = vmul.f32 %v4428, %v4457
    %v4459 = vmul.f32 %v4439, %v4458
    %v4460 = vsub.f32 %v4429, %v4459
    %v4462 = vlaneseq
    %v4463 = vshrl.u32 %v4462, 7
    %v4464 = vsub.s32 0, %v4463
    %v4465 = vrot.slane %v4458, %v4464
    %v4467 = vmul.f32 %v4414, %v4465
    %v4468 = vmul.f32 %v4417, %v4465
    %v4469 = vmul.f32 %v4422, %v4465
    %v4470 = vmul.f32 %v4425, %v4465
    %v4472 = vlaneseq
    %v4473 = vshrl.u32 %v4472, 7
    %v4474 = vsub.s32 0, %v4473
    %v4475 = vrot.slane %v4460, %v4474
    %v4477 = vadd.f32 %v4467, %v4475
    %v4478 = vadd.f32 %v4468, %v4475
    %v4479 = vadd.f32 %v4469, %v4475
    %v4480 = vadd.f32 %v4470, %v4475
    %v4481 = vmax.f32 %v4477, 0.0
    %v4482 = vmax.f32 %v4478, 0.0
    %v4483 = vmax.f32 %v4479, 0.0
    %v4484 = vmax.f32 %v4480, 0.0
    %v4485 = vpack.c.bf16 %v4482, %v4481
    %v4486 = vpack.c.bf16 %v4484, %v4483
    %4487 = vst [vmem:[#allocation4] sm:$0x7] 0
    %4488 = vst [vmem:[#allocation4 + $0x4] sm:$0x7] 0
    %4489 = vst [vmem:[#allocation4 + $0x8] sm:$0x7] 0
    %4490 = vst [vmem:[#allocation4 + $0xc] sm:$0x7] 0
    %4491 = vst [vmem:[#allocation4 + $0x10] sm:$0x7] 0
    %4492 = vst [vmem:[#allocation4 + $0x14] sm:$0x7] 0
    %4493 = vst [vmem:[#allocation4 + $0x18] sm:$0x7] 0
    %4494 = vst [vmem:[#allocation4 + $0x1c] sm:$0x7] 0
    %4495 = vst [vmem:[#allocation4 + $0x20] sm:$0x7] 0
    %4496 = vst [vmem:[#allocation4 + $0x24] sm:$0x7] 0
    %4497 = vst [vmem:[#allocation4 + $0x28] sm:$0x7] 0
    %4498 = vst [vmem:[#allocation4 + $0x2c] sm:$0x7] 0
    %v4500 = vunpack.c.l.b16 %v4485
    %v4501 = vpack.c.b16 %v4500, %v4500
    %v4503 = vshrl.u32 %v4501, 16
    %v4505 = vrot.slane %v4503, 7
    %v4506 = vshll.u32 %v4501, 16
    %v4508 = vor.u32 %v4505, %v4506
    %s4510 = scalar_lea.vmem [#allocation4], 4
    %v4511 = vld [vmem:[%s4510] sm:$0x7]
    %v4512 = vsel %vm2242, %v4508, %v4511
    %4513 = vst [vmem:[%s4510] sm:$0x7] %v4512
    %v4514 = vrot.slane %v4503, 5
    %v4515 = vrot.slane %v4506, 6
    %v4516 = vor.u32 %v4514, %v4515
    %v4517 = vrot.slane %v4516, 4
    %s4519 = scalar_lea.vmem [#allocation4], 8
    %v4520 = vld [vmem:[%s4519] sm:$0x7]
    %v4521 = vsel %vm2242, %v4517, %v4520
    %4522 = vst [vmem:[%s4519] sm:$0x7] %v4521
    %v4523 = vunpack.c.h.b16 %v4485
    %v4524 = vpack.c.b16 %v4523, %v4523
    %v4526 = vshrl.u32 %v4524, 16
    %v4528 = vrot.slane %v4526, 7
    %v4529 = vshll.u32 %v4524, 16
    %v4531 = vor.u32 %v4528, %v4529
    %s4533 = scalar_lea.vmem [#allocation4], 12
    %v4534 = vld [vmem:[%s4533] sm:$0x7]
    %v4535 = vsel %vm2242, %v4531, %v4534
    %4536 = vst [vmem:[%s4533] sm:$0x7] %v4535
    %v4537 = vrot.slane %v4526, 5
    %v4538 = vrot.slane %v4529, 6
    %v4539 = vor.u32 %v4537, %v4538
    %v4540 = vrot.slane %v4539, 4
    %s4542 = scalar_lea.vmem [#allocation4], 16
    %v4543 = vld [vmem:[%s4542] sm:$0x7]
    %v4544 = vsel %vm2242, %v4540, %v4543
    %4545 = vst [vmem:[%s4542] sm:$0x7] %v4544
    %v4547 = vunpack.c.l.b16 %v4486
    %v4548 = vpack.c.b16 %v4547, %v4547
    %v4550 = vshrl.u32 %v4548, 16
    %v4552 = vrot.slane %v4550, 7
    %v4553 = vshll.u32 %v4548, 16
    %v4555 = vor.u32 %v4552, %v4553
    %s4557 = scalar_lea.vmem [#allocation4], 28
    %v4558 = vld [vmem:[%s4557] sm:$0x7]
    %v4559 = vsel %vm2242, %v4555, %v4558
    %4560 = vst [vmem:[%s4557] sm:$0x7] %v4559
    %v4561 = vrot.slane %v4550, 5
    %v4562 = vrot.slane %v4553, 6
    %v4563 = vor.u32 %v4561, %v4562
    %v4564 = vrot.slane %v4563, 4
    %s4566 = scalar_lea.vmem [#allocation4], 32
    %v4567 = vld [vmem:[%s4566] sm:$0x7]
    %v4568 = vsel %vm2242, %v4564, %v4567
    %4569 = vst [vmem:[%s4566] sm:$0x7] %v4568
    %v4570 = vunpack.c.h.b16 %v4486
    %v4571 = vpack.c.b16 %v4570, %v4570
    %v4573 = vshrl.u32 %v4571, 16
    %v4575 = vrot.slane %v4573, 7
    %v4576 = vshll.u32 %v4571, 16
    %v4578 = vor.u32 %v4575, %v4576
    %s4580 = scalar_lea.vmem [#allocation4], 36
    %v4581 = vld [vmem:[%s4580] sm:$0x7]
    %v4582 = vsel %vm2242, %v4578, %v4581
    %4583 = vst [vmem:[%s4580] sm:$0x7] %v4582
    %v4584 = vrot.slane %v4573, 5
    %v4585 = vrot.slane %v4576, 6
    %v4586 = vor.u32 %v4584, %v4585
    %v4587 = vrot.slane %v4586, 4
    %s4589 = scalar_lea.vmem [#allocation4], 40
    %v4590 = vld [vmem:[%s4589] sm:$0x7]
    %v4591 = vsel %vm2242, %v4587, %v4590
    %4592 = vst [vmem:[%s4589] sm:$0x7] %v4591
    %v4593 = vld [vmem:[#allocation4] sm:$0x3]
    %4594 = vst [vmem:[#allocation5] sm:$0x3] %v4593
    %v4595 = vld [vmem:[%s4510] sm:$0x3]
    %v4597 = vunpack.c.l.b16 %v4595
    %v4598 = vpack.c.b16 %v4597, %v4597
    %v4599 = vrot.slane %v4598, 6
    %4601 = vst [vmem:[#allocation5] sm:$0xc] %v4599
    %v4602 = vld [vmem:[%s4519] sm:$0x3]
    %v4604 = vunpack.c.l.b16 %v4602
    %v4605 = vpack.c.b16 %v4604, %v4604
    %4607 = vst [vmem:[#allocation5] sm:$0x30] %v4605
    %v4608 = vld [vmem:[%s4533] sm:$0x3]
    %v4610 = vunpack.c.l.b16 %v4608
    %v4611 = vpack.c.b16 %v4610, %v4610
    %v4612 = vrot.slane %v4611, 2
    %4614 = vst [vmem:[#allocation5] sm:$0xc0] %v4612
    %s4615 = scalar_lea.vmem [#allocation4], 24
    %v4616 = vld [vmem:[%s4615] sm:$0x3]
    %4617 = vst [vmem:[#allocation5 + $0x48] sm:$0x3] %v4616
    %v4618 = vld [vmem:[%s4557] sm:$0x3]
    %v4620 = vunpack.c.l.b16 %v4618
    %v4621 = vpack.c.b16 %v4620, %v4620
    %v4622 = vrot.slane %v4621, 6
    %4624 = vst [vmem:[#allocation5 + $0x48] sm:$0xc] %v4622
    %v4625 = vld [vmem:[%s4566] sm:$0x3]
    %v4627 = vunpack.c.l.b16 %v4625
    %v4628 = vpack.c.b16 %v4627, %v4627
    %4630 = vst [vmem:[#allocation5 + $0x48] sm:$0x30] %v4628
    %v4631 = vld [vmem:[%s4580] sm:$0x3]
    %v4633 = vunpack.c.l.b16 %v4631
    %v4634 = vpack.c.b16 %v4633, %v4633
    %v4635 = vrot.slane %v4634, 2
    %4637 = vst [vmem:[#allocation5 + $0x48] sm:$0xc0] %v4635
    %v4638 = vld [vmem:[#allocation4] sm:$0x7]
    %v4640 = vunpack.c.l.b16 %v4638
    %v4641 = vpack.c.b16 %v4640, %v4640
    %v4643 = vshrl.u32 %v4641, 16
    %v4645 = vshll.u32 %v4641, 16
    %v4647 = vrot.slane %v4645, 1
    %v4648 = vor.u32 %v4643, %v4647
    %4650 = vst [vmem:[#allocation5 + $0x8] sm:$0x3] %v4648
    %v4651 = vld [vmem:[%s4510] sm:$0x7]
    %v4653 = vunpack.c.l.b16 %v4651
    %v4654 = vpack.c.b16 %v4653, %v4653
    %v4656 = vshrl.u32 %v4654, 16
    %v4658 = vrot.slane %v4656, 6
    %v4659 = vshll.u32 %v4654, 16
    %v4661 = vrot.slane %v4659, 7
    %v4662 = vor.u32 %v4658, %v4661
    %4664 = vst [vmem:[#allocation5 + $0x8] sm:$0xc] %v4662
    %v4665 = vld [vmem:[%s4519] sm:$0x7]
    %v4667 = vunpack.c.l.b16 %v4665
    %v4668 = vpack.c.b16 %v4667, %v4667
    %v4670 = vshrl.u32 %v4668, 16
    %v4672 = vrot.slane %v4670, 4
    %v4673 = vshll.u32 %v4668, 16
    %v4675 = vrot.slane %v4673, 5
    %v4676 = vor.u32 %v4672, %v4675
    %4678 = vst [vmem:[#allocation5 + $0x8] sm:$0x30] %v4676
    %v4679 = vld [vmem:[%s4533] sm:$0x7]
    %v4681 = vunpack.c.l.b16 %v4679
    %v4682 = vpack.c.b16 %v4681, %v4681
    %v4684 = vshrl.u32 %v4682, 16
    %v4686 = vrot.slane %v4684, 2
    %v4687 = vshll.u32 %v4682, 16
    %v4689 = vrot.slane %v4687, 3
    %v4690 = vor.u32 %v4686, %v4689
    %4692 = vst [vmem:[#allocation5 + $0x8] sm:$0xc0] %v4690
    %v4693 = vld [vmem:[%s4615] sm:$0x7]
    %v4695 = vunpack.c.l.b16 %v4693
    %v4696 = vpack.c.b16 %v4695, %v4695
    %v4698 = vshrl.u32 %v4696, 16
    %v4700 = vshll.u32 %v4696, 16
    %v4702 = vrot.slane %v4700, 1
    %v4703 = vor.u32 %v4698, %v4702
    %4705 = vst [vmem:[#allocation5 + $0x50] sm:$0x3] %v4703
    %v4706 = vld [vmem:[%s4557] sm:$0x7]
    %v4708 = vunpack.c.l.b16 %v4706
    %v4709 = vpack.c.b16 %v4708, %v4708
    %v4711 = vshrl.u32 %v4709, 16
    %v4713 = vrot.slane %v4711, 6
    %v4714 = vshll.u32 %v4709, 16
    %v4716 = vrot.slane %v4714, 7
    %v4717 = vor.u32 %v4713, %v4716
    %4719 = vst [vmem:[#allocation5 + $0x50] sm:$0xc] %v4717
    %v4720 = vld [vmem:[%s4566] sm:$0x7]
    %v4722 = vunpack.c.l.b16 %v4720
    %v4723 = vpack.c.b16 %v4722, %v4722
    %v4725 = vshrl.u32 %v4723, 16
    %v4727 = vrot.slane %v4725, 4
    %v4728 = vshll.u32 %v4723, 16
    %v4730 = vrot.slane %v4728, 5
    %v4731 = vor.u32 %v4727, %v4730
    %4733 = vst [vmem:[#allocation5 + $0x50] sm:$0x30] %v4731
    %v4734 = vld [vmem:[%s4580] sm:$0x7]
    %v4736 = vunpack.c.l.b16 %v4734
    %v4737 = vpack.c.b16 %v4736, %v4736
    %v4739 = vshrl.u32 %v4737, 16
    %v4741 = vrot.slane %v4739, 2
    %v4742 = vshll.u32 %v4737, 16
    %v4744 = vrot.slane %v4742, 3
    %v4745 = vor.u32 %v4741, %v4744
    %4747 = vst [vmem:[#allocation5 + $0x50] sm:$0xc0] %v4745
    %v4748 = vld [vmem:[#allocation4] sm:$0x6]
    %v4750 = vunpack.c.l.b16 %v4748
    %v4751 = vpack.c.b16 %v4750, %v4750
    %v4752 = vrot.slane %v4751, 1
    %4754 = vst [vmem:[#allocation5 + $0x10] sm:$0x3] %v4752
    %v4755 = vld [vmem:[%s4510] sm:$0x6]
    %v4757 = vunpack.c.l.b16 %v4755
    %v4758 = vpack.c.b16 %v4757, %v4757
    %v4759 = vrot.slane %v4758, 7
    %4761 = vst [vmem:[#allocation5 + $0x10] sm:$0xc] %v4759
    %v4762 = vld [vmem:[%s4519] sm:$0x6]
    %v4764 = vunpack.c.l.b16 %v4762
    %v4765 = vpack.c.b16 %v4764, %v4764
    %v4766 = vrot.slane %v4765, 5
    %4768 = vst [vmem:[#allocation5 + $0x10] sm:$0x30] %v4766
    %v4769 = vld [vmem:[%s4533] sm:$0x6]
    %v4771 = vunpack.c.l.b16 %v4769
    %v4772 = vpack.c.b16 %v4771, %v4771
    %v4773 = vrot.slane %v4772, 3
    %4775 = vst [vmem:[#allocation5 + $0x10] sm:$0xc0] %v4773
    %v4776 = vld [vmem:[%s4615] sm:$0x6]
    %v4778 = vunpack.c.l.b16 %v4776
    %v4779 = vpack.c.b16 %v4778, %v4778
    %v4780 = vrot.slane %v4779, 1
    %4782 = vst [vmem:[#allocation5 + $0x58] sm:$0x3] %v4780
    %v4783 = vld [vmem:[%s4557] sm:$0x6]
    %v4785 = vunpack.c.l.b16 %v4783
    %v4786 = vpack.c.b16 %v4785, %v4785
    %v4787 = vrot.slane %v4786, 7
    %4789 = vst [vmem:[#allocation5 + $0x58] sm:$0xc] %v4787
    %v4790 = vld [vmem:[%s4566] sm:$0x6]
    %v4792 = vunpack.c.l.b16 %v4790
    %v4793 = vpack.c.b16 %v4792, %v4792
    %v4794 = vrot.slane %v4793, 5
    %4796 = vst [vmem:[#allocation5 + $0x58] sm:$0x30] %v4794
    %v4797 = vld [vmem:[%s4580] sm:$0x6]
    %v4799 = vunpack.c.l.b16 %v4797
    %v4800 = vpack.c.b16 %v4799, %v4799
    %v4801 = vrot.slane %v4800, 3
    %4803 = vst [vmem:[#allocation5 + $0x58] sm:$0xc0] %v4801
    %v4804 = vld [vmem:[%s4510] sm:$0x3]
    %4805 = vst [vmem:[#allocation5 + $0x18] sm:$0x3] %v4804
    %v4806 = vld [vmem:[%s4519] sm:$0x3]
    %v4808 = vunpack.c.l.b16 %v4806
    %v4809 = vpack.c.b16 %v4808, %v4808
    %v4810 = vrot.slane %v4809, 6
    %4812 = vst [vmem:[#allocation5 + $0x18] sm:$0xc] %v4810
    %v4813 = vld [vmem:[%s4533] sm:$0x3]
    %v4815 = vunpack.c.l.b16 %v4813
    %v4816 = vpack.c.b16 %v4815, %v4815
    %4818 = vst [vmem:[#allocation5 + $0x18] sm:$0x30] %v4816
    %v4819 = vld [vmem:[%s4542] sm:$0x3]
    %v4821 = vunpack.c.l.b16 %v4819
    %v4822 = vpack.c.b16 %v4821, %v4821
    %v4823 = vrot.slane %v4822, 2
    %4825 = vst [vmem:[#allocation5 + $0x18] sm:$0xc0] %v4823
    %v4826 = vld [vmem:[%s4557] sm:$0x3]
    %4827 = vst [vmem:[#allocation5 + $0x60] sm:$0x3] %v4826
    %v4828 = vld [vmem:[%s4566] sm:$0x3]
    %v4830 = vunpack.c.l.b16 %v4828
    %v4831 = vpack.c.b16 %v4830, %v4830
    %v4832 = vrot.slane %v4831, 6
    %4834 = vst [vmem:[#allocation5 + $0x60] sm:$0xc] %v4832
    %v4835 = vld [vmem:[%s4580] sm:$0x3]
    %v4837 = vunpack.c.l.b16 %v4835
    %v4838 = vpack.c.b16 %v4837, %v4837
    %4840 = vst [vmem:[#allocation5 + $0x60] sm:$0x30] %v4838
    %v4841 = vld [vmem:[%s4589] sm:$0x3]
    %v4843 = vunpack.c.l.b16 %v4841
    %v4844 = vpack.c.b16 %v4843, %v4843
    %v4845 = vrot.slane %v4844, 2
    %4847 = vst [vmem:[#allocation5 + $0x60] sm:$0xc0] %v4845
    %v4848 = vld [vmem:[%s4510] sm:$0x7]
    %v4850 = vunpack.c.l.b16 %v4848
    %v4851 = vpack.c.b16 %v4850, %v4850
    %v4853 = vshrl.u32 %v4851, 16
    %v4855 = vshll.u32 %v4851, 16
    %v4857 = vrot.slane %v4855, 1
    %v4858 = vor.u32 %v4853, %v4857
    %4860 = vst [vmem:[#allocation5 + $0x20] sm:$0x3] %v4858
    %v4861 = vld [vmem:[%s4519] sm:$0x7]
    %v4863 = vunpack.c.l.b16 %v4861
    %v4864 = vpack.c.b16 %v4863, %v4863
    %v4866 = vshrl.u32 %v4864, 16
    %v4868 = vrot.slane %v4866, 6
    %v4869 = vshll.u32 %v4864, 16
    %v4871 = vrot.slane %v4869, 7
    %v4872 = vor.u32 %v4868, %v4871
    %4874 = vst [vmem:[#allocation5 + $0x20] sm:$0xc] %v4872
    %v4875 = vld [vmem:[%s4533] sm:$0x7]
    %v4877 = vunpack.c.l.b16 %v4875
    %v4878 = vpack.c.b16 %v4877, %v4877
    %v4880 = vshrl.u32 %v4878, 16
    %v4882 = vrot.slane %v4880, 4
    %v4883 = vshll.u32 %v4878, 16
    %v4885 = vrot.slane %v4883, 5
    %v4886 = vor.u32 %v4882, %v4885
    %4888 = vst [vmem:[#allocation5 + $0x20] sm:$0x30] %v4886
    %v4889 = vld [vmem:[%s4542] sm:$0x7]
    %v4891 = vunpack.c.l.b16 %v4889
    %v4892 = vpack.c.b16 %v4891, %v4891
    %v4894 = vshrl.u32 %v4892, 16
    %v4896 = vrot.slane %v4894, 2
    %v4897 = vshll.u32 %v4892, 16
    %v4899 = vrot.slane %v4897, 3
    %v4900 = vor.u32 %v4896, %v4899
    %4902 = vst [vmem:[#allocation5 + $0x20] sm:$0xc0] %v4900
    %v4903 = vld [vmem:[%s4557] sm:$0x7]
    %v4905 = vunpack.c.l.b16 %v4903
    %v4906 = vpack.c.b16 %v4905, %v4905
    %v4908 = vshrl.u32 %v4906, 16
    %v4910 = vshll.u32 %v4906, 16
    %v4912 = vrot.slane %v4910, 1
    %v4913 = vor.u32 %v4908, %v4912
    %4915 = vst [vmem:[#allocation5 + $0x68] sm:$0x3] %v4913
    %v4916 = vld [vmem:[%s4566] sm:$0x7]
    %v4918 = vunpack.c.l.b16 %v4916
    %v4919 = vpack.c.b16 %v4918, %v4918
    %v4921 = vshrl.u32 %v4919, 16
    %v4923 = vrot.slane %v4921, 6
    %v4924 = vshll.u32 %v4919, 16
    %v4926 = vrot.slane %v4924, 7
    %v4927 = vor.u32 %v4923, %v4926
    %4929 = vst [vmem:[#allocation5 + $0x68] sm:$0xc] %v4927
    %v4930 = vld [vmem:[%s4580] sm:$0x7]
    %v4932 = vunpack.c.l.b16 %v4930
    %v4933 = vpack.c.b16 %v4932, %v4932
    %v4935 = vshrl.u32 %v4933, 16
    %v4937 = vrot.slane %v4935, 4
    %v4938 = vshll.u32 %v4933, 16
    %v4940 = vrot.slane %v4938, 5
    %v4941 = vor.u32 %v4937, %v4940
    %4943 = vst [vmem:[#allocation5 + $0x68] sm:$0x30] %v4941
    %v4944 = vld [vmem:[%s4589] sm:$0x7]
    %v4946 = vunpack.c.l.b16 %v4944
    %v4947 = vpack.c.b16 %v4946, %v4946
    %v4949 = vshrl.u32 %v4947, 16
    %v4951 = vrot.slane %v4949, 2
    %v4952 = vshll.u32 %v4947, 16
    %v4954 = vrot.slane %v4952, 3
    %v4955 = vor.u32 %v4951, %v4954
    %4957 = vst [vmem:[#allocation5 + $0x68] sm:$0xc0] %v4955
    %v4958 = vld [vmem:[%s4510] sm:$0x6]
    %v4960 = vunpack.c.l.b16 %v4958
    %v4961 = vpack.c.b16 %v4960, %v4960
    %v4962 = vrot.slane %v4961, 1
    %4964 = vst [vmem:[#allocation5 + $0x28] sm:$0x3] %v4962
    %v4965 = vld [vmem:[%s4519] sm:$0x6]
    %v4967 = vunpack.c.l.b16 %v4965
    %v4968 = vpack.c.b16 %v4967, %v4967
    %v4969 = vrot.slane %v4968, 7
    %4971 = vst [vmem:[#allocation5 + $0x28] sm:$0xc] %v4969
    %v4972 = vld [vmem:[%s4533] sm:$0x6]
    %v4974 = vunpack.c.l.b16 %v4972
    %v4975 = vpack.c.b16 %v4974, %v4974
    %v4976 = vrot.slane %v4975, 5
    %4978 = vst [vmem:[#allocation5 + $0x28] sm:$0x30] %v4976
    %v4979 = vld [vmem:[%s4542] sm:$0x6]
    %v4981 = vunpack.c.l.b16 %v4979
    %v4982 = vpack.c.b16 %v4981, %v4981
    %v4983 = vrot.slane %v4982, 3
    %4985 = vst [vmem:[#allocation5 + $0x28] sm:$0xc0] %v4983
    %v4986 = vld [vmem:[%s4557] sm:$0x6]
    %v4988 = vunpack.c.l.b16 %v4986
    %v4989 = vpack.c.b16 %v4988, %v4988
    %v4990 = vrot.slane %v4989, 1
    %4992 = vst [vmem:[#allocation5 + $0x70] sm:$0x3] %v4990
    %v4993 = vld [vmem:[%s4566] sm:$0x6]
    %v4995 = vunpack.c.l.b16 %v4993
    %v4996 = vpack.c.b16 %v4995, %v4995
    %v4997 = vrot.slane %v4996, 7
    %4999 = vst [vmem:[#allocation5 + $0x70] sm:$0xc] %v4997
    %v5000 = vld [vmem:[%s4580] sm:$0x6]
    %v5002 = vunpack.c.l.b16 %v5000
    %v5003 = vpack.c.b16 %v5002, %v5002
    %v5004 = vrot.slane %v5003, 5
    %5006 = vst [vmem:[#allocation5 + $0x70] sm:$0x30] %v5004
    %v5007 = vld [vmem:[%s4589] sm:$0x6]
    %v5009 = vunpack.c.l.b16 %v5007
    %v5010 = vpack.c.b16 %v5009, %v5009
    %v5011 = vrot.slane %v5010, 3
    %5013 = vst [vmem:[#allocation5 + $0x70] sm:$0xc0] %v5011
    %v5014 = vld [vmem:[%s4519] sm:$0x3]
    %5015 = vst [vmem:[#allocation5 + $0x30] sm:$0x3] %v5014
    %v5016 = vld [vmem:[%s4533] sm:$0x3]
    %v5018 = vunpack.c.l.b16 %v5016
    %v5019 = vpack.c.b16 %v5018, %v5018
    %v5020 = vrot.slane %v5019, 6
    %5022 = vst [vmem:[#allocation5 + $0x30] sm:$0xc] %v5020
    %v5023 = vld [vmem:[%s4542] sm:$0x3]
    %v5025 = vunpack.c.l.b16 %v5023
    %v5026 = vpack.c.b16 %v5025, %v5025
    %5028 = vst [vmem:[#allocation5 + $0x30] sm:$0x30] %v5026
    %s5029 = scalar_lea.vmem [#allocation4], 20
    %v5030 = vld [vmem:[%s5029] sm:$0x3]
    %v5032 = vunpack.c.l.b16 %v5030
    %v5033 = vpack.c.b16 %v5032, %v5032
    %v5034 = vrot.slane %v5033, 2
    %5036 = vst [vmem:[#allocation5 + $0x30] sm:$0xc0] %v5034
    %v5037 = vld [vmem:[%s4566] sm:$0x3]
    %5038 = vst [vmem:[#allocation5 + $0x78] sm:$0x3] %v5037
    %v5039 = vld [vmem:[%s4580] sm:$0x3]
    %v5041 = vunpack.c.l.b16 %v5039
    %v5042 = vpack.c.b16 %v5041, %v5041
    %v5043 = vrot.slane %v5042, 6
    %5045 = vst [vmem:[#allocation5 + $0x78] sm:$0xc] %v5043
    %v5046 = vld [vmem:[%s4589] sm:$0x3]
    %v5048 = vunpack.c.l.b16 %v5046
    %v5049 = vpack.c.b16 %v5048, %v5048
    %5051 = vst [vmem:[#allocation5 + $0x78] sm:$0x30] %v5049
    %s5052 = scalar_lea.vmem [#allocation4], 44
    %v5053 = vld [vmem:[%s5052] sm:$0x3]
    %v5055 = vunpack.c.l.b16 %v5053
    %v5056 = vpack.c.b16 %v5055, %v5055
    %v5057 = vrot.slane %v5056, 2
    %5059 = vst [vmem:[#allocation5 + $0x78] sm:$0xc0] %v5057
    %v5060 = vld [vmem:[%s4519] sm:$0x7]
    %v5062 = vunpack.c.l.b16 %v5060
    %v5063 = vpack.c.b16 %v5062, %v5062
    %v5065 = vshrl.u32 %v5063, 16
    %v5067 = vshll.u32 %v5063, 16
    %v5069 = vrot.slane %v5067, 1
    %v5070 = vor.u32 %v5065, %v5069
    %5072 = vst [vmem:[#allocation5 + $0x38] sm:$0x3] %v5070
    %v5073 = vld [vmem:[%s4533] sm:$0x7]
    %v5075 = vunpack.c.l.b16 %v5073
    %v5076 = vpack.c.b16 %v5075, %v5075
    %v5078 = vshrl.u32 %v5076, 16
    %v5080 = vrot.slane %v5078, 6
    %v5081 = vshll.u32 %v5076, 16
    %v5083 = vrot.slane %v5081, 7
    %v5084 = vor.u32 %v5080, %v5083
    %5086 = vst [vmem:[#allocation5 + $0x38] sm:$0xc] %v5084
    %v5087 = vld [vmem:[%s4542] sm:$0x7]
    %v5089 = vunpack.c.l.b16 %v5087
    %v5090 = vpack.c.b16 %v5089, %v5089
    %v5092 = vshrl.u32 %v5090, 16
    %v5094 = vrot.slane %v5092, 4
    %v5095 = vshll.u32 %v5090, 16
    %v5097 = vrot.slane %v5095, 5
    %v5098 = vor.u32 %v5094, %v5097
    %5100 = vst [vmem:[#allocation5 + $0x38] sm:$0x30] %v5098
    %v5101 = vld [vmem:[%s5029] sm:$0x7]
    %v5103 = vunpack.c.l.b16 %v5101
    %v5104 = vpack.c.b16 %v5103, %v5103
    %v5106 = vshrl.u32 %v5104, 16
    %v5108 = vrot.slane %v5106, 2
    %v5109 = vshll.u32 %v5104, 16
    %v5111 = vrot.slane %v5109, 3
    %v5112 = vor.u32 %v5108, %v5111
    %5114 = vst [vmem:[#allocation5 + $0x38] sm:$0xc0] %v5112
    %v5115 = vld [vmem:[%s4566] sm:$0x7]
    %v5117 = vunpack.c.l.b16 %v5115
    %v5118 = vpack.c.b16 %v5117, %v5117
    %v5120 = vshrl.u32 %v5118, 16
    %v5122 = vshll.u32 %v5118, 16
    %v5124 = vrot.slane %v5122, 1
    %v5125 = vor.u32 %v5120, %v5124
    %5127 = vst [vmem:[#allocation5 + $0x80] sm:$0x3] %v5125
    %v5128 = vld [vmem:[%s4580] sm:$0x7]
    %v5130 = vunpack.c.l.b16 %v5128
    %v5131 = vpack.c.b16 %v5130, %v5130
    %v5133 = vshrl.u32 %v5131, 16
    %v5135 = vrot.slane %v5133, 6
    %v5136 = vshll.u32 %v5131, 16
    %v5138 = vrot.slane %v5136, 7
    %v5139 = vor.u32 %v5135, %v5138
    %5141 = vst [vmem:[#allocation5 + $0x80] sm:$0xc] %v5139
    %v5142 = vld [vmem:[%s4589] sm:$0x7]
    %v5144 = vunpack.c.l.b16 %v5142
    %v5145 = vpack.c.b16 %v5144, %v5144
    %v5147 = vshrl.u32 %v5145, 16
    %v5149 = vrot.slane %v5147, 4
    %v5150 = vshll.u32 %v5145, 16
    %v5152 = vrot.slane %v5150, 5
    %v5153 = vor.u32 %v5149, %v5152
    %5155 = vst [vmem:[#allocation5 + $0x80] sm:$0x30] %v5153
    %v5156 = vld [vmem:[%s5052] sm:$0x7]
    %v5158 = vunpack.c.l.b16 %v5156
    %v5159 = vpack.c.b16 %v5158, %v5158
    %v5161 = vshrl.u32 %v5159, 16
    %v5163 = vrot.slane %v5161, 2
    %v5164 = vshll.u32 %v5159, 16
    %v5166 = vrot.slane %v5164, 3
    %v5167 = vor.u32 %v5163, %v5166
    %5169 = vst [vmem:[#allocation5 + $0x80] sm:$0xc0] %v5167
    %v5170 = vld [vmem:[%s4519] sm:$0x6]
    %v5172 = vunpack.c.l.b16 %v5170
    %v5173 = vpack.c.b16 %v5172, %v5172
    %v5174 = vrot.slane %v5173, 1
    %5176 = vst [vmem:[#allocation5 + $0x40] sm:$0x3] %v5174
    %v5177 = vld [vmem:[%s4533] sm:$0x6]
    %v5179 = vunpack.c.l.b16 %v5177
    %v5180 = vpack.c.b16 %v5179, %v5179
    %v5181 = vrot.slane %v5180, 7
    %5183 = vst [vmem:[#allocation5 + $0x40] sm:$0xc] %v5181
    %v5184 = vld [vmem:[%s4542] sm:$0x6]
    %v5186 = vunpack.c.l.b16 %v5184
    %v5187 = vpack.c.b16 %v5186, %v5186
    %v5188 = vrot.slane %v5187, 5
    %5190 = vst [vmem:[#allocation5 + $0x40] sm:$0x30] %v5188
    %v5191 = vld [vmem:[%s5029] sm:$0x6]
    %v5193 = vunpack.c.l.b16 %v5191
    %v5194 = vpack.c.b16 %v5193, %v5193
    %v5195 = vrot.slane %v5194, 3
    %5197 = vst [vmem:[#allocation5 + $0x40] sm:$0xc0] %v5195
    %v5198 = vld [vmem:[%s4566] sm:$0x6]
    %v5200 = vunpack.c.l.b16 %v5198
    %v5201 = vpack.c.b16 %v5200, %v5200
    %v5202 = vrot.slane %v5201, 1
    %5204 = vst [vmem:[#allocation5 + $0x88] sm:$0x3] %v5202
    %v5205 = vld [vmem:[%s4580] sm:$0x6]
    %v5207 = vunpack.c.l.b16 %v5205
    %v5208 = vpack.c.b16 %v5207, %v5207
    %v5209 = vrot.slane %v5208, 7
    %5211 = vst [vmem:[#allocation5 + $0x88] sm:$0xc] %v5209
    %v5212 = vld [vmem:[%s4589] sm:$0x6]
    %v5214 = vunpack.c.l.b16 %v5212
    %v5215 = vpack.c.b16 %v5214, %v5214
    %v5216 = vrot.slane %v5215, 5
    %5218 = vst [vmem:[#allocation5 + $0x88] sm:$0x30] %v5216
    %v5219 = vld [vmem:[%s5052] sm:$0x6]
    %v5221 = vunpack.c.l.b16 %v5219
    %v5222 = vpack.c.b16 %v5221, %v5221
    %v5223 = vrot.slane %v5222, 3
    %5225 = vst [vmem:[#allocation5 + $0x88] sm:$0xc0] %v5223
    %v5226 = vld [vmem:[#allocation5] sm:$0xff]
    %v5227 = vld [vmem:[#allocation5 + $0x8] sm:$0xff]
    %v5228 = vld [vmem:[#allocation5 + $0x10] sm:$0xff]
    %v5229 = vld [vmem:[#allocation5 + $0x18] sm:$0xff]
    %v5230 = vld [vmem:[#allocation5 + $0x20] sm:$0xff]
    %v5231 = vld [vmem:[#allocation5 + $0x28] sm:$0xff]
    %v5232 = vld [vmem:[#allocation5 + $0x30] sm:$0xff]
    %v5233 = vld [vmem:[#allocation5 + $0x38] sm:$0xff]
    %v5234 = vld [vmem:[#allocation5 + $0x40] sm:$0xff]
    %v5235 = vld [vmem:[#allocation5 + $0x48] sm:$0xff]
    %v5236 = vld [vmem:[#allocation5 + $0x50] sm:$0xff]
    %v5237 = vld [vmem:[#allocation5 + $0x58] sm:$0xff]
    %v5238 = vld [vmem:[#allocation5 + $0x60] sm:$0xff]
    %v5239 = vld [vmem:[#allocation5 + $0x68] sm:$0xff]
    %v5240 = vld [vmem:[#allocation5 + $0x70] sm:$0xff]
    %v5241 = vld [vmem:[#allocation5 + $0x78] sm:$0xff]
    %v5242 = vld [vmem:[#allocation5 + $0x80] sm:$0xff]
    %v5243 = vld [vmem:[#allocation5 + $0x88] sm:$0xff]
    %v5244 = vld [vmem:[%s7] sm:$0xf]
    %v5245 = vld [vmem:[%s7 + $0x4] sm:$0xf]
    %v5246 = vld [vmem:[%s7 + $0x8] sm:$0xf]
    %v5247 = vld [vmem:[%s7 + $0xc] sm:$0xf]
    %v5248 = vld [vmem:[%s7 + $0x10] sm:$0xf]
    %v5249 = vld [vmem:[%s7 + $0x14] sm:$0xf]
    %v5250 = vld [vmem:[%s7 + $0x18] sm:$0xf]
    %v5251 = vld [vmem:[%s7 + $0x1c] sm:$0xf]
    %v5252 = vld [vmem:[%s7 + $0x20] sm:$0xf]
    %v5253 = vld [vmem:[%s7 + $0x24] sm:$0xf]
    %v5254 = vld [vmem:[%s7 + $0x28] sm:$0xf]
    %v5255 = vld [vmem:[%s7 + $0x2c] sm:$0xf]
    %v5256 = vld [vmem:[%s7 + $0x30] sm:$0xf]
    %v5257 = vld [vmem:[%s7 + $0x34] sm:$0xf]
    %v5258 = vld [vmem:[%s7 + $0x38] sm:$0xf]
    %v5259 = vld [vmem:[%s7 + $0x3c] sm:$0xf]
    %v5260 = vld [vmem:[%s7 + $0x40] sm:$0xf]
    %v5261 = vld [vmem:[%s7 + $0x44] sm:$0xf]
    %v5262 = vld [vmem:[%s7 + $0x48] sm:$0xf]
    %v5263 = vld [vmem:[%s7 + $0x4c] sm:$0xf]
    %v5264 = vld [vmem:[%s7 + $0x50] sm:$0xf]
    %v5265 = vld [vmem:[%s7 + $0x54] sm:$0xf]
    %v5266 = vld [vmem:[%s7 + $0x58] sm:$0xf]
    %v5267 = vld [vmem:[%s7 + $0x5c] sm:$0xf]
    %v5268 = vld [vmem:[%s7 + $0x60] sm:$0xf]
    %v5269 = vld [vmem:[%s7 + $0x64] sm:$0xf]
    %v5270 = vld [vmem:[%s7 + $0x68] sm:$0xf]
    %v5271 = vld [vmem:[%s7 + $0x6c] sm:$0xf]
    %v5272 = vld [vmem:[%s7 + $0x70] sm:$0xf]
    %v5273 = vld [vmem:[%s7 + $0x74] sm:$0xf]
    %v5274 = vld [vmem:[%s7 + $0x78] sm:$0xf]
    %v5275 = vld [vmem:[%s7 + $0x7c] sm:$0xf]
    %v5276 = vld [vmem:[%s7 + $0x80] sm:$0xf]
    %v5277 = vld [vmem:[%s7 + $0x84] sm:$0xf]
    %v5278 = vld [vmem:[%s7 + $0x88] sm:$0xf]
    %v5279 = vld [vmem:[%s7 + $0x8c] sm:$0xf]
    %v5280 = vld [vmem:[%s7 + $0x90] sm:$0xf]
    %v5281 = vld [vmem:[%s7 + $0x94] sm:$0xf]
    %v5282 = vld [vmem:[%s7 + $0x98] sm:$0xf]
    %v5283 = vld [vmem:[%s7 + $0x9c] sm:$0xf]
    %v5284 = vld [vmem:[%s7 + $0xa0] sm:$0xf]
    %v5285 = vld [vmem:[%s7 + $0xa4] sm:$0xf]
    %v5286 = vld [vmem:[%s7 + $0xa8] sm:$0xf]
    %v5287 = vld [vmem:[%s7 + $0xac] sm:$0xf]
    %v5288 = vld [vmem:[%s7 + $0xb0] sm:$0xf]
    %v5289 = vld [vmem:[%s7 + $0xb4] sm:$0xf]
    %v5290 = vld [vmem:[%s7 + $0xb8] sm:$0xf]
    %v5291 = vld [vmem:[%s7 + $0xbc] sm:$0xf]
    %v5292 = vld [vmem:[%s7 + $0xc0] sm:$0xf]
    %v5293 = vld [vmem:[%s7 + $0xc4] sm:$0xf]
    %v5294 = vld [vmem:[%s7 + $0xc8] sm:$0xf]
    %v5295 = vld [vmem:[%s7 + $0xcc] sm:$0xf]
    %v5296 = vld [vmem:[%s7 + $0xd0] sm:$0xf]
    %v5297 = vld [vmem:[%s7 + $0xd4] sm:$0xf]
    %v5298 = vld [vmem:[%s7 + $0xd8] sm:$0xf]
    %v5299 = vld [vmem:[%s7 + $0xdc] sm:$0xf]
    %v5300 = vld [vmem:[%s7 + $0xe0] sm:$0xf]
    %v5301 = vld [vmem:[%s7 + $0xe4] sm:$0xf]
    %v5302 = vld [vmem:[%s7 + $0xe8] sm:$0xf]
    %v5303 = vld [vmem:[%s7 + $0xec] sm:$0xf]
    %v5304 = vld [vmem:[%s7 + $0xf0] sm:$0xf]
    %v5305 = vld [vmem:[%s7 + $0xf4] sm:$0xf]
    %v5306 = vld [vmem:[%s7 + $0xf8] sm:$0xf]
    %v5307 = vld [vmem:[%s7 + $0xfc] sm:$0xf]
    %v5308 = vld [vmem:[%s7 + $0x100] sm:$0xf]
    %v5309 = vld [vmem:[%s7 + $0x104] sm:$0xf]
    %v5310 = vld [vmem:[%s7 + $0x108] sm:$0xf]
    %v5311 = vld [vmem:[%s7 + $0x10c] sm:$0xf]
    %v5312 = vld [vmem:[%s7 + $0x110] sm:$0xf]
    %v5313 = vld [vmem:[%s7 + $0x114] sm:$0xf]
    %v5314 = vld [vmem:[%s7 + $0x118] sm:$0xf]
    %v5315 = vld [vmem:[%s7 + $0x11c] sm:$0xf]
    %v5316 = vld [vmem:[%s7 + $0x120] sm:$0xf]
    %v5317 = vld [vmem:[%s7 + $0x124] sm:$0xf]
    %v5318 = vld [vmem:[%s7 + $0x128] sm:$0xf]
    %v5319 = vld [vmem:[%s7 + $0x12c] sm:$0xf]
    %v5320 = vld [vmem:[%s7 + $0x130] sm:$0xf]
    %v5321 = vld [vmem:[%s7 + $0x134] sm:$0xf]
    %v5322 = vld [vmem:[%s7 + $0x138] sm:$0xf]
    %v5323 = vld [vmem:[%s7 + $0x13c] sm:$0xf]
    %v5324 = vld [vmem:[%s7 + $0x140] sm:$0xf]
    %v5325 = vld [vmem:[%s7 + $0x144] sm:$0xf]
    %v5326 = vld [vmem:[%s7 + $0x148] sm:$0xf]
    %v5327 = vld [vmem:[%s7 + $0x14c] sm:$0xf]
    %v5328 = vld [vmem:[%s7 + $0x150] sm:$0xf]
    %v5329 = vld [vmem:[%s7 + $0x154] sm:$0xf]
    %v5330 = vld [vmem:[%s7 + $0x158] sm:$0xf]
    %v5331 = vld [vmem:[%s7 + $0x15c] sm:$0xf]
    %v5332 = vld [vmem:[%s7 + $0x160] sm:$0xf]
    %v5333 = vld [vmem:[%s7 + $0x164] sm:$0xf]
    %v5334 = vld [vmem:[%s7 + $0x168] sm:$0xf]
    %v5335 = vld [vmem:[%s7 + $0x16c] sm:$0xf]
    %v5336 = vld [vmem:[%s7 + $0x170] sm:$0xf]
    %v5337 = vld [vmem:[%s7 + $0x174] sm:$0xf]
    %v5338 = vld [vmem:[%s7 + $0x178] sm:$0xf]
    %v5339 = vld [vmem:[%s7 + $0x17c] sm:$0xf]
    %v5340 = vld [vmem:[%s7 + $0x180] sm:$0xf]
    %v5341 = vld [vmem:[%s7 + $0x184] sm:$0xf]
    %v5342 = vld [vmem:[%s7 + $0x188] sm:$0xf]
    %v5343 = vld [vmem:[%s7 + $0x18c] sm:$0xf]
    %v5344 = vld [vmem:[%s7 + $0x190] sm:$0xf]
    %v5345 = vld [vmem:[%s7 + $0x194] sm:$0xf]
    %v5346 = vld [vmem:[%s7 + $0x198] sm:$0xf]
    %v5347 = vld [vmem:[%s7 + $0x19c] sm:$0xf]
    %v5348 = vld [vmem:[%s7 + $0x1a0] sm:$0xf]
    %v5349 = vld [vmem:[%s7 + $0x1a4] sm:$0xf]
    %v5350 = vld [vmem:[%s7 + $0x1a8] sm:$0xf]
    %v5351 = vld [vmem:[%s7 + $0x1ac] sm:$0xf]
    %v5352 = vld [vmem:[%s7 + $0x1b0] sm:$0xf]
    %v5353 = vld [vmem:[%s7 + $0x1b4] sm:$0xf]
    %v5354 = vld [vmem:[%s7 + $0x1b8] sm:$0xf]
    %v5355 = vld [vmem:[%s7 + $0x1bc] sm:$0xf]
    %v5356 = vld [vmem:[%s7 + $0x1c0] sm:$0xf]
    %v5357 = vld [vmem:[%s7 + $0x1c4] sm:$0xf]
    %v5358 = vld [vmem:[%s7 + $0x1c8] sm:$0xf]
    %v5359 = vld [vmem:[%s7 + $0x1cc] sm:$0xf]
    %v5360 = vld [vmem:[%s7 + $0x1d0] sm:$0xf]
    %v5361 = vld [vmem:[%s7 + $0x1d4] sm:$0xf]
    %v5362 = vld [vmem:[%s7 + $0x1d8] sm:$0xf]
    %v5363 = vld [vmem:[%s7 + $0x1dc] sm:$0xf]
    %v5364 = vld [vmem:[%s7 + $0x1e0] sm:$0xf]
    %v5365 = vld [vmem:[%s7 + $0x1e4] sm:$0xf]
    %v5366 = vld [vmem:[%s7 + $0x1e8] sm:$0xf]
    %v5367 = vld [vmem:[%s7 + $0x1ec] sm:$0xf]
    %v5368 = vld [vmem:[%s7 + $0x1f0] sm:$0xf]
    %v5369 = vld [vmem:[%s7 + $0x1f4] sm:$0xf]
    %v5370 = vld [vmem:[%s7 + $0x1f8] sm:$0xf]
    %v5371 = vld [vmem:[%s7 + $0x1fc] sm:$0xf]
    %v5372 = vld [vmem:[%s7 + $0x200] sm:$0xf]
    %v5373 = vld [vmem:[%s7 + $0x204] sm:$0xf]
    %v5374 = vld [vmem:[%s7 + $0x208] sm:$0xf]
    %v5375 = vld [vmem:[%s7 + $0x20c] sm:$0xf]
    %v5376 = vld [vmem:[%s7 + $0x210] sm:$0xf]
    %v5377 = vld [vmem:[%s7 + $0x214] sm:$0xf]
    %v5378 = vld [vmem:[%s7 + $0x218] sm:$0xf]
    %v5379 = vld [vmem:[%s7 + $0x21c] sm:$0xf]
    %v5380 = vld [vmem:[%s7 + $0x220] sm:$0xf]
    %v5381 = vld [vmem:[%s7 + $0x224] sm:$0xf]
    %v5382 = vld [vmem:[%s7 + $0x228] sm:$0xf]
    %v5383 = vld [vmem:[%s7 + $0x22c] sm:$0xf]
    %v5384 = vld [vmem:[%s7 + $0x230] sm:$0xf]
    %v5385 = vld [vmem:[%s7 + $0x234] sm:$0xf]
    %v5386 = vld [vmem:[%s7 + $0x238] sm:$0xf]
    %v5387 = vld [vmem:[%s7 + $0x23c] sm:$0xf]
    %v5532 = vunpack.c.l.b16 %v5244
    %v5533 = vunpack.c.l.b16 %v5245
    %v5534 = vunpack.c.l.b16 %v5246
    %v5535 = vunpack.c.l.b16 %v5247
    %v5536 = vunpack.c.l.b16 %v5248
    %v5537 = vunpack.c.l.b16 %v5249
    %v5538 = vunpack.c.l.b16 %v5250
    %v5539 = vunpack.c.l.b16 %v5251
    %v5540 = vunpack.c.l.b16 %v5252
    %v5541 = vunpack.c.l.b16 %v5253
    %v5542 = vunpack.c.l.b16 %v5254
    %v5543 = vunpack.c.l.b16 %v5255
    %v5544 = vunpack.c.l.b16 %v5256
    %v5545 = vunpack.c.l.b16 %v5257
    %v5546 = vunpack.c.l.b16 %v5258
    %v5547 = vunpack.c.l.b16 %v5259
    %v5548 = vunpack.c.l.b16 %v5260
    %v5549 = vunpack.c.l.b16 %v5261
    %v5550 = vunpack.c.l.b16 %v5262
    %v5551 = vunpack.c.l.b16 %v5263
    %v5552 = vunpack.c.l.b16 %v5264
    %v5553 = vunpack.c.l.b16 %v5265
    %v5554 = vunpack.c.l.b16 %v5266
    %v5555 = vunpack.c.l.b16 %v5267
    %v5556 = vunpack.c.l.b16 %v5268
    %v5557 = vunpack.c.l.b16 %v5269
    %v5558 = vunpack.c.l.b16 %v5270
    %v5559 = vunpack.c.l.b16 %v5271
    %v5560 = vunpack.c.l.b16 %v5272
    %v5561 = vunpack.c.l.b16 %v5273
    %v5562 = vunpack.c.l.b16 %v5274
    %v5563 = vunpack.c.l.b16 %v5275
    %v5564 = vunpack.c.l.b16 %v5276
    %v5565 = vunpack.c.l.b16 %v5277
    %v5566 = vunpack.c.l.b16 %v5278
    %v5567 = vunpack.c.l.b16 %v5279
    %v5568 = vunpack.c.l.b16 %v5280
    %v5569 = vunpack.c.l.b16 %v5281
    %v5570 = vunpack.c.l.b16 %v5282
    %v5571 = vunpack.c.l.b16 %v5283
    %v5572 = vunpack.c.l.b16 %v5284
    %v5573 = vunpack.c.l.b16 %v5285
    %v5574 = vunpack.c.l.b16 %v5286
    %v5575 = vunpack.c.l.b16 %v5287
    %v5576 = vunpack.c.l.b16 %v5288
    %v5577 = vunpack.c.l.b16 %v5289
    %v5578 = vunpack.c.l.b16 %v5290
    %v5579 = vunpack.c.l.b16 %v5291
    %v5580 = vunpack.c.l.b16 %v5292
    %v5581 = vunpack.c.l.b16 %v5293
    %v5582 = vunpack.c.l.b16 %v5294
    %v5583 = vunpack.c.l.b16 %v5295
    %v5584 = vunpack.c.l.b16 %v5296
    %v5585 = vunpack.c.l.b16 %v5297
    %v5586 = vunpack.c.l.b16 %v5298
    %v5587 = vunpack.c.l.b16 %v5299
    %v5588 = vunpack.c.l.b16 %v5300
    %v5589 = vunpack.c.l.b16 %v5301
    %v5590 = vunpack.c.l.b16 %v5302
    %v5591 = vunpack.c.l.b16 %v5303
    %v5592 = vunpack.c.l.b16 %v5304
    %v5593 = vunpack.c.l.b16 %v5305
    %v5594 = vunpack.c.l.b16 %v5306
    %v5595 = vunpack.c.l.b16 %v5307
    %v5596 = vunpack.c.l.b16 %v5308
    %v5597 = vunpack.c.l.b16 %v5309
    %v5598 = vunpack.c.l.b16 %v5310
    %v5599 = vunpack.c.l.b16 %v5311
    %v5600 = vunpack.c.l.b16 %v5312
    %v5601 = vunpack.c.l.b16 %v5313
    %v5602 = vunpack.c.l.b16 %v5314
    %v5603 = vunpack.c.l.b16 %v5315
    %v5604 = vunpack.c.l.b16 %v5316
    %v5605 = vunpack.c.l.b16 %v5317
    %v5606 = vunpack.c.l.b16 %v5318
    %v5607 = vunpack.c.l.b16 %v5319
    %v5608 = vunpack.c.l.b16 %v5320
    %v5609 = vunpack.c.l.b16 %v5321
    %v5610 = vunpack.c.l.b16 %v5322
    %v5611 = vunpack.c.l.b16 %v5323
    %v5612 = vunpack.c.l.b16 %v5324
    %v5613 = vunpack.c.l.b16 %v5325
    %v5614 = vunpack.c.l.b16 %v5326
    %v5615 = vunpack.c.l.b16 %v5327
    %v5616 = vunpack.c.l.b16 %v5328
    %v5617 = vunpack.c.l.b16 %v5329
    %v5618 = vunpack.c.l.b16 %v5330
    %v5619 = vunpack.c.l.b16 %v5331
    %v5620 = vunpack.c.l.b16 %v5332
    %v5621 = vunpack.c.l.b16 %v5333
    %v5622 = vunpack.c.l.b16 %v5334
    %v5623 = vunpack.c.l.b16 %v5335
    %v5624 = vunpack.c.l.b16 %v5336
    %v5625 = vunpack.c.l.b16 %v5337
    %v5626 = vunpack.c.l.b16 %v5338
    %v5627 = vunpack.c.l.b16 %v5339
    %v5628 = vunpack.c.l.b16 %v5340
    %v5629 = vunpack.c.l.b16 %v5341
    %v5630 = vunpack.c.l.b16 %v5342
    %v5631 = vunpack.c.l.b16 %v5343
    %v5632 = vunpack.c.l.b16 %v5344
    %v5633 = vunpack.c.l.b16 %v5345
    %v5634 = vunpack.c.l.b16 %v5346
    %v5635 = vunpack.c.l.b16 %v5347
    %v5636 = vunpack.c.l.b16 %v5348
    %v5637 = vunpack.c.l.b16 %v5349
    %v5638 = vunpack.c.l.b16 %v5350
    %v5639 = vunpack.c.l.b16 %v5351
    %v5640 = vunpack.c.l.b16 %v5352
    %v5641 = vunpack.c.l.b16 %v5353
    %v5642 = vunpack.c.l.b16 %v5354
    %v5643 = vunpack.c.l.b16 %v5355
    %v5644 = vunpack.c.l.b16 %v5356
    %v5645 = vunpack.c.l.b16 %v5357
    %v5646 = vunpack.c.l.b16 %v5358
    %v5647 = vunpack.c.l.b16 %v5359
    %v5648 = vunpack.c.l.b16 %v5360
    %v5649 = vunpack.c.l.b16 %v5361
    %v5650 = vunpack.c.l.b16 %v5362
    %v5651 = vunpack.c.l.b16 %v5363
    %v5652 = vunpack.c.l.b16 %v5364
    %v5653 = vunpack.c.l.b16 %v5365
    %v5654 = vunpack.c.l.b16 %v5366
    %v5655 = vunpack.c.l.b16 %v5367
    %v5656 = vunpack.c.l.b16 %v5368
    %v5657 = vunpack.c.l.b16 %v5369
    %v5658 = vunpack.c.l.b16 %v5370
    %v5659 = vunpack.c.l.b16 %v5371
    %v5660 = vunpack.c.l.b16 %v5372
    %v5661 = vunpack.c.l.b16 %v5373
    %v5662 = vunpack.c.l.b16 %v5374
    %v5663 = vunpack.c.l.b16 %v5375
    %v5664 = vunpack.c.l.b16 %v5376
    %v5665 = vunpack.c.l.b16 %v5377
    %v5666 = vunpack.c.l.b16 %v5378
    %v5667 = vunpack.c.l.b16 %v5379
    %v5668 = vunpack.c.l.b16 %v5380
    %v5669 = vunpack.c.l.b16 %v5381
    %v5670 = vunpack.c.l.b16 %v5382
    %v5671 = vunpack.c.l.b16 %v5383
    %v5672 = vunpack.c.l.b16 %v5384
    %v5673 = vunpack.c.l.b16 %v5385
    %v5674 = vunpack.c.l.b16 %v5386
    %v5675 = vunpack.c.l.b16 %v5387
    %v5676 = vpack.c.b16 %v5533, %v5532
    %v5677 = vpack.c.b16 %v5535, %v5534
    %v5678 = vpack.c.b16 %v5537, %v5536
    %v5679 = vpack.c.b16 %v5539, %v5538
    %v5680 = vpack.c.b16 %v5541, %v5540
    %v5681 = vpack.c.b16 %v5543, %v5542
    %v5682 = vpack.c.b16 %v5545, %v5544
    %v5683 = vpack.c.b16 %v5547, %v5546
    %v5684 = vpack.c.b16 %v5549, %v5548
    %v5685 = vpack.c.b16 %v5551, %v5550
    %v5686 = vpack.c.b16 %v5553, %v5552
    %v5687 = vpack.c.b16 %v5555, %v5554
    %v5688 = vpack.c.b16 %v5557, %v5556
    %v5689 = vpack.c.b16 %v5559, %v5558
    %v5690 = vpack.c.b16 %v5561, %v5560
    %v5691 = vpack.c.b16 %v5563, %v5562
    %v5692 = vpack.c.b16 %v5565, %v5564
    %v5693 = vpack.c.b16 %v5567, %v5566
    %v5694 = vpack.c.b16 %v5569, %v5568
    %v5695 = vpack.c.b16 %v5571, %v5570
    %v5696 = vpack.c.b16 %v5573, %v5572
    %v5697 = vpack.c.b16 %v5575, %v5574
    %v5698 = vpack.c.b16 %v5577, %v5576
    %v5699 = vpack.c.b16 %v5579, %v5578
    %v5700 = vpack.c.b16 %v5581, %v5580
    %v5701 = vpack.c.b16 %v5583, %v5582
    %v5702 = vpack.c.b16 %v5585, %v5584
    %v5703 = vpack.c.b16 %v5587, %v5586
    %v5704 = vpack.c.b16 %v5589, %v5588
    %v5705 = vpack.c.b16 %v5591, %v5590
    %v5706 = vpack.c.b16 %v5593, %v5592
    %v5707 = vpack.c.b16 %v5595, %v5594
    %v5708 = vpack.c.b16 %v5597, %v5596
    %v5709 = vpack.c.b16 %v5599, %v5598
    %v5710 = vpack.c.b16 %v5601, %v5600
    %v5711 = vpack.c.b16 %v5603, %v5602
    %v5712 = vpack.c.b16 %v5605, %v5604
    %v5713 = vpack.c.b16 %v5607, %v5606
    %v5714 = vpack.c.b16 %v5609, %v5608
    %v5715 = vpack.c.b16 %v5611, %v5610
    %v5716 = vpack.c.b16 %v5613, %v5612
    %v5717 = vpack.c.b16 %v5615, %v5614
    %v5718 = vpack.c.b16 %v5617, %v5616
    %v5719 = vpack.c.b16 %v5619, %v5618
    %v5720 = vpack.c.b16 %v5621, %v5620
    %v5721 = vpack.c.b16 %v5623, %v5622
    %v5722 = vpack.c.b16 %v5625, %v5624
    %v5723 = vpack.c.b16 %v5627, %v5626
    %v5724 = vpack.c.b16 %v5629, %v5628
    %v5725 = vpack.c.b16 %v5631, %v5630
    %v5726 = vpack.c.b16 %v5633, %v5632
    %v5727 = vpack.c.b16 %v5635, %v5634
    %v5728 = vpack.c.b16 %v5637, %v5636
    %v5729 = vpack.c.b16 %v5639, %v5638
    %v5730 = vpack.c.b16 %v5641, %v5640
    %v5731 = vpack.c.b16 %v5643, %v5642
    %v5732 = vpack.c.b16 %v5645, %v5644
    %v5733 = vpack.c.b16 %v5647, %v5646
    %v5734 = vpack.c.b16 %v5649, %v5648
    %v5735 = vpack.c.b16 %v5651, %v5650
    %v5736 = vpack.c.b16 %v5653, %v5652
    %v5737 = vpack.c.b16 %v5655, %v5654
    %v5738 = vpack.c.b16 %v5657, %v5656
    %v5739 = vpack.c.b16 %v5659, %v5658
    %v5740 = vpack.c.b16 %v5661, %v5660
    %v5741 = vpack.c.b16 %v5663, %v5662
    %v5742 = vpack.c.b16 %v5665, %v5664
    %v5743 = vpack.c.b16 %v5667, %v5666
    %v5744 = vpack.c.b16 %v5669, %v5668
    %v5745 = vpack.c.b16 %v5671, %v5670
    %v5746 = vpack.c.b16 %v5673, %v5672
    %v5747 = vpack.c.b16 %v5675, %v5674
    %5820 = vmatprep.subr.bf16.mxu0 0
    %5821 = vmatpush1.bf16.msra.mxu0 %v5676
    %5822 = vmatprep.subr.bf16.mxu0 0
    %5823 = vmatpush1.bf16.msra.mxu0 %v5677
    %5824 = vmatprep.subr.bf16.mxu0 0
    %5825 = vmatpush1.bf16.msra.mxu0 %v5678
    %5826 = vmatprep.subr.bf16.mxu0 0
    %5827 = vmatpush1.bf16.msra.mxu0 %v5679
    %5828 = vmatprep.subr.bf16.mxu0 0
    %5829 = vmatpush1.bf16.msra.mxu0 %v5680
    %5830 = vmatprep.subr.bf16.mxu0 0
    %5831 = vmatpush1.bf16.msra.mxu0 %v5681
    %5832 = vmatprep.subr.bf16.mxu0 0
    %5833 = vmatpush1.bf16.msra.mxu0 %v5682
    %5834 = vmatprep.subr.bf16.mxu0 0
    %5835 = vmatpush1.bf16.msra.mxu0 %v5683
    %5836 = vmatprep.subr.bf16.mxu0 0
    %5837 = vmatpush1.bf16.msra.mxu0 %v5684
    %5838 = vmatprep.subr.bf16.mxu0 0
    %5839 = vmatpush1.bf16.msra.mxu0 %v5685
    %5840 = vmatprep.subr.bf16.mxu0 0
    %5841 = vmatpush1.bf16.msra.mxu0 %v5686
    %5842 = vmatprep.subr.bf16.mxu0 0
    %5843 = vmatpush1.bf16.msra.mxu0 %v5687
    %5844 = vmatprep.subr.bf16.mxu0 0
    %5845 = vmatpush1.bf16.msra.mxu0 %v5688
    %5846 = vmatprep.subr.bf16.mxu0 0
    %5847 = vmatpush1.bf16.msra.mxu0 %v5689
    %5848 = vmatprep.subr.bf16.mxu0 0
    %5849 = vmatpush1.bf16.msra.mxu0 %v5690
    %5850 = vmatprep.subr.bf16.mxu0 0
    %5851 = vmatpush1.bf16.msra.mxu0 %v5691
    %5852 = vmatprep.mubr.bf16.mxu0 %v5227
    %5853 = vmatmul.mubr.bf16.gmra.mrb[0].mxu0 %v5226
    %v5854 = vpop.f32.mrb[0].mxu0
    %v5855 = vadd.f32 0.0, %v5854
    %v5856 = vpop.f32.mrb[0].mxu0
    %v5857 = vpop.f32.mrb[0].mxu0
    %v5858 = vadd.f32 0.0, %v5857
    %v5859 = vpop.f32.mrb[0].mxu0
    %5860 = vmatprep.mubr.bf16.mxu0 %v5236
    %5861 = vmatmul.mubr.bf16.gmra.mrb[0].mxu0 %v5235
    %v5862 = vpop.f32.mrb[0].mxu0
    %v5863 = vadd.f32 0.0, %v5862
    %v5864 = vpop.f32.mrb[0].mxu0
    %v5865 = vpop.f32.mrb[0].mxu0
    %v5866 = vadd.f32 0.0, %v5865
    %v5867 = vpop.f32.mrb[0].mxu0
    %5868 = vdwg.mxu0
    %5869 = vmatprep.subr.bf16.mxu0 0
    %5870 = vmatpush1.bf16.msra.mxu0 %v5692
    %5871 = vmatprep.subr.bf16.mxu0 0
    %5872 = vmatpush1.bf16.msra.mxu0 %v5693
    %5873 = vmatprep.subr.bf16.mxu0 0
    %5874 = vmatpush1.bf16.msra.mxu0 %v5694
    %5875 = vmatprep.subr.bf16.mxu0 0
    %5876 = vmatpush1.bf16.msra.mxu0 %v5695
    %5877 = vmatprep.subr.bf16.mxu0 0
    %5878 = vmatpush1.bf16.msra.mxu0 %v5696
    %5879 = vmatprep.subr.bf16.mxu0 0
    %5880 = vmatpush1.bf16.msra.mxu0 %v5697
    %5881 = vmatprep.subr.bf16.mxu0 0
    %5882 = vmatpush1.bf16.msra.mxu0 %v5698
    %5883 = vmatprep.subr.bf16.mxu0 0
    %5884 = vmatpush1.bf16.msra.mxu0 %v5699
    %5885 = vmatprep.subr.bf16.mxu0 0
    %5886 = vmatpush1.bf16.msra.mxu0 %v5700
    %5887 = vmatprep.subr.bf16.mxu0 0
    %5888 = vmatpush1.bf16.msra.mxu0 %v5701
    %5889 = vmatprep.subr.bf16.mxu0 0
    %5890 = vmatpush1.bf16.msra.mxu0 %v5702
    %5891 = vmatprep.subr.bf16.mxu0 0
    %5892 = vmatpush1.bf16.msra.mxu0 %v5703
    %5893 = vmatprep.subr.bf16.mxu0 0
    %5894 = vmatpush1.bf16.msra.mxu0 %v5704
    %5895 = vmatprep.subr.bf16.mxu0 0
    %5896 = vmatpush1.bf16.msra.mxu0 %v5705
    %5897 = vmatprep.subr.bf16.mxu0 0
    %5898 = vmatpush1.bf16.msra.mxu0 %v5706
    %5899 = vmatprep.subr.bf16.mxu0 0
    %5900 = vmatpush1.bf16.msra.mxu0 %v5707
    %5901 = vmatprep.mubr.bf16.mxu0 %v5229
    %5902 = vmatmul.mubr.bf16.gmra.mrb[0].mxu0 %v5228
    %v5903 = vpop.f32.mrb[0].mxu0
    %v5904 = vadd.f32 %v5855, %v5903
    %v5905 = vpop.f32.mrb[0].mxu0
    %v5906 = vpop.f32.mrb[0].mxu0
    %v5907 = vadd.f32 %v5858, %v5906
    %v5908 = vpop.f32.mrb[0].mxu0
    %5909 = vmatprep.mubr.bf16.mxu0 %v5238
    %5910 = vmatmul.mubr.bf16.gmra.mrb[0].mxu0 %v5237
    %v5911 = vpop.f32.mrb[0].mxu0
    %v5912 = vadd.f32 %v5863, %v5911
    %v5913 = vpop.f32.mrb[0].mxu0
    %v5914 = vpop.f32.mrb[0].mxu0
    %v5915 = vadd.f32 %v5866, %v5914
    %v5916 = vpop.f32.mrb[0].mxu0
    %5917 = vdwg.mxu0
    %5918 = vmatprep.subr.bf16.mxu0 0
    %5919 = vmatpush1.bf16.msra.mxu0 %v5708
    %5920 = vmatprep.subr.bf16.mxu0 0
    %5921 = vmatpush1.bf16.msra.mxu0 %v5709
    %5922 = vmatprep.subr.bf16.mxu0 0
    %5923 = vmatpush1.bf16.msra.mxu0 %v5710
    %5924 = vmatprep.subr.bf16.mxu0 0
    %5925 = vmatpush1.bf16.msra.mxu0 %v5711
    %5926 = vmatprep.subr.bf16.mxu0 0
    %5927 = vmatpush1.bf16.msra.mxu0 %v5712
    %5928 = vmatprep.subr.bf16.mxu0 0
    %5929 = vmatpush1.bf16.msra.mxu0 %v5713
    %5930 = vmatprep.subr.bf16.mxu0 0
    %5931 = vmatpush1.bf16.msra.mxu0 %v5714
    %5932 = vmatprep.subr.bf16.mxu0 0
    %5933 = vmatpush1.bf16.msra.mxu0 %v5715
    %5934 = vmatprep.subr.bf16.mxu0 0
    %5935 = vmatpush1.bf16.msra.mxu0 %v5716
    %5936 = vmatprep.subr.bf16.mxu0 0
    %5937 = vmatpush1.bf16.msra.mxu0 %v5717
    %5938 = vmatprep.subr.bf16.mxu0 0
    %5939 = vmatpush1.bf16.msra.mxu0 %v5718
    %5940 = vmatprep.subr.bf16.mxu0 0
    %5941 = vmatpush1.bf16.msra.mxu0 %v5719
    %5942 = vmatprep.subr.bf16.mxu0 0
    %5943 = vmatpush1.bf16.msra.mxu0 %v5720
    %5944 = vmatprep.subr.bf16.mxu0 0
    %5945 = vmatpush1.bf16.msra.mxu0 %v5721
    %5946 = vmatprep.subr.bf16.mxu0 0
    %5947 = vmatpush1.bf16.msra.mxu0 %v5722
    %5948 = vmatprep.subr.bf16.mxu0 0
    %5949 = vmatpush1.bf16.msra.mxu0 %v5723
    %5950 = vmatprep.mubr.bf16.mxu0 %v5231
    %5951 = vmatmul.mubr.bf16.gmra.mrb[0].mxu0 %v5230
    %v5952 = vpop.f32.mrb[0].mxu0
    %v5953 = vadd.f32 %v5904, %v5952
    %v5954 = vpop.f32.mrb[0].mxu0
    %v5955 = vpop.f32.mrb[0].mxu0
    %v5956 = vadd.f32 %v5907, %v5955
    %v5957 = vpop.f32.mrb[0].mxu0
    %5958 = vmatprep.mubr.bf16.mxu0 %v5240
    %5959 = vmatmul.mubr.bf16.gmra.mrb[0].mxu0 %v5239
    %v5960 = vpop.f32.mrb[0].mxu0
    %v5961 = vadd.f32 %v5912, %v5960
    %v5962 = vpop.f32.mrb[0].mxu0
    %v5963 = vpop.f32.mrb[0].mxu0
    %v5964 = vadd.f32 %v5915, %v5963
    %v5965 = vpop.f32.mrb[0].mxu0
    %5966 = vdwg.mxu0
    %5967 = vmatprep.subr.bf16.mxu0 0
    %5968 = vmatpush1.bf16.msra.mxu0 %v5724
    %5969 = vmatprep.subr.bf16.mxu0 0
    %5970 = vmatpush1.bf16.msra.mxu0 %v5725
    %5971 = vmatprep.subr.bf16.mxu0 0
    %5972 = vmatpush1.bf16.msra.mxu0 %v5726
    %5973 = vmatprep.subr.bf16.mxu0 0
    %5974 = vmatpush1.bf16.msra.mxu0 %v5727
    %5975 = vmatprep.subr.bf16.mxu0 0
    %5976 = vmatpush1.bf16.msra.mxu0 %v5728
    %5977 = vmatprep.subr.bf16.mxu0 0
    %5978 = vmatpush1.bf16.msra.mxu0 %v5729
    %5979 = vmatprep.subr.bf16.mxu0 0
    %5980 = vmatpush1.bf16.msra.mxu0 %v5730
    %5981 = vmatprep.subr.bf16.mxu0 0
    %5982 = vmatpush1.bf16.msra.mxu0 %v5731
    %5983 = vmatprep.subr.bf16.mxu0 0
    %5984 = vmatpush1.bf16.msra.mxu0 %v5732
    %5985 = vmatprep.subr.bf16.mxu0 0
    %5986 = vmatpush1.bf16.msra.mxu0 %v5733
    %5987 = vmatprep.subr.bf16.mxu0 0
    %5988 = vmatpush1.bf16.msra.mxu0 %v5734
    %5989 = vmatprep.subr.bf16.mxu0 0
    %5990 = vmatpush1.bf16.msra.mxu0 %v5735
    %5991 = vmatprep.subr.bf16.mxu0 0
    %5992 = vmatpush1.bf16.msra.mxu0 %v5736
    %5993 = vmatprep.subr.bf16.mxu0 0
    %5994 = vmatpush1.bf16.msra.mxu0 %v5737
    %5995 = vmatprep.subr.bf16.mxu0 0
    %5996 = vmatpush1.bf16.msra.mxu0 %v5738
    %5997 = vmatprep.subr.bf16.mxu0 0
    %5998 = vmatpush1.bf16.msra.mxu0 %v5739
    %5999 = vmatprep.mubr.bf16.mxu0 %v5233
    %6000 = vmatmul.mubr.bf16.gmra.mrb[0].mxu0 %v5232
    %v6001 = vpop.f32.mrb[0].mxu0
    %v6002 = vadd.f32 %v5953, %v6001
    %v6003 = vpop.f32.mrb[0].mxu0
    %v6004 = vpop.f32.mrb[0].mxu0
    %v6005 = vadd.f32 %v5956, %v6004
    %v6006 = vpop.f32.mrb[0].mxu0
    %6007 = vmatprep.mubr.bf16.mxu0 %v5242
    %6008 = vmatmul.mubr.bf16.gmra.mrb[0].mxu0 %v5241
    %v6009 = vpop.f32.mrb[0].mxu0
    %v6010 = vadd.f32 %v5961, %v6009
    %v6011 = vpop.f32.mrb[0].mxu0
    %v6012 = vpop.f32.mrb[0].mxu0
    %v6013 = vadd.f32 %v5964, %v6012
    %v6014 = vpop.f32.mrb[0].mxu0
    %6015 = vdwg.mxu0
    %6016 = vmatprep.subr.bf16.mxu0 0
    %6017 = vmatpush1.bf16.msra.mxu0 %v5740
    %6018 = vmatprep.subr.bf16.mxu0 0
    %6019 = vmatpush1.bf16.msra.mxu0 %v5741
    %6020 = vmatprep.subr.bf16.mxu0 0
    %6021 = vmatpush1.bf16.msra.mxu0 %v5742
    %6022 = vmatprep.subr.bf16.mxu0 0
    %6023 = vmatpush1.bf16.msra.mxu0 %v5743
    %6024 = vmatprep.subr.bf16.mxu0 0
    %6025 = vmatpush1.bf16.msra.mxu0 %v5744
    %6026 = vmatprep.subr.bf16.mxu0 0
    %6027 = vmatpush1.bf16.msra.mxu0 %v5745
    %6028 = vmatprep.subr.bf16.mxu0 0
    %6029 = vmatpush1.bf16.msra.mxu0 %v5746
    %6030 = vmatprep.subr.bf16.mxu0 0
    %6031 = vmatpush1.bf16.msra.mxu0 %v5747
    %6032 = vmatprep.subr.bf16.mxu0 0
    %6033 = vmatpush1.bf16.msra.mxu0 0
    %6034 = vmatprep.subr.bf16.mxu0 0
    %6035 = vmatpush1.bf16.msra.mxu0 0
    %6036 = vmatprep.subr.bf16.mxu0 0
    %6037 = vmatpush1.bf16.msra.mxu0 0
    %6038 = vmatprep.subr.bf16.mxu0 0
    %6039 = vmatpush1.bf16.msra.mxu0 0
    %6040 = vmatprep.subr.bf16.mxu0 0
    %6041 = vmatpush1.bf16.msra.mxu0 0
    %6042 = vmatprep.subr.bf16.mxu0 0
    %6043 = vmatpush1.bf16.msra.mxu0 0
    %6044 = vmatprep.subr.bf16.mxu0 0
    %6045 = vmatpush1.bf16.msra.mxu0 0
    %6046 = vmatprep.subr.bf16.mxu0 0
    %6047 = vmatpush1.bf16.msra.mxu0 0
    %6048 = vmatprep.mubr.bf16.mxu0 0
    %6049 = vmatmul.mubr.bf16.gmra.mrb[0].mxu0 %v5234
    %v6050 = vpop.f32.mrb[0].mxu0
    %v6051 = vadd.f32 %v6002, %v6050
    %v6052 = vpop.f32.mrb[0].mxu0
    %v6053 = vpop.f32.mrb[0].mxu0
    %v6054 = vadd.f32 %v6005, %v6053
    %v6055 = vpop.f32.mrb[0].mxu0
    %6056 = vmatprep.mubr.bf16.mxu0 0
    %6057 = vmatmul.mubr.bf16.gmra.mrb[0].mxu0 %v5243
    %v6058 = vpop.f32.mrb[0].mxu0
    %v6059 = vadd.f32 %v6010, %v6058
    %v6060 = vpop.f32.mrb[0].mxu0
    %v6061 = vpop.f32.mrb[0].mxu0
    %v6062 = vadd.f32 %v6013, %v6061
    %v6063 = vpop.f32.mrb[0].mxu0
    %6064 = vdwg.mxu0
    %v6065 = vld [vmem:[%s8] sm:$0x1]
    %v6066 = vld [vmem:[%s9] sm:$0x1]
    %v6067 = vadd.f32 %v6051, %v6054
    %v6068 = vadd.f32 %v6067, %v6059
    %v6069 = vadd.f32 %v6068, %v6062
    %v6070 = vrot.slane %v6069, 4
    %v6071 = vadd.f32 %v6069, %v6070
    %v6072 = vrot.slane %v6071, 2
    %v6073 = vadd.f32 %v6071, %v6072
    %v6074 = vrot.slane %v6073, 1
    %v6075 = vadd.f32 %v6073, %v6074
    %v6076 = vmul.f32 %v6075, 0.03125
    %v6077 = vmul.f32 %v6051, %v6051
    %v6078 = vmul.f32 %v6054, %v6054
    %v6079 = vmul.f32 %v6059, %v6059
    %v6080 = vmul.f32 %v6062, %v6062
    %v6081 = vadd.f32 %v6077, %v6078
    %v6082 = vadd.f32 %v6081, %v6079
    %v6083 = vadd.f32 %v6082, %v6080
    %v6084 = vrot.slane %v6083, 4
    %v6085 = vadd.f32 %v6083, %v6084
    %v6086 = vrot.slane %v6085, 2
    %v6087 = vadd.f32 %v6085, %v6086
    %v6088 = vrot.slane %v6087, 1
    %v6089 = vadd.f32 %v6087, %v6088
    %v6090 = vmul.f32 %v6089, 0.03125
    %v6091 = vmul.f32 %v6076, %v6076
    %v6092 = vsub.f32 %v6090, %v6091
    %v6093 = vadd.f32 %v6092, 1e-05
    %v6094 = vrsqrt.pop %v6093
    %v6095 = vmul.f32 %v6065, %v6094
    %v6096 = vmul.f32 %v6076, %v6095
    %v6097 = vsub.f32 %v6066, %v6096
    %v6099 = vlaneseq
    %v6100 = vshrl.u32 %v6099, 7
    %v6101 = vsub.s32 0, %v6100
    %v6102 = vrot.slane %v6095, %v6101
    %v6104 = vmul.f32 %v6051, %v6102
    %v6105 = vmul.f32 %v6054, %v6102
    %v6106 = vmul.f32 %v6059, %v6102
    %v6107 = vmul.f32 %v6062, %v6102
    %v6109 = vlaneseq
    %v6110 = vshrl.u32 %v6109, 7
    %v6111 = vsub.s32 0, %v6110
    %v6112 = vrot.slane %v6097, %v6111
    %v6114 = vadd.f32 %v6104, %v6112
    %v6115 = vadd.f32 %v6105, %v6112
    %v6116 = vadd.f32 %v6106, %v6112
    %v6117 = vadd.f32 %v6107, %v6112
    %v6118 = vmax.f32 %v6114, 0.0
    %v6119 = vmax.f32 %v6115, 0.0
    %v6120 = vmax.f32 %v6116, 0.0
    %v6121 = vmax.f32 %v6117, 0.0
    %v6122 = vpack.c.bf16 %v6119, %v6118
    %v6123 = vpack.c.bf16 %v6121, %v6120
    %v6124 = vld [vmem:[%s10] sm:$0xf]
    %v6125 = vld [vmem:[%s10 + $0x4] sm:$0xf]
    %v6126 = vld [vmem:[%s10 + $0x8] sm:$0xf]
    %v6127 = vld [vmem:[%s10 + $0xc] sm:$0xf]
    %v6128 = vld [vmem:[%s10 + $0x10] sm:$0xf]
    %v6129 = vld [vmem:[%s10 + $0x14] sm:$0xf]
    %v6130 = vld [vmem:[%s10 + $0x18] sm:$0xf]
    %v6131 = vld [vmem:[%s10 + $0x1c] sm:$0xf]
    %v6132 = vld [vmem:[%s10 + $0x20] sm:$0xf]
    %v6133 = vld [vmem:[%s10 + $0x24] sm:$0xf]
    %v6134 = vld [vmem:[%s10 + $0x28] sm:$0xf]
    %v6135 = vld [vmem:[%s10 + $0x2c] sm:$0xf]
    %v6136 = vld [vmem:[%s10 + $0x30] sm:$0xf]
    %v6137 = vld [vmem:[%s10 + $0x34] sm:$0xf]
    %v6138 = vld [vmem:[%s10 + $0x38] sm:$0xf]
    %v6139 = vld [vmem:[%s10 + $0x3c] sm:$0xf]
    %v6140 = vld [vmem:[%s11] sm:$0x1]
    %v6142 = vlaneseq
    %v6143 = vshrl.u32 %v6142, 7
    %v6144 = vsub.s32 0, %v6143
    %v6145 = vrot.slane %v6140, %v6144
    %v6163 = vunpack.c.l.b16 %v6124
    %v6164 = vunpack.c.l.b16 %v6125
    %v6165 = vunpack.c.l.b16 %v6126
    %v6166 = vunpack.c.l.b16 %v6127
    %v6167 = vunpack.c.l.b16 %v6128
    %v6168 = vunpack.c.l.b16 %v6129
    %v6169 = vunpack.c.l.b16 %v6130
    %v6170 = vunpack.c.l.b16 %v6131
    %v6171 = vunpack.c.l.b16 %v6132
    %v6172 = vunpack.c.l.b16 %v6133
    %v6173 = vunpack.c.l.b16 %v6134
    %v6174 = vunpack.c.l.b16 %v6135
    %v6175 = vunpack.c.l.b16 %v6136
    %v6176 = vunpack.c.l.b16 %v6137
    %v6177 = vunpack.c.l.b16 %v6138
    %v6178 = vunpack.c.l.b16 %v6139
    %v6179 = vpack.c.b16 %v6164, %v6163
    %v6180 = vpack.c.b16 %v6166, %v6165
    %v6181 = vpack.c.b16 %v6168, %v6167
    %v6182 = vpack.c.b16 %v6170, %v6169
    %v6183 = vpack.c.b16 %v6172, %v6171
    %v6184 = vpack.c.b16 %v6174, %v6173
    %v6185 = vpack.c.b16 %v6176, %v6175
    %v6186 = vpack.c.b16 %v6178, %v6177
    %6195 = vmatprep.subr.bf16.mxu0 0
    %6196 = vmatpush1.bf16.msra.mxu0 %v6179
    %6197 = vmatprep.subr.bf16.mxu0 0
    %6198 = vmatpush1.bf16.msra.mxu0 %v6180
    %6199 = vmatprep.subr.bf16.mxu0 0
    %6200 = vmatpush1.bf16.msra.mxu0 %v6181
    %6201 = vmatprep.subr.bf16.mxu0 0
    %6202 = vmatpush1.bf16.msra.mxu0 %v6182
    %6203 = vmatprep.subr.bf16.mxu0 0
    %6204 = vmatpush1.bf16.msra.mxu0 %v6183
    %6205 = vmatprep.subr.bf16.mxu0 0
    %6206 = vmatpush1.bf16.msra.mxu0 %v6184
    %6207 = vmatprep.subr.bf16.mxu0 0
    %6208 = vmatpush1.bf16.msra.mxu0 %v6185
    %6209 = vmatprep.subr.bf16.mxu0 0
    %6210 = vmatpush1.bf16.msra.mxu0 %v6186
    %6211 = vmatprep.subr.bf16.mxu0 0
    %6212 = vmatpush1.bf16.msra.mxu0 0
    %6213 = vmatprep.subr.bf16.mxu0 0
    %6214 = vmatpush1.bf16.msra.mxu0 0
    %6215 = vmatprep.subr.bf16.mxu0 0
    %6216 = vmatpush1.bf16.msra.mxu0 0
    %6217 = vmatprep.subr.bf16.mxu0 0
    %6218 = vmatpush1.bf16.msra.mxu0 0
    %6219 = vmatprep.subr.bf16.mxu0 0
    %6220 = vmatpush1.bf16.msra.mxu0 0
    %6221 = vmatprep.subr.bf16.mxu0 0
    %6222 = vmatpush1.bf16.msra.mxu0 0
    %6223 = vmatprep.subr.bf16.mxu0 0
    %6224 = vmatpush1.bf16.msra.mxu0 0
    %6225 = vmatprep.subr.bf16.mxu0 0
    %6226 = vmatpush1.bf16.msra.mxu0 0
    %6227 = vmatprep.mubr.bf16.mxu0 0
    %6228 = vmatmul.mubr.bf16.gmra.mrb[0].mxu0 %v6122
    %v6229 = vpop.f32.mrb[0].mxu0
    %v6230 = vadd.f32 %v6145, %v6229
    %v6231 = vpop.f32.mrb[0].mxu0
    %v6232 = vpop.f32.mrb[0].mxu0
    %v6233 = vadd.f32 %v6145, %v6232
    %v6234 = vpop.f32.mrb[0].mxu0
    %6235 = vmatprep.mubr.bf16.mxu0 0
    %6236 = vmatmul.mubr.bf16.gmra.mrb[0].mxu0 %v6123
    %v6237 = vpop.f32.mrb[0].mxu0
    %v6238 = vadd.f32 %v6145, %v6237
    %v6239 = vpop.f32.mrb[0].mxu0
    %v6240 = vpop.f32.mrb[0].mxu0
    %v6241 = vadd.f32 %v6145, %v6240
    %v6242 = vpop.f32.mrb[0].mxu0
    %6243 = vdwg.mxu0
    %6244 = vst [vmem:[#allocation6] sm:$0xff] %v6230
    %6245 = vst [vmem:[#allocation6 + $0x8] sm:$0xff] %v6233
    %6246 = vst [vmem:[#allocation6 + $0x10] sm:$0xff] %v6238
    %6247 = vst [vmem:[#allocation6 + $0x18] sm:$0xff] %v6241
    // Predicated region
    $region50: #{encoder_forward.1} parent=1 // pred_check
      _
    $region51: #{encoder_forward.1} parent=1 // pred_check_branch
      %6249 = sbr.rel (0) target = $region53
    $region52: #{encoder_forward.1} parent=1 // pred_region
      %s6251 = ssub.s32 512, 512
      %6252 = vsyncadd [#allocation7], %s6251
      %s6253 = sshll.u32 [#allocation6], 4
      %s6254 = int_to_ptr.vmem [resolvable:$true] %s6253
      %6259 = dma.vmem_to_hbm [thread:$0]  %s6254, 512, %s12, [#allocation7], 128, 128, 8
    $region53: #{encoder_forward.1} parent=1 // pred_fallthru
      _
    // Predicated region
    $region54: #{encoder_forward.1} parent=1 // pred_check
      _
    $region55: #{encoder_forward.1} parent=1 // pred_check_branch
      %6261 = sbr.rel (0) target = $region57
    $region56: #{encoder_forward.1} parent=1 // pred_region
      %6262 = dma.done [#allocation7], 512
    $region57: #{encoder_forward.1} parent=1 // pred_fallthru
      _
    %6263 = vsyncpa [#allocation7], 1

</llo_original>
